<compile_context>
chip_gen: v7x
topology: tpu7x:2x2x1
jax: 0.10.0
libtpu: 0.0.40
codegen_flags: <defaults>
</compile_context>

<pallas_src>
import functools

import jax
import jax.numpy as jnp
from jax.experimental import pallas as pl
from jax.experimental.pallas import tpu as pltpu

ALPHA = 0.2          # LeakyReLU negative slope
NEG_BIG = -9e15      # mask value used by the reference module


def gat_kernel(h_ref, a1_ref, wh2_ref, mask_ref, o_ref, *, tm):
    i = pl.program_id(0)

    a1 = a1_ref[...]                                 # (1, F) == a[:F, 0]
    wh2_row = wh2_ref[...]                           # (1, N) == (h @ a[F:]).T

    # Rows of h belonging to this block, sliced from the resident copy.
    row0 = pl.multiple_of(i * tm, tm)
    hb = h_ref[pl.ds(row0, tm), :]                   # (TM, F)

    # Wh1 for the block rows: multiply + lane reduce -> (TM, 1).  Cheap
    # (TM*F) relative to the (TM, N) chain below, so kept in-kernel.
    wh1 = jnp.sum(hb * a1, axis=1, keepdims=True)    # (TM, 1)

    # e = leaky_relu(Wh1 + Wh2.T): single mul + max instead of compare+select.
    e = wh1 + wh2_row                                # (TM, N) via broadcast
    e = jnp.maximum(e, ALPHA * e)

    # Adjacency mask (int8, != 0 means edge) -> -9e15 where no edge.  Keeps
    # the reference's uniform-attention behaviour for fully-masked rows.
    att = jnp.where(mask_ref[...] != 0, e, jnp.float32(NEG_BIG))

    # Row-wise softmax numerator only; normalization deferred past the matmul.
    att = att - jnp.max(att, axis=1, keepdims=True)
    p = jnp.exp(att)                                 # (TM, N), unnormalized
    denom = jnp.sum(p, axis=1, keepdims=True)        # (TM, 1)

    # h_prime = softmax(att) @ h, with the 1/denom scale applied after the
    # MXU matmul and after ReLU (scale > 0, so it commutes with ReLU).
    hp = jnp.dot(p, h_ref[...], preferred_element_type=jnp.float32)  # (TM, F)
    # Exact reciprocal: touches only a (TM, 1) vector, keeps 1e-4 tolerance.
    o_ref[...] = jnp.maximum(hp, 0.0) * pl.reciprocal(denom, approx=False)


def _pick_tm(n, budget_bytes=16 << 20):
    """Row-tile size whose working set fits a v7x-safe VMEM budget.

    ~14 bytes per (row, col) element: double-buffered int8 mask tile (2 B)
    plus ~3 live (TM, N) f32 temporaries around the max/exp/sum chain.
    Capped at 512 rows and at N//2 (>= 2 grid blocks so both v7x TensorCores
    get work); even block counts preferred; multiple of 32 for int8 sublane
    tiling.
    """
    tm = min(512, max(32, budget_bytes // (14 * n)), n)
    if n >= 64:
        tm = min(tm, n // 2)
    tm -= tm % 32
    tm = max(tm, 32)

    best = None
    t = tm
    while t >= 32:
        if n % t == 0:
            if (n // t) % 2 == 0:        # even block count: balanced megacore
                return t
            if best is None:
                best = t
        t -= 32
    if best is not None:
        return best
    return n                             # awkward/small graphs: single block


def uniform_header_gat(h, adj, a, *, tm=None):
    """h: (N, F) float32, adj: (N, N) float (>0 == edge), a: (2F, 1) float32."""
    N, F = h.shape
    assert adj.shape == (N, N)
    assert a.shape == (2 * F, 1)

    h = h.astype(jnp.float32)
    a = a.astype(jnp.float32)
    a1 = a[:F, 0].reshape(1, F)

    # Hoisted Wh2: identical for every grid step, so compute once in the
    # wrapper and ship as a (1, N) resident input (~4*N bytes).
    wh2_row = (h @ a[F:, 0]).reshape(1, N).astype(jnp.float32)

    # Adjacency as an int8 mask: same `adj > 0` semantics, 4x fewer HBM bytes
    # on the dominant N^2 term (important on v5e's ~0.8 TB/s HBM).
    mask = (adj > 0).astype(jnp.int8)

    if tm is None:
        tm = _pick_tm(N)
    # int8 mask tile uses (32, 128) sublane tiling -> tm must be a multiple
    # of 32 (or span the whole array).
    assert N % tm == 0 and (tm % 32 == 0 or tm == N)
    grid = (N // tm,)

    cost = pl.CostEstimate(
        flops=int(2 * N * N * F + 10 * N * N + 4 * N * F),
        transcendentals=int(N * N),
        bytes_accessed=int(N * N * 1 + 2 * N * F * 4 + N * 4 + F * 4),
    )

    kernel = functools.partial(gat_kernel, tm=tm)

    return pl.pallas_call(
        kernel,
        out_shape=jax.ShapeDtypeStruct((N, F), jnp.float32),
        grid=grid,
        in_specs=[
            pl.BlockSpec((N, F), lambda i: (0, 0)),    # h, fully resident
            pl.BlockSpec((1, F), lambda i: (0, 0)),    # a1
            pl.BlockSpec((1, N), lambda i: (0, 0)),    # wh2_row, precomputed
            pl.BlockSpec((tm, N), lambda i: (i, 0)),   # adj mask rows (int8)
        ],
        out_specs=pl.BlockSpec((tm, F), lambda i: (i, 0)),
        compiler_params=pltpu.CompilerParams(
            dimension_semantics=("parallel",),         # megacore on v7x
            vmem_limit_bytes=40 * 1024 * 1024,         # headroom under v7x's
        ),                                             # 64 MiB physical VMEM
        cost_estimate=cost,
    )(h, a1, wh2_row, mask)


def reference(h, adj, a):
    """Pure-JAX reference of the PyTorch forward (eval mode)."""
    F = h.shape[1]
    wh1 = h @ a[:F, :]
    wh2 = h @ a[F:, :]
    e = wh1 + wh2.T
    e = jnp.where(e > 0, e, ALPHA * e)
    att = jnp.where(adj > 0, e, NEG_BIG)
    att = jax.nn.softmax(att, axis=1)
    return jax.nn.relu(att @ h)


if __name__ == "__main__":
    N, F = 1024, 32  # small synthetic graph: 1024 nodes, 32 features

    key = jax.random.PRNGKey(0)
    k_h, k_adj, k_a = jax.random.split(key, 3)

    h = jax.random.normal(k_h, (N, F), dtype=jnp.float32)

    # random sparse adjacency with self-loops
    adj = (jax.random.uniform(k_adj, (N, N)) < 0.05).astype(jnp.float32)
    adj = jnp.maximum(adj, jnp.eye(N, dtype=jnp.float32))

    # xavier_uniform_(gain=1.414) on a (2F, 1) parameter, deterministic
    gain = 1.414
    bound = gain * (6.0 / (2 * F + 1)) ** 0.5
    a = jax.random.uniform(k_a, (2 * F, 1), minval=-bound, maxval=bound,
                           dtype=jnp.float32)

    out = uniform_header_gat(h, adj, a)
    out = jax.block_until_ready(out)

    ref = reference(h, adj, a)
    assert out.shape == (N, F)
    assert jnp.allclose(out, ref, atol=1e-4, rtol=1e-4), "mismatch vs reference"

    print("KERNEL_OK")
</pallas_src>

<mosaic_0001>
module attributes {stable_mosaic.version = 11 : i64} {
  func.func @gat_kernel(%arg0: i32, %arg1: memref<1024x32xf32, #tpu.memory_space<vmem>>, %arg2: memref<1x32xf32, #tpu.memory_space<vmem>>, %arg3: memref<1x1024xf32, #tpu.memory_space<vmem>>, %arg4: memref<512x1024xi8, #tpu.memory_space<vmem>>, %arg5: memref<512x32xf32, #tpu.memory_space<vmem>>) attributes {dimension_semantics = [#tpu.dimension_semantics<parallel>], iteration_bounds = array<i64: 2>, scalar_prefetch = 0 : i64, scratch_operands = 0 : i64, tpu.core_type = #tpu.core_type<tc>, window_params = [{pipeline_mode = #tpu.pipeline_mode<synchronous>, transform_indices = @transform_0, window_bounds = array<i64: 1024, 32>}, {pipeline_mode = #tpu.pipeline_mode<synchronous>, transform_indices = @transform_1, window_bounds = array<i64: 1, 32>}, {pipeline_mode = #tpu.pipeline_mode<synchronous>, transform_indices = @transform_2, window_bounds = array<i64: 1, 1024>}, {transform_indices = @transform_3, window_bounds = array<i64: 512, 1024>}, {transform_indices = @transform_4, window_bounds = array<i64: 512, 32>}]} {
    %c0 = arith.constant 0 : index
    %c0_0 = arith.constant 0 : index
    %0 = vector.load %arg2[%c0, %c0_0] : memref<1x32xf32, #tpu.memory_space<vmem>>, vector<1x32xf32>
    %c0_1 = arith.constant 0 : index
    %c0_2 = arith.constant 0 : index
    %1 = vector.load %arg3[%c0_1, %c0_2] : memref<1x1024xf32, #tpu.memory_space<vmem>>, vector<1x1024xf32>
    %c512_i32 = arith.constant 512 : i32
    %2 = arith.muli %arg0, %c512_i32 : i32
    %3 = tpu.assume_multiple %2, 512 : i32
    %4 = arith.index_cast %3 : i32 to index
    %c0_3 = arith.constant 0 : index
    %5 = vector.load %arg1[%4, %c0_3] : memref<1024x32xf32, #tpu.memory_space<vmem>>, vector<512x32xf32>
    %6 = vector.broadcast %0 : vector<1x32xf32> to vector<512x32xf32>
    %7 = arith.mulf %5, %6 : vector<512x32xf32>
    %cst = arith.constant dense<0.000000e+00> : vector<512xf32>
    %8 = vector.multi_reduction <add>, %7, %cst [1] : vector<512x32xf32> to vector<512xf32>
    %9 = vector.shape_cast %8 : vector<512xf32> to vector<512x1xf32>
    %10 = vector.broadcast %9 : vector<512x1xf32> to vector<512x1024xf32>
    %11 = vector.broadcast %1 : vector<1x1024xf32> to vector<512x1024xf32>
    %12 = arith.addf %10, %11 : vector<512x1024xf32>
    %cst_4 = arith.constant 2.000000e-01 : f32
    %13 = vector.broadcast %cst_4 : f32 to vector<512x1024xf32>
    %14 = arith.mulf %13, %12 : vector<512x1024xf32>
    %15 = arith.maximumf %12, %14 : vector<512x1024xf32>
    %c0_5 = arith.constant 0 : index
    %c0_6 = arith.constant 0 : index
    %16 = vector.load %arg4[%c0_5, %c0_6] : memref<512x1024xi8, #tpu.memory_space<vmem>>, vector<512x1024xi8>
    %c0_i8 = arith.constant 0 : i8
    %17 = vector.broadcast %c0_i8 : i8 to vector<512x1024xi8>
    %18 = arith.cmpi ne, %16, %17 : vector<512x1024xi8>
    %cst_7 = arith.constant -9.000000e+15 : f32
    %19 = vector.broadcast %cst_7 : f32 to vector<512x1024xf32>
    %20 = arith.select %18, %15, %19 : vector<512x1024xi1>, vector<512x1024xf32>
    %cst_8 = arith.constant dense<0xFF800000> : vector<512xf32>
    %21 = vector.multi_reduction <maximumf>, %20, %cst_8 [1] : vector<512x1024xf32> to vector<512xf32>
    %22 = vector.shape_cast %21 : vector<512xf32> to vector<512x1xf32>
    %23 = vector.broadcast %22 : vector<512x1xf32> to vector<512x1024xf32>
    %24 = arith.subf %20, %23 : vector<512x1024xf32>
    %25 = math.exp %24 : vector<512x1024xf32>
    %cst_9 = arith.constant dense<0.000000e+00> : vector<512xf32>
    %26 = vector.multi_reduction <add>, %25, %cst_9 [1] : vector<512x1024xf32> to vector<512xf32>
    %27 = vector.shape_cast %26 : vector<512xf32> to vector<512x1xf32>
    %c0_10 = arith.constant 0 : index
    %c0_11 = arith.constant 0 : index
    %28 = vector.load %arg1[%c0_10, %c0_11] : memref<1024x32xf32, #tpu.memory_space<vmem>>, vector<1024x32xf32>
    %cst_12 = arith.constant dense<0.000000e+00> : vector<512x32xf32>
    %29 = tpu.matmul %25, %28, %cst_12 {dimension_numbers = #tpu.dot_dimension_numbers<[1], [0], [0], [1], [0, 0, 1, 1], [], []>} : vector<512x1024xf32>, vector<1024x32xf32>, vector<512x32xf32> -> vector<512x32xf32>
    %cst_13 = arith.constant 0.000000e+00 : f32
    %30 = vector.broadcast %cst_13 : f32 to vector<512x32xf32>
    %31 = arith.maximumf %29, %30 : vector<512x32xf32>
    %32 = tpu.reciprocal %27 : vector<512x1xf32> -> vector<512x1xf32>
    %33 = vector.broadcast %32 : vector<512x1xf32> to vector<512x32xf32>
    %34 = arith.mulf %31, %33 : vector<512x32xf32>
    %c0_14 = arith.constant 0 : index
    %c0_15 = arith.constant 0 : index
    %35 = vector.load %arg5[%c0_14, %c0_15] : memref<512x32xf32, #tpu.memory_space<vmem>>, vector<512x32xf32>
    tpu.vector_store %arg5[%c0_14, %c0_15], %34 {strides = array<i32>} : memref<512x32xf32, #tpu.memory_space<vmem>>, vector<512x32xf32>,
    return
  }
  func.func @transform_0(%arg0: i32) -> (i32, i32) {
    %c0_i32 = arith.constant 0 : i32
    %c0_i32_0 = arith.constant 0 : i32
    %c0_i32_1 = arith.constant 0 : i32
    return %c0_i32, %c0_i32_0 : i32, i32
  }
  func.func @transform_1(%arg0: i32) -> (i32, i32) {
    %c0_i32 = arith.constant 0 : i32
    %c0_i32_0 = arith.constant 0 : i32
    %c0_i32_1 = arith.constant 0 : i32
    return %c0_i32, %c0_i32_0 : i32, i32
  }
  func.func @transform_2(%arg0: i32) -> (i32, i32) {
    %c0_i32 = arith.constant 0 : i32
    %c0_i32_0 = arith.constant 0 : i32
    %c0_i32_1 = arith.constant 0 : i32
    return %c0_i32, %c0_i32_0 : i32, i32
  }
  func.func @transform_3(%arg0: i32) -> (i32, i32) {
    %c0_i32 = arith.constant 0 : i32
    %c0_i32_0 = arith.constant 0 : i32
    return %arg0, %c0_i32 : i32, i32
  }
  func.func @transform_4(%arg0: i32) -> (i32, i32) {
    %c0_i32 = arith.constant 0 : i32
    %c0_i32_0 = arith.constant 0 : i32
    return %arg0, %c0_i32 : i32, i32
  }
}

</mosaic_0001>

<llo_original>
// kernel: tpu_custom_call.1
$region0: #{tpu_custom_call.1}
  #allocation0 [shape = 'u32[]', space=smem, size = 0x4, offset = 0x4, fixed_abs, tag = 'smem constant byte address 0x4 - core index']
  #allocation1 [shape = 'u32[144,128]{1,0:T(1,128)}', space=vmem, size = 0x12000, scoped, tag = 'internal scratch']
  %s0 = inlined_call_operand.vmem [shape: f32[1024,32], index: 0, kind: input, shape index: {}]
  %s1 = inlined_call_operand.vmem [shape: f32[1,32], index: 1, kind: input, shape index: {}]
  %s2 = inlined_call_operand.vmem [shape: f32[1,1024], index: 2, kind: input, shape index: {}]
  %s3 = inlined_call_operand.hbm [shape: s8[1024,1024], index: 3, kind: input, shape index: {}]
  %s4 = inlined_call_operand.vmem [shape: f32[1024,32], index: 4, kind: output, shape index: {}]
  %s5 = sld [smem:[#allocation0]]
  $region53: #{tpu_custom_call.1} parent=0
    _
  %s7 = ssub.s32 1, %s5
  %s8 = scalar_select 0, %s7, %s5
  $region1: #{tpu_custom_call.1} parent=0
    #allocation2 [shape = 'u8[1048576]{0}', space=vmem, size = 0x100000, scoped, tag = 'input window, operand 3']
    #allocation3 [shape = 's32[2]{0}', space=sflag, size = 0x8, scoped, tag = 'scoped memory for tpu_custom_call.1']
    %9 = vsyncpa [#allocation3], 0
    %s10 = scalar_lea.sflag [#allocation3], 1
    %11 = vsyncpa %s10, 0
    loop: start=0, step=1, limit=4
    $region2: #{tpu_custom_call.1} parent=1 // loop_pre_header
      _
    $region3: #{tpu_custom_call.1} parent=1 // loop_header
      %s13 = sphi 0, %s17
      %p14 = scmp.ge.s32.totalorder %s13, 4
      %s21 = sphi 0, %s21
      %s23 = sphi 0, %s21
      %s24 = sphi 0, %s23
      %s38 = sphi 0, %s24
      %s42 = sphi 0, %s42
      %s44 = sphi 0, %s42
      %s45 = sphi 0, %s44
      %s59 = sphi 0, %s45
      %s63 = sphi 0, %s63
      %s65 = sphi 0, %s63
      %s66 = sphi 0, %s65
      %s80 = sphi 0, %s66
      %s86 = sphi 0, %s88
      %s89 = sphi 0, %s86
      %s90 = sphi 0, %s89
      %s106 = sphi 0, %s90
      %s112 = sphi 0, %s114
      %s115 = sphi 0, %s112
      %s116 = sphi 0, %s115
      %s132 = sphi 0, %s116
    $region4: #{tpu_custom_call.1} parent=1 // loop_header_branch
      %16 = sbr.rel (%p14) target = $region8
    $region5: #{tpu_custom_call.1} parent=1 // loop_body
      %s18 = ssub.s32 %s13, 1
      %s19 = ssub.s32 %s13, 2
      %s20 = sadd.s32 %s13, 1
      %s22 = sadd.s32 %s21, 1
      %p25 = scmp.eq.s32.totalorder %s13, 1
      %p26 = scmp.ne.s32.totalorder %s21, %s23
      %p27 = scmp.eq.s32.totalorder %s13, 0
      %p28 = por %p26, %p27
      %p29 = scmp.ne.s32.totalorder %s21, %s23
      %p30 = scmp.eq.s32.totalorder %s18, 1
      %p31 = por %p29, %p30
      %p32 = scmp.ne.s32.totalorder %s23, %s24
      %p33 = scmp.eq.s32.totalorder %s18, 0
      %p34 = por %p32, %p33
      %p35 = scmp.ne.s32.totalorder %s23, %s24
      %p36 = scmp.eq.s32.totalorder %s19, 1
      %p37 = por %p35, %p36
      %p39 = scmp.ne.s32.totalorder %s24, %s38
      %p40 = scmp.eq.s32.totalorder %s19, 0
      %p41 = por %p39, %p40
      %s43 = sadd.s32 %s42, 1
      %p46 = scmp.eq.s32.totalorder %s13, 1
      %p47 = scmp.ne.s32.totalorder %s42, %s44
      %p48 = scmp.eq.s32.totalorder %s13, 0
      %p49 = por %p47, %p48
      %p50 = scmp.ne.s32.totalorder %s42, %s44
      %p51 = scmp.eq.s32.totalorder %s18, 1
      %p52 = por %p50, %p51
      %p53 = scmp.ne.s32.totalorder %s44, %s45
      %p54 = scmp.eq.s32.totalorder %s18, 0
      %p55 = por %p53, %p54
      %p56 = scmp.ne.s32.totalorder %s44, %s45
      %p57 = scmp.eq.s32.totalorder %s19, 1
      %p58 = por %p56, %p57
      %p60 = scmp.ne.s32.totalorder %s45, %s59
      %p61 = scmp.eq.s32.totalorder %s19, 0
      %p62 = por %p60, %p61
      %s64 = sadd.s32 %s63, 1
      %p67 = scmp.eq.s32.totalorder %s13, 1
      %p68 = scmp.ne.s32.totalorder %s63, %s65
      %p69 = scmp.eq.s32.totalorder %s13, 0
      %p70 = por %p68, %p69
      %p71 = scmp.ne.s32.totalorder %s63, %s65
      %p72 = scmp.eq.s32.totalorder %s18, 1
      %p73 = por %p71, %p72
      %p74 = scmp.ne.s32.totalorder %s65, %s66
      %p75 = scmp.eq.s32.totalorder %s18, 0
      %p76 = por %p74, %p75
      %p77 = scmp.ne.s32.totalorder %s65, %s66
      %p78 = scmp.eq.s32.totalorder %s19, 1
      %p79 = por %p77, %p78
      %p81 = scmp.ne.s32.totalorder %s66, %s80
      %p82 = scmp.eq.s32.totalorder %s19, 0
      %p83 = por %p81, %p82
      %s84 = ssub.s32 %s13, %s20
      %p85 = scmp.eq.s32.totalorder %s84, 0
      %s87 = sadd.s32 %s86, 1
      %s88 = scalar_select %p85, %s86, %s87
      %p91 = pneg %p85
      %p92 = scmp.eq.s32.totalorder %s13, 1
      %p93 = por %p91, %p92
      %p94 = scmp.ne.s32.totalorder %s86, %s89
      %p95 = scmp.eq.s32.totalorder %s13, 0
      %p96 = por %p94, %p95
      %p97 = scmp.ne.s32.totalorder %s86, %s89
      %p98 = scmp.eq.s32.totalorder %s18, 1
      %p99 = por %p97, %p98
      %p100 = scmp.ne.s32.totalorder %s89, %s90
      %p101 = scmp.eq.s32.totalorder %s18, 0
      %p102 = por %p100, %p101
      %p103 = scmp.ne.s32.totalorder %s89, %s90
      %p104 = scmp.eq.s32.totalorder %s19, 1
      %p105 = por %p103, %p104
      %p107 = scmp.ne.s32.totalorder %s90, %s106
      %p108 = scmp.eq.s32.totalorder %s19, 0
      %p109 = por %p107, %p108
      %s110 = ssub.s32 %s13, %s20
      %p111 = scmp.eq.s32.totalorder %s110, 0
      %s113 = sadd.s32 %s112, 1
      %s114 = scalar_select %p111, %s112, %s113
      %p117 = pneg %p111
      %p118 = scmp.eq.s32.totalorder %s13, 1
      %p119 = por %p117, %p118
      %p120 = scmp.ne.s32.totalorder %s112, %s115
      %p121 = scmp.eq.s32.totalorder %s13, 0
      %p122 = por %p120, %p121
      %p123 = scmp.ne.s32.totalorder %s112, %s115
      %p124 = scmp.eq.s32.totalorder %s18, 1
      %p125 = por %p123, %p124
      %p126 = scmp.ne.s32.totalorder %s115, %s116
      %p127 = scmp.eq.s32.totalorder %s18, 0
      %p128 = por %p126, %p127
      %p129 = scmp.ne.s32.totalorder %s115, %s116
      %p130 = scmp.eq.s32.totalorder %s19, 1
      %p131 = por %p129, %p130
      %p133 = scmp.ne.s32.totalorder %s116, %s132
      %p134 = scmp.eq.s32.totalorder %s19, 0
      %p135 = por %p133, %p134
      %p136 = scmp.le.s32.totalorder 1, %s13
      %p137 = scmp.lt.s32.totalorder %s13, 3
      %p138 = pnand %p136, %p137
      %p139 = pneg %p138
      // Predicated region
      $region9: #{tpu_custom_call.1} parent=5 // pred_check
        _
      $region10: #{tpu_custom_call.1} parent=5 // pred_check_branch
        %141 = sbr.rel (%p138) target = $region12
      $region11: #{tpu_custom_call.1} parent=5 // pred_region
        %s142 = ssub.s32 %s13, 1
        // Predicated region
        $region13: #{tpu_custom_call.1} parent=11 // pred_check
          %p143 = pneg %p34
        $region14: #{tpu_custom_call.1} parent=11 // pred_check_branch
          %145 = sbr.rel (%p143) target = $region16
        $region15: #{tpu_custom_call.1} parent=11 // pred_region
          _
        $region16: #{tpu_custom_call.1} parent=11 // pred_fallthru
          _
        // Predicated region
        $region17: #{tpu_custom_call.1} parent=11 // pred_check
          %p146 = pneg %p55
        $region18: #{tpu_custom_call.1} parent=11 // pred_check_branch
          %148 = sbr.rel (%p146) target = $region20
        $region19: #{tpu_custom_call.1} parent=11 // pred_region
          _
        $region20: #{tpu_custom_call.1} parent=11 // pred_fallthru
          _
        // Predicated region
        $region21: #{tpu_custom_call.1} parent=11 // pred_check
          %p149 = pneg %p76
        $region22: #{tpu_custom_call.1} parent=11 // pred_check_branch
          %151 = sbr.rel (%p149) target = $region24
        $region23: #{tpu_custom_call.1} parent=11 // pred_region
          _
        $region24: #{tpu_custom_call.1} parent=11 // pred_fallthru
          _
      $region12: #{tpu_custom_call.1} parent=5 // pred_fallthru
        _
      %p152 = scmp.lt.s32.totalorder %s13, 2
      // Predicated region
      $region25: #{tpu_custom_call.1} parent=5 // pred_check
        %p153 = pneg %p152
      $region26: #{tpu_custom_call.1} parent=5 // pred_check_branch
        %155 = sbr.rel (%p153) target = $region28
      $region27: #{tpu_custom_call.1} parent=5 // pred_region
        // Predicated region
        $region29: #{tpu_custom_call.1} parent=27 // pred_check
          %p156 = pneg %p96
        $region30: #{tpu_custom_call.1} parent=27 // pred_check_branch
          %158 = sbr.rel (%p156) target = $region32
        $region31: #{tpu_custom_call.1} parent=27 // pred_region
          %s159 = sand.u32 %s86, 1
          %s160 = scalar_lea.sflag [#allocation3], %s159
          %s161 = sand.u32 %s86, 1
          %s162 = smul.addr %s161, 1024
          %s163 = scalar_lea.vmem [#allocation2], %s162
          %s164 = smul.u32 16, %s13
          %s166 = ssub.s32 16384, 16384
          %167 = vsyncadd %s160, %s166
          %s168 = smul.addr %s164, 8
          %s169 = smul.addr %s168, 128
          %s170 = scalar_lea.hbm %s3, %s169
          %s171 = sshll.u32 %s163, 4
          %s172 = int_to_ptr.vmem [resolvable:$true] %s171
          %177 = dma.hbm_to_vmem [thread:$0]  %s170, 16384, %s172, %s160, 1024, 1024, 64
        $region32: #{tpu_custom_call.1} parent=27 // pred_fallthru
          _
      $region28: #{tpu_custom_call.1} parent=5 // pred_fallthru
        _
      %p178 = scmp.le.s32.totalorder 1, %s13
      %p179 = scmp.lt.s32.totalorder %s13, 3
      %p180 = pnand %p178, %p179
      %p181 = pneg %p180
      // Predicated region
      $region33: #{tpu_custom_call.1} parent=5 // pred_check
        _
      $region34: #{tpu_custom_call.1} parent=5 // pred_check_branch
        %183 = sbr.rel (%p180) target = $region36
      $region35: #{tpu_custom_call.1} parent=5 // pred_region
        %s184 = ssub.s32 %s13, 1
        %s185 = sand.u32 %s89, 1
        %s186 = scalar_lea.sflag [#allocation3], %s185
        %s187 = sand.u32 %s89, 1
        %s188 = smul.addr %s187, 1024
        %s189 = scalar_lea.vmem [#allocation2], %s188
        // Predicated region
        $region37: #{tpu_custom_call.1} parent=35 // pred_check
          %p190 = pneg %p102
        $region38: #{tpu_custom_call.1} parent=35 // pred_check_branch
          %192 = sbr.rel (%p190) target = $region40
        $region39: #{tpu_custom_call.1} parent=35 // pred_region
          %193 = dma.done %s186, 16384
        $region40: #{tpu_custom_call.1} parent=35 // pred_fallthru
          _
        %p194 = pneg %p34
        %p195 = pneg %p31
        %p196 = pneg %p55
        %p197 = pneg %p52
        %p198 = pneg %p76
        %p199 = pneg %p73
        %s200 = sand.u32 %s89, 1
        %s201 = scalar_lea.sflag [#allocation3], %s200
        %s202 = sand.u32 %s89, 1
        %s203 = smul.addr %s202, 1024
        %s204 = scalar_lea.vmem [#allocation2], %s203
        %p205 = pneg %p102
        %p206 = pneg %p99
        %p207 = pneg %p128
        %p208 = pneg %p125
        %s209 = smul.u32 64, %s18
        %p210 = scmp.lt.s32.totalorder %s209, 127
        %s211 = scalar_select %p210, %s209, 127
        %s212 = smul.addr %s211, 8
        %s213 = scalar_lea.vmem %s4, %s212
        %s214 = smul.u32 16, %s18
        %s215 = smul.u32 64, %s18
        %p216 = scmp.lt.s32.totalorder %s215, 127
        %s217 = scalar_select %p216, %s215, 127
        %s218 = smul.addr %s217, 8
        %s219 = scalar_lea.vmem %s4, %s218
        %s220 = smul.u32 64, %s18
        %v223 = vld [vmem:[%s1] sm:$0x1]
        %v224 = vld [vmem:[%s2] sm:$0xff]
        %s225 = smul.u32 %s18, 512
        %s226 = scalar_lea.vmem %s0, %s225
        %v227 = vld [vmem:[%s226] sm:$0xff]
        %v228 = vld [vmem:[%s226 + $0x8] sm:$0xff]
        %v229 = vld [vmem:[%s226 + $0x10] sm:$0xff]
        %v230 = vld [vmem:[%s226 + $0x18] sm:$0xff]
        %v231 = vld [vmem:[%s226 + $0x20] sm:$0xff]
        %v232 = vld [vmem:[%s226 + $0x28] sm:$0xff]
        %v233 = vld [vmem:[%s226 + $0x30] sm:$0xff]
        %v234 = vld [vmem:[%s226 + $0x38] sm:$0xff]
        %v235 = vld [vmem:[%s226 + $0x40] sm:$0xff]
        %v236 = vld [vmem:[%s226 + $0x48] sm:$0xff]
        %v237 = vld [vmem:[%s226 + $0x50] sm:$0xff]
        %v238 = vld [vmem:[%s226 + $0x58] sm:$0xff]
        %v239 = vld [vmem:[%s226 + $0x60] sm:$0xff]
        %v240 = vld [vmem:[%s226 + $0x68] sm:$0xff]
        %v241 = vld [vmem:[%s226 + $0x70] sm:$0xff]
        %v242 = vld [vmem:[%s226 + $0x78] sm:$0xff]
        %v243 = vld [vmem:[%s226 + $0x80] sm:$0xff]
        %v244 = vld [vmem:[%s226 + $0x88] sm:$0xff]
        %v245 = vld [vmem:[%s226 + $0x90] sm:$0xff]
        %v246 = vld [vmem:[%s226 + $0x98] sm:$0xff]
        %v247 = vld [vmem:[%s226 + $0xa0] sm:$0xff]
        %v248 = vld [vmem:[%s226 + $0xa8] sm:$0xff]
        %v249 = vld [vmem:[%s226 + $0xb0] sm:$0xff]
        %v250 = vld [vmem:[%s226 + $0xb8] sm:$0xff]
        %v251 = vld [vmem:[%s226 + $0xc0] sm:$0xff]
        %v252 = vld [vmem:[%s226 + $0xc8] sm:$0xff]
        %v253 = vld [vmem:[%s226 + $0xd0] sm:$0xff]
        %v254 = vld [vmem:[%s226 + $0xd8] sm:$0xff]
        %v255 = vld [vmem:[%s226 + $0xe0] sm:$0xff]
        %v256 = vld [vmem:[%s226 + $0xe8] sm:$0xff]
        %v257 = vld [vmem:[%s226 + $0xf0] sm:$0xff]
        %v258 = vld [vmem:[%s226 + $0xf8] sm:$0xff]
        %v259 = vld [vmem:[%s226 + $0x100] sm:$0xff]
        %v260 = vld [vmem:[%s226 + $0x108] sm:$0xff]
        %v261 = vld [vmem:[%s226 + $0x110] sm:$0xff]
        %v262 = vld [vmem:[%s226 + $0x118] sm:$0xff]
        %v263 = vld [vmem:[%s226 + $0x120] sm:$0xff]
        %v264 = vld [vmem:[%s226 + $0x128] sm:$0xff]
        %v265 = vld [vmem:[%s226 + $0x130] sm:$0xff]
        %v266 = vld [vmem:[%s226 + $0x138] sm:$0xff]
        %v267 = vld [vmem:[%s226 + $0x140] sm:$0xff]
        %v268 = vld [vmem:[%s226 + $0x148] sm:$0xff]
        %v269 = vld [vmem:[%s226 + $0x150] sm:$0xff]
        %v270 = vld [vmem:[%s226 + $0x158] sm:$0xff]
        %v271 = vld [vmem:[%s226 + $0x160] sm:$0xff]
        %v272 = vld [vmem:[%s226 + $0x168] sm:$0xff]
        %v273 = vld [vmem:[%s226 + $0x170] sm:$0xff]
        %v274 = vld [vmem:[%s226 + $0x178] sm:$0xff]
        %v275 = vld [vmem:[%s226 + $0x180] sm:$0xff]
        %v276 = vld [vmem:[%s226 + $0x188] sm:$0xff]
        %v277 = vld [vmem:[%s226 + $0x190] sm:$0xff]
        %v278 = vld [vmem:[%s226 + $0x198] sm:$0xff]
        %v279 = vld [vmem:[%s226 + $0x1a0] sm:$0xff]
        %v280 = vld [vmem:[%s226 + $0x1a8] sm:$0xff]
        %v281 = vld [vmem:[%s226 + $0x1b0] sm:$0xff]
        %v282 = vld [vmem:[%s226 + $0x1b8] sm:$0xff]
        %v283 = vld [vmem:[%s226 + $0x1c0] sm:$0xff]
        %v284 = vld [vmem:[%s226 + $0x1c8] sm:$0xff]
        %v285 = vld [vmem:[%s226 + $0x1d0] sm:$0xff]
        %v286 = vld [vmem:[%s226 + $0x1d8] sm:$0xff]
        %v287 = vld [vmem:[%s226 + $0x1e0] sm:$0xff]
        %v288 = vld [vmem:[%s226 + $0x1e8] sm:$0xff]
        %v289 = vld [vmem:[%s226 + $0x1f0] sm:$0xff]
        %v290 = vld [vmem:[%s226 + $0x1f8] sm:$0xff]
        %v292 = vlaneseq
        %v293 = vshrl.u32 %v292, 7
        %v294 = vsub.s32 0, %v293
        %v295 = vrot.slane %v223, %v294
        %v297 = vmul.f32 %v227, %v295
        %v298 = vmul.f32 %v228, %v295
        %v299 = vmul.f32 %v229, %v295
        %v300 = vmul.f32 %v230, %v295
        %v301 = vmul.f32 %v231, %v295
        %v302 = vmul.f32 %v232, %v295
        %v303 = vmul.f32 %v233, %v295
        %v304 = vmul.f32 %v234, %v295
        %v305 = vmul.f32 %v235, %v295
        %v306 = vmul.f32 %v236, %v295
        %v307 = vmul.f32 %v237, %v295
        %v308 = vmul.f32 %v238, %v295
        %v309 = vmul.f32 %v239, %v295
        %v310 = vmul.f32 %v240, %v295
        %v311 = vmul.f32 %v241, %v295
        %v312 = vmul.f32 %v242, %v295
        %v313 = vmul.f32 %v243, %v295
        %v314 = vmul.f32 %v244, %v295
        %v315 = vmul.f32 %v245, %v295
        %v316 = vmul.f32 %v246, %v295
        %v317 = vmul.f32 %v247, %v295
        %v318 = vmul.f32 %v248, %v295
        %v319 = vmul.f32 %v249, %v295
        %v320 = vmul.f32 %v250, %v295
        %v321 = vmul.f32 %v251, %v295
        %v322 = vmul.f32 %v252, %v295
        %v323 = vmul.f32 %v253, %v295
        %v324 = vmul.f32 %v254, %v295
        %v325 = vmul.f32 %v255, %v295
        %v326 = vmul.f32 %v256, %v295
        %v327 = vmul.f32 %v257, %v295
        %v328 = vmul.f32 %v258, %v295
        %v329 = vmul.f32 %v259, %v295
        %v330 = vmul.f32 %v260, %v295
        %v331 = vmul.f32 %v261, %v295
        %v332 = vmul.f32 %v262, %v295
        %v333 = vmul.f32 %v263, %v295
        %v334 = vmul.f32 %v264, %v295
        %v335 = vmul.f32 %v265, %v295
        %v336 = vmul.f32 %v266, %v295
        %v337 = vmul.f32 %v267, %v295
        %v338 = vmul.f32 %v268, %v295
        %v339 = vmul.f32 %v269, %v295
        %v340 = vmul.f32 %v270, %v295
        %v341 = vmul.f32 %v271, %v295
        %v342 = vmul.f32 %v272, %v295
        %v343 = vmul.f32 %v273, %v295
        %v344 = vmul.f32 %v274, %v295
        %v345 = vmul.f32 %v275, %v295
        %v346 = vmul.f32 %v276, %v295
        %v347 = vmul.f32 %v277, %v295
        %v348 = vmul.f32 %v278, %v295
        %v349 = vmul.f32 %v279, %v295
        %v350 = vmul.f32 %v280, %v295
        %v351 = vmul.f32 %v281, %v295
        %v352 = vmul.f32 %v282, %v295
        %v353 = vmul.f32 %v283, %v295
        %v354 = vmul.f32 %v284, %v295
        %v355 = vmul.f32 %v285, %v295
        %v356 = vmul.f32 %v286, %v295
        %v357 = vmul.f32 %v287, %v295
        %v358 = vmul.f32 %v288, %v295
        %v359 = vmul.f32 %v289, %v295
        %v360 = vmul.f32 %v290, %v295
        %vm361 = vcmask 261120
        %v362 = vsel %vm361, %v297, 0.0
        %363 = vadd.xlane.f32.xlu0 %v362
        %v364 = vpop.xlane.xlu0 %363
        %v365 = vsel %vm361, %v298, 0.0
        %366 = vadd.xlane.f32.xlu0 %v365
        %v367 = vpop.xlane.xlu0 %366
        %v368 = vsel %vm361, %v299, 0.0
        %369 = vadd.xlane.f32.xlu0 %v368
        %v370 = vpop.xlane.xlu0 %369
        %v371 = vsel %vm361, %v300, 0.0
        %372 = vadd.xlane.f32.xlu0 %v371
        %v373 = vpop.xlane.xlu0 %372
        %v374 = vsel %vm361, %v301, 0.0
        %375 = vadd.xlane.f32.xlu0 %v374
        %v376 = vpop.xlane.xlu0 %375
        %v377 = vsel %vm361, %v302, 0.0
        %378 = vadd.xlane.f32.xlu0 %v377
        %v379 = vpop.xlane.xlu0 %378
        %v380 = vsel %vm361, %v303, 0.0
        %381 = vadd.xlane.f32.xlu0 %v380
        %v382 = vpop.xlane.xlu0 %381
        %v383 = vsel %vm361, %v304, 0.0
        %384 = vadd.xlane.f32.xlu0 %v383
        %v385 = vpop.xlane.xlu0 %384
        %v386 = vsel %vm361, %v305, 0.0
        %387 = vadd.xlane.f32.xlu0 %v386
        %v388 = vpop.xlane.xlu0 %387
        %v389 = vsel %vm361, %v306, 0.0
        %390 = vadd.xlane.f32.xlu0 %v389
        %v391 = vpop.xlane.xlu0 %390
        %v392 = vsel %vm361, %v307, 0.0
        %393 = vadd.xlane.f32.xlu0 %v392
        %v394 = vpop.xlane.xlu0 %393
        %v395 = vsel %vm361, %v308, 0.0
        %396 = vadd.xlane.f32.xlu0 %v395
        %v397 = vpop.xlane.xlu0 %396
        %v398 = vsel %vm361, %v309, 0.0
        %399 = vadd.xlane.f32.xlu0 %v398
        %v400 = vpop.xlane.xlu0 %399
        %v401 = vsel %vm361, %v310, 0.0
        %402 = vadd.xlane.f32.xlu0 %v401
        %v403 = vpop.xlane.xlu0 %402
        %v404 = vsel %vm361, %v311, 0.0
        %405 = vadd.xlane.f32.xlu0 %v404
        %v406 = vpop.xlane.xlu0 %405
        %v407 = vsel %vm361, %v312, 0.0
        %408 = vadd.xlane.f32.xlu0 %v407
        %v409 = vpop.xlane.xlu0 %408
        %v410 = vsel %vm361, %v313, 0.0
        %411 = vadd.xlane.f32.xlu0 %v410
        %v412 = vpop.xlane.xlu0 %411
        %v413 = vsel %vm361, %v314, 0.0
        %414 = vadd.xlane.f32.xlu0 %v413
        %v415 = vpop.xlane.xlu0 %414
        %v416 = vsel %vm361, %v315, 0.0
        %417 = vadd.xlane.f32.xlu0 %v416
        %v418 = vpop.xlane.xlu0 %417
        %v419 = vsel %vm361, %v316, 0.0
        %420 = vadd.xlane.f32.xlu0 %v419
        %v421 = vpop.xlane.xlu0 %420
        %v422 = vsel %vm361, %v317, 0.0
        %423 = vadd.xlane.f32.xlu0 %v422
        %v424 = vpop.xlane.xlu0 %423
        %v425 = vsel %vm361, %v318, 0.0
        %426 = vadd.xlane.f32.xlu0 %v425
        %v427 = vpop.xlane.xlu0 %426
        %v428 = vsel %vm361, %v319, 0.0
        %429 = vadd.xlane.f32.xlu0 %v428
        %v430 = vpop.xlane.xlu0 %429
        %v431 = vsel %vm361, %v320, 0.0
        %432 = vadd.xlane.f32.xlu0 %v431
        %v433 = vpop.xlane.xlu0 %432
        %v434 = vsel %vm361, %v321, 0.0
        %435 = vadd.xlane.f32.xlu0 %v434
        %v436 = vpop.xlane.xlu0 %435
        %v437 = vsel %vm361, %v322, 0.0
        %438 = vadd.xlane.f32.xlu0 %v437
        %v439 = vpop.xlane.xlu0 %438
        %v440 = vsel %vm361, %v323, 0.0
        %441 = vadd.xlane.f32.xlu0 %v440
        %v442 = vpop.xlane.xlu0 %441
        %v443 = vsel %vm361, %v324, 0.0
        %444 = vadd.xlane.f32.xlu0 %v443
        %v445 = vpop.xlane.xlu0 %444
        %v446 = vsel %vm361, %v325, 0.0
        %447 = vadd.xlane.f32.xlu0 %v446
        %v448 = vpop.xlane.xlu0 %447
        %v449 = vsel %vm361, %v326, 0.0
        %450 = vadd.xlane.f32.xlu0 %v449
        %v451 = vpop.xlane.xlu0 %450
        %v452 = vsel %vm361, %v327, 0.0
        %453 = vadd.xlane.f32.xlu0 %v452
        %v454 = vpop.xlane.xlu0 %453
        %v455 = vsel %vm361, %v328, 0.0
        %456 = vadd.xlane.f32.xlu0 %v455
        %v457 = vpop.xlane.xlu0 %456
        %v458 = vsel %vm361, %v329, 0.0
        %459 = vadd.xlane.f32.xlu0 %v458
        %v460 = vpop.xlane.xlu0 %459
        %v461 = vsel %vm361, %v330, 0.0
        %462 = vadd.xlane.f32.xlu0 %v461
        %v463 = vpop.xlane.xlu0 %462
        %v464 = vsel %vm361, %v331, 0.0
        %465 = vadd.xlane.f32.xlu0 %v464
        %v466 = vpop.xlane.xlu0 %465
        %v467 = vsel %vm361, %v332, 0.0
        %468 = vadd.xlane.f32.xlu0 %v467
        %v469 = vpop.xlane.xlu0 %468
        %v470 = vsel %vm361, %v333, 0.0
        %471 = vadd.xlane.f32.xlu0 %v470
        %v472 = vpop.xlane.xlu0 %471
        %v473 = vsel %vm361, %v334, 0.0
        %474 = vadd.xlane.f32.xlu0 %v473
        %v475 = vpop.xlane.xlu0 %474
        %v476 = vsel %vm361, %v335, 0.0
        %477 = vadd.xlane.f32.xlu0 %v476
        %v478 = vpop.xlane.xlu0 %477
        %v479 = vsel %vm361, %v336, 0.0
        %480 = vadd.xlane.f32.xlu0 %v479
        %v481 = vpop.xlane.xlu0 %480
        %v482 = vsel %vm361, %v337, 0.0
        %483 = vadd.xlane.f32.xlu0 %v482
        %v484 = vpop.xlane.xlu0 %483
        %v485 = vsel %vm361, %v338, 0.0
        %486 = vadd.xlane.f32.xlu0 %v485
        %v487 = vpop.xlane.xlu0 %486
        %v488 = vsel %vm361, %v339, 0.0
        %489 = vadd.xlane.f32.xlu0 %v488
        %v490 = vpop.xlane.xlu0 %489
        %v491 = vsel %vm361, %v340, 0.0
        %492 = vadd.xlane.f32.xlu0 %v491
        %v493 = vpop.xlane.xlu0 %492
        %v494 = vsel %vm361, %v341, 0.0
        %495 = vadd.xlane.f32.xlu0 %v494
        %v496 = vpop.xlane.xlu0 %495
        %v497 = vsel %vm361, %v342, 0.0
        %498 = vadd.xlane.f32.xlu0 %v497
        %v499 = vpop.xlane.xlu0 %498
        %v500 = vsel %vm361, %v343, 0.0
        %501 = vadd.xlane.f32.xlu0 %v500
        %v502 = vpop.xlane.xlu0 %501
        %v503 = vsel %vm361, %v344, 0.0
        %504 = vadd.xlane.f32.xlu0 %v503
        %v505 = vpop.xlane.xlu0 %504
        %v506 = vsel %vm361, %v345, 0.0
        %507 = vadd.xlane.f32.xlu0 %v506
        %v508 = vpop.xlane.xlu0 %507
        %v509 = vsel %vm361, %v346, 0.0
        %510 = vadd.xlane.f32.xlu0 %v509
        %v511 = vpop.xlane.xlu0 %510
        %v512 = vsel %vm361, %v347, 0.0
        %513 = vadd.xlane.f32.xlu0 %v512
        %v514 = vpop.xlane.xlu0 %513
        %v515 = vsel %vm361, %v348, 0.0
        %516 = vadd.xlane.f32.xlu0 %v515
        %v517 = vpop.xlane.xlu0 %516
        %v518 = vsel %vm361, %v349, 0.0
        %519 = vadd.xlane.f32.xlu0 %v518
        %v520 = vpop.xlane.xlu0 %519
        %v521 = vsel %vm361, %v350, 0.0
        %522 = vadd.xlane.f32.xlu0 %v521
        %v523 = vpop.xlane.xlu0 %522
        %v524 = vsel %vm361, %v351, 0.0
        %525 = vadd.xlane.f32.xlu0 %v524
        %v526 = vpop.xlane.xlu0 %525
        %v527 = vsel %vm361, %v352, 0.0
        %528 = vadd.xlane.f32.xlu0 %v527
        %v529 = vpop.xlane.xlu0 %528
        %v530 = vsel %vm361, %v353, 0.0
        %531 = vadd.xlane.f32.xlu0 %v530
        %v532 = vpop.xlane.xlu0 %531
        %v533 = vsel %vm361, %v354, 0.0
        %534 = vadd.xlane.f32.xlu0 %v533
        %v535 = vpop.xlane.xlu0 %534
        %v536 = vsel %vm361, %v355, 0.0
        %537 = vadd.xlane.f32.xlu0 %v536
        %v538 = vpop.xlane.xlu0 %537
        %v539 = vsel %vm361, %v356, 0.0
        %540 = vadd.xlane.f32.xlu0 %v539
        %v541 = vpop.xlane.xlu0 %540
        %v542 = vsel %vm361, %v357, 0.0
        %543 = vadd.xlane.f32.xlu0 %v542
        %v544 = vpop.xlane.xlu0 %543
        %v545 = vsel %vm361, %v358, 0.0
        %546 = vadd.xlane.f32.xlu0 %v545
        %v547 = vpop.xlane.xlu0 %546
        %v548 = vsel %vm361, %v359, 0.0
        %549 = vadd.xlane.f32.xlu0 %v548
        %v550 = vpop.xlane.xlu0 %549
        %v551 = vsel %vm361, %v360, 0.0
        %552 = vadd.xlane.f32.xlu0 %v551
        %v553 = vpop.xlane.xlu0 %552
        %v555 = vlaneseq
        %v556 = vshrl.u32 %v555, 7
        %v557 = vsub.s32 0, %v556
        %v558 = vrot.slane %v224, %v557
        %v559 = vlaneseq
        %v560 = vshrl.u32 %v559, 7
        %v561 = vsub.s32 1, %v560
        %v562 = vrot.slane %v224, %v561
        %v563 = vlaneseq
        %v564 = vshrl.u32 %v563, 7
        %v565 = vsub.s32 2, %v564
        %v566 = vrot.slane %v224, %v565
        %v567 = vlaneseq
        %v568 = vshrl.u32 %v567, 7
        %v569 = vsub.s32 3, %v568
        %v570 = vrot.slane %v224, %v569
        %v571 = vlaneseq
        %v572 = vshrl.u32 %v571, 7
        %v573 = vsub.s32 4, %v572
        %v574 = vrot.slane %v224, %v573
        %v575 = vlaneseq
        %v576 = vshrl.u32 %v575, 7
        %v577 = vsub.s32 5, %v576
        %v578 = vrot.slane %v224, %v577
        %v579 = vlaneseq
        %v580 = vshrl.u32 %v579, 7
        %v581 = vsub.s32 6, %v580
        %v582 = vrot.slane %v224, %v581
        %v583 = vlaneseq
        %v584 = vshrl.u32 %v583, 7
        %v585 = vsub.s32 7, %v584
        %v586 = vrot.slane %v224, %v585
        %v595 = vadd.f32 %v364, %v558
        %v596 = vadd.f32 %v364, %v562
        %v597 = vadd.f32 %v364, %v566
        %v598 = vadd.f32 %v364, %v570
        %v599 = vadd.f32 %v364, %v574
        %v600 = vadd.f32 %v364, %v578
        %v601 = vadd.f32 %v364, %v582
        %v602 = vadd.f32 %v364, %v586
        %v603 = vadd.f32 %v367, %v558
        %v604 = vadd.f32 %v367, %v562
        %v605 = vadd.f32 %v367, %v566
        %v606 = vadd.f32 %v367, %v570
        %v607 = vadd.f32 %v367, %v574
        %v608 = vadd.f32 %v367, %v578
        %v609 = vadd.f32 %v367, %v582
        %v610 = vadd.f32 %v367, %v586
        %v611 = vadd.f32 %v370, %v558
        %v612 = vadd.f32 %v370, %v562
        %v613 = vadd.f32 %v370, %v566
        %v614 = vadd.f32 %v370, %v570
        %v615 = vadd.f32 %v370, %v574
        %v616 = vadd.f32 %v370, %v578
        %v617 = vadd.f32 %v370, %v582
        %v618 = vadd.f32 %v370, %v586
        %v619 = vadd.f32 %v373, %v558
        %v620 = vadd.f32 %v373, %v562
        %v621 = vadd.f32 %v373, %v566
        %v622 = vadd.f32 %v373, %v570
        %v623 = vadd.f32 %v373, %v574
        %v624 = vadd.f32 %v373, %v578
        %v625 = vadd.f32 %v373, %v582
        %v626 = vadd.f32 %v373, %v586
        %v627 = vadd.f32 %v376, %v558
        %v628 = vadd.f32 %v376, %v562
        %v629 = vadd.f32 %v376, %v566
        %v630 = vadd.f32 %v376, %v570
        %v631 = vadd.f32 %v376, %v574
        %v632 = vadd.f32 %v376, %v578
        %v633 = vadd.f32 %v376, %v582
        %v634 = vadd.f32 %v376, %v586
        %v635 = vadd.f32 %v379, %v558
        %v636 = vadd.f32 %v379, %v562
        %v637 = vadd.f32 %v379, %v566
        %v638 = vadd.f32 %v379, %v570
        %v639 = vadd.f32 %v379, %v574
        %v640 = vadd.f32 %v379, %v578
        %v641 = vadd.f32 %v379, %v582
        %v642 = vadd.f32 %v379, %v586
        %v643 = vadd.f32 %v382, %v558
        %v644 = vadd.f32 %v382, %v562
        %v645 = vadd.f32 %v382, %v566
        %v646 = vadd.f32 %v382, %v570
        %v647 = vadd.f32 %v382, %v574
        %v648 = vadd.f32 %v382, %v578
        %v649 = vadd.f32 %v382, %v582
        %v650 = vadd.f32 %v382, %v586
        %v651 = vadd.f32 %v385, %v558
        %v652 = vadd.f32 %v385, %v562
        %v653 = vadd.f32 %v385, %v566
        %v654 = vadd.f32 %v385, %v570
        %v655 = vadd.f32 %v385, %v574
        %v656 = vadd.f32 %v385, %v578
        %v657 = vadd.f32 %v385, %v582
        %v658 = vadd.f32 %v385, %v586
        %v659 = vadd.f32 %v388, %v558
        %v660 = vadd.f32 %v388, %v562
        %v661 = vadd.f32 %v388, %v566
        %v662 = vadd.f32 %v388, %v570
        %v663 = vadd.f32 %v388, %v574
        %v664 = vadd.f32 %v388, %v578
        %v665 = vadd.f32 %v388, %v582
        %v666 = vadd.f32 %v388, %v586
        %v667 = vadd.f32 %v391, %v558
        %v668 = vadd.f32 %v391, %v562
        %v669 = vadd.f32 %v391, %v566
        %v670 = vadd.f32 %v391, %v570
        %v671 = vadd.f32 %v391, %v574
        %v672 = vadd.f32 %v391, %v578
        %v673 = vadd.f32 %v391, %v582
        %v674 = vadd.f32 %v391, %v586
        %v675 = vadd.f32 %v394, %v558
        %v676 = vadd.f32 %v394, %v562
        %v677 = vadd.f32 %v394, %v566
        %v678 = vadd.f32 %v394, %v570
        %v679 = vadd.f32 %v394, %v574
        %v680 = vadd.f32 %v394, %v578
        %v681 = vadd.f32 %v394, %v582
        %v682 = vadd.f32 %v394, %v586
        %v683 = vadd.f32 %v397, %v558
        %v684 = vadd.f32 %v397, %v562
        %v685 = vadd.f32 %v397, %v566
        %v686 = vadd.f32 %v397, %v570
        %v687 = vadd.f32 %v397, %v574
        %v688 = vadd.f32 %v397, %v578
        %v689 = vadd.f32 %v397, %v582
        %v690 = vadd.f32 %v397, %v586
        %v691 = vadd.f32 %v400, %v558
        %v692 = vadd.f32 %v400, %v562
        %v693 = vadd.f32 %v400, %v566
        %v694 = vadd.f32 %v400, %v570
        %v695 = vadd.f32 %v400, %v574
        %v696 = vadd.f32 %v400, %v578
        %v697 = vadd.f32 %v400, %v582
        %v698 = vadd.f32 %v400, %v586
        %v699 = vadd.f32 %v403, %v558
        %v700 = vadd.f32 %v403, %v562
        %v701 = vadd.f32 %v403, %v566
        %v702 = vadd.f32 %v403, %v570
        %v703 = vadd.f32 %v403, %v574
        %v704 = vadd.f32 %v403, %v578
        %v705 = vadd.f32 %v403, %v582
        %v706 = vadd.f32 %v403, %v586
        %v707 = vadd.f32 %v406, %v558
        %v708 = vadd.f32 %v406, %v562
        %v709 = vadd.f32 %v406, %v566
        %v710 = vadd.f32 %v406, %v570
        %v711 = vadd.f32 %v406, %v574
        %v712 = vadd.f32 %v406, %v578
        %v713 = vadd.f32 %v406, %v582
        %v714 = vadd.f32 %v406, %v586
        %v715 = vadd.f32 %v409, %v558
        %v716 = vadd.f32 %v409, %v562
        %v717 = vadd.f32 %v409, %v566
        %v718 = vadd.f32 %v409, %v570
        %v719 = vadd.f32 %v409, %v574
        %v720 = vadd.f32 %v409, %v578
        %v721 = vadd.f32 %v409, %v582
        %v722 = vadd.f32 %v409, %v586
        %v723 = vadd.f32 %v412, %v558
        %v724 = vadd.f32 %v412, %v562
        %v725 = vadd.f32 %v412, %v566
        %v726 = vadd.f32 %v412, %v570
        %v727 = vadd.f32 %v412, %v574
        %v728 = vadd.f32 %v412, %v578
        %v729 = vadd.f32 %v412, %v582
        %v730 = vadd.f32 %v412, %v586
        %v731 = vadd.f32 %v415, %v558
        %v732 = vadd.f32 %v415, %v562
        %v733 = vadd.f32 %v415, %v566
        %v734 = vadd.f32 %v415, %v570
        %v735 = vadd.f32 %v415, %v574
        %v736 = vadd.f32 %v415, %v578
        %v737 = vadd.f32 %v415, %v582
        %v738 = vadd.f32 %v415, %v586
        %v739 = vadd.f32 %v418, %v558
        %v740 = vadd.f32 %v418, %v562
        %v741 = vadd.f32 %v418, %v566
        %v742 = vadd.f32 %v418, %v570
        %v743 = vadd.f32 %v418, %v574
        %v744 = vadd.f32 %v418, %v578
        %v745 = vadd.f32 %v418, %v582
        %v746 = vadd.f32 %v418, %v586
        %v747 = vadd.f32 %v421, %v558
        %v748 = vadd.f32 %v421, %v562
        %v749 = vadd.f32 %v421, %v566
        %v750 = vadd.f32 %v421, %v570
        %v751 = vadd.f32 %v421, %v574
        %v752 = vadd.f32 %v421, %v578
        %v753 = vadd.f32 %v421, %v582
        %v754 = vadd.f32 %v421, %v586
        %v755 = vadd.f32 %v424, %v558
        %v756 = vadd.f32 %v424, %v562
        %v757 = vadd.f32 %v424, %v566
        %v758 = vadd.f32 %v424, %v570
        %v759 = vadd.f32 %v424, %v574
        %v760 = vadd.f32 %v424, %v578
        %v761 = vadd.f32 %v424, %v582
        %v762 = vadd.f32 %v424, %v586
        %v763 = vadd.f32 %v427, %v558
        %v764 = vadd.f32 %v427, %v562
        %v765 = vadd.f32 %v427, %v566
        %v766 = vadd.f32 %v427, %v570
        %v767 = vadd.f32 %v427, %v574
        %v768 = vadd.f32 %v427, %v578
        %v769 = vadd.f32 %v427, %v582
        %v770 = vadd.f32 %v427, %v586
        %v771 = vadd.f32 %v430, %v558
        %v772 = vadd.f32 %v430, %v562
        %v773 = vadd.f32 %v430, %v566
        %v774 = vadd.f32 %v430, %v570
        %v775 = vadd.f32 %v430, %v574
        %v776 = vadd.f32 %v430, %v578
        %v777 = vadd.f32 %v430, %v582
        %v778 = vadd.f32 %v430, %v586
        %v779 = vadd.f32 %v433, %v558
        %v780 = vadd.f32 %v433, %v562
        %v781 = vadd.f32 %v433, %v566
        %v782 = vadd.f32 %v433, %v570
        %v783 = vadd.f32 %v433, %v574
        %v784 = vadd.f32 %v433, %v578
        %v785 = vadd.f32 %v433, %v582
        %v786 = vadd.f32 %v433, %v586
        %v787 = vadd.f32 %v436, %v558
        %v788 = vadd.f32 %v436, %v562
        %v789 = vadd.f32 %v436, %v566
        %v790 = vadd.f32 %v436, %v570
        %v791 = vadd.f32 %v436, %v574
        %v792 = vadd.f32 %v436, %v578
        %v793 = vadd.f32 %v436, %v582
        %v794 = vadd.f32 %v436, %v586
        %v795 = vadd.f32 %v439, %v558
        %v796 = vadd.f32 %v439, %v562
        %v797 = vadd.f32 %v439, %v566
        %v798 = vadd.f32 %v439, %v570
        %v799 = vadd.f32 %v439, %v574
        %v800 = vadd.f32 %v439, %v578
        %v801 = vadd.f32 %v439, %v582
        %v802 = vadd.f32 %v439, %v586
        %v803 = vadd.f32 %v442, %v558
        %v804 = vadd.f32 %v442, %v562
        %v805 = vadd.f32 %v442, %v566
        %v806 = vadd.f32 %v442, %v570
        %v807 = vadd.f32 %v442, %v574
        %v808 = vadd.f32 %v442, %v578
        %v809 = vadd.f32 %v442, %v582
        %v810 = vadd.f32 %v442, %v586
        %v811 = vadd.f32 %v445, %v558
        %v812 = vadd.f32 %v445, %v562
        %v813 = vadd.f32 %v445, %v566
        %v814 = vadd.f32 %v445, %v570
        %v815 = vadd.f32 %v445, %v574
        %v816 = vadd.f32 %v445, %v578
        %v817 = vadd.f32 %v445, %v582
        %v818 = vadd.f32 %v445, %v586
        %v819 = vadd.f32 %v448, %v558
        %v820 = vadd.f32 %v448, %v562
        %v821 = vadd.f32 %v448, %v566
        %v822 = vadd.f32 %v448, %v570
        %v823 = vadd.f32 %v448, %v574
        %v824 = vadd.f32 %v448, %v578
        %v825 = vadd.f32 %v448, %v582
        %v826 = vadd.f32 %v448, %v586
        %v827 = vadd.f32 %v451, %v558
        %v828 = vadd.f32 %v451, %v562
        %v829 = vadd.f32 %v451, %v566
        %v830 = vadd.f32 %v451, %v570
        %v831 = vadd.f32 %v451, %v574
        %v832 = vadd.f32 %v451, %v578
        %v833 = vadd.f32 %v451, %v582
        %v834 = vadd.f32 %v451, %v586
        %v835 = vadd.f32 %v454, %v558
        %v836 = vadd.f32 %v454, %v562
        %v837 = vadd.f32 %v454, %v566
        %v838 = vadd.f32 %v454, %v570
        %v839 = vadd.f32 %v454, %v574
        %v840 = vadd.f32 %v454, %v578
        %v841 = vadd.f32 %v454, %v582
        %v842 = vadd.f32 %v454, %v586
        %v843 = vadd.f32 %v457, %v558
        %v844 = vadd.f32 %v457, %v562
        %v845 = vadd.f32 %v457, %v566
        %v846 = vadd.f32 %v457, %v570
        %v847 = vadd.f32 %v457, %v574
        %v848 = vadd.f32 %v457, %v578
        %v849 = vadd.f32 %v457, %v582
        %v850 = vadd.f32 %v457, %v586
        %v851 = vadd.f32 %v460, %v558
        %v852 = vadd.f32 %v460, %v562
        %v853 = vadd.f32 %v460, %v566
        %v854 = vadd.f32 %v460, %v570
        %v855 = vadd.f32 %v460, %v574
        %v856 = vadd.f32 %v460, %v578
        %v857 = vadd.f32 %v460, %v582
        %v858 = vadd.f32 %v460, %v586
        %v859 = vadd.f32 %v463, %v558
        %v860 = vadd.f32 %v463, %v562
        %v861 = vadd.f32 %v463, %v566
        %v862 = vadd.f32 %v463, %v570
        %v863 = vadd.f32 %v463, %v574
        %v864 = vadd.f32 %v463, %v578
        %v865 = vadd.f32 %v463, %v582
        %v866 = vadd.f32 %v463, %v586
        %v867 = vadd.f32 %v466, %v558
        %v868 = vadd.f32 %v466, %v562
        %v869 = vadd.f32 %v466, %v566
        %v870 = vadd.f32 %v466, %v570
        %v871 = vadd.f32 %v466, %v574
        %v872 = vadd.f32 %v466, %v578
        %v873 = vadd.f32 %v466, %v582
        %v874 = vadd.f32 %v466, %v586
        %v875 = vadd.f32 %v469, %v558
        %v876 = vadd.f32 %v469, %v562
        %v877 = vadd.f32 %v469, %v566
        %v878 = vadd.f32 %v469, %v570
        %v879 = vadd.f32 %v469, %v574
        %v880 = vadd.f32 %v469, %v578
        %v881 = vadd.f32 %v469, %v582
        %v882 = vadd.f32 %v469, %v586
        %v883 = vadd.f32 %v472, %v558
        %v884 = vadd.f32 %v472, %v562
        %v885 = vadd.f32 %v472, %v566
        %v886 = vadd.f32 %v472, %v570
        %v887 = vadd.f32 %v472, %v574
        %v888 = vadd.f32 %v472, %v578
        %v889 = vadd.f32 %v472, %v582
        %v890 = vadd.f32 %v472, %v586
        %v891 = vadd.f32 %v475, %v558
        %v892 = vadd.f32 %v475, %v562
        %v893 = vadd.f32 %v475, %v566
        %v894 = vadd.f32 %v475, %v570
        %v895 = vadd.f32 %v475, %v574
        %v896 = vadd.f32 %v475, %v578
        %v897 = vadd.f32 %v475, %v582
        %v898 = vadd.f32 %v475, %v586
        %v899 = vadd.f32 %v478, %v558
        %v900 = vadd.f32 %v478, %v562
        %v901 = vadd.f32 %v478, %v566
        %v902 = vadd.f32 %v478, %v570
        %v903 = vadd.f32 %v478, %v574
        %v904 = vadd.f32 %v478, %v578
        %v905 = vadd.f32 %v478, %v582
        %v906 = vadd.f32 %v478, %v586
        %v907 = vadd.f32 %v481, %v558
        %v908 = vadd.f32 %v481, %v562
        %v909 = vadd.f32 %v481, %v566
        %v910 = vadd.f32 %v481, %v570
        %v911 = vadd.f32 %v481, %v574
        %v912 = vadd.f32 %v481, %v578
        %v913 = vadd.f32 %v481, %v582
        %v914 = vadd.f32 %v481, %v586
        %v915 = vadd.f32 %v484, %v558
        %v916 = vadd.f32 %v484, %v562
        %v917 = vadd.f32 %v484, %v566
        %v918 = vadd.f32 %v484, %v570
        %v919 = vadd.f32 %v484, %v574
        %v920 = vadd.f32 %v484, %v578
        %v921 = vadd.f32 %v484, %v582
        %v922 = vadd.f32 %v484, %v586
        %v923 = vadd.f32 %v487, %v558
        %v924 = vadd.f32 %v487, %v562
        %v925 = vadd.f32 %v487, %v566
        %v926 = vadd.f32 %v487, %v570
        %v927 = vadd.f32 %v487, %v574
        %v928 = vadd.f32 %v487, %v578
        %v929 = vadd.f32 %v487, %v582
        %v930 = vadd.f32 %v487, %v586
        %v931 = vadd.f32 %v490, %v558
        %v932 = vadd.f32 %v490, %v562
        %v933 = vadd.f32 %v490, %v566
        %v934 = vadd.f32 %v490, %v570
        %v935 = vadd.f32 %v490, %v574
        %v936 = vadd.f32 %v490, %v578
        %v937 = vadd.f32 %v490, %v582
        %v938 = vadd.f32 %v490, %v586
        %v939 = vadd.f32 %v493, %v558
        %v940 = vadd.f32 %v493, %v562
        %v941 = vadd.f32 %v493, %v566
        %v942 = vadd.f32 %v493, %v570
        %v943 = vadd.f32 %v493, %v574
        %v944 = vadd.f32 %v493, %v578
        %v945 = vadd.f32 %v493, %v582
        %v946 = vadd.f32 %v493, %v586
        %v947 = vadd.f32 %v496, %v558
        %v948 = vadd.f32 %v496, %v562
        %v949 = vadd.f32 %v496, %v566
        %v950 = vadd.f32 %v496, %v570
        %v951 = vadd.f32 %v496, %v574
        %v952 = vadd.f32 %v496, %v578
        %v953 = vadd.f32 %v496, %v582
        %v954 = vadd.f32 %v496, %v586
        %v955 = vadd.f32 %v499, %v558
        %v956 = vadd.f32 %v499, %v562
        %v957 = vadd.f32 %v499, %v566
        %v958 = vadd.f32 %v499, %v570
        %v959 = vadd.f32 %v499, %v574
        %v960 = vadd.f32 %v499, %v578
        %v961 = vadd.f32 %v499, %v582
        %v962 = vadd.f32 %v499, %v586
        %v963 = vadd.f32 %v502, %v558
        %v964 = vadd.f32 %v502, %v562
        %v965 = vadd.f32 %v502, %v566
        %v966 = vadd.f32 %v502, %v570
        %v967 = vadd.f32 %v502, %v574
        %v968 = vadd.f32 %v502, %v578
        %v969 = vadd.f32 %v502, %v582
        %v970 = vadd.f32 %v502, %v586
        %v971 = vadd.f32 %v505, %v558
        %v972 = vadd.f32 %v505, %v562
        %v973 = vadd.f32 %v505, %v566
        %v974 = vadd.f32 %v505, %v570
        %v975 = vadd.f32 %v505, %v574
        %v976 = vadd.f32 %v505, %v578
        %v977 = vadd.f32 %v505, %v582
        %v978 = vadd.f32 %v505, %v586
        %v979 = vadd.f32 %v508, %v558
        %v980 = vadd.f32 %v508, %v562
        %v981 = vadd.f32 %v508, %v566
        %v982 = vadd.f32 %v508, %v570
        %v983 = vadd.f32 %v508, %v574
        %v984 = vadd.f32 %v508, %v578
        %v985 = vadd.f32 %v508, %v582
        %v986 = vadd.f32 %v508, %v586
        %v987 = vadd.f32 %v511, %v558
        %v988 = vadd.f32 %v511, %v562
        %v989 = vadd.f32 %v511, %v566
        %v990 = vadd.f32 %v511, %v570
        %v991 = vadd.f32 %v511, %v574
        %v992 = vadd.f32 %v511, %v578
        %v993 = vadd.f32 %v511, %v582
        %v994 = vadd.f32 %v511, %v586
        %v995 = vadd.f32 %v514, %v558
        %v996 = vadd.f32 %v514, %v562
        %v997 = vadd.f32 %v514, %v566
        %v998 = vadd.f32 %v514, %v570
        %v999 = vadd.f32 %v514, %v574
        %v1000 = vadd.f32 %v514, %v578
        %v1001 = vadd.f32 %v514, %v582
        %v1002 = vadd.f32 %v514, %v586
        %v1003 = vadd.f32 %v517, %v558
        %v1004 = vadd.f32 %v517, %v562
        %v1005 = vadd.f32 %v517, %v566
        %v1006 = vadd.f32 %v517, %v570
        %v1007 = vadd.f32 %v517, %v574
        %v1008 = vadd.f32 %v517, %v578
        %v1009 = vadd.f32 %v517, %v582
        %v1010 = vadd.f32 %v517, %v586
        %v1011 = vadd.f32 %v520, %v558
        %v1012 = vadd.f32 %v520, %v562
        %v1013 = vadd.f32 %v520, %v566
        %v1014 = vadd.f32 %v520, %v570
        %v1015 = vadd.f32 %v520, %v574
        %v1016 = vadd.f32 %v520, %v578
        %v1017 = vadd.f32 %v520, %v582
        %v1018 = vadd.f32 %v520, %v586
        %v1019 = vadd.f32 %v523, %v558
        %v1020 = vadd.f32 %v523, %v562
        %v1021 = vadd.f32 %v523, %v566
        %v1022 = vadd.f32 %v523, %v570
        %v1023 = vadd.f32 %v523, %v574
        %v1024 = vadd.f32 %v523, %v578
        %v1025 = vadd.f32 %v523, %v582
        %v1026 = vadd.f32 %v523, %v586
        %v1027 = vadd.f32 %v526, %v558
        %v1028 = vadd.f32 %v526, %v562
        %v1029 = vadd.f32 %v526, %v566
        %v1030 = vadd.f32 %v526, %v570
        %v1031 = vadd.f32 %v526, %v574
        %v1032 = vadd.f32 %v526, %v578
        %v1033 = vadd.f32 %v526, %v582
        %v1034 = vadd.f32 %v526, %v586
        %v1035 = vadd.f32 %v529, %v558
        %v1036 = vadd.f32 %v529, %v562
        %v1037 = vadd.f32 %v529, %v566
        %v1038 = vadd.f32 %v529, %v570
        %v1039 = vadd.f32 %v529, %v574
        %v1040 = vadd.f32 %v529, %v578
        %v1041 = vadd.f32 %v529, %v582
        %v1042 = vadd.f32 %v529, %v586
        %v1043 = vadd.f32 %v532, %v558
        %v1044 = vadd.f32 %v532, %v562
        %v1045 = vadd.f32 %v532, %v566
        %v1046 = vadd.f32 %v532, %v570
        %v1047 = vadd.f32 %v532, %v574
        %v1048 = vadd.f32 %v532, %v578
        %v1049 = vadd.f32 %v532, %v582
        %v1050 = vadd.f32 %v532, %v586
        %v1051 = vadd.f32 %v535, %v558
        %v1052 = vadd.f32 %v535, %v562
        %v1053 = vadd.f32 %v535, %v566
        %v1054 = vadd.f32 %v535, %v570
        %v1055 = vadd.f32 %v535, %v574
        %v1056 = vadd.f32 %v535, %v578
        %v1057 = vadd.f32 %v535, %v582
        %v1058 = vadd.f32 %v535, %v586
        %v1059 = vadd.f32 %v538, %v558
        %v1060 = vadd.f32 %v538, %v562
        %v1061 = vadd.f32 %v538, %v566
        %v1062 = vadd.f32 %v538, %v570
        %v1063 = vadd.f32 %v538, %v574
        %v1064 = vadd.f32 %v538, %v578
        %v1065 = vadd.f32 %v538, %v582
        %v1066 = vadd.f32 %v538, %v586
        %v1067 = vadd.f32 %v541, %v558
        %v1068 = vadd.f32 %v541, %v562
        %v1069 = vadd.f32 %v541, %v566
        %v1070 = vadd.f32 %v541, %v570
        %v1071 = vadd.f32 %v541, %v574
        %v1072 = vadd.f32 %v541, %v578
        %v1073 = vadd.f32 %v541, %v582
        %v1074 = vadd.f32 %v541, %v586
        %v1075 = vadd.f32 %v544, %v558
        %v1076 = vadd.f32 %v544, %v562
        %v1077 = vadd.f32 %v544, %v566
        %v1078 = vadd.f32 %v544, %v570
        %v1079 = vadd.f32 %v544, %v574
        %v1080 = vadd.f32 %v544, %v578
        %v1081 = vadd.f32 %v544, %v582
        %v1082 = vadd.f32 %v544, %v586
        %v1083 = vadd.f32 %v547, %v558
        %v1084 = vadd.f32 %v547, %v562
        %v1085 = vadd.f32 %v547, %v566
        %v1086 = vadd.f32 %v547, %v570
        %v1087 = vadd.f32 %v547, %v574
        %v1088 = vadd.f32 %v547, %v578
        %v1089 = vadd.f32 %v547, %v582
        %v1090 = vadd.f32 %v547, %v586
        %v1091 = vadd.f32 %v550, %v558
        %v1092 = vadd.f32 %v550, %v562
        %v1093 = vadd.f32 %v550, %v566
        %v1094 = vadd.f32 %v550, %v570
        %v1095 = vadd.f32 %v550, %v574
        %v1096 = vadd.f32 %v550, %v578
        %v1097 = vadd.f32 %v550, %v582
        %v1098 = vadd.f32 %v550, %v586
        %v1099 = vadd.f32 %v553, %v558
        %v1100 = vadd.f32 %v553, %v562
        %v1101 = vadd.f32 %v553, %v566
        %v1102 = vadd.f32 %v553, %v570
        %v1103 = vadd.f32 %v553, %v574
        %v1104 = vadd.f32 %v553, %v578
        %v1105 = vadd.f32 %v553, %v582
        %v1106 = vadd.f32 %v553, %v586
        %v1107 = vmul.f32 %v595, 0.2
        %v1108 = vmul.f32 %v596, 0.2
        %v1109 = vmul.f32 %v597, 0.2
        %v1110 = vmul.f32 %v598, 0.2
        %v1111 = vmul.f32 %v599, 0.2
        %v1112 = vmul.f32 %v600, 0.2
        %v1113 = vmul.f32 %v601, 0.2
        %v1114 = vmul.f32 %v602, 0.2
        %v1115 = vmul.f32 %v603, 0.2
        %v1116 = vmul.f32 %v604, 0.2
        %v1117 = vmul.f32 %v605, 0.2
        %v1118 = vmul.f32 %v606, 0.2
        %v1119 = vmul.f32 %v607, 0.2
        %v1120 = vmul.f32 %v608, 0.2
        %v1121 = vmul.f32 %v609, 0.2
        %v1122 = vmul.f32 %v610, 0.2
        %v1123 = vmul.f32 %v611, 0.2
        %v1124 = vmul.f32 %v612, 0.2
        %v1125 = vmul.f32 %v613, 0.2
        %v1126 = vmul.f32 %v614, 0.2
        %v1127 = vmul.f32 %v615, 0.2
        %v1128 = vmul.f32 %v616, 0.2
        %v1129 = vmul.f32 %v617, 0.2
        %v1130 = vmul.f32 %v618, 0.2
        %v1131 = vmul.f32 %v619, 0.2
        %v1132 = vmul.f32 %v620, 0.2
        %v1133 = vmul.f32 %v621, 0.2
        %v1134 = vmul.f32 %v622, 0.2
        %v1135 = vmul.f32 %v623, 0.2
        %v1136 = vmul.f32 %v624, 0.2
        %v1137 = vmul.f32 %v625, 0.2
        %v1138 = vmul.f32 %v626, 0.2
        %v1139 = vmul.f32 %v627, 0.2
        %v1140 = vmul.f32 %v628, 0.2
        %v1141 = vmul.f32 %v629, 0.2
        %v1142 = vmul.f32 %v630, 0.2
        %v1143 = vmul.f32 %v631, 0.2
        %v1144 = vmul.f32 %v632, 0.2
        %v1145 = vmul.f32 %v633, 0.2
        %v1146 = vmul.f32 %v634, 0.2
        %v1147 = vmul.f32 %v635, 0.2
        %v1148 = vmul.f32 %v636, 0.2
        %v1149 = vmul.f32 %v637, 0.2
        %v1150 = vmul.f32 %v638, 0.2
        %v1151 = vmul.f32 %v639, 0.2
        %v1152 = vmul.f32 %v640, 0.2
        %v1153 = vmul.f32 %v641, 0.2
        %v1154 = vmul.f32 %v642, 0.2
        %v1155 = vmul.f32 %v643, 0.2
        %v1156 = vmul.f32 %v644, 0.2
        %v1157 = vmul.f32 %v645, 0.2
        %v1158 = vmul.f32 %v646, 0.2
        %v1159 = vmul.f32 %v647, 0.2
        %v1160 = vmul.f32 %v648, 0.2
        %v1161 = vmul.f32 %v649, 0.2
        %v1162 = vmul.f32 %v650, 0.2
        %v1163 = vmul.f32 %v651, 0.2
        %v1164 = vmul.f32 %v652, 0.2
        %v1165 = vmul.f32 %v653, 0.2
        %v1166 = vmul.f32 %v654, 0.2
        %v1167 = vmul.f32 %v655, 0.2
        %v1168 = vmul.f32 %v656, 0.2
        %v1169 = vmul.f32 %v657, 0.2
        %v1170 = vmul.f32 %v658, 0.2
        %v1171 = vmul.f32 %v659, 0.2
        %v1172 = vmul.f32 %v660, 0.2
        %v1173 = vmul.f32 %v661, 0.2
        %v1174 = vmul.f32 %v662, 0.2
        %v1175 = vmul.f32 %v663, 0.2
        %v1176 = vmul.f32 %v664, 0.2
        %v1177 = vmul.f32 %v665, 0.2
        %v1178 = vmul.f32 %v666, 0.2
        %v1179 = vmul.f32 %v667, 0.2
        %v1180 = vmul.f32 %v668, 0.2
        %v1181 = vmul.f32 %v669, 0.2
        %v1182 = vmul.f32 %v670, 0.2
        %v1183 = vmul.f32 %v671, 0.2
        %v1184 = vmul.f32 %v672, 0.2
        %v1185 = vmul.f32 %v673, 0.2
        %v1186 = vmul.f32 %v674, 0.2
        %v1187 = vmul.f32 %v675, 0.2
        %v1188 = vmul.f32 %v676, 0.2
        %v1189 = vmul.f32 %v677, 0.2
        %v1190 = vmul.f32 %v678, 0.2
        %v1191 = vmul.f32 %v679, 0.2
        %v1192 = vmul.f32 %v680, 0.2
        %v1193 = vmul.f32 %v681, 0.2
        %v1194 = vmul.f32 %v682, 0.2
        %v1195 = vmul.f32 %v683, 0.2
        %v1196 = vmul.f32 %v684, 0.2
        %v1197 = vmul.f32 %v685, 0.2
        %v1198 = vmul.f32 %v686, 0.2
        %v1199 = vmul.f32 %v687, 0.2
        %v1200 = vmul.f32 %v688, 0.2
        %v1201 = vmul.f32 %v689, 0.2
        %v1202 = vmul.f32 %v690, 0.2
        %v1203 = vmul.f32 %v691, 0.2
        %v1204 = vmul.f32 %v692, 0.2
        %v1205 = vmul.f32 %v693, 0.2
        %v1206 = vmul.f32 %v694, 0.2
        %v1207 = vmul.f32 %v695, 0.2
        %v1208 = vmul.f32 %v696, 0.2
        %v1209 = vmul.f32 %v697, 0.2
        %v1210 = vmul.f32 %v698, 0.2
        %v1211 = vmul.f32 %v699, 0.2
        %v1212 = vmul.f32 %v700, 0.2
        %v1213 = vmul.f32 %v701, 0.2
        %v1214 = vmul.f32 %v702, 0.2
        %v1215 = vmul.f32 %v703, 0.2
        %v1216 = vmul.f32 %v704, 0.2
        %v1217 = vmul.f32 %v705, 0.2
        %v1218 = vmul.f32 %v706, 0.2
        %v1219 = vmul.f32 %v707, 0.2
        %v1220 = vmul.f32 %v708, 0.2
        %v1221 = vmul.f32 %v709, 0.2
        %v1222 = vmul.f32 %v710, 0.2
        %v1223 = vmul.f32 %v711, 0.2
        %v1224 = vmul.f32 %v712, 0.2
        %v1225 = vmul.f32 %v713, 0.2
        %v1226 = vmul.f32 %v714, 0.2
        %v1227 = vmul.f32 %v715, 0.2
        %v1228 = vmul.f32 %v716, 0.2
        %v1229 = vmul.f32 %v717, 0.2
        %v1230 = vmul.f32 %v718, 0.2
        %v1231 = vmul.f32 %v719, 0.2
        %v1232 = vmul.f32 %v720, 0.2
        %v1233 = vmul.f32 %v721, 0.2
        %v1234 = vmul.f32 %v722, 0.2
        %v1235 = vmul.f32 %v723, 0.2
        %v1236 = vmul.f32 %v724, 0.2
        %v1237 = vmul.f32 %v725, 0.2
        %v1238 = vmul.f32 %v726, 0.2
        %v1239 = vmul.f32 %v727, 0.2
        %v1240 = vmul.f32 %v728, 0.2
        %v1241 = vmul.f32 %v729, 0.2
        %v1242 = vmul.f32 %v730, 0.2
        %v1243 = vmul.f32 %v731, 0.2
        %v1244 = vmul.f32 %v732, 0.2
        %v1245 = vmul.f32 %v733, 0.2
        %v1246 = vmul.f32 %v734, 0.2
        %v1247 = vmul.f32 %v735, 0.2
        %v1248 = vmul.f32 %v736, 0.2
        %v1249 = vmul.f32 %v737, 0.2
        %v1250 = vmul.f32 %v738, 0.2
        %v1251 = vmul.f32 %v739, 0.2
        %v1252 = vmul.f32 %v740, 0.2
        %v1253 = vmul.f32 %v741, 0.2
        %v1254 = vmul.f32 %v742, 0.2
        %v1255 = vmul.f32 %v743, 0.2
        %v1256 = vmul.f32 %v744, 0.2
        %v1257 = vmul.f32 %v745, 0.2
        %v1258 = vmul.f32 %v746, 0.2
        %v1259 = vmul.f32 %v747, 0.2
        %v1260 = vmul.f32 %v748, 0.2
        %v1261 = vmul.f32 %v749, 0.2
        %v1262 = vmul.f32 %v750, 0.2
        %v1263 = vmul.f32 %v751, 0.2
        %v1264 = vmul.f32 %v752, 0.2
        %v1265 = vmul.f32 %v753, 0.2
        %v1266 = vmul.f32 %v754, 0.2
        %v1267 = vmul.f32 %v755, 0.2
        %v1268 = vmul.f32 %v756, 0.2
        %v1269 = vmul.f32 %v757, 0.2
        %v1270 = vmul.f32 %v758, 0.2
        %v1271 = vmul.f32 %v759, 0.2
        %v1272 = vmul.f32 %v760, 0.2
        %v1273 = vmul.f32 %v761, 0.2
        %v1274 = vmul.f32 %v762, 0.2
        %v1275 = vmul.f32 %v763, 0.2
        %v1276 = vmul.f32 %v764, 0.2
        %v1277 = vmul.f32 %v765, 0.2
        %v1278 = vmul.f32 %v766, 0.2
        %v1279 = vmul.f32 %v767, 0.2
        %v1280 = vmul.f32 %v768, 0.2
        %v1281 = vmul.f32 %v769, 0.2
        %v1282 = vmul.f32 %v770, 0.2
        %v1283 = vmul.f32 %v771, 0.2
        %v1284 = vmul.f32 %v772, 0.2
        %v1285 = vmul.f32 %v773, 0.2
        %v1286 = vmul.f32 %v774, 0.2
        %v1287 = vmul.f32 %v775, 0.2
        %v1288 = vmul.f32 %v776, 0.2
        %v1289 = vmul.f32 %v777, 0.2
        %v1290 = vmul.f32 %v778, 0.2
        %v1291 = vmul.f32 %v779, 0.2
        %v1292 = vmul.f32 %v780, 0.2
        %v1293 = vmul.f32 %v781, 0.2
        %v1294 = vmul.f32 %v782, 0.2
        %v1295 = vmul.f32 %v783, 0.2
        %v1296 = vmul.f32 %v784, 0.2
        %v1297 = vmul.f32 %v785, 0.2
        %v1298 = vmul.f32 %v786, 0.2
        %v1299 = vmul.f32 %v787, 0.2
        %v1300 = vmul.f32 %v788, 0.2
        %v1301 = vmul.f32 %v789, 0.2
        %v1302 = vmul.f32 %v790, 0.2
        %v1303 = vmul.f32 %v791, 0.2
        %v1304 = vmul.f32 %v792, 0.2
        %v1305 = vmul.f32 %v793, 0.2
        %v1306 = vmul.f32 %v794, 0.2
        %v1307 = vmul.f32 %v795, 0.2
        %v1308 = vmul.f32 %v796, 0.2
        %v1309 = vmul.f32 %v797, 0.2
        %v1310 = vmul.f32 %v798, 0.2
        %v1311 = vmul.f32 %v799, 0.2
        %v1312 = vmul.f32 %v800, 0.2
        %v1313 = vmul.f32 %v801, 0.2
        %v1314 = vmul.f32 %v802, 0.2
        %v1315 = vmul.f32 %v803, 0.2
        %v1316 = vmul.f32 %v804, 0.2
        %v1317 = vmul.f32 %v805, 0.2
        %v1318 = vmul.f32 %v806, 0.2
        %v1319 = vmul.f32 %v807, 0.2
        %v1320 = vmul.f32 %v808, 0.2
        %v1321 = vmul.f32 %v809, 0.2
        %v1322 = vmul.f32 %v810, 0.2
        %v1323 = vmul.f32 %v811, 0.2
        %v1324 = vmul.f32 %v812, 0.2
        %v1325 = vmul.f32 %v813, 0.2
        %v1326 = vmul.f32 %v814, 0.2
        %v1327 = vmul.f32 %v815, 0.2
        %v1328 = vmul.f32 %v816, 0.2
        %v1329 = vmul.f32 %v817, 0.2
        %v1330 = vmul.f32 %v818, 0.2
        %v1331 = vmul.f32 %v819, 0.2
        %v1332 = vmul.f32 %v820, 0.2
        %v1333 = vmul.f32 %v821, 0.2
        %v1334 = vmul.f32 %v822, 0.2
        %v1335 = vmul.f32 %v823, 0.2
        %v1336 = vmul.f32 %v824, 0.2
        %v1337 = vmul.f32 %v825, 0.2
        %v1338 = vmul.f32 %v826, 0.2
        %v1339 = vmul.f32 %v827, 0.2
        %v1340 = vmul.f32 %v828, 0.2
        %v1341 = vmul.f32 %v829, 0.2
        %v1342 = vmul.f32 %v830, 0.2
        %v1343 = vmul.f32 %v831, 0.2
        %v1344 = vmul.f32 %v832, 0.2
        %v1345 = vmul.f32 %v833, 0.2
        %v1346 = vmul.f32 %v834, 0.2
        %v1347 = vmul.f32 %v835, 0.2
        %v1348 = vmul.f32 %v836, 0.2
        %v1349 = vmul.f32 %v837, 0.2
        %v1350 = vmul.f32 %v838, 0.2
        %v1351 = vmul.f32 %v839, 0.2
        %v1352 = vmul.f32 %v840, 0.2
        %v1353 = vmul.f32 %v841, 0.2
        %v1354 = vmul.f32 %v842, 0.2
        %v1355 = vmul.f32 %v843, 0.2
        %v1356 = vmul.f32 %v844, 0.2
        %v1357 = vmul.f32 %v845, 0.2
        %v1358 = vmul.f32 %v846, 0.2
        %v1359 = vmul.f32 %v847, 0.2
        %v1360 = vmul.f32 %v848, 0.2
        %v1361 = vmul.f32 %v849, 0.2
        %v1362 = vmul.f32 %v850, 0.2
        %v1363 = vmul.f32 %v851, 0.2
        %v1364 = vmul.f32 %v852, 0.2
        %v1365 = vmul.f32 %v853, 0.2
        %v1366 = vmul.f32 %v854, 0.2
        %v1367 = vmul.f32 %v855, 0.2
        %v1368 = vmul.f32 %v856, 0.2
        %v1369 = vmul.f32 %v857, 0.2
        %v1370 = vmul.f32 %v858, 0.2
        %v1371 = vmul.f32 %v859, 0.2
        %v1372 = vmul.f32 %v860, 0.2
        %v1373 = vmul.f32 %v861, 0.2
        %v1374 = vmul.f32 %v862, 0.2
        %v1375 = vmul.f32 %v863, 0.2
        %v1376 = vmul.f32 %v864, 0.2
        %v1377 = vmul.f32 %v865, 0.2
        %v1378 = vmul.f32 %v866, 0.2
        %v1379 = vmul.f32 %v867, 0.2
        %v1380 = vmul.f32 %v868, 0.2
        %v1381 = vmul.f32 %v869, 0.2
        %v1382 = vmul.f32 %v870, 0.2
        %v1383 = vmul.f32 %v871, 0.2
        %v1384 = vmul.f32 %v872, 0.2
        %v1385 = vmul.f32 %v873, 0.2
        %v1386 = vmul.f32 %v874, 0.2
        %v1387 = vmul.f32 %v875, 0.2
        %v1388 = vmul.f32 %v876, 0.2
        %v1389 = vmul.f32 %v877, 0.2
        %v1390 = vmul.f32 %v878, 0.2
        %v1391 = vmul.f32 %v879, 0.2
        %v1392 = vmul.f32 %v880, 0.2
        %v1393 = vmul.f32 %v881, 0.2
        %v1394 = vmul.f32 %v882, 0.2
        %v1395 = vmul.f32 %v883, 0.2
        %v1396 = vmul.f32 %v884, 0.2
        %v1397 = vmul.f32 %v885, 0.2
        %v1398 = vmul.f32 %v886, 0.2
        %v1399 = vmul.f32 %v887, 0.2
        %v1400 = vmul.f32 %v888, 0.2
        %v1401 = vmul.f32 %v889, 0.2
        %v1402 = vmul.f32 %v890, 0.2
        %v1403 = vmul.f32 %v891, 0.2
        %v1404 = vmul.f32 %v892, 0.2
        %v1405 = vmul.f32 %v893, 0.2
        %v1406 = vmul.f32 %v894, 0.2
        %v1407 = vmul.f32 %v895, 0.2
        %v1408 = vmul.f32 %v896, 0.2
        %v1409 = vmul.f32 %v897, 0.2
        %v1410 = vmul.f32 %v898, 0.2
        %v1411 = vmul.f32 %v899, 0.2
        %v1412 = vmul.f32 %v900, 0.2
        %v1413 = vmul.f32 %v901, 0.2
        %v1414 = vmul.f32 %v902, 0.2
        %v1415 = vmul.f32 %v903, 0.2
        %v1416 = vmul.f32 %v904, 0.2
        %v1417 = vmul.f32 %v905, 0.2
        %v1418 = vmul.f32 %v906, 0.2
        %v1419 = vmul.f32 %v907, 0.2
        %v1420 = vmul.f32 %v908, 0.2
        %v1421 = vmul.f32 %v909, 0.2
        %v1422 = vmul.f32 %v910, 0.2
        %v1423 = vmul.f32 %v911, 0.2
        %v1424 = vmul.f32 %v912, 0.2
        %v1425 = vmul.f32 %v913, 0.2
        %v1426 = vmul.f32 %v914, 0.2
        %v1427 = vmul.f32 %v915, 0.2
        %v1428 = vmul.f32 %v916, 0.2
        %v1429 = vmul.f32 %v917, 0.2
        %v1430 = vmul.f32 %v918, 0.2
        %v1431 = vmul.f32 %v919, 0.2
        %v1432 = vmul.f32 %v920, 0.2
        %v1433 = vmul.f32 %v921, 0.2
        %v1434 = vmul.f32 %v922, 0.2
        %v1435 = vmul.f32 %v923, 0.2
        %v1436 = vmul.f32 %v924, 0.2
        %v1437 = vmul.f32 %v925, 0.2
        %v1438 = vmul.f32 %v926, 0.2
        %v1439 = vmul.f32 %v927, 0.2
        %v1440 = vmul.f32 %v928, 0.2
        %v1441 = vmul.f32 %v929, 0.2
        %v1442 = vmul.f32 %v930, 0.2
        %v1443 = vmul.f32 %v931, 0.2
        %v1444 = vmul.f32 %v932, 0.2
        %v1445 = vmul.f32 %v933, 0.2
        %v1446 = vmul.f32 %v934, 0.2
        %v1447 = vmul.f32 %v935, 0.2
        %v1448 = vmul.f32 %v936, 0.2
        %v1449 = vmul.f32 %v937, 0.2
        %v1450 = vmul.f32 %v938, 0.2
        %v1451 = vmul.f32 %v939, 0.2
        %v1452 = vmul.f32 %v940, 0.2
        %v1453 = vmul.f32 %v941, 0.2
        %v1454 = vmul.f32 %v942, 0.2
        %v1455 = vmul.f32 %v943, 0.2
        %v1456 = vmul.f32 %v944, 0.2
        %v1457 = vmul.f32 %v945, 0.2
        %v1458 = vmul.f32 %v946, 0.2
        %v1459 = vmul.f32 %v947, 0.2
        %v1460 = vmul.f32 %v948, 0.2
        %v1461 = vmul.f32 %v949, 0.2
        %v1462 = vmul.f32 %v950, 0.2
        %v1463 = vmul.f32 %v951, 0.2
        %v1464 = vmul.f32 %v952, 0.2
        %v1465 = vmul.f32 %v953, 0.2
        %v1466 = vmul.f32 %v954, 0.2
        %v1467 = vmul.f32 %v955, 0.2
        %v1468 = vmul.f32 %v956, 0.2
        %v1469 = vmul.f32 %v957, 0.2
        %v1470 = vmul.f32 %v958, 0.2
        %v1471 = vmul.f32 %v959, 0.2
        %v1472 = vmul.f32 %v960, 0.2
        %v1473 = vmul.f32 %v961, 0.2
        %v1474 = vmul.f32 %v962, 0.2
        %v1475 = vmul.f32 %v963, 0.2
        %v1476 = vmul.f32 %v964, 0.2
        %v1477 = vmul.f32 %v965, 0.2
        %v1478 = vmul.f32 %v966, 0.2
        %v1479 = vmul.f32 %v967, 0.2
        %v1480 = vmul.f32 %v968, 0.2
        %v1481 = vmul.f32 %v969, 0.2
        %v1482 = vmul.f32 %v970, 0.2
        %v1483 = vmul.f32 %v971, 0.2
        %v1484 = vmul.f32 %v972, 0.2
        %v1485 = vmul.f32 %v973, 0.2
        %v1486 = vmul.f32 %v974, 0.2
        %v1487 = vmul.f32 %v975, 0.2
        %v1488 = vmul.f32 %v976, 0.2
        %v1489 = vmul.f32 %v977, 0.2
        %v1490 = vmul.f32 %v978, 0.2
        %v1491 = vmul.f32 %v979, 0.2
        %v1492 = vmul.f32 %v980, 0.2
        %v1493 = vmul.f32 %v981, 0.2
        %v1494 = vmul.f32 %v982, 0.2
        %v1495 = vmul.f32 %v983, 0.2
        %v1496 = vmul.f32 %v984, 0.2
        %v1497 = vmul.f32 %v985, 0.2
        %v1498 = vmul.f32 %v986, 0.2
        %v1499 = vmul.f32 %v987, 0.2
        %v1500 = vmul.f32 %v988, 0.2
        %v1501 = vmul.f32 %v989, 0.2
        %v1502 = vmul.f32 %v990, 0.2
        %v1503 = vmul.f32 %v991, 0.2
        %v1504 = vmul.f32 %v992, 0.2
        %v1505 = vmul.f32 %v993, 0.2
        %v1506 = vmul.f32 %v994, 0.2
        %v1507 = vmul.f32 %v995, 0.2
        %v1508 = vmul.f32 %v996, 0.2
        %v1509 = vmul.f32 %v997, 0.2
        %v1510 = vmul.f32 %v998, 0.2
        %v1511 = vmul.f32 %v999, 0.2
        %v1512 = vmul.f32 %v1000, 0.2
        %v1513 = vmul.f32 %v1001, 0.2
        %v1514 = vmul.f32 %v1002, 0.2
        %v1515 = vmul.f32 %v1003, 0.2
        %v1516 = vmul.f32 %v1004, 0.2
        %v1517 = vmul.f32 %v1005, 0.2
        %v1518 = vmul.f32 %v1006, 0.2
        %v1519 = vmul.f32 %v1007, 0.2
        %v1520 = vmul.f32 %v1008, 0.2
        %v1521 = vmul.f32 %v1009, 0.2
        %v1522 = vmul.f32 %v1010, 0.2
        %v1523 = vmul.f32 %v1011, 0.2
        %v1524 = vmul.f32 %v1012, 0.2
        %v1525 = vmul.f32 %v1013, 0.2
        %v1526 = vmul.f32 %v1014, 0.2
        %v1527 = vmul.f32 %v1015, 0.2
        %v1528 = vmul.f32 %v1016, 0.2
        %v1529 = vmul.f32 %v1017, 0.2
        %v1530 = vmul.f32 %v1018, 0.2
        %v1531 = vmul.f32 %v1019, 0.2
        %v1532 = vmul.f32 %v1020, 0.2
        %v1533 = vmul.f32 %v1021, 0.2
        %v1534 = vmul.f32 %v1022, 0.2
        %v1535 = vmul.f32 %v1023, 0.2
        %v1536 = vmul.f32 %v1024, 0.2
        %v1537 = vmul.f32 %v1025, 0.2
        %v1538 = vmul.f32 %v1026, 0.2
        %v1539 = vmul.f32 %v1027, 0.2
        %v1540 = vmul.f32 %v1028, 0.2
        %v1541 = vmul.f32 %v1029, 0.2
        %v1542 = vmul.f32 %v1030, 0.2
        %v1543 = vmul.f32 %v1031, 0.2
        %v1544 = vmul.f32 %v1032, 0.2
        %v1545 = vmul.f32 %v1033, 0.2
        %v1546 = vmul.f32 %v1034, 0.2
        %v1547 = vmul.f32 %v1035, 0.2
        %v1548 = vmul.f32 %v1036, 0.2
        %v1549 = vmul.f32 %v1037, 0.2
        %v1550 = vmul.f32 %v1038, 0.2
        %v1551 = vmul.f32 %v1039, 0.2
        %v1552 = vmul.f32 %v1040, 0.2
        %v1553 = vmul.f32 %v1041, 0.2
        %v1554 = vmul.f32 %v1042, 0.2
        %v1555 = vmul.f32 %v1043, 0.2
        %v1556 = vmul.f32 %v1044, 0.2
        %v1557 = vmul.f32 %v1045, 0.2
        %v1558 = vmul.f32 %v1046, 0.2
        %v1559 = vmul.f32 %v1047, 0.2
        %v1560 = vmul.f32 %v1048, 0.2
        %v1561 = vmul.f32 %v1049, 0.2
        %v1562 = vmul.f32 %v1050, 0.2
        %v1563 = vmul.f32 %v1051, 0.2
        %v1564 = vmul.f32 %v1052, 0.2
        %v1565 = vmul.f32 %v1053, 0.2
        %v1566 = vmul.f32 %v1054, 0.2
        %v1567 = vmul.f32 %v1055, 0.2
        %v1568 = vmul.f32 %v1056, 0.2
        %v1569 = vmul.f32 %v1057, 0.2
        %v1570 = vmul.f32 %v1058, 0.2
        %v1571 = vmul.f32 %v1059, 0.2
        %v1572 = vmul.f32 %v1060, 0.2
        %v1573 = vmul.f32 %v1061, 0.2
        %v1574 = vmul.f32 %v1062, 0.2
        %v1575 = vmul.f32 %v1063, 0.2
        %v1576 = vmul.f32 %v1064, 0.2
        %v1577 = vmul.f32 %v1065, 0.2
        %v1578 = vmul.f32 %v1066, 0.2
        %v1579 = vmul.f32 %v1067, 0.2
        %v1580 = vmul.f32 %v1068, 0.2
        %v1581 = vmul.f32 %v1069, 0.2
        %v1582 = vmul.f32 %v1070, 0.2
        %v1583 = vmul.f32 %v1071, 0.2
        %v1584 = vmul.f32 %v1072, 0.2
        %v1585 = vmul.f32 %v1073, 0.2
        %v1586 = vmul.f32 %v1074, 0.2
        %v1587 = vmul.f32 %v1075, 0.2
        %v1588 = vmul.f32 %v1076, 0.2
        %v1589 = vmul.f32 %v1077, 0.2
        %v1590 = vmul.f32 %v1078, 0.2
        %v1591 = vmul.f32 %v1079, 0.2
        %v1592 = vmul.f32 %v1080, 0.2
        %v1593 = vmul.f32 %v1081, 0.2
        %v1594 = vmul.f32 %v1082, 0.2
        %v1595 = vmul.f32 %v1083, 0.2
        %v1596 = vmul.f32 %v1084, 0.2
        %v1597 = vmul.f32 %v1085, 0.2
        %v1598 = vmul.f32 %v1086, 0.2
        %v1599 = vmul.f32 %v1087, 0.2
        %v1600 = vmul.f32 %v1088, 0.2
        %v1601 = vmul.f32 %v1089, 0.2
        %v1602 = vmul.f32 %v1090, 0.2
        %v1603 = vmul.f32 %v1091, 0.2
        %v1604 = vmul.f32 %v1092, 0.2
        %v1605 = vmul.f32 %v1093, 0.2
        %v1606 = vmul.f32 %v1094, 0.2
        %v1607 = vmul.f32 %v1095, 0.2
        %v1608 = vmul.f32 %v1096, 0.2
        %v1609 = vmul.f32 %v1097, 0.2
        %v1610 = vmul.f32 %v1098, 0.2
        %v1611 = vmul.f32 %v1099, 0.2
        %v1612 = vmul.f32 %v1100, 0.2
        %v1613 = vmul.f32 %v1101, 0.2
        %v1614 = vmul.f32 %v1102, 0.2
        %v1615 = vmul.f32 %v1103, 0.2
        %v1616 = vmul.f32 %v1104, 0.2
        %v1617 = vmul.f32 %v1105, 0.2
        %v1618 = vmul.f32 %v1106, 0.2
        %v1619 = vmax.f32 %v595, %v1107
        %v1620 = vmax.f32 %v596, %v1108
        %v1621 = vmax.f32 %v597, %v1109
        %v1622 = vmax.f32 %v598, %v1110
        %v1623 = vmax.f32 %v599, %v1111
        %v1624 = vmax.f32 %v600, %v1112
        %v1625 = vmax.f32 %v601, %v1113
        %v1626 = vmax.f32 %v602, %v1114
        %v1627 = vmax.f32 %v603, %v1115
        %v1628 = vmax.f32 %v604, %v1116
        %v1629 = vmax.f32 %v605, %v1117
        %v1630 = vmax.f32 %v606, %v1118
        %v1631 = vmax.f32 %v607, %v1119
        %v1632 = vmax.f32 %v608, %v1120
        %v1633 = vmax.f32 %v609, %v1121
        %v1634 = vmax.f32 %v610, %v1122
        %v1635 = vmax.f32 %v611, %v1123
        %v1636 = vmax.f32 %v612, %v1124
        %v1637 = vmax.f32 %v613, %v1125
        %v1638 = vmax.f32 %v614, %v1126
        %v1639 = vmax.f32 %v615, %v1127
        %v1640 = vmax.f32 %v616, %v1128
        %v1641 = vmax.f32 %v617, %v1129
        %v1642 = vmax.f32 %v618, %v1130
        %v1643 = vmax.f32 %v619, %v1131
        %v1644 = vmax.f32 %v620, %v1132
        %v1645 = vmax.f32 %v621, %v1133
        %v1646 = vmax.f32 %v622, %v1134
        %v1647 = vmax.f32 %v623, %v1135
        %v1648 = vmax.f32 %v624, %v1136
        %v1649 = vmax.f32 %v625, %v1137
        %v1650 = vmax.f32 %v626, %v1138
        %v1651 = vmax.f32 %v627, %v1139
        %v1652 = vmax.f32 %v628, %v1140
        %v1653 = vmax.f32 %v629, %v1141
        %v1654 = vmax.f32 %v630, %v1142
        %v1655 = vmax.f32 %v631, %v1143
        %v1656 = vmax.f32 %v632, %v1144
        %v1657 = vmax.f32 %v633, %v1145
        %v1658 = vmax.f32 %v634, %v1146
        %v1659 = vmax.f32 %v635, %v1147
        %v1660 = vmax.f32 %v636, %v1148
        %v1661 = vmax.f32 %v637, %v1149
        %v1662 = vmax.f32 %v638, %v1150
        %v1663 = vmax.f32 %v639, %v1151
        %v1664 = vmax.f32 %v640, %v1152
        %v1665 = vmax.f32 %v641, %v1153
        %v1666 = vmax.f32 %v642, %v1154
        %v1667 = vmax.f32 %v643, %v1155
        %v1668 = vmax.f32 %v644, %v1156
        %v1669 = vmax.f32 %v645, %v1157
        %v1670 = vmax.f32 %v646, %v1158
        %v1671 = vmax.f32 %v647, %v1159
        %v1672 = vmax.f32 %v648, %v1160
        %v1673 = vmax.f32 %v649, %v1161
        %v1674 = vmax.f32 %v650, %v1162
        %v1675 = vmax.f32 %v651, %v1163
        %v1676 = vmax.f32 %v652, %v1164
        %v1677 = vmax.f32 %v653, %v1165
        %v1678 = vmax.f32 %v654, %v1166
        %v1679 = vmax.f32 %v655, %v1167
        %v1680 = vmax.f32 %v656, %v1168
        %v1681 = vmax.f32 %v657, %v1169
        %v1682 = vmax.f32 %v658, %v1170
        %v1683 = vmax.f32 %v659, %v1171
        %v1684 = vmax.f32 %v660, %v1172
        %v1685 = vmax.f32 %v661, %v1173
        %v1686 = vmax.f32 %v662, %v1174
        %v1687 = vmax.f32 %v663, %v1175
        %v1688 = vmax.f32 %v664, %v1176
        %v1689 = vmax.f32 %v665, %v1177
        %v1690 = vmax.f32 %v666, %v1178
        %v1691 = vmax.f32 %v667, %v1179
        %v1692 = vmax.f32 %v668, %v1180
        %v1693 = vmax.f32 %v669, %v1181
        %v1694 = vmax.f32 %v670, %v1182
        %v1695 = vmax.f32 %v671, %v1183
        %v1696 = vmax.f32 %v672, %v1184
        %v1697 = vmax.f32 %v673, %v1185
        %v1698 = vmax.f32 %v674, %v1186
        %v1699 = vmax.f32 %v675, %v1187
        %v1700 = vmax.f32 %v676, %v1188
        %v1701 = vmax.f32 %v677, %v1189
        %v1702 = vmax.f32 %v678, %v1190
        %v1703 = vmax.f32 %v679, %v1191
        %v1704 = vmax.f32 %v680, %v1192
        %v1705 = vmax.f32 %v681, %v1193
        %v1706 = vmax.f32 %v682, %v1194
        %v1707 = vmax.f32 %v683, %v1195
        %v1708 = vmax.f32 %v684, %v1196
        %v1709 = vmax.f32 %v685, %v1197
        %v1710 = vmax.f32 %v686, %v1198
        %v1711 = vmax.f32 %v687, %v1199
        %v1712 = vmax.f32 %v688, %v1200
        %v1713 = vmax.f32 %v689, %v1201
        %v1714 = vmax.f32 %v690, %v1202
        %v1715 = vmax.f32 %v691, %v1203
        %v1716 = vmax.f32 %v692, %v1204
        %v1717 = vmax.f32 %v693, %v1205
        %v1718 = vmax.f32 %v694, %v1206
        %v1719 = vmax.f32 %v695, %v1207
        %v1720 = vmax.f32 %v696, %v1208
        %v1721 = vmax.f32 %v697, %v1209
        %v1722 = vmax.f32 %v698, %v1210
        %v1723 = vmax.f32 %v699, %v1211
        %v1724 = vmax.f32 %v700, %v1212
        %v1725 = vmax.f32 %v701, %v1213
        %v1726 = vmax.f32 %v702, %v1214
        %v1727 = vmax.f32 %v703, %v1215
        %v1728 = vmax.f32 %v704, %v1216
        %v1729 = vmax.f32 %v705, %v1217
        %v1730 = vmax.f32 %v706, %v1218
        %v1731 = vmax.f32 %v707, %v1219
        %v1732 = vmax.f32 %v708, %v1220
        %v1733 = vmax.f32 %v709, %v1221
        %v1734 = vmax.f32 %v710, %v1222
        %v1735 = vmax.f32 %v711, %v1223
        %v1736 = vmax.f32 %v712, %v1224
        %v1737 = vmax.f32 %v713, %v1225
        %v1738 = vmax.f32 %v714, %v1226
        %v1739 = vmax.f32 %v715, %v1227
        %v1740 = vmax.f32 %v716, %v1228
        %v1741 = vmax.f32 %v717, %v1229
        %v1742 = vmax.f32 %v718, %v1230
        %v1743 = vmax.f32 %v719, %v1231
        %v1744 = vmax.f32 %v720, %v1232
        %v1745 = vmax.f32 %v721, %v1233
        %v1746 = vmax.f32 %v722, %v1234
        %v1747 = vmax.f32 %v723, %v1235
        %v1748 = vmax.f32 %v724, %v1236
        %v1749 = vmax.f32 %v725, %v1237
        %v1750 = vmax.f32 %v726, %v1238
        %v1751 = vmax.f32 %v727, %v1239
        %v1752 = vmax.f32 %v728, %v1240
        %v1753 = vmax.f32 %v729, %v1241
        %v1754 = vmax.f32 %v730, %v1242
        %v1755 = vmax.f32 %v731, %v1243
        %v1756 = vmax.f32 %v732, %v1244
        %v1757 = vmax.f32 %v733, %v1245
        %v1758 = vmax.f32 %v734, %v1246
        %v1759 = vmax.f32 %v735, %v1247
        %v1760 = vmax.f32 %v736, %v1248
        %v1761 = vmax.f32 %v737, %v1249
        %v1762 = vmax.f32 %v738, %v1250
        %v1763 = vmax.f32 %v739, %v1251
        %v1764 = vmax.f32 %v740, %v1252
        %v1765 = vmax.f32 %v741, %v1253
        %v1766 = vmax.f32 %v742, %v1254
        %v1767 = vmax.f32 %v743, %v1255
        %v1768 = vmax.f32 %v744, %v1256
        %v1769 = vmax.f32 %v745, %v1257
        %v1770 = vmax.f32 %v746, %v1258
        %v1771 = vmax.f32 %v747, %v1259
        %v1772 = vmax.f32 %v748, %v1260
        %v1773 = vmax.f32 %v749, %v1261
        %v1774 = vmax.f32 %v750, %v1262
        %v1775 = vmax.f32 %v751, %v1263
        %v1776 = vmax.f32 %v752, %v1264
        %v1777 = vmax.f32 %v753, %v1265
        %v1778 = vmax.f32 %v754, %v1266
        %v1779 = vmax.f32 %v755, %v1267
        %v1780 = vmax.f32 %v756, %v1268
        %v1781 = vmax.f32 %v757, %v1269
        %v1782 = vmax.f32 %v758, %v1270
        %v1783 = vmax.f32 %v759, %v1271
        %v1784 = vmax.f32 %v760, %v1272
        %v1785 = vmax.f32 %v761, %v1273
        %v1786 = vmax.f32 %v762, %v1274
        %v1787 = vmax.f32 %v763, %v1275
        %v1788 = vmax.f32 %v764, %v1276
        %v1789 = vmax.f32 %v765, %v1277
        %v1790 = vmax.f32 %v766, %v1278
        %v1791 = vmax.f32 %v767, %v1279
        %v1792 = vmax.f32 %v768, %v1280
        %v1793 = vmax.f32 %v769, %v1281
        %v1794 = vmax.f32 %v770, %v1282
        %v1795 = vmax.f32 %v771, %v1283
        %v1796 = vmax.f32 %v772, %v1284
        %v1797 = vmax.f32 %v773, %v1285
        %v1798 = vmax.f32 %v774, %v1286
        %v1799 = vmax.f32 %v775, %v1287
        %v1800 = vmax.f32 %v776, %v1288
        %v1801 = vmax.f32 %v777, %v1289
        %v1802 = vmax.f32 %v778, %v1290
        %v1803 = vmax.f32 %v779, %v1291
        %v1804 = vmax.f32 %v780, %v1292
        %v1805 = vmax.f32 %v781, %v1293
        %v1806 = vmax.f32 %v782, %v1294
        %v1807 = vmax.f32 %v783, %v1295
        %v1808 = vmax.f32 %v784, %v1296
        %v1809 = vmax.f32 %v785, %v1297
        %v1810 = vmax.f32 %v786, %v1298
        %v1811 = vmax.f32 %v787, %v1299
        %v1812 = vmax.f32 %v788, %v1300
        %v1813 = vmax.f32 %v789, %v1301
        %v1814 = vmax.f32 %v790, %v1302
        %v1815 = vmax.f32 %v791, %v1303
        %v1816 = vmax.f32 %v792, %v1304
        %v1817 = vmax.f32 %v793, %v1305
        %v1818 = vmax.f32 %v794, %v1306
        %v1819 = vmax.f32 %v795, %v1307
        %v1820 = vmax.f32 %v796, %v1308
        %v1821 = vmax.f32 %v797, %v1309
        %v1822 = vmax.f32 %v798, %v1310
        %v1823 = vmax.f32 %v799, %v1311
        %v1824 = vmax.f32 %v800, %v1312
        %v1825 = vmax.f32 %v801, %v1313
        %v1826 = vmax.f32 %v802, %v1314
        %v1827 = vmax.f32 %v803, %v1315
        %v1828 = vmax.f32 %v804, %v1316
        %v1829 = vmax.f32 %v805, %v1317
        %v1830 = vmax.f32 %v806, %v1318
        %v1831 = vmax.f32 %v807, %v1319
        %v1832 = vmax.f32 %v808, %v1320
        %v1833 = vmax.f32 %v809, %v1321
        %v1834 = vmax.f32 %v810, %v1322
        %v1835 = vmax.f32 %v811, %v1323
        %v1836 = vmax.f32 %v812, %v1324
        %v1837 = vmax.f32 %v813, %v1325
        %v1838 = vmax.f32 %v814, %v1326
        %v1839 = vmax.f32 %v815, %v1327
        %v1840 = vmax.f32 %v816, %v1328
        %v1841 = vmax.f32 %v817, %v1329
        %v1842 = vmax.f32 %v818, %v1330
        %v1843 = vmax.f32 %v819, %v1331
        %v1844 = vmax.f32 %v820, %v1332
        %v1845 = vmax.f32 %v821, %v1333
        %v1846 = vmax.f32 %v822, %v1334
        %v1847 = vmax.f32 %v823, %v1335
        %v1848 = vmax.f32 %v824, %v1336
        %v1849 = vmax.f32 %v825, %v1337
        %v1850 = vmax.f32 %v826, %v1338
        %v1851 = vmax.f32 %v827, %v1339
        %v1852 = vmax.f32 %v828, %v1340
        %v1853 = vmax.f32 %v829, %v1341
        %v1854 = vmax.f32 %v830, %v1342
        %v1855 = vmax.f32 %v831, %v1343
        %v1856 = vmax.f32 %v832, %v1344
        %v1857 = vmax.f32 %v833, %v1345
        %v1858 = vmax.f32 %v834, %v1346
        %v1859 = vmax.f32 %v835, %v1347
        %v1860 = vmax.f32 %v836, %v1348
        %v1861 = vmax.f32 %v837, %v1349
        %v1862 = vmax.f32 %v838, %v1350
        %v1863 = vmax.f32 %v839, %v1351
        %v1864 = vmax.f32 %v840, %v1352
        %v1865 = vmax.f32 %v841, %v1353
        %v1866 = vmax.f32 %v842, %v1354
        %v1867 = vmax.f32 %v843, %v1355
        %v1868 = vmax.f32 %v844, %v1356
        %v1869 = vmax.f32 %v845, %v1357
        %v1870 = vmax.f32 %v846, %v1358
        %v1871 = vmax.f32 %v847, %v1359
        %v1872 = vmax.f32 %v848, %v1360
        %v1873 = vmax.f32 %v849, %v1361
        %v1874 = vmax.f32 %v850, %v1362
        %v1875 = vmax.f32 %v851, %v1363
        %v1876 = vmax.f32 %v852, %v1364
        %v1877 = vmax.f32 %v853, %v1365
        %v1878 = vmax.f32 %v854, %v1366
        %v1879 = vmax.f32 %v855, %v1367
        %v1880 = vmax.f32 %v856, %v1368
        %v1881 = vmax.f32 %v857, %v1369
        %v1882 = vmax.f32 %v858, %v1370
        %v1883 = vmax.f32 %v859, %v1371
        %v1884 = vmax.f32 %v860, %v1372
        %v1885 = vmax.f32 %v861, %v1373
        %v1886 = vmax.f32 %v862, %v1374
        %v1887 = vmax.f32 %v863, %v1375
        %v1888 = vmax.f32 %v864, %v1376
        %v1889 = vmax.f32 %v865, %v1377
        %v1890 = vmax.f32 %v866, %v1378
        %v1891 = vmax.f32 %v867, %v1379
        %v1892 = vmax.f32 %v868, %v1380
        %v1893 = vmax.f32 %v869, %v1381
        %v1894 = vmax.f32 %v870, %v1382
        %v1895 = vmax.f32 %v871, %v1383
        %v1896 = vmax.f32 %v872, %v1384
        %v1897 = vmax.f32 %v873, %v1385
        %v1898 = vmax.f32 %v874, %v1386
        %v1899 = vmax.f32 %v875, %v1387
        %v1900 = vmax.f32 %v876, %v1388
        %v1901 = vmax.f32 %v877, %v1389
        %v1902 = vmax.f32 %v878, %v1390
        %v1903 = vmax.f32 %v879, %v1391
        %v1904 = vmax.f32 %v880, %v1392
        %v1905 = vmax.f32 %v881, %v1393
        %v1906 = vmax.f32 %v882, %v1394
        %v1907 = vmax.f32 %v883, %v1395
        %v1908 = vmax.f32 %v884, %v1396
        %v1909 = vmax.f32 %v885, %v1397
        %v1910 = vmax.f32 %v886, %v1398
        %v1911 = vmax.f32 %v887, %v1399
        %v1912 = vmax.f32 %v888, %v1400
        %v1913 = vmax.f32 %v889, %v1401
        %v1914 = vmax.f32 %v890, %v1402
        %v1915 = vmax.f32 %v891, %v1403
        %v1916 = vmax.f32 %v892, %v1404
        %v1917 = vmax.f32 %v893, %v1405
        %v1918 = vmax.f32 %v894, %v1406
        %v1919 = vmax.f32 %v895, %v1407
        %v1920 = vmax.f32 %v896, %v1408
        %v1921 = vmax.f32 %v897, %v1409
        %v1922 = vmax.f32 %v898, %v1410
        %v1923 = vmax.f32 %v899, %v1411
        %v1924 = vmax.f32 %v900, %v1412
        %v1925 = vmax.f32 %v901, %v1413
        %v1926 = vmax.f32 %v902, %v1414
        %v1927 = vmax.f32 %v903, %v1415
        %v1928 = vmax.f32 %v904, %v1416
        %v1929 = vmax.f32 %v905, %v1417
        %v1930 = vmax.f32 %v906, %v1418
        %v1931 = vmax.f32 %v907, %v1419
        %v1932 = vmax.f32 %v908, %v1420
        %v1933 = vmax.f32 %v909, %v1421
        %v1934 = vmax.f32 %v910, %v1422
        %v1935 = vmax.f32 %v911, %v1423
        %v1936 = vmax.f32 %v912, %v1424
        %v1937 = vmax.f32 %v913, %v1425
        %v1938 = vmax.f32 %v914, %v1426
        %v1939 = vmax.f32 %v915, %v1427
        %v1940 = vmax.f32 %v916, %v1428
        %v1941 = vmax.f32 %v917, %v1429
        %v1942 = vmax.f32 %v918, %v1430
        %v1943 = vmax.f32 %v919, %v1431
        %v1944 = vmax.f32 %v920, %v1432
        %v1945 = vmax.f32 %v921, %v1433
        %v1946 = vmax.f32 %v922, %v1434
        %v1947 = vmax.f32 %v923, %v1435
        %v1948 = vmax.f32 %v924, %v1436
        %v1949 = vmax.f32 %v925, %v1437
        %v1950 = vmax.f32 %v926, %v1438
        %v1951 = vmax.f32 %v927, %v1439
        %v1952 = vmax.f32 %v928, %v1440
        %v1953 = vmax.f32 %v929, %v1441
        %v1954 = vmax.f32 %v930, %v1442
        %v1955 = vmax.f32 %v931, %v1443
        %v1956 = vmax.f32 %v932, %v1444
        %v1957 = vmax.f32 %v933, %v1445
        %v1958 = vmax.f32 %v934, %v1446
        %v1959 = vmax.f32 %v935, %v1447
        %v1960 = vmax.f32 %v936, %v1448
        %v1961 = vmax.f32 %v937, %v1449
        %v1962 = vmax.f32 %v938, %v1450
        %v1963 = vmax.f32 %v939, %v1451
        %v1964 = vmax.f32 %v940, %v1452
        %v1965 = vmax.f32 %v941, %v1453
        %v1966 = vmax.f32 %v942, %v1454
        %v1967 = vmax.f32 %v943, %v1455
        %v1968 = vmax.f32 %v944, %v1456
        %v1969 = vmax.f32 %v945, %v1457
        %v1970 = vmax.f32 %v946, %v1458
        %v1971 = vmax.f32 %v947, %v1459
        %v1972 = vmax.f32 %v948, %v1460
        %v1973 = vmax.f32 %v949, %v1461
        %v1974 = vmax.f32 %v950, %v1462
        %v1975 = vmax.f32 %v951, %v1463
        %v1976 = vmax.f32 %v952, %v1464
        %v1977 = vmax.f32 %v953, %v1465
        %v1978 = vmax.f32 %v954, %v1466
        %v1979 = vmax.f32 %v955, %v1467
        %v1980 = vmax.f32 %v956, %v1468
        %v1981 = vmax.f32 %v957, %v1469
        %v1982 = vmax.f32 %v958, %v1470
        %v1983 = vmax.f32 %v959, %v1471
        %v1984 = vmax.f32 %v960, %v1472
        %v1985 = vmax.f32 %v961, %v1473
        %v1986 = vmax.f32 %v962, %v1474
        %v1987 = vmax.f32 %v963, %v1475
        %v1988 = vmax.f32 %v964, %v1476
        %v1989 = vmax.f32 %v965, %v1477
        %v1990 = vmax.f32 %v966, %v1478
        %v1991 = vmax.f32 %v967, %v1479
        %v1992 = vmax.f32 %v968, %v1480
        %v1993 = vmax.f32 %v969, %v1481
        %v1994 = vmax.f32 %v970, %v1482
        %v1995 = vmax.f32 %v971, %v1483
        %v1996 = vmax.f32 %v972, %v1484
        %v1997 = vmax.f32 %v973, %v1485
        %v1998 = vmax.f32 %v974, %v1486
        %v1999 = vmax.f32 %v975, %v1487
        %v2000 = vmax.f32 %v976, %v1488
        %v2001 = vmax.f32 %v977, %v1489
        %v2002 = vmax.f32 %v978, %v1490
        %v2003 = vmax.f32 %v979, %v1491
        %v2004 = vmax.f32 %v980, %v1492
        %v2005 = vmax.f32 %v981, %v1493
        %v2006 = vmax.f32 %v982, %v1494
        %v2007 = vmax.f32 %v983, %v1495
        %v2008 = vmax.f32 %v984, %v1496
        %v2009 = vmax.f32 %v985, %v1497
        %v2010 = vmax.f32 %v986, %v1498
        %v2011 = vmax.f32 %v987, %v1499
        %v2012 = vmax.f32 %v988, %v1500
        %v2013 = vmax.f32 %v989, %v1501
        %v2014 = vmax.f32 %v990, %v1502
        %v2015 = vmax.f32 %v991, %v1503
        %v2016 = vmax.f32 %v992, %v1504
        %v2017 = vmax.f32 %v993, %v1505
        %v2018 = vmax.f32 %v994, %v1506
        %v2019 = vmax.f32 %v995, %v1507
        %v2020 = vmax.f32 %v996, %v1508
        %v2021 = vmax.f32 %v997, %v1509
        %v2022 = vmax.f32 %v998, %v1510
        %v2023 = vmax.f32 %v999, %v1511
        %v2024 = vmax.f32 %v1000, %v1512
        %v2025 = vmax.f32 %v1001, %v1513
        %v2026 = vmax.f32 %v1002, %v1514
        %v2027 = vmax.f32 %v1003, %v1515
        %v2028 = vmax.f32 %v1004, %v1516
        %v2029 = vmax.f32 %v1005, %v1517
        %v2030 = vmax.f32 %v1006, %v1518
        %v2031 = vmax.f32 %v1007, %v1519
        %v2032 = vmax.f32 %v1008, %v1520
        %v2033 = vmax.f32 %v1009, %v1521
        %v2034 = vmax.f32 %v1010, %v1522
        %v2035 = vmax.f32 %v1011, %v1523
        %v2036 = vmax.f32 %v1012, %v1524
        %v2037 = vmax.f32 %v1013, %v1525
        %v2038 = vmax.f32 %v1014, %v1526
        %v2039 = vmax.f32 %v1015, %v1527
        %v2040 = vmax.f32 %v1016, %v1528
        %v2041 = vmax.f32 %v1017, %v1529
        %v2042 = vmax.f32 %v1018, %v1530
        %v2043 = vmax.f32 %v1019, %v1531
        %v2044 = vmax.f32 %v1020, %v1532
        %v2045 = vmax.f32 %v1021, %v1533
        %v2046 = vmax.f32 %v1022, %v1534
        %v2047 = vmax.f32 %v1023, %v1535
        %v2048 = vmax.f32 %v1024, %v1536
        %v2049 = vmax.f32 %v1025, %v1537
        %v2050 = vmax.f32 %v1026, %v1538
        %v2051 = vmax.f32 %v1027, %v1539
        %v2052 = vmax.f32 %v1028, %v1540
        %v2053 = vmax.f32 %v1029, %v1541
        %v2054 = vmax.f32 %v1030, %v1542
        %v2055 = vmax.f32 %v1031, %v1543
        %v2056 = vmax.f32 %v1032, %v1544
        %v2057 = vmax.f32 %v1033, %v1545
        %v2058 = vmax.f32 %v1034, %v1546
        %v2059 = vmax.f32 %v1035, %v1547
        %v2060 = vmax.f32 %v1036, %v1548
        %v2061 = vmax.f32 %v1037, %v1549
        %v2062 = vmax.f32 %v1038, %v1550
        %v2063 = vmax.f32 %v1039, %v1551
        %v2064 = vmax.f32 %v1040, %v1552
        %v2065 = vmax.f32 %v1041, %v1553
        %v2066 = vmax.f32 %v1042, %v1554
        %v2067 = vmax.f32 %v1043, %v1555
        %v2068 = vmax.f32 %v1044, %v1556
        %v2069 = vmax.f32 %v1045, %v1557
        %v2070 = vmax.f32 %v1046, %v1558
        %v2071 = vmax.f32 %v1047, %v1559
        %v2072 = vmax.f32 %v1048, %v1560
        %v2073 = vmax.f32 %v1049, %v1561
        %v2074 = vmax.f32 %v1050, %v1562
        %v2075 = vmax.f32 %v1051, %v1563
        %v2076 = vmax.f32 %v1052, %v1564
        %v2077 = vmax.f32 %v1053, %v1565
        %v2078 = vmax.f32 %v1054, %v1566
        %v2079 = vmax.f32 %v1055, %v1567
        %v2080 = vmax.f32 %v1056, %v1568
        %v2081 = vmax.f32 %v1057, %v1569
        %v2082 = vmax.f32 %v1058, %v1570
        %v2083 = vmax.f32 %v1059, %v1571
        %v2084 = vmax.f32 %v1060, %v1572
        %v2085 = vmax.f32 %v1061, %v1573
        %v2086 = vmax.f32 %v1062, %v1574
        %v2087 = vmax.f32 %v1063, %v1575
        %v2088 = vmax.f32 %v1064, %v1576
        %v2089 = vmax.f32 %v1065, %v1577
        %v2090 = vmax.f32 %v1066, %v1578
        %v2091 = vmax.f32 %v1067, %v1579
        %v2092 = vmax.f32 %v1068, %v1580
        %v2093 = vmax.f32 %v1069, %v1581
        %v2094 = vmax.f32 %v1070, %v1582
        %v2095 = vmax.f32 %v1071, %v1583
        %v2096 = vmax.f32 %v1072, %v1584
        %v2097 = vmax.f32 %v1073, %v1585
        %v2098 = vmax.f32 %v1074, %v1586
        %v2099 = vmax.f32 %v1075, %v1587
        %v2100 = vmax.f32 %v1076, %v1588
        %v2101 = vmax.f32 %v1077, %v1589
        %v2102 = vmax.f32 %v1078, %v1590
        %v2103 = vmax.f32 %v1079, %v1591
        %v2104 = vmax.f32 %v1080, %v1592
        %v2105 = vmax.f32 %v1081, %v1593
        %v2106 = vmax.f32 %v1082, %v1594
        %v2107 = vmax.f32 %v1083, %v1595
        %v2108 = vmax.f32 %v1084, %v1596
        %v2109 = vmax.f32 %v1085, %v1597
        %v2110 = vmax.f32 %v1086, %v1598
        %v2111 = vmax.f32 %v1087, %v1599
        %v2112 = vmax.f32 %v1088, %v1600
        %v2113 = vmax.f32 %v1089, %v1601
        %v2114 = vmax.f32 %v1090, %v1602
        %v2115 = vmax.f32 %v1091, %v1603
        %v2116 = vmax.f32 %v1092, %v1604
        %v2117 = vmax.f32 %v1093, %v1605
        %v2118 = vmax.f32 %v1094, %v1606
        %v2119 = vmax.f32 %v1095, %v1607
        %v2120 = vmax.f32 %v1096, %v1608
        %v2121 = vmax.f32 %v1097, %v1609
        %v2122 = vmax.f32 %v1098, %v1610
        %v2123 = vmax.f32 %v1099, %v1611
        %v2124 = vmax.f32 %v1100, %v1612
        %v2125 = vmax.f32 %v1101, %v1613
        %v2126 = vmax.f32 %v1102, %v1614
        %v2127 = vmax.f32 %v1103, %v1615
        %v2128 = vmax.f32 %v1104, %v1616
        %v2129 = vmax.f32 %v1105, %v1617
        %v2130 = vmax.f32 %v1106, %v1618
        %v2131 = vld [vmem:[%s189] sm:$0xff]
        %v2132 = vld [vmem:[%s189 + $0x8] sm:$0xff]
        %v2133 = vld [vmem:[%s189 + $0x10] sm:$0xff]
        %v2134 = vld [vmem:[%s189 + $0x18] sm:$0xff]
        %v2135 = vld [vmem:[%s189 + $0x20] sm:$0xff]
        %v2136 = vld [vmem:[%s189 + $0x28] sm:$0xff]
        %v2137 = vld [vmem:[%s189 + $0x30] sm:$0xff]
        %v2138 = vld [vmem:[%s189 + $0x38] sm:$0xff]
        %v2139 = vld [vmem:[%s189 + $0x40] sm:$0xff]
        %v2140 = vld [vmem:[%s189 + $0x48] sm:$0xff]
        %v2141 = vld [vmem:[%s189 + $0x50] sm:$0xff]
        %v2142 = vld [vmem:[%s189 + $0x58] sm:$0xff]
        %v2143 = vld [vmem:[%s189 + $0x60] sm:$0xff]
        %v2144 = vld [vmem:[%s189 + $0x68] sm:$0xff]
        %v2145 = vld [vmem:[%s189 + $0x70] sm:$0xff]
        %v2146 = vld [vmem:[%s189 + $0x78] sm:$0xff]
        %v2147 = vld [vmem:[%s189 + $0x80] sm:$0xff]
        %v2148 = vld [vmem:[%s189 + $0x88] sm:$0xff]
        %v2149 = vld [vmem:[%s189 + $0x90] sm:$0xff]
        %v2150 = vld [vmem:[%s189 + $0x98] sm:$0xff]
        %v2151 = vld [vmem:[%s189 + $0xa0] sm:$0xff]
        %v2152 = vld [vmem:[%s189 + $0xa8] sm:$0xff]
        %v2153 = vld [vmem:[%s189 + $0xb0] sm:$0xff]
        %v2154 = vld [vmem:[%s189 + $0xb8] sm:$0xff]
        %v2155 = vld [vmem:[%s189 + $0xc0] sm:$0xff]
        %v2156 = vld [vmem:[%s189 + $0xc8] sm:$0xff]
        %v2157 = vld [vmem:[%s189 + $0xd0] sm:$0xff]
        %v2158 = vld [vmem:[%s189 + $0xd8] sm:$0xff]
        %v2159 = vld [vmem:[%s189 + $0xe0] sm:$0xff]
        %v2160 = vld [vmem:[%s189 + $0xe8] sm:$0xff]
        %v2161 = vld [vmem:[%s189 + $0xf0] sm:$0xff]
        %v2162 = vld [vmem:[%s189 + $0xf8] sm:$0xff]
        %v2163 = vld [vmem:[%s189 + $0x100] sm:$0xff]
        %v2164 = vld [vmem:[%s189 + $0x108] sm:$0xff]
        %v2165 = vld [vmem:[%s189 + $0x110] sm:$0xff]
        %v2166 = vld [vmem:[%s189 + $0x118] sm:$0xff]
        %v2167 = vld [vmem:[%s189 + $0x120] sm:$0xff]
        %v2168 = vld [vmem:[%s189 + $0x128] sm:$0xff]
        %v2169 = vld [vmem:[%s189 + $0x130] sm:$0xff]
        %v2170 = vld [vmem:[%s189 + $0x138] sm:$0xff]
        %v2171 = vld [vmem:[%s189 + $0x140] sm:$0xff]
        %v2172 = vld [vmem:[%s189 + $0x148] sm:$0xff]
        %v2173 = vld [vmem:[%s189 + $0x150] sm:$0xff]
        %v2174 = vld [vmem:[%s189 + $0x158] sm:$0xff]
        %v2175 = vld [vmem:[%s189 + $0x160] sm:$0xff]
        %v2176 = vld [vmem:[%s189 + $0x168] sm:$0xff]
        %v2177 = vld [vmem:[%s189 + $0x170] sm:$0xff]
        %v2178 = vld [vmem:[%s189 + $0x178] sm:$0xff]
        %v2179 = vld [vmem:[%s189 + $0x180] sm:$0xff]
        %v2180 = vld [vmem:[%s189 + $0x188] sm:$0xff]
        %v2181 = vld [vmem:[%s189 + $0x190] sm:$0xff]
        %v2182 = vld [vmem:[%s189 + $0x198] sm:$0xff]
        %v2183 = vld [vmem:[%s189 + $0x1a0] sm:$0xff]
        %v2184 = vld [vmem:[%s189 + $0x1a8] sm:$0xff]
        %v2185 = vld [vmem:[%s189 + $0x1b0] sm:$0xff]
        %v2186 = vld [vmem:[%s189 + $0x1b8] sm:$0xff]
        %v2187 = vld [vmem:[%s189 + $0x1c0] sm:$0xff]
        %v2188 = vld [vmem:[%s189 + $0x1c8] sm:$0xff]
        %v2189 = vld [vmem:[%s189 + $0x1d0] sm:$0xff]
        %v2190 = vld [vmem:[%s189 + $0x1d8] sm:$0xff]
        %v2191 = vld [vmem:[%s189 + $0x1e0] sm:$0xff]
        %v2192 = vld [vmem:[%s189 + $0x1e8] sm:$0xff]
        %v2193 = vld [vmem:[%s189 + $0x1f0] sm:$0xff]
        %v2194 = vld [vmem:[%s189 + $0x1f8] sm:$0xff]
        %v2195 = vld [vmem:[%s189 + $0x200] sm:$0xff]
        %v2196 = vld [vmem:[%s189 + $0x208] sm:$0xff]
        %v2197 = vld [vmem:[%s189 + $0x210] sm:$0xff]
        %v2198 = vld [vmem:[%s189 + $0x218] sm:$0xff]
        %v2199 = vld [vmem:[%s189 + $0x220] sm:$0xff]
        %v2200 = vld [vmem:[%s189 + $0x228] sm:$0xff]
        %v2201 = vld [vmem:[%s189 + $0x230] sm:$0xff]
        %v2202 = vld [vmem:[%s189 + $0x238] sm:$0xff]
        %v2203 = vld [vmem:[%s189 + $0x240] sm:$0xff]
        %v2204 = vld [vmem:[%s189 + $0x248] sm:$0xff]
        %v2205 = vld [vmem:[%s189 + $0x250] sm:$0xff]
        %v2206 = vld [vmem:[%s189 + $0x258] sm:$0xff]
        %v2207 = vld [vmem:[%s189 + $0x260] sm:$0xff]
        %v2208 = vld [vmem:[%s189 + $0x268] sm:$0xff]
        %v2209 = vld [vmem:[%s189 + $0x270] sm:$0xff]
        %v2210 = vld [vmem:[%s189 + $0x278] sm:$0xff]
        %v2211 = vld [vmem:[%s189 + $0x280] sm:$0xff]
        %v2212 = vld [vmem:[%s189 + $0x288] sm:$0xff]
        %v2213 = vld [vmem:[%s189 + $0x290] sm:$0xff]
        %v2214 = vld [vmem:[%s189 + $0x298] sm:$0xff]
        %v2215 = vld [vmem:[%s189 + $0x2a0] sm:$0xff]
        %v2216 = vld [vmem:[%s189 + $0x2a8] sm:$0xff]
        %v2217 = vld [vmem:[%s189 + $0x2b0] sm:$0xff]
        %v2218 = vld [vmem:[%s189 + $0x2b8] sm:$0xff]
        %v2219 = vld [vmem:[%s189 + $0x2c0] sm:$0xff]
        %v2220 = vld [vmem:[%s189 + $0x2c8] sm:$0xff]
        %v2221 = vld [vmem:[%s189 + $0x2d0] sm:$0xff]
        %v2222 = vld [vmem:[%s189 + $0x2d8] sm:$0xff]
        %v2223 = vld [vmem:[%s189 + $0x2e0] sm:$0xff]
        %v2224 = vld [vmem:[%s189 + $0x2e8] sm:$0xff]
        %v2225 = vld [vmem:[%s189 + $0x2f0] sm:$0xff]
        %v2226 = vld [vmem:[%s189 + $0x2f8] sm:$0xff]
        %v2227 = vld [vmem:[%s189 + $0x300] sm:$0xff]
        %v2228 = vld [vmem:[%s189 + $0x308] sm:$0xff]
        %v2229 = vld [vmem:[%s189 + $0x310] sm:$0xff]
        %v2230 = vld [vmem:[%s189 + $0x318] sm:$0xff]
        %v2231 = vld [vmem:[%s189 + $0x320] sm:$0xff]
        %v2232 = vld [vmem:[%s189 + $0x328] sm:$0xff]
        %v2233 = vld [vmem:[%s189 + $0x330] sm:$0xff]
        %v2234 = vld [vmem:[%s189 + $0x338] sm:$0xff]
        %v2235 = vld [vmem:[%s189 + $0x340] sm:$0xff]
        %v2236 = vld [vmem:[%s189 + $0x348] sm:$0xff]
        %v2237 = vld [vmem:[%s189 + $0x350] sm:$0xff]
        %v2238 = vld [vmem:[%s189 + $0x358] sm:$0xff]
        %v2239 = vld [vmem:[%s189 + $0x360] sm:$0xff]
        %v2240 = vld [vmem:[%s189 + $0x368] sm:$0xff]
        %v2241 = vld [vmem:[%s189 + $0x370] sm:$0xff]
        %v2242 = vld [vmem:[%s189 + $0x378] sm:$0xff]
        %v2243 = vld [vmem:[%s189 + $0x380] sm:$0xff]
        %v2244 = vld [vmem:[%s189 + $0x388] sm:$0xff]
        %v2245 = vld [vmem:[%s189 + $0x390] sm:$0xff]
        %v2246 = vld [vmem:[%s189 + $0x398] sm:$0xff]
        %v2247 = vld [vmem:[%s189 + $0x3a0] sm:$0xff]
        %v2248 = vld [vmem:[%s189 + $0x3a8] sm:$0xff]
        %v2249 = vld [vmem:[%s189 + $0x3b0] sm:$0xff]
        %v2250 = vld [vmem:[%s189 + $0x3b8] sm:$0xff]
        %v2251 = vld [vmem:[%s189 + $0x3c0] sm:$0xff]
        %v2252 = vld [vmem:[%s189 + $0x3c8] sm:$0xff]
        %v2253 = vld [vmem:[%s189 + $0x3d0] sm:$0xff]
        %v2254 = vld [vmem:[%s189 + $0x3d8] sm:$0xff]
        %v2255 = vld [vmem:[%s189 + $0x3e0] sm:$0xff]
        %v2256 = vld [vmem:[%s189 + $0x3e8] sm:$0xff]
        %v2257 = vld [vmem:[%s189 + $0x3f0] sm:$0xff]
        %v2258 = vld [vmem:[%s189 + $0x3f8] sm:$0xff]
        %vm2259 = vnez %v2131
        %vm2260 = vnez %v2132
        %vm2261 = vnez %v2133
        %vm2262 = vnez %v2134
        %vm2263 = vnez %v2135
        %vm2264 = vnez %v2136
        %vm2265 = vnez %v2137
        %vm2266 = vnez %v2138
        %vm2267 = vnez %v2139
        %vm2268 = vnez %v2140
        %vm2269 = vnez %v2141
        %vm2270 = vnez %v2142
        %vm2271 = vnez %v2143
        %vm2272 = vnez %v2144
        %vm2273 = vnez %v2145
        %vm2274 = vnez %v2146
        %vm2275 = vnez %v2147
        %vm2276 = vnez %v2148
        %vm2277 = vnez %v2149
        %vm2278 = vnez %v2150
        %vm2279 = vnez %v2151
        %vm2280 = vnez %v2152
        %vm2281 = vnez %v2153
        %vm2282 = vnez %v2154
        %vm2283 = vnez %v2155
        %vm2284 = vnez %v2156
        %vm2285 = vnez %v2157
        %vm2286 = vnez %v2158
        %vm2287 = vnez %v2159
        %vm2288 = vnez %v2160
        %vm2289 = vnez %v2161
        %vm2290 = vnez %v2162
        %vm2291 = vnez %v2163
        %vm2292 = vnez %v2164
        %vm2293 = vnez %v2165
        %vm2294 = vnez %v2166
        %vm2295 = vnez %v2167
        %vm2296 = vnez %v2168
        %vm2297 = vnez %v2169
        %vm2298 = vnez %v2170
        %vm2299 = vnez %v2171
        %vm2300 = vnez %v2172
        %vm2301 = vnez %v2173
        %vm2302 = vnez %v2174
        %vm2303 = vnez %v2175
        %vm2304 = vnez %v2176
        %vm2305 = vnez %v2177
        %vm2306 = vnez %v2178
        %vm2307 = vnez %v2179
        %vm2308 = vnez %v2180
        %vm2309 = vnez %v2181
        %vm2310 = vnez %v2182
        %vm2311 = vnez %v2183
        %vm2312 = vnez %v2184
        %vm2313 = vnez %v2185
        %vm2314 = vnez %v2186
        %vm2315 = vnez %v2187
        %vm2316 = vnez %v2188
        %vm2317 = vnez %v2189
        %vm2318 = vnez %v2190
        %vm2319 = vnez %v2191
        %vm2320 = vnez %v2192
        %vm2321 = vnez %v2193
        %vm2322 = vnez %v2194
        %vm2323 = vnez %v2195
        %vm2324 = vnez %v2196
        %vm2325 = vnez %v2197
        %vm2326 = vnez %v2198
        %vm2327 = vnez %v2199
        %vm2328 = vnez %v2200
        %vm2329 = vnez %v2201
        %vm2330 = vnez %v2202
        %vm2331 = vnez %v2203
        %vm2332 = vnez %v2204
        %vm2333 = vnez %v2205
        %vm2334 = vnez %v2206
        %vm2335 = vnez %v2207
        %vm2336 = vnez %v2208
        %vm2337 = vnez %v2209
        %vm2338 = vnez %v2210
        %vm2339 = vnez %v2211
        %vm2340 = vnez %v2212
        %vm2341 = vnez %v2213
        %vm2342 = vnez %v2214
        %vm2343 = vnez %v2215
        %vm2344 = vnez %v2216
        %vm2345 = vnez %v2217
        %vm2346 = vnez %v2218
        %vm2347 = vnez %v2219
        %vm2348 = vnez %v2220
        %vm2349 = vnez %v2221
        %vm2350 = vnez %v2222
        %vm2351 = vnez %v2223
        %vm2352 = vnez %v2224
        %vm2353 = vnez %v2225
        %vm2354 = vnez %v2226
        %vm2355 = vnez %v2227
        %vm2356 = vnez %v2228
        %vm2357 = vnez %v2229
        %vm2358 = vnez %v2230
        %vm2359 = vnez %v2231
        %vm2360 = vnez %v2232
        %vm2361 = vnez %v2233
        %vm2362 = vnez %v2234
        %vm2363 = vnez %v2235
        %vm2364 = vnez %v2236
        %vm2365 = vnez %v2237
        %vm2366 = vnez %v2238
        %vm2367 = vnez %v2239
        %vm2368 = vnez %v2240
        %vm2369 = vnez %v2241
        %vm2370 = vnez %v2242
        %vm2371 = vnez %v2243
        %vm2372 = vnez %v2244
        %vm2373 = vnez %v2245
        %vm2374 = vnez %v2246
        %vm2375 = vnez %v2247
        %vm2376 = vnez %v2248
        %vm2377 = vnez %v2249
        %vm2378 = vnez %v2250
        %vm2379 = vnez %v2251
        %vm2380 = vnez %v2252
        %vm2381 = vnez %v2253
        %vm2382 = vnez %v2254
        %vm2383 = vnez %v2255
        %vm2384 = vnez %v2256
        %vm2385 = vnez %v2257
        %vm2386 = vnez %v2258
        %v2387 = vsel %vm2259, 16843009, 0
        %v2388 = vsel %vm2260, 16843009, 0
        %v2389 = vsel %vm2261, 16843009, 0
        %v2390 = vsel %vm2262, 16843009, 0
        %v2391 = vsel %vm2263, 16843009, 0
        %v2392 = vsel %vm2264, 16843009, 0
        %v2393 = vsel %vm2265, 16843009, 0
        %v2394 = vsel %vm2266, 16843009, 0
        %v2395 = vsel %vm2267, 16843009, 0
        %v2396 = vsel %vm2268, 16843009, 0
        %v2397 = vsel %vm2269, 16843009, 0
        %v2398 = vsel %vm2270, 16843009, 0
        %v2399 = vsel %vm2271, 16843009, 0
        %v2400 = vsel %vm2272, 16843009, 0
        %v2401 = vsel %vm2273, 16843009, 0
        %v2402 = vsel %vm2274, 16843009, 0
        %v2403 = vsel %vm2275, 16843009, 0
        %v2404 = vsel %vm2276, 16843009, 0
        %v2405 = vsel %vm2277, 16843009, 0
        %v2406 = vsel %vm2278, 16843009, 0
        %v2407 = vsel %vm2279, 16843009, 0
        %v2408 = vsel %vm2280, 16843009, 0
        %v2409 = vsel %vm2281, 16843009, 0
        %v2410 = vsel %vm2282, 16843009, 0
        %v2411 = vsel %vm2283, 16843009, 0
        %v2412 = vsel %vm2284, 16843009, 0
        %v2413 = vsel %vm2285, 16843009, 0
        %v2414 = vsel %vm2286, 16843009, 0
        %v2415 = vsel %vm2287, 16843009, 0
        %v2416 = vsel %vm2288, 16843009, 0
        %v2417 = vsel %vm2289, 16843009, 0
        %v2418 = vsel %vm2290, 16843009, 0
        %v2419 = vsel %vm2291, 16843009, 0
        %v2420 = vsel %vm2292, 16843009, 0
        %v2421 = vsel %vm2293, 16843009, 0
        %v2422 = vsel %vm2294, 16843009, 0
        %v2423 = vsel %vm2295, 16843009, 0
        %v2424 = vsel %vm2296, 16843009, 0
        %v2425 = vsel %vm2297, 16843009, 0
        %v2426 = vsel %vm2298, 16843009, 0
        %v2427 = vsel %vm2299, 16843009, 0
        %v2428 = vsel %vm2300, 16843009, 0
        %v2429 = vsel %vm2301, 16843009, 0
        %v2430 = vsel %vm2302, 16843009, 0
        %v2431 = vsel %vm2303, 16843009, 0
        %v2432 = vsel %vm2304, 16843009, 0
        %v2433 = vsel %vm2305, 16843009, 0
        %v2434 = vsel %vm2306, 16843009, 0
        %v2435 = vsel %vm2307, 16843009, 0
        %v2436 = vsel %vm2308, 16843009, 0
        %v2437 = vsel %vm2309, 16843009, 0
        %v2438 = vsel %vm2310, 16843009, 0
        %v2439 = vsel %vm2311, 16843009, 0
        %v2440 = vsel %vm2312, 16843009, 0
        %v2441 = vsel %vm2313, 16843009, 0
        %v2442 = vsel %vm2314, 16843009, 0
        %v2443 = vsel %vm2315, 16843009, 0
        %v2444 = vsel %vm2316, 16843009, 0
        %v2445 = vsel %vm2317, 16843009, 0
        %v2446 = vsel %vm2318, 16843009, 0
        %v2447 = vsel %vm2319, 16843009, 0
        %v2448 = vsel %vm2320, 16843009, 0
        %v2449 = vsel %vm2321, 16843009, 0
        %v2450 = vsel %vm2322, 16843009, 0
        %v2451 = vsel %vm2323, 16843009, 0
        %v2452 = vsel %vm2324, 16843009, 0
        %v2453 = vsel %vm2325, 16843009, 0
        %v2454 = vsel %vm2326, 16843009, 0
        %v2455 = vsel %vm2327, 16843009, 0
        %v2456 = vsel %vm2328, 16843009, 0
        %v2457 = vsel %vm2329, 16843009, 0
        %v2458 = vsel %vm2330, 16843009, 0
        %v2459 = vsel %vm2331, 16843009, 0
        %v2460 = vsel %vm2332, 16843009, 0
        %v2461 = vsel %vm2333, 16843009, 0
        %v2462 = vsel %vm2334, 16843009, 0
        %v2463 = vsel %vm2335, 16843009, 0
        %v2464 = vsel %vm2336, 16843009, 0
        %v2465 = vsel %vm2337, 16843009, 0
        %v2466 = vsel %vm2338, 16843009, 0
        %v2467 = vsel %vm2339, 16843009, 0
        %v2468 = vsel %vm2340, 16843009, 0
        %v2469 = vsel %vm2341, 16843009, 0
        %v2470 = vsel %vm2342, 16843009, 0
        %v2471 = vsel %vm2343, 16843009, 0
        %v2472 = vsel %vm2344, 16843009, 0
        %v2473 = vsel %vm2345, 16843009, 0
        %v2474 = vsel %vm2346, 16843009, 0
        %v2475 = vsel %vm2347, 16843009, 0
        %v2476 = vsel %vm2348, 16843009, 0
        %v2477 = vsel %vm2349, 16843009, 0
        %v2478 = vsel %vm2350, 16843009, 0
        %v2479 = vsel %vm2351, 16843009, 0
        %v2480 = vsel %vm2352, 16843009, 0
        %v2481 = vsel %vm2353, 16843009, 0
        %v2482 = vsel %vm2354, 16843009, 0
        %v2483 = vsel %vm2355, 16843009, 0
        %v2484 = vsel %vm2356, 16843009, 0
        %v2485 = vsel %vm2357, 16843009, 0
        %v2486 = vsel %vm2358, 16843009, 0
        %v2487 = vsel %vm2359, 16843009, 0
        %v2488 = vsel %vm2360, 16843009, 0
        %v2489 = vsel %vm2361, 16843009, 0
        %v2490 = vsel %vm2362, 16843009, 0
        %v2491 = vsel %vm2363, 16843009, 0
        %v2492 = vsel %vm2364, 16843009, 0
        %v2493 = vsel %vm2365, 16843009, 0
        %v2494 = vsel %vm2366, 16843009, 0
        %v2495 = vsel %vm2367, 16843009, 0
        %v2496 = vsel %vm2368, 16843009, 0
        %v2497 = vsel %vm2369, 16843009, 0
        %v2498 = vsel %vm2370, 16843009, 0
        %v2499 = vsel %vm2371, 16843009, 0
        %v2500 = vsel %vm2372, 16843009, 0
        %v2501 = vsel %vm2373, 16843009, 0
        %v2502 = vsel %vm2374, 16843009, 0
        %v2503 = vsel %vm2375, 16843009, 0
        %v2504 = vsel %vm2376, 16843009, 0
        %v2505 = vsel %vm2377, 16843009, 0
        %v2506 = vsel %vm2378, 16843009, 0
        %v2507 = vsel %vm2379, 16843009, 0
        %v2508 = vsel %vm2380, 16843009, 0
        %v2509 = vsel %vm2381, 16843009, 0
        %v2510 = vsel %vm2382, 16843009, 0
        %v2511 = vsel %vm2383, 16843009, 0
        %v2512 = vsel %vm2384, 16843009, 0
        %v2513 = vsel %vm2385, 16843009, 0
        %v2514 = vsel %vm2386, 16843009, 0
        %v2515 = vunpack.c.0.s8 %v2387
        %v2516 = vunpack.c.0.s8 %v2388
        %v2517 = vunpack.c.0.s8 %v2389
        %v2518 = vunpack.c.0.s8 %v2390
        %v2519 = vunpack.c.0.s8 %v2391
        %v2520 = vunpack.c.0.s8 %v2392
        %v2521 = vunpack.c.0.s8 %v2393
        %v2522 = vunpack.c.0.s8 %v2394
        %v2523 = vunpack.c.1.s8 %v2387
        %v2524 = vunpack.c.1.s8 %v2388
        %v2525 = vunpack.c.1.s8 %v2389
        %v2526 = vunpack.c.1.s8 %v2390
        %v2527 = vunpack.c.1.s8 %v2391
        %v2528 = vunpack.c.1.s8 %v2392
        %v2529 = vunpack.c.1.s8 %v2393
        %v2530 = vunpack.c.1.s8 %v2394
        %v2531 = vunpack.c.2.s8 %v2387
        %v2532 = vunpack.c.2.s8 %v2388
        %v2533 = vunpack.c.2.s8 %v2389
        %v2534 = vunpack.c.2.s8 %v2390
        %v2535 = vunpack.c.2.s8 %v2391
        %v2536 = vunpack.c.2.s8 %v2392
        %v2537 = vunpack.c.2.s8 %v2393
        %v2538 = vunpack.c.2.s8 %v2394
        %v2539 = vunpack.c.3.s8 %v2387
        %v2540 = vunpack.c.3.s8 %v2388
        %v2541 = vunpack.c.3.s8 %v2389
        %v2542 = vunpack.c.3.s8 %v2390
        %v2543 = vunpack.c.3.s8 %v2391
        %v2544 = vunpack.c.3.s8 %v2392
        %v2545 = vunpack.c.3.s8 %v2393
        %v2546 = vunpack.c.3.s8 %v2394
        %v2547 = vunpack.c.0.s8 %v2395
        %v2548 = vunpack.c.0.s8 %v2396
        %v2549 = vunpack.c.0.s8 %v2397
        %v2550 = vunpack.c.0.s8 %v2398
        %v2551 = vunpack.c.0.s8 %v2399
        %v2552 = vunpack.c.0.s8 %v2400
        %v2553 = vunpack.c.0.s8 %v2401
        %v2554 = vunpack.c.0.s8 %v2402
        %v2555 = vunpack.c.1.s8 %v2395
        %v2556 = vunpack.c.1.s8 %v2396
        %v2557 = vunpack.c.1.s8 %v2397
        %v2558 = vunpack.c.1.s8 %v2398
        %v2559 = vunpack.c.1.s8 %v2399
        %v2560 = vunpack.c.1.s8 %v2400
        %v2561 = vunpack.c.1.s8 %v2401
        %v2562 = vunpack.c.1.s8 %v2402
        %v2563 = vunpack.c.2.s8 %v2395
        %v2564 = vunpack.c.2.s8 %v2396
        %v2565 = vunpack.c.2.s8 %v2397
        %v2566 = vunpack.c.2.s8 %v2398
        %v2567 = vunpack.c.2.s8 %v2399
        %v2568 = vunpack.c.2.s8 %v2400
        %v2569 = vunpack.c.2.s8 %v2401
        %v2570 = vunpack.c.2.s8 %v2402
        %v2571 = vunpack.c.3.s8 %v2395
        %v2572 = vunpack.c.3.s8 %v2396
        %v2573 = vunpack.c.3.s8 %v2397
        %v2574 = vunpack.c.3.s8 %v2398
        %v2575 = vunpack.c.3.s8 %v2399
        %v2576 = vunpack.c.3.s8 %v2400
        %v2577 = vunpack.c.3.s8 %v2401
        %v2578 = vunpack.c.3.s8 %v2402
        %v2579 = vunpack.c.0.s8 %v2403
        %v2580 = vunpack.c.0.s8 %v2404
        %v2581 = vunpack.c.0.s8 %v2405
        %v2582 = vunpack.c.0.s8 %v2406
        %v2583 = vunpack.c.0.s8 %v2407
        %v2584 = vunpack.c.0.s8 %v2408
        %v2585 = vunpack.c.0.s8 %v2409
        %v2586 = vunpack.c.0.s8 %v2410
        %v2587 = vunpack.c.1.s8 %v2403
        %v2588 = vunpack.c.1.s8 %v2404
        %v2589 = vunpack.c.1.s8 %v2405
        %v2590 = vunpack.c.1.s8 %v2406
        %v2591 = vunpack.c.1.s8 %v2407
        %v2592 = vunpack.c.1.s8 %v2408
        %v2593 = vunpack.c.1.s8 %v2409
        %v2594 = vunpack.c.1.s8 %v2410
        %v2595 = vunpack.c.2.s8 %v2403
        %v2596 = vunpack.c.2.s8 %v2404
        %v2597 = vunpack.c.2.s8 %v2405
        %v2598 = vunpack.c.2.s8 %v2406
        %v2599 = vunpack.c.2.s8 %v2407
        %v2600 = vunpack.c.2.s8 %v2408
        %v2601 = vunpack.c.2.s8 %v2409
        %v2602 = vunpack.c.2.s8 %v2410
        %v2603 = vunpack.c.3.s8 %v2403
        %v2604 = vunpack.c.3.s8 %v2404
        %v2605 = vunpack.c.3.s8 %v2405
        %v2606 = vunpack.c.3.s8 %v2406
        %v2607 = vunpack.c.3.s8 %v2407
        %v2608 = vunpack.c.3.s8 %v2408
        %v2609 = vunpack.c.3.s8 %v2409
        %v2610 = vunpack.c.3.s8 %v2410
        %v2611 = vunpack.c.0.s8 %v2411
        %v2612 = vunpack.c.0.s8 %v2412
        %v2613 = vunpack.c.0.s8 %v2413
        %v2614 = vunpack.c.0.s8 %v2414
        %v2615 = vunpack.c.0.s8 %v2415
        %v2616 = vunpack.c.0.s8 %v2416
        %v2617 = vunpack.c.0.s8 %v2417
        %v2618 = vunpack.c.0.s8 %v2418
        %v2619 = vunpack.c.1.s8 %v2411
        %v2620 = vunpack.c.1.s8 %v2412
        %v2621 = vunpack.c.1.s8 %v2413
        %v2622 = vunpack.c.1.s8 %v2414
        %v2623 = vunpack.c.1.s8 %v2415
        %v2624 = vunpack.c.1.s8 %v2416
        %v2625 = vunpack.c.1.s8 %v2417
        %v2626 = vunpack.c.1.s8 %v2418
        %v2627 = vunpack.c.2.s8 %v2411
        %v2628 = vunpack.c.2.s8 %v2412
        %v2629 = vunpack.c.2.s8 %v2413
        %v2630 = vunpack.c.2.s8 %v2414
        %v2631 = vunpack.c.2.s8 %v2415
        %v2632 = vunpack.c.2.s8 %v2416
        %v2633 = vunpack.c.2.s8 %v2417
        %v2634 = vunpack.c.2.s8 %v2418
        %v2635 = vunpack.c.3.s8 %v2411
        %v2636 = vunpack.c.3.s8 %v2412
        %v2637 = vunpack.c.3.s8 %v2413
        %v2638 = vunpack.c.3.s8 %v2414
        %v2639 = vunpack.c.3.s8 %v2415
        %v2640 = vunpack.c.3.s8 %v2416
        %v2641 = vunpack.c.3.s8 %v2417
        %v2642 = vunpack.c.3.s8 %v2418
        %v2643 = vunpack.c.0.s8 %v2419
        %v2644 = vunpack.c.0.s8 %v2420
        %v2645 = vunpack.c.0.s8 %v2421
        %v2646 = vunpack.c.0.s8 %v2422
        %v2647 = vunpack.c.0.s8 %v2423
        %v2648 = vunpack.c.0.s8 %v2424
        %v2649 = vunpack.c.0.s8 %v2425
        %v2650 = vunpack.c.0.s8 %v2426
        %v2651 = vunpack.c.1.s8 %v2419
        %v2652 = vunpack.c.1.s8 %v2420
        %v2653 = vunpack.c.1.s8 %v2421
        %v2654 = vunpack.c.1.s8 %v2422
        %v2655 = vunpack.c.1.s8 %v2423
        %v2656 = vunpack.c.1.s8 %v2424
        %v2657 = vunpack.c.1.s8 %v2425
        %v2658 = vunpack.c.1.s8 %v2426
        %v2659 = vunpack.c.2.s8 %v2419
        %v2660 = vunpack.c.2.s8 %v2420
        %v2661 = vunpack.c.2.s8 %v2421
        %v2662 = vunpack.c.2.s8 %v2422
        %v2663 = vunpack.c.2.s8 %v2423
        %v2664 = vunpack.c.2.s8 %v2424
        %v2665 = vunpack.c.2.s8 %v2425
        %v2666 = vunpack.c.2.s8 %v2426
        %v2667 = vunpack.c.3.s8 %v2419
        %v2668 = vunpack.c.3.s8 %v2420
        %v2669 = vunpack.c.3.s8 %v2421
        %v2670 = vunpack.c.3.s8 %v2422
        %v2671 = vunpack.c.3.s8 %v2423
        %v2672 = vunpack.c.3.s8 %v2424
        %v2673 = vunpack.c.3.s8 %v2425
        %v2674 = vunpack.c.3.s8 %v2426
        %v2675 = vunpack.c.0.s8 %v2427
        %v2676 = vunpack.c.0.s8 %v2428
        %v2677 = vunpack.c.0.s8 %v2429
        %v2678 = vunpack.c.0.s8 %v2430
        %v2679 = vunpack.c.0.s8 %v2431
        %v2680 = vunpack.c.0.s8 %v2432
        %v2681 = vunpack.c.0.s8 %v2433
        %v2682 = vunpack.c.0.s8 %v2434
        %v2683 = vunpack.c.1.s8 %v2427
        %v2684 = vunpack.c.1.s8 %v2428
        %v2685 = vunpack.c.1.s8 %v2429
        %v2686 = vunpack.c.1.s8 %v2430
        %v2687 = vunpack.c.1.s8 %v2431
        %v2688 = vunpack.c.1.s8 %v2432
        %v2689 = vunpack.c.1.s8 %v2433
        %v2690 = vunpack.c.1.s8 %v2434
        %v2691 = vunpack.c.2.s8 %v2427
        %v2692 = vunpack.c.2.s8 %v2428
        %v2693 = vunpack.c.2.s8 %v2429
        %v2694 = vunpack.c.2.s8 %v2430
        %v2695 = vunpack.c.2.s8 %v2431
        %v2696 = vunpack.c.2.s8 %v2432
        %v2697 = vunpack.c.2.s8 %v2433
        %v2698 = vunpack.c.2.s8 %v2434
        %v2699 = vunpack.c.3.s8 %v2427
        %v2700 = vunpack.c.3.s8 %v2428
        %v2701 = vunpack.c.3.s8 %v2429
        %v2702 = vunpack.c.3.s8 %v2430
        %v2703 = vunpack.c.3.s8 %v2431
        %v2704 = vunpack.c.3.s8 %v2432
        %v2705 = vunpack.c.3.s8 %v2433
        %v2706 = vunpack.c.3.s8 %v2434
        %v2707 = vunpack.c.0.s8 %v2435
        %v2708 = vunpack.c.0.s8 %v2436
        %v2709 = vunpack.c.0.s8 %v2437
        %v2710 = vunpack.c.0.s8 %v2438
        %v2711 = vunpack.c.0.s8 %v2439
        %v2712 = vunpack.c.0.s8 %v2440
        %v2713 = vunpack.c.0.s8 %v2441
        %v2714 = vunpack.c.0.s8 %v2442
        %v2715 = vunpack.c.1.s8 %v2435
        %v2716 = vunpack.c.1.s8 %v2436
        %v2717 = vunpack.c.1.s8 %v2437
        %v2718 = vunpack.c.1.s8 %v2438
        %v2719 = vunpack.c.1.s8 %v2439
        %v2720 = vunpack.c.1.s8 %v2440
        %v2721 = vunpack.c.1.s8 %v2441
        %v2722 = vunpack.c.1.s8 %v2442
        %v2723 = vunpack.c.2.s8 %v2435
        %v2724 = vunpack.c.2.s8 %v2436
        %v2725 = vunpack.c.2.s8 %v2437
        %v2726 = vunpack.c.2.s8 %v2438
        %v2727 = vunpack.c.2.s8 %v2439
        %v2728 = vunpack.c.2.s8 %v2440
        %v2729 = vunpack.c.2.s8 %v2441
        %v2730 = vunpack.c.2.s8 %v2442
        %v2731 = vunpack.c.3.s8 %v2435
        %v2732 = vunpack.c.3.s8 %v2436
        %v2733 = vunpack.c.3.s8 %v2437
        %v2734 = vunpack.c.3.s8 %v2438
        %v2735 = vunpack.c.3.s8 %v2439
        %v2736 = vunpack.c.3.s8 %v2440
        %v2737 = vunpack.c.3.s8 %v2441
        %v2738 = vunpack.c.3.s8 %v2442
        %v2739 = vunpack.c.0.s8 %v2443
        %v2740 = vunpack.c.0.s8 %v2444
        %v2741 = vunpack.c.0.s8 %v2445
        %v2742 = vunpack.c.0.s8 %v2446
        %v2743 = vunpack.c.0.s8 %v2447
        %v2744 = vunpack.c.0.s8 %v2448
        %v2745 = vunpack.c.0.s8 %v2449
        %v2746 = vunpack.c.0.s8 %v2450
        %v2747 = vunpack.c.1.s8 %v2443
        %v2748 = vunpack.c.1.s8 %v2444
        %v2749 = vunpack.c.1.s8 %v2445
        %v2750 = vunpack.c.1.s8 %v2446
        %v2751 = vunpack.c.1.s8 %v2447
        %v2752 = vunpack.c.1.s8 %v2448
        %v2753 = vunpack.c.1.s8 %v2449
        %v2754 = vunpack.c.1.s8 %v2450
        %v2755 = vunpack.c.2.s8 %v2443
        %v2756 = vunpack.c.2.s8 %v2444
        %v2757 = vunpack.c.2.s8 %v2445
        %v2758 = vunpack.c.2.s8 %v2446
        %v2759 = vunpack.c.2.s8 %v2447
        %v2760 = vunpack.c.2.s8 %v2448
        %v2761 = vunpack.c.2.s8 %v2449
        %v2762 = vunpack.c.2.s8 %v2450
        %v2763 = vunpack.c.3.s8 %v2443
        %v2764 = vunpack.c.3.s8 %v2444
        %v2765 = vunpack.c.3.s8 %v2445
        %v2766 = vunpack.c.3.s8 %v2446
        %v2767 = vunpack.c.3.s8 %v2447
        %v2768 = vunpack.c.3.s8 %v2448
        %v2769 = vunpack.c.3.s8 %v2449
        %v2770 = vunpack.c.3.s8 %v2450
        %v2771 = vunpack.c.0.s8 %v2451
        %v2772 = vunpack.c.0.s8 %v2452
        %v2773 = vunpack.c.0.s8 %v2453
        %v2774 = vunpack.c.0.s8 %v2454
        %v2775 = vunpack.c.0.s8 %v2455
        %v2776 = vunpack.c.0.s8 %v2456
        %v2777 = vunpack.c.0.s8 %v2457
        %v2778 = vunpack.c.0.s8 %v2458
        %v2779 = vunpack.c.1.s8 %v2451
        %v2780 = vunpack.c.1.s8 %v2452
        %v2781 = vunpack.c.1.s8 %v2453
        %v2782 = vunpack.c.1.s8 %v2454
        %v2783 = vunpack.c.1.s8 %v2455
        %v2784 = vunpack.c.1.s8 %v2456
        %v2785 = vunpack.c.1.s8 %v2457
        %v2786 = vunpack.c.1.s8 %v2458
        %v2787 = vunpack.c.2.s8 %v2451
        %v2788 = vunpack.c.2.s8 %v2452
        %v2789 = vunpack.c.2.s8 %v2453
        %v2790 = vunpack.c.2.s8 %v2454
        %v2791 = vunpack.c.2.s8 %v2455
        %v2792 = vunpack.c.2.s8 %v2456
        %v2793 = vunpack.c.2.s8 %v2457
        %v2794 = vunpack.c.2.s8 %v2458
        %v2795 = vunpack.c.3.s8 %v2451
        %v2796 = vunpack.c.3.s8 %v2452
        %v2797 = vunpack.c.3.s8 %v2453
        %v2798 = vunpack.c.3.s8 %v2454
        %v2799 = vunpack.c.3.s8 %v2455
        %v2800 = vunpack.c.3.s8 %v2456
        %v2801 = vunpack.c.3.s8 %v2457
        %v2802 = vunpack.c.3.s8 %v2458
        %v2803 = vunpack.c.0.s8 %v2459
        %v2804 = vunpack.c.0.s8 %v2460
        %v2805 = vunpack.c.0.s8 %v2461
        %v2806 = vunpack.c.0.s8 %v2462
        %v2807 = vunpack.c.0.s8 %v2463
        %v2808 = vunpack.c.0.s8 %v2464
        %v2809 = vunpack.c.0.s8 %v2465
        %v2810 = vunpack.c.0.s8 %v2466
        %v2811 = vunpack.c.1.s8 %v2459
        %v2812 = vunpack.c.1.s8 %v2460
        %v2813 = vunpack.c.1.s8 %v2461
        %v2814 = vunpack.c.1.s8 %v2462
        %v2815 = vunpack.c.1.s8 %v2463
        %v2816 = vunpack.c.1.s8 %v2464
        %v2817 = vunpack.c.1.s8 %v2465
        %v2818 = vunpack.c.1.s8 %v2466
        %v2819 = vunpack.c.2.s8 %v2459
        %v2820 = vunpack.c.2.s8 %v2460
        %v2821 = vunpack.c.2.s8 %v2461
        %v2822 = vunpack.c.2.s8 %v2462
        %v2823 = vunpack.c.2.s8 %v2463
        %v2824 = vunpack.c.2.s8 %v2464
        %v2825 = vunpack.c.2.s8 %v2465
        %v2826 = vunpack.c.2.s8 %v2466
        %v2827 = vunpack.c.3.s8 %v2459
        %v2828 = vunpack.c.3.s8 %v2460
        %v2829 = vunpack.c.3.s8 %v2461
        %v2830 = vunpack.c.3.s8 %v2462
        %v2831 = vunpack.c.3.s8 %v2463
        %v2832 = vunpack.c.3.s8 %v2464
        %v2833 = vunpack.c.3.s8 %v2465
        %v2834 = vunpack.c.3.s8 %v2466
        %v2835 = vunpack.c.0.s8 %v2467
        %v2836 = vunpack.c.0.s8 %v2468
        %v2837 = vunpack.c.0.s8 %v2469
        %v2838 = vunpack.c.0.s8 %v2470
        %v2839 = vunpack.c.0.s8 %v2471
        %v2840 = vunpack.c.0.s8 %v2472
        %v2841 = vunpack.c.0.s8 %v2473
        %v2842 = vunpack.c.0.s8 %v2474
        %v2843 = vunpack.c.1.s8 %v2467
        %v2844 = vunpack.c.1.s8 %v2468
        %v2845 = vunpack.c.1.s8 %v2469
        %v2846 = vunpack.c.1.s8 %v2470
        %v2847 = vunpack.c.1.s8 %v2471
        %v2848 = vunpack.c.1.s8 %v2472
        %v2849 = vunpack.c.1.s8 %v2473
        %v2850 = vunpack.c.1.s8 %v2474
        %v2851 = vunpack.c.2.s8 %v2467
        %v2852 = vunpack.c.2.s8 %v2468
        %v2853 = vunpack.c.2.s8 %v2469
        %v2854 = vunpack.c.2.s8 %v2470
        %v2855 = vunpack.c.2.s8 %v2471
        %v2856 = vunpack.c.2.s8 %v2472
        %v2857 = vunpack.c.2.s8 %v2473
        %v2858 = vunpack.c.2.s8 %v2474
        %v2859 = vunpack.c.3.s8 %v2467
        %v2860 = vunpack.c.3.s8 %v2468
        %v2861 = vunpack.c.3.s8 %v2469
        %v2862 = vunpack.c.3.s8 %v2470
        %v2863 = vunpack.c.3.s8 %v2471
        %v2864 = vunpack.c.3.s8 %v2472
        %v2865 = vunpack.c.3.s8 %v2473
        %v2866 = vunpack.c.3.s8 %v2474
        %v2867 = vunpack.c.0.s8 %v2475
        %v2868 = vunpack.c.0.s8 %v2476
        %v2869 = vunpack.c.0.s8 %v2477
        %v2870 = vunpack.c.0.s8 %v2478
        %v2871 = vunpack.c.0.s8 %v2479
        %v2872 = vunpack.c.0.s8 %v2480
        %v2873 = vunpack.c.0.s8 %v2481
        %v2874 = vunpack.c.0.s8 %v2482
        %v2875 = vunpack.c.1.s8 %v2475
        %v2876 = vunpack.c.1.s8 %v2476
        %v2877 = vunpack.c.1.s8 %v2477
        %v2878 = vunpack.c.1.s8 %v2478
        %v2879 = vunpack.c.1.s8 %v2479
        %v2880 = vunpack.c.1.s8 %v2480
        %v2881 = vunpack.c.1.s8 %v2481
        %v2882 = vunpack.c.1.s8 %v2482
        %v2883 = vunpack.c.2.s8 %v2475
        %v2884 = vunpack.c.2.s8 %v2476
        %v2885 = vunpack.c.2.s8 %v2477
        %v2886 = vunpack.c.2.s8 %v2478
        %v2887 = vunpack.c.2.s8 %v2479
        %v2888 = vunpack.c.2.s8 %v2480
        %v2889 = vunpack.c.2.s8 %v2481
        %v2890 = vunpack.c.2.s8 %v2482
        %v2891 = vunpack.c.3.s8 %v2475
        %v2892 = vunpack.c.3.s8 %v2476
        %v2893 = vunpack.c.3.s8 %v2477
        %v2894 = vunpack.c.3.s8 %v2478
        %v2895 = vunpack.c.3.s8 %v2479
        %v2896 = vunpack.c.3.s8 %v2480
        %v2897 = vunpack.c.3.s8 %v2481
        %v2898 = vunpack.c.3.s8 %v2482
        %v2899 = vunpack.c.0.s8 %v2483
        %v2900 = vunpack.c.0.s8 %v2484
        %v2901 = vunpack.c.0.s8 %v2485
        %v2902 = vunpack.c.0.s8 %v2486
        %v2903 = vunpack.c.0.s8 %v2487
        %v2904 = vunpack.c.0.s8 %v2488
        %v2905 = vunpack.c.0.s8 %v2489
        %v2906 = vunpack.c.0.s8 %v2490
        %v2907 = vunpack.c.1.s8 %v2483
        %v2908 = vunpack.c.1.s8 %v2484
        %v2909 = vunpack.c.1.s8 %v2485
        %v2910 = vunpack.c.1.s8 %v2486
        %v2911 = vunpack.c.1.s8 %v2487
        %v2912 = vunpack.c.1.s8 %v2488
        %v2913 = vunpack.c.1.s8 %v2489
        %v2914 = vunpack.c.1.s8 %v2490
        %v2915 = vunpack.c.2.s8 %v2483
        %v2916 = vunpack.c.2.s8 %v2484
        %v2917 = vunpack.c.2.s8 %v2485
        %v2918 = vunpack.c.2.s8 %v2486
        %v2919 = vunpack.c.2.s8 %v2487
        %v2920 = vunpack.c.2.s8 %v2488
        %v2921 = vunpack.c.2.s8 %v2489
        %v2922 = vunpack.c.2.s8 %v2490
        %v2923 = vunpack.c.3.s8 %v2483
        %v2924 = vunpack.c.3.s8 %v2484
        %v2925 = vunpack.c.3.s8 %v2485
        %v2926 = vunpack.c.3.s8 %v2486
        %v2927 = vunpack.c.3.s8 %v2487
        %v2928 = vunpack.c.3.s8 %v2488
        %v2929 = vunpack.c.3.s8 %v2489
        %v2930 = vunpack.c.3.s8 %v2490
        %v2931 = vunpack.c.0.s8 %v2491
        %v2932 = vunpack.c.0.s8 %v2492
        %v2933 = vunpack.c.0.s8 %v2493
        %v2934 = vunpack.c.0.s8 %v2494
        %v2935 = vunpack.c.0.s8 %v2495
        %v2936 = vunpack.c.0.s8 %v2496
        %v2937 = vunpack.c.0.s8 %v2497
        %v2938 = vunpack.c.0.s8 %v2498
        %v2939 = vunpack.c.1.s8 %v2491
        %v2940 = vunpack.c.1.s8 %v2492
        %v2941 = vunpack.c.1.s8 %v2493
        %v2942 = vunpack.c.1.s8 %v2494
        %v2943 = vunpack.c.1.s8 %v2495
        %v2944 = vunpack.c.1.s8 %v2496
        %v2945 = vunpack.c.1.s8 %v2497
        %v2946 = vunpack.c.1.s8 %v2498
        %v2947 = vunpack.c.2.s8 %v2491
        %v2948 = vunpack.c.2.s8 %v2492
        %v2949 = vunpack.c.2.s8 %v2493
        %v2950 = vunpack.c.2.s8 %v2494
        %v2951 = vunpack.c.2.s8 %v2495
        %v2952 = vunpack.c.2.s8 %v2496
        %v2953 = vunpack.c.2.s8 %v2497
        %v2954 = vunpack.c.2.s8 %v2498
        %v2955 = vunpack.c.3.s8 %v2491
        %v2956 = vunpack.c.3.s8 %v2492
        %v2957 = vunpack.c.3.s8 %v2493
        %v2958 = vunpack.c.3.s8 %v2494
        %v2959 = vunpack.c.3.s8 %v2495
        %v2960 = vunpack.c.3.s8 %v2496
        %v2961 = vunpack.c.3.s8 %v2497
        %v2962 = vunpack.c.3.s8 %v2498
        %v2963 = vunpack.c.0.s8 %v2499
        %v2964 = vunpack.c.0.s8 %v2500
        %v2965 = vunpack.c.0.s8 %v2501
        %v2966 = vunpack.c.0.s8 %v2502
        %v2967 = vunpack.c.0.s8 %v2503
        %v2968 = vunpack.c.0.s8 %v2504
        %v2969 = vunpack.c.0.s8 %v2505
        %v2970 = vunpack.c.0.s8 %v2506
        %v2971 = vunpack.c.1.s8 %v2499
        %v2972 = vunpack.c.1.s8 %v2500
        %v2973 = vunpack.c.1.s8 %v2501
        %v2974 = vunpack.c.1.s8 %v2502
        %v2975 = vunpack.c.1.s8 %v2503
        %v2976 = vunpack.c.1.s8 %v2504
        %v2977 = vunpack.c.1.s8 %v2505
        %v2978 = vunpack.c.1.s8 %v2506
        %v2979 = vunpack.c.2.s8 %v2499
        %v2980 = vunpack.c.2.s8 %v2500
        %v2981 = vunpack.c.2.s8 %v2501
        %v2982 = vunpack.c.2.s8 %v2502
        %v2983 = vunpack.c.2.s8 %v2503
        %v2984 = vunpack.c.2.s8 %v2504
        %v2985 = vunpack.c.2.s8 %v2505
        %v2986 = vunpack.c.2.s8 %v2506
        %v2987 = vunpack.c.3.s8 %v2499
        %v2988 = vunpack.c.3.s8 %v2500
        %v2989 = vunpack.c.3.s8 %v2501
        %v2990 = vunpack.c.3.s8 %v2502
        %v2991 = vunpack.c.3.s8 %v2503
        %v2992 = vunpack.c.3.s8 %v2504
        %v2993 = vunpack.c.3.s8 %v2505
        %v2994 = vunpack.c.3.s8 %v2506
        %v2995 = vunpack.c.0.s8 %v2507
        %v2996 = vunpack.c.0.s8 %v2508
        %v2997 = vunpack.c.0.s8 %v2509
        %v2998 = vunpack.c.0.s8 %v2510
        %v2999 = vunpack.c.0.s8 %v2511
        %v3000 = vunpack.c.0.s8 %v2512
        %v3001 = vunpack.c.0.s8 %v2513
        %v3002 = vunpack.c.0.s8 %v2514
        %v3003 = vunpack.c.1.s8 %v2507
        %v3004 = vunpack.c.1.s8 %v2508
        %v3005 = vunpack.c.1.s8 %v2509
        %v3006 = vunpack.c.1.s8 %v2510
        %v3007 = vunpack.c.1.s8 %v2511
        %v3008 = vunpack.c.1.s8 %v2512
        %v3009 = vunpack.c.1.s8 %v2513
        %v3010 = vunpack.c.1.s8 %v2514
        %v3011 = vunpack.c.2.s8 %v2507
        %v3012 = vunpack.c.2.s8 %v2508
        %v3013 = vunpack.c.2.s8 %v2509
        %v3014 = vunpack.c.2.s8 %v2510
        %v3015 = vunpack.c.2.s8 %v2511
        %v3016 = vunpack.c.2.s8 %v2512
        %v3017 = vunpack.c.2.s8 %v2513
        %v3018 = vunpack.c.2.s8 %v2514
        %v3019 = vunpack.c.3.s8 %v2507
        %v3020 = vunpack.c.3.s8 %v2508
        %v3021 = vunpack.c.3.s8 %v2509
        %v3022 = vunpack.c.3.s8 %v2510
        %v3023 = vunpack.c.3.s8 %v2511
        %v3024 = vunpack.c.3.s8 %v2512
        %v3025 = vunpack.c.3.s8 %v2513
        %v3026 = vunpack.c.3.s8 %v2514
        %v3027 = vpack.c.b16 %v2516, %v2515
        %v3028 = vpack.c.b16 %v2518, %v2517
        %v3029 = vpack.c.b8 %v3028, %v3027
        %v3030 = vpack.c.b16 %v2520, %v2519
        %v3031 = vpack.c.b16 %v2522, %v2521
        %v3032 = vpack.c.b8 %v3031, %v3030
        %v3033 = vpack.c.b16 %v2524, %v2523
        %v3034 = vpack.c.b16 %v2526, %v2525
        %v3035 = vpack.c.b8 %v3034, %v3033
        %v3036 = vpack.c.b16 %v2528, %v2527
        %v3037 = vpack.c.b16 %v2530, %v2529
        %v3038 = vpack.c.b8 %v3037, %v3036
        %v3039 = vpack.c.b16 %v2532, %v2531
        %v3040 = vpack.c.b16 %v2534, %v2533
        %v3041 = vpack.c.b8 %v3040, %v3039
        %v3042 = vpack.c.b16 %v2536, %v2535
        %v3043 = vpack.c.b16 %v2538, %v2537
        %v3044 = vpack.c.b8 %v3043, %v3042
        %v3045 = vpack.c.b16 %v2540, %v2539
        %v3046 = vpack.c.b16 %v2542, %v2541
        %v3047 = vpack.c.b8 %v3046, %v3045
        %v3048 = vpack.c.b16 %v2544, %v2543
        %v3049 = vpack.c.b16 %v2546, %v2545
        %v3050 = vpack.c.b8 %v3049, %v3048
        %v3051 = vpack.c.b16 %v2548, %v2547
        %v3052 = vpack.c.b16 %v2550, %v2549
        %v3053 = vpack.c.b8 %v3052, %v3051
        %v3054 = vpack.c.b16 %v2552, %v2551
        %v3055 = vpack.c.b16 %v2554, %v2553
        %v3056 = vpack.c.b8 %v3055, %v3054
        %v3057 = vpack.c.b16 %v2556, %v2555
        %v3058 = vpack.c.b16 %v2558, %v2557
        %v3059 = vpack.c.b8 %v3058, %v3057
        %v3060 = vpack.c.b16 %v2560, %v2559
        %v3061 = vpack.c.b16 %v2562, %v2561
        %v3062 = vpack.c.b8 %v3061, %v3060
        %v3063 = vpack.c.b16 %v2564, %v2563
        %v3064 = vpack.c.b16 %v2566, %v2565
        %v3065 = vpack.c.b8 %v3064, %v3063
        %v3066 = vpack.c.b16 %v2568, %v2567
        %v3067 = vpack.c.b16 %v2570, %v2569
        %v3068 = vpack.c.b8 %v3067, %v3066
        %v3069 = vpack.c.b16 %v2572, %v2571
        %v3070 = vpack.c.b16 %v2574, %v2573
        %v3071 = vpack.c.b8 %v3070, %v3069
        %v3072 = vpack.c.b16 %v2576, %v2575
        %v3073 = vpack.c.b16 %v2578, %v2577
        %v3074 = vpack.c.b8 %v3073, %v3072
        %v3075 = vpack.c.b16 %v2580, %v2579
        %v3076 = vpack.c.b16 %v2582, %v2581
        %v3077 = vpack.c.b8 %v3076, %v3075
        %v3078 = vpack.c.b16 %v2584, %v2583
        %v3079 = vpack.c.b16 %v2586, %v2585
        %v3080 = vpack.c.b8 %v3079, %v3078
        %v3081 = vpack.c.b16 %v2588, %v2587
        %v3082 = vpack.c.b16 %v2590, %v2589
        %v3083 = vpack.c.b8 %v3082, %v3081
        %v3084 = vpack.c.b16 %v2592, %v2591
        %v3085 = vpack.c.b16 %v2594, %v2593
        %v3086 = vpack.c.b8 %v3085, %v3084
        %v3087 = vpack.c.b16 %v2596, %v2595
        %v3088 = vpack.c.b16 %v2598, %v2597
        %v3089 = vpack.c.b8 %v3088, %v3087
        %v3090 = vpack.c.b16 %v2600, %v2599
        %v3091 = vpack.c.b16 %v2602, %v2601
        %v3092 = vpack.c.b8 %v3091, %v3090
        %v3093 = vpack.c.b16 %v2604, %v2603
        %v3094 = vpack.c.b16 %v2606, %v2605
        %v3095 = vpack.c.b8 %v3094, %v3093
        %v3096 = vpack.c.b16 %v2608, %v2607
        %v3097 = vpack.c.b16 %v2610, %v2609
        %v3098 = vpack.c.b8 %v3097, %v3096
        %v3099 = vpack.c.b16 %v2612, %v2611
        %v3100 = vpack.c.b16 %v2614, %v2613
        %v3101 = vpack.c.b8 %v3100, %v3099
        %v3102 = vpack.c.b16 %v2616, %v2615
        %v3103 = vpack.c.b16 %v2618, %v2617
        %v3104 = vpack.c.b8 %v3103, %v3102
        %v3105 = vpack.c.b16 %v2620, %v2619
        %v3106 = vpack.c.b16 %v2622, %v2621
        %v3107 = vpack.c.b8 %v3106, %v3105
        %v3108 = vpack.c.b16 %v2624, %v2623
        %v3109 = vpack.c.b16 %v2626, %v2625
        %v3110 = vpack.c.b8 %v3109, %v3108
        %v3111 = vpack.c.b16 %v2628, %v2627
        %v3112 = vpack.c.b16 %v2630, %v2629
        %v3113 = vpack.c.b8 %v3112, %v3111
        %v3114 = vpack.c.b16 %v2632, %v2631
        %v3115 = vpack.c.b16 %v2634, %v2633
        %v3116 = vpack.c.b8 %v3115, %v3114
        %v3117 = vpack.c.b16 %v2636, %v2635
        %v3118 = vpack.c.b16 %v2638, %v2637
        %v3119 = vpack.c.b8 %v3118, %v3117
        %v3120 = vpack.c.b16 %v2640, %v2639
        %v3121 = vpack.c.b16 %v2642, %v2641
        %v3122 = vpack.c.b8 %v3121, %v3120
        %v3123 = vpack.c.b16 %v2644, %v2643
        %v3124 = vpack.c.b16 %v2646, %v2645
        %v3125 = vpack.c.b8 %v3124, %v3123
        %v3126 = vpack.c.b16 %v2648, %v2647
        %v3127 = vpack.c.b16 %v2650, %v2649
        %v3128 = vpack.c.b8 %v3127, %v3126
        %v3129 = vpack.c.b16 %v2652, %v2651
        %v3130 = vpack.c.b16 %v2654, %v2653
        %v3131 = vpack.c.b8 %v3130, %v3129
        %v3132 = vpack.c.b16 %v2656, %v2655
        %v3133 = vpack.c.b16 %v2658, %v2657
        %v3134 = vpack.c.b8 %v3133, %v3132
        %v3135 = vpack.c.b16 %v2660, %v2659
        %v3136 = vpack.c.b16 %v2662, %v2661
        %v3137 = vpack.c.b8 %v3136, %v3135
        %v3138 = vpack.c.b16 %v2664, %v2663
        %v3139 = vpack.c.b16 %v2666, %v2665
        %v3140 = vpack.c.b8 %v3139, %v3138
        %v3141 = vpack.c.b16 %v2668, %v2667
        %v3142 = vpack.c.b16 %v2670, %v2669
        %v3143 = vpack.c.b8 %v3142, %v3141
        %v3144 = vpack.c.b16 %v2672, %v2671
        %v3145 = vpack.c.b16 %v2674, %v2673
        %v3146 = vpack.c.b8 %v3145, %v3144
        %v3147 = vpack.c.b16 %v2676, %v2675
        %v3148 = vpack.c.b16 %v2678, %v2677
        %v3149 = vpack.c.b8 %v3148, %v3147
        %v3150 = vpack.c.b16 %v2680, %v2679
        %v3151 = vpack.c.b16 %v2682, %v2681
        %v3152 = vpack.c.b8 %v3151, %v3150
        %v3153 = vpack.c.b16 %v2684, %v2683
        %v3154 = vpack.c.b16 %v2686, %v2685
        %v3155 = vpack.c.b8 %v3154, %v3153
        %v3156 = vpack.c.b16 %v2688, %v2687
        %v3157 = vpack.c.b16 %v2690, %v2689
        %v3158 = vpack.c.b8 %v3157, %v3156
        %v3159 = vpack.c.b16 %v2692, %v2691
        %v3160 = vpack.c.b16 %v2694, %v2693
        %v3161 = vpack.c.b8 %v3160, %v3159
        %v3162 = vpack.c.b16 %v2696, %v2695
        %v3163 = vpack.c.b16 %v2698, %v2697
        %v3164 = vpack.c.b8 %v3163, %v3162
        %v3165 = vpack.c.b16 %v2700, %v2699
        %v3166 = vpack.c.b16 %v2702, %v2701
        %v3167 = vpack.c.b8 %v3166, %v3165
        %v3168 = vpack.c.b16 %v2704, %v2703
        %v3169 = vpack.c.b16 %v2706, %v2705
        %v3170 = vpack.c.b8 %v3169, %v3168
        %v3171 = vpack.c.b16 %v2708, %v2707
        %v3172 = vpack.c.b16 %v2710, %v2709
        %v3173 = vpack.c.b8 %v3172, %v3171
        %v3174 = vpack.c.b16 %v2712, %v2711
        %v3175 = vpack.c.b16 %v2714, %v2713
        %v3176 = vpack.c.b8 %v3175, %v3174
        %v3177 = vpack.c.b16 %v2716, %v2715
        %v3178 = vpack.c.b16 %v2718, %v2717
        %v3179 = vpack.c.b8 %v3178, %v3177
        %v3180 = vpack.c.b16 %v2720, %v2719
        %v3181 = vpack.c.b16 %v2722, %v2721
        %v3182 = vpack.c.b8 %v3181, %v3180
        %v3183 = vpack.c.b16 %v2724, %v2723
        %v3184 = vpack.c.b16 %v2726, %v2725
        %v3185 = vpack.c.b8 %v3184, %v3183
        %v3186 = vpack.c.b16 %v2728, %v2727
        %v3187 = vpack.c.b16 %v2730, %v2729
        %v3188 = vpack.c.b8 %v3187, %v3186
        %v3189 = vpack.c.b16 %v2732, %v2731
        %v3190 = vpack.c.b16 %v2734, %v2733
        %v3191 = vpack.c.b8 %v3190, %v3189
        %v3192 = vpack.c.b16 %v2736, %v2735
        %v3193 = vpack.c.b16 %v2738, %v2737
        %v3194 = vpack.c.b8 %v3193, %v3192
        %v3195 = vpack.c.b16 %v2740, %v2739
        %v3196 = vpack.c.b16 %v2742, %v2741
        %v3197 = vpack.c.b8 %v3196, %v3195
        %v3198 = vpack.c.b16 %v2744, %v2743
        %v3199 = vpack.c.b16 %v2746, %v2745
        %v3200 = vpack.c.b8 %v3199, %v3198
        %v3201 = vpack.c.b16 %v2748, %v2747
        %v3202 = vpack.c.b16 %v2750, %v2749
        %v3203 = vpack.c.b8 %v3202, %v3201
        %v3204 = vpack.c.b16 %v2752, %v2751
        %v3205 = vpack.c.b16 %v2754, %v2753
        %v3206 = vpack.c.b8 %v3205, %v3204
        %v3207 = vpack.c.b16 %v2756, %v2755
        %v3208 = vpack.c.b16 %v2758, %v2757
        %v3209 = vpack.c.b8 %v3208, %v3207
        %v3210 = vpack.c.b16 %v2760, %v2759
        %v3211 = vpack.c.b16 %v2762, %v2761
        %v3212 = vpack.c.b8 %v3211, %v3210
        %v3213 = vpack.c.b16 %v2764, %v2763
        %v3214 = vpack.c.b16 %v2766, %v2765
        %v3215 = vpack.c.b8 %v3214, %v3213
        %v3216 = vpack.c.b16 %v2768, %v2767
        %v3217 = vpack.c.b16 %v2770, %v2769
        %v3218 = vpack.c.b8 %v3217, %v3216
        %v3219 = vpack.c.b16 %v2772, %v2771
        %v3220 = vpack.c.b16 %v2774, %v2773
        %v3221 = vpack.c.b8 %v3220, %v3219
        %v3222 = vpack.c.b16 %v2776, %v2775
        %v3223 = vpack.c.b16 %v2778, %v2777
        %v3224 = vpack.c.b8 %v3223, %v3222
        %v3225 = vpack.c.b16 %v2780, %v2779
        %v3226 = vpack.c.b16 %v2782, %v2781
        %v3227 = vpack.c.b8 %v3226, %v3225
        %v3228 = vpack.c.b16 %v2784, %v2783
        %v3229 = vpack.c.b16 %v2786, %v2785
        %v3230 = vpack.c.b8 %v3229, %v3228
        %v3231 = vpack.c.b16 %v2788, %v2787
        %v3232 = vpack.c.b16 %v2790, %v2789
        %v3233 = vpack.c.b8 %v3232, %v3231
        %v3234 = vpack.c.b16 %v2792, %v2791
        %v3235 = vpack.c.b16 %v2794, %v2793
        %v3236 = vpack.c.b8 %v3235, %v3234
        %v3237 = vpack.c.b16 %v2796, %v2795
        %v3238 = vpack.c.b16 %v2798, %v2797
        %v3239 = vpack.c.b8 %v3238, %v3237
        %v3240 = vpack.c.b16 %v2800, %v2799
        %v3241 = vpack.c.b16 %v2802, %v2801
        %v3242 = vpack.c.b8 %v3241, %v3240
        %v3243 = vpack.c.b16 %v2804, %v2803
        %v3244 = vpack.c.b16 %v2806, %v2805
        %v3245 = vpack.c.b8 %v3244, %v3243
        %v3246 = vpack.c.b16 %v2808, %v2807
        %v3247 = vpack.c.b16 %v2810, %v2809
        %v3248 = vpack.c.b8 %v3247, %v3246
        %v3249 = vpack.c.b16 %v2812, %v2811
        %v3250 = vpack.c.b16 %v2814, %v2813
        %v3251 = vpack.c.b8 %v3250, %v3249
        %v3252 = vpack.c.b16 %v2816, %v2815
        %v3253 = vpack.c.b16 %v2818, %v2817
        %v3254 = vpack.c.b8 %v3253, %v3252
        %v3255 = vpack.c.b16 %v2820, %v2819
        %v3256 = vpack.c.b16 %v2822, %v2821
        %v3257 = vpack.c.b8 %v3256, %v3255
        %v3258 = vpack.c.b16 %v2824, %v2823
        %v3259 = vpack.c.b16 %v2826, %v2825
        %v3260 = vpack.c.b8 %v3259, %v3258
        %v3261 = vpack.c.b16 %v2828, %v2827
        %v3262 = vpack.c.b16 %v2830, %v2829
        %v3263 = vpack.c.b8 %v3262, %v3261
        %v3264 = vpack.c.b16 %v2832, %v2831
        %v3265 = vpack.c.b16 %v2834, %v2833
        %v3266 = vpack.c.b8 %v3265, %v3264
        %v3267 = vpack.c.b16 %v2836, %v2835
        %v3268 = vpack.c.b16 %v2838, %v2837
        %v3269 = vpack.c.b8 %v3268, %v3267
        %v3270 = vpack.c.b16 %v2840, %v2839
        %v3271 = vpack.c.b16 %v2842, %v2841
        %v3272 = vpack.c.b8 %v3271, %v3270
        %v3273 = vpack.c.b16 %v2844, %v2843
        %v3274 = vpack.c.b16 %v2846, %v2845
        %v3275 = vpack.c.b8 %v3274, %v3273
        %v3276 = vpack.c.b16 %v2848, %v2847
        %v3277 = vpack.c.b16 %v2850, %v2849
        %v3278 = vpack.c.b8 %v3277, %v3276
        %v3279 = vpack.c.b16 %v2852, %v2851
        %v3280 = vpack.c.b16 %v2854, %v2853
        %v3281 = vpack.c.b8 %v3280, %v3279
        %v3282 = vpack.c.b16 %v2856, %v2855
        %v3283 = vpack.c.b16 %v2858, %v2857
        %v3284 = vpack.c.b8 %v3283, %v3282
        %v3285 = vpack.c.b16 %v2860, %v2859
        %v3286 = vpack.c.b16 %v2862, %v2861
        %v3287 = vpack.c.b8 %v3286, %v3285
        %v3288 = vpack.c.b16 %v2864, %v2863
        %v3289 = vpack.c.b16 %v2866, %v2865
        %v3290 = vpack.c.b8 %v3289, %v3288
        %v3291 = vpack.c.b16 %v2868, %v2867
        %v3292 = vpack.c.b16 %v2870, %v2869
        %v3293 = vpack.c.b8 %v3292, %v3291
        %v3294 = vpack.c.b16 %v2872, %v2871
        %v3295 = vpack.c.b16 %v2874, %v2873
        %v3296 = vpack.c.b8 %v3295, %v3294
        %v3297 = vpack.c.b16 %v2876, %v2875
        %v3298 = vpack.c.b16 %v2878, %v2877
        %v3299 = vpack.c.b8 %v3298, %v3297
        %v3300 = vpack.c.b16 %v2880, %v2879
        %v3301 = vpack.c.b16 %v2882, %v2881
        %v3302 = vpack.c.b8 %v3301, %v3300
        %v3303 = vpack.c.b16 %v2884, %v2883
        %v3304 = vpack.c.b16 %v2886, %v2885
        %v3305 = vpack.c.b8 %v3304, %v3303
        %v3306 = vpack.c.b16 %v2888, %v2887
        %v3307 = vpack.c.b16 %v2890, %v2889
        %v3308 = vpack.c.b8 %v3307, %v3306
        %v3309 = vpack.c.b16 %v2892, %v2891
        %v3310 = vpack.c.b16 %v2894, %v2893
        %v3311 = vpack.c.b8 %v3310, %v3309
        %v3312 = vpack.c.b16 %v2896, %v2895
        %v3313 = vpack.c.b16 %v2898, %v2897
        %v3314 = vpack.c.b8 %v3313, %v3312
        %v3315 = vpack.c.b16 %v2900, %v2899
        %v3316 = vpack.c.b16 %v2902, %v2901
        %v3317 = vpack.c.b8 %v3316, %v3315
        %v3318 = vpack.c.b16 %v2904, %v2903
        %v3319 = vpack.c.b16 %v2906, %v2905
        %v3320 = vpack.c.b8 %v3319, %v3318
        %v3321 = vpack.c.b16 %v2908, %v2907
        %v3322 = vpack.c.b16 %v2910, %v2909
        %v3323 = vpack.c.b8 %v3322, %v3321
        %v3324 = vpack.c.b16 %v2912, %v2911
        %v3325 = vpack.c.b16 %v2914, %v2913
        %v3326 = vpack.c.b8 %v3325, %v3324
        %v3327 = vpack.c.b16 %v2916, %v2915
        %v3328 = vpack.c.b16 %v2918, %v2917
        %v3329 = vpack.c.b8 %v3328, %v3327
        %v3330 = vpack.c.b16 %v2920, %v2919
        %v3331 = vpack.c.b16 %v2922, %v2921
        %v3332 = vpack.c.b8 %v3331, %v3330
        %v3333 = vpack.c.b16 %v2924, %v2923
        %v3334 = vpack.c.b16 %v2926, %v2925
        %v3335 = vpack.c.b8 %v3334, %v3333
        %v3336 = vpack.c.b16 %v2928, %v2927
        %v3337 = vpack.c.b16 %v2930, %v2929
        %v3338 = vpack.c.b8 %v3337, %v3336
        %v3339 = vpack.c.b16 %v2932, %v2931
        %v3340 = vpack.c.b16 %v2934, %v2933
        %v3341 = vpack.c.b8 %v3340, %v3339
        %v3342 = vpack.c.b16 %v2936, %v2935
        %v3343 = vpack.c.b16 %v2938, %v2937
        %v3344 = vpack.c.b8 %v3343, %v3342
        %v3345 = vpack.c.b16 %v2940, %v2939
        %v3346 = vpack.c.b16 %v2942, %v2941
        %v3347 = vpack.c.b8 %v3346, %v3345
        %v3348 = vpack.c.b16 %v2944, %v2943
        %v3349 = vpack.c.b16 %v2946, %v2945
        %v3350 = vpack.c.b8 %v3349, %v3348
        %v3351 = vpack.c.b16 %v2948, %v2947
        %v3352 = vpack.c.b16 %v2950, %v2949
        %v3353 = vpack.c.b8 %v3352, %v3351
        %v3354 = vpack.c.b16 %v2952, %v2951
        %v3355 = vpack.c.b16 %v2954, %v2953
        %v3356 = vpack.c.b8 %v3355, %v3354
        %v3357 = vpack.c.b16 %v2956, %v2955
        %v3358 = vpack.c.b16 %v2958, %v2957
        %v3359 = vpack.c.b8 %v3358, %v3357
        %v3360 = vpack.c.b16 %v2960, %v2959
        %v3361 = vpack.c.b16 %v2962, %v2961
        %v3362 = vpack.c.b8 %v3361, %v3360
        %v3363 = vpack.c.b16 %v2964, %v2963
        %v3364 = vpack.c.b16 %v2966, %v2965
        %v3365 = vpack.c.b8 %v3364, %v3363
        %v3366 = vpack.c.b16 %v2968, %v2967
        %v3367 = vpack.c.b16 %v2970, %v2969
        %v3368 = vpack.c.b8 %v3367, %v3366
        %v3369 = vpack.c.b16 %v2972, %v2971
        %v3370 = vpack.c.b16 %v2974, %v2973
        %v3371 = vpack.c.b8 %v3370, %v3369
        %v3372 = vpack.c.b16 %v2976, %v2975
        %v3373 = vpack.c.b16 %v2978, %v2977
        %v3374 = vpack.c.b8 %v3373, %v3372
        %v3375 = vpack.c.b16 %v2980, %v2979
        %v3376 = vpack.c.b16 %v2982, %v2981
        %v3377 = vpack.c.b8 %v3376, %v3375
        %v3378 = vpack.c.b16 %v2984, %v2983
        %v3379 = vpack.c.b16 %v2986, %v2985
        %v3380 = vpack.c.b8 %v3379, %v3378
        %v3381 = vpack.c.b16 %v2988, %v2987
        %v3382 = vpack.c.b16 %v2990, %v2989
        %v3383 = vpack.c.b8 %v3382, %v3381
        %v3384 = vpack.c.b16 %v2992, %v2991
        %v3385 = vpack.c.b16 %v2994, %v2993
        %v3386 = vpack.c.b8 %v3385, %v3384
        %v3387 = vpack.c.b16 %v2996, %v2995
        %v3388 = vpack.c.b16 %v2998, %v2997
        %v3389 = vpack.c.b8 %v3388, %v3387
        %v3390 = vpack.c.b16 %v3000, %v2999
        %v3391 = vpack.c.b16 %v3002, %v3001
        %v3392 = vpack.c.b8 %v3391, %v3390
        %v3393 = vpack.c.b16 %v3004, %v3003
        %v3394 = vpack.c.b16 %v3006, %v3005
        %v3395 = vpack.c.b8 %v3394, %v3393
        %v3396 = vpack.c.b16 %v3008, %v3007
        %v3397 = vpack.c.b16 %v3010, %v3009
        %v3398 = vpack.c.b8 %v3397, %v3396
        %v3399 = vpack.c.b16 %v3012, %v3011
        %v3400 = vpack.c.b16 %v3014, %v3013
        %v3401 = vpack.c.b8 %v3400, %v3399
        %v3402 = vpack.c.b16 %v3016, %v3015
        %v3403 = vpack.c.b16 %v3018, %v3017
        %v3404 = vpack.c.b8 %v3403, %v3402
        %v3405 = vpack.c.b16 %v3020, %v3019
        %v3406 = vpack.c.b16 %v3022, %v3021
        %v3407 = vpack.c.b8 %v3406, %v3405
        %v3408 = vpack.c.b16 %v3024, %v3023
        %v3409 = vpack.c.b16 %v3026, %v3025
        %v3410 = vpack.c.b8 %v3409, %v3408
        %vm3411 = vnez %v3029
        %vm3412 = vnez %v3032
        %vm3413 = vnez %v3035
        %vm3414 = vnez %v3038
        %vm3415 = vnez %v3041
        %vm3416 = vnez %v3044
        %vm3417 = vnez %v3047
        %vm3418 = vnez %v3050
        %vm3419 = vnez %v3053
        %vm3420 = vnez %v3056
        %vm3421 = vnez %v3059
        %vm3422 = vnez %v3062
        %vm3423 = vnez %v3065
        %vm3424 = vnez %v3068
        %vm3425 = vnez %v3071
        %vm3426 = vnez %v3074
        %vm3427 = vnez %v3077
        %vm3428 = vnez %v3080
        %vm3429 = vnez %v3083
        %vm3430 = vnez %v3086
        %vm3431 = vnez %v3089
        %vm3432 = vnez %v3092
        %vm3433 = vnez %v3095
        %vm3434 = vnez %v3098
        %vm3435 = vnez %v3101
        %vm3436 = vnez %v3104
        %vm3437 = vnez %v3107
        %vm3438 = vnez %v3110
        %vm3439 = vnez %v3113
        %vm3440 = vnez %v3116
        %vm3441 = vnez %v3119
        %vm3442 = vnez %v3122
        %vm3443 = vnez %v3125
        %vm3444 = vnez %v3128
        %vm3445 = vnez %v3131
        %vm3446 = vnez %v3134
        %vm3447 = vnez %v3137
        %vm3448 = vnez %v3140
        %vm3449 = vnez %v3143
        %vm3450 = vnez %v3146
        %vm3451 = vnez %v3149
        %vm3452 = vnez %v3152
        %vm3453 = vnez %v3155
        %vm3454 = vnez %v3158
        %vm3455 = vnez %v3161
        %vm3456 = vnez %v3164
        %vm3457 = vnez %v3167
        %vm3458 = vnez %v3170
        %vm3459 = vnez %v3173
        %vm3460 = vnez %v3176
        %vm3461 = vnez %v3179
        %vm3462 = vnez %v3182
        %vm3463 = vnez %v3185
        %vm3464 = vnez %v3188
        %vm3465 = vnez %v3191
        %vm3466 = vnez %v3194
        %vm3467 = vnez %v3197
        %vm3468 = vnez %v3200
        %vm3469 = vnez %v3203
        %vm3470 = vnez %v3206
        %vm3471 = vnez %v3209
        %vm3472 = vnez %v3212
        %vm3473 = vnez %v3215
        %vm3474 = vnez %v3218
        %vm3475 = vnez %v3221
        %vm3476 = vnez %v3224
        %vm3477 = vnez %v3227
        %vm3478 = vnez %v3230
        %vm3479 = vnez %v3233
        %vm3480 = vnez %v3236
        %vm3481 = vnez %v3239
        %vm3482 = vnez %v3242
        %vm3483 = vnez %v3245
        %vm3484 = vnez %v3248
        %vm3485 = vnez %v3251
        %vm3486 = vnez %v3254
        %vm3487 = vnez %v3257
        %vm3488 = vnez %v3260
        %vm3489 = vnez %v3263
        %vm3490 = vnez %v3266
        %vm3491 = vnez %v3269
        %vm3492 = vnez %v3272
        %vm3493 = vnez %v3275
        %vm3494 = vnez %v3278
        %vm3495 = vnez %v3281
        %vm3496 = vnez %v3284
        %vm3497 = vnez %v3287
        %vm3498 = vnez %v3290
        %vm3499 = vnez %v3293
        %vm3500 = vnez %v3296
        %vm3501 = vnez %v3299
        %vm3502 = vnez %v3302
        %vm3503 = vnez %v3305
        %vm3504 = vnez %v3308
        %vm3505 = vnez %v3311
        %vm3506 = vnez %v3314
        %vm3507 = vnez %v3317
        %vm3508 = vnez %v3320
        %vm3509 = vnez %v3323
        %vm3510 = vnez %v3326
        %vm3511 = vnez %v3329
        %vm3512 = vnez %v3332
        %vm3513 = vnez %v3335
        %vm3514 = vnez %v3338
        %vm3515 = vnez %v3341
        %vm3516 = vnez %v3344
        %vm3517 = vnez %v3347
        %vm3518 = vnez %v3350
        %vm3519 = vnez %v3353
        %vm3520 = vnez %v3356
        %vm3521 = vnez %v3359
        %vm3522 = vnez %v3362
        %vm3523 = vnez %v3365
        %vm3524 = vnez %v3368
        %vm3525 = vnez %v3371
        %vm3526 = vnez %v3374
        %vm3527 = vnez %v3377
        %vm3528 = vnez %v3380
        %vm3529 = vnez %v3383
        %vm3530 = vnez %v3386
        %vm3531 = vnez %v3389
        %vm3532 = vnez %v3392
        %vm3533 = vnez %v3395
        %vm3534 = vnez %v3398
        %vm3535 = vnez %v3401
        %vm3536 = vnez %v3404
        %vm3537 = vnez %v3407
        %vm3538 = vnez %v3410
        %v3539 = vsel %vm3411, 16843009, 0
        %v3540 = vsel %vm3412, 16843009, 0
        %v3541 = vsel %vm3413, 16843009, 0
        %v3542 = vsel %vm3414, 16843009, 0
        %v3543 = vsel %vm3415, 16843009, 0
        %v3544 = vsel %vm3416, 16843009, 0
        %v3545 = vsel %vm3417, 16843009, 0
        %v3546 = vsel %vm3418, 16843009, 0
        %v3547 = vsel %vm3419, 16843009, 0
        %v3548 = vsel %vm3420, 16843009, 0
        %v3549 = vsel %vm3421, 16843009, 0
        %v3550 = vsel %vm3422, 16843009, 0
        %v3551 = vsel %vm3423, 16843009, 0
        %v3552 = vsel %vm3424, 16843009, 0
        %v3553 = vsel %vm3425, 16843009, 0
        %v3554 = vsel %vm3426, 16843009, 0
        %v3555 = vsel %vm3427, 16843009, 0
        %v3556 = vsel %vm3428, 16843009, 0
        %v3557 = vsel %vm3429, 16843009, 0
        %v3558 = vsel %vm3430, 16843009, 0
        %v3559 = vsel %vm3431, 16843009, 0
        %v3560 = vsel %vm3432, 16843009, 0
        %v3561 = vsel %vm3433, 16843009, 0
        %v3562 = vsel %vm3434, 16843009, 0
        %v3563 = vsel %vm3435, 16843009, 0
        %v3564 = vsel %vm3436, 16843009, 0
        %v3565 = vsel %vm3437, 16843009, 0
        %v3566 = vsel %vm3438, 16843009, 0
        %v3567 = vsel %vm3439, 16843009, 0
        %v3568 = vsel %vm3440, 16843009, 0
        %v3569 = vsel %vm3441, 16843009, 0
        %v3570 = vsel %vm3442, 16843009, 0
        %v3571 = vsel %vm3443, 16843009, 0
        %v3572 = vsel %vm3444, 16843009, 0
        %v3573 = vsel %vm3445, 16843009, 0
        %v3574 = vsel %vm3446, 16843009, 0
        %v3575 = vsel %vm3447, 16843009, 0
        %v3576 = vsel %vm3448, 16843009, 0
        %v3577 = vsel %vm3449, 16843009, 0
        %v3578 = vsel %vm3450, 16843009, 0
        %v3579 = vsel %vm3451, 16843009, 0
        %v3580 = vsel %vm3452, 16843009, 0
        %v3581 = vsel %vm3453, 16843009, 0
        %v3582 = vsel %vm3454, 16843009, 0
        %v3583 = vsel %vm3455, 16843009, 0
        %v3584 = vsel %vm3456, 16843009, 0
        %v3585 = vsel %vm3457, 16843009, 0
        %v3586 = vsel %vm3458, 16843009, 0
        %v3587 = vsel %vm3459, 16843009, 0
        %v3588 = vsel %vm3460, 16843009, 0
        %v3589 = vsel %vm3461, 16843009, 0
        %v3590 = vsel %vm3462, 16843009, 0
        %v3591 = vsel %vm3463, 16843009, 0
        %v3592 = vsel %vm3464, 16843009, 0
        %v3593 = vsel %vm3465, 16843009, 0
        %v3594 = vsel %vm3466, 16843009, 0
        %v3595 = vsel %vm3467, 16843009, 0
        %v3596 = vsel %vm3468, 16843009, 0
        %v3597 = vsel %vm3469, 16843009, 0
        %v3598 = vsel %vm3470, 16843009, 0
        %v3599 = vsel %vm3471, 16843009, 0
        %v3600 = vsel %vm3472, 16843009, 0
        %v3601 = vsel %vm3473, 16843009, 0
        %v3602 = vsel %vm3474, 16843009, 0
        %v3603 = vsel %vm3475, 16843009, 0
        %v3604 = vsel %vm3476, 16843009, 0
        %v3605 = vsel %vm3477, 16843009, 0
        %v3606 = vsel %vm3478, 16843009, 0
        %v3607 = vsel %vm3479, 16843009, 0
        %v3608 = vsel %vm3480, 16843009, 0
        %v3609 = vsel %vm3481, 16843009, 0
        %v3610 = vsel %vm3482, 16843009, 0
        %v3611 = vsel %vm3483, 16843009, 0
        %v3612 = vsel %vm3484, 16843009, 0
        %v3613 = vsel %vm3485, 16843009, 0
        %v3614 = vsel %vm3486, 16843009, 0
        %v3615 = vsel %vm3487, 16843009, 0
        %v3616 = vsel %vm3488, 16843009, 0
        %v3617 = vsel %vm3489, 16843009, 0
        %v3618 = vsel %vm3490, 16843009, 0
        %v3619 = vsel %vm3491, 16843009, 0
        %v3620 = vsel %vm3492, 16843009, 0
        %v3621 = vsel %vm3493, 16843009, 0
        %v3622 = vsel %vm3494, 16843009, 0
        %v3623 = vsel %vm3495, 16843009, 0
        %v3624 = vsel %vm3496, 16843009, 0
        %v3625 = vsel %vm3497, 16843009, 0
        %v3626 = vsel %vm3498, 16843009, 0
        %v3627 = vsel %vm3499, 16843009, 0
        %v3628 = vsel %vm3500, 16843009, 0
        %v3629 = vsel %vm3501, 16843009, 0
        %v3630 = vsel %vm3502, 16843009, 0
        %v3631 = vsel %vm3503, 16843009, 0
        %v3632 = vsel %vm3504, 16843009, 0
        %v3633 = vsel %vm3505, 16843009, 0
        %v3634 = vsel %vm3506, 16843009, 0
        %v3635 = vsel %vm3507, 16843009, 0
        %v3636 = vsel %vm3508, 16843009, 0
        %v3637 = vsel %vm3509, 16843009, 0
        %v3638 = vsel %vm3510, 16843009, 0
        %v3639 = vsel %vm3511, 16843009, 0
        %v3640 = vsel %vm3512, 16843009, 0
        %v3641 = vsel %vm3513, 16843009, 0
        %v3642 = vsel %vm3514, 16843009, 0
        %v3643 = vsel %vm3515, 16843009, 0
        %v3644 = vsel %vm3516, 16843009, 0
        %v3645 = vsel %vm3517, 16843009, 0
        %v3646 = vsel %vm3518, 16843009, 0
        %v3647 = vsel %vm3519, 16843009, 0
        %v3648 = vsel %vm3520, 16843009, 0
        %v3649 = vsel %vm3521, 16843009, 0
        %v3650 = vsel %vm3522, 16843009, 0
        %v3651 = vsel %vm3523, 16843009, 0
        %v3652 = vsel %vm3524, 16843009, 0
        %v3653 = vsel %vm3525, 16843009, 0
        %v3654 = vsel %vm3526, 16843009, 0
        %v3655 = vsel %vm3527, 16843009, 0
        %v3656 = vsel %vm3528, 16843009, 0
        %v3657 = vsel %vm3529, 16843009, 0
        %v3658 = vsel %vm3530, 16843009, 0
        %v3659 = vsel %vm3531, 16843009, 0
        %v3660 = vsel %vm3532, 16843009, 0
        %v3661 = vsel %vm3533, 16843009, 0
        %v3662 = vsel %vm3534, 16843009, 0
        %v3663 = vsel %vm3535, 16843009, 0
        %v3664 = vsel %vm3536, 16843009, 0
        %v3665 = vsel %vm3537, 16843009, 0
        %v3666 = vsel %vm3538, 16843009, 0
        %v3667 = vunpack.c.0.s8 %v3539
        %v3668 = vunpack.c.1.s8 %v3539
        %v3669 = vunpack.c.2.s8 %v3539
        %v3670 = vunpack.c.3.s8 %v3539
        %v3671 = vunpack.c.0.s8 %v3540
        %v3672 = vunpack.c.1.s8 %v3540
        %v3673 = vunpack.c.2.s8 %v3540
        %v3674 = vunpack.c.3.s8 %v3540
        %v3675 = vunpack.c.0.s8 %v3541
        %v3676 = vunpack.c.1.s8 %v3541
        %v3677 = vunpack.c.2.s8 %v3541
        %v3678 = vunpack.c.3.s8 %v3541
        %v3679 = vunpack.c.0.s8 %v3542
        %v3680 = vunpack.c.1.s8 %v3542
        %v3681 = vunpack.c.2.s8 %v3542
        %v3682 = vunpack.c.3.s8 %v3542
        %v3683 = vunpack.c.0.s8 %v3543
        %v3684 = vunpack.c.1.s8 %v3543
        %v3685 = vunpack.c.2.s8 %v3543
        %v3686 = vunpack.c.3.s8 %v3543
        %v3687 = vunpack.c.0.s8 %v3544
        %v3688 = vunpack.c.1.s8 %v3544
        %v3689 = vunpack.c.2.s8 %v3544
        %v3690 = vunpack.c.3.s8 %v3544
        %v3691 = vunpack.c.0.s8 %v3545
        %v3692 = vunpack.c.1.s8 %v3545
        %v3693 = vunpack.c.2.s8 %v3545
        %v3694 = vunpack.c.3.s8 %v3545
        %v3695 = vunpack.c.0.s8 %v3546
        %v3696 = vunpack.c.1.s8 %v3546
        %v3697 = vunpack.c.2.s8 %v3546
        %v3698 = vunpack.c.3.s8 %v3546
        %v3699 = vunpack.c.0.s8 %v3547
        %v3700 = vunpack.c.1.s8 %v3547
        %v3701 = vunpack.c.2.s8 %v3547
        %v3702 = vunpack.c.3.s8 %v3547
        %v3703 = vunpack.c.0.s8 %v3548
        %v3704 = vunpack.c.1.s8 %v3548
        %v3705 = vunpack.c.2.s8 %v3548
        %v3706 = vunpack.c.3.s8 %v3548
        %v3707 = vunpack.c.0.s8 %v3549
        %v3708 = vunpack.c.1.s8 %v3549
        %v3709 = vunpack.c.2.s8 %v3549
        %v3710 = vunpack.c.3.s8 %v3549
        %v3711 = vunpack.c.0.s8 %v3550
        %v3712 = vunpack.c.1.s8 %v3550
        %v3713 = vunpack.c.2.s8 %v3550
        %v3714 = vunpack.c.3.s8 %v3550
        %v3715 = vunpack.c.0.s8 %v3551
        %v3716 = vunpack.c.1.s8 %v3551
        %v3717 = vunpack.c.2.s8 %v3551
        %v3718 = vunpack.c.3.s8 %v3551
        %v3719 = vunpack.c.0.s8 %v3552
        %v3720 = vunpack.c.1.s8 %v3552
        %v3721 = vunpack.c.2.s8 %v3552
        %v3722 = vunpack.c.3.s8 %v3552
        %v3723 = vunpack.c.0.s8 %v3553
        %v3724 = vunpack.c.1.s8 %v3553
        %v3725 = vunpack.c.2.s8 %v3553
        %v3726 = vunpack.c.3.s8 %v3553
        %v3727 = vunpack.c.0.s8 %v3554
        %v3728 = vunpack.c.1.s8 %v3554
        %v3729 = vunpack.c.2.s8 %v3554
        %v3730 = vunpack.c.3.s8 %v3554
        %v3731 = vunpack.c.0.s8 %v3555
        %v3732 = vunpack.c.1.s8 %v3555
        %v3733 = vunpack.c.2.s8 %v3555
        %v3734 = vunpack.c.3.s8 %v3555
        %v3735 = vunpack.c.0.s8 %v3556
        %v3736 = vunpack.c.1.s8 %v3556
        %v3737 = vunpack.c.2.s8 %v3556
        %v3738 = vunpack.c.3.s8 %v3556
        %v3739 = vunpack.c.0.s8 %v3557
        %v3740 = vunpack.c.1.s8 %v3557
        %v3741 = vunpack.c.2.s8 %v3557
        %v3742 = vunpack.c.3.s8 %v3557
        %v3743 = vunpack.c.0.s8 %v3558
        %v3744 = vunpack.c.1.s8 %v3558
        %v3745 = vunpack.c.2.s8 %v3558
        %v3746 = vunpack.c.3.s8 %v3558
        %v3747 = vunpack.c.0.s8 %v3559
        %v3748 = vunpack.c.1.s8 %v3559
        %v3749 = vunpack.c.2.s8 %v3559
        %v3750 = vunpack.c.3.s8 %v3559
        %v3751 = vunpack.c.0.s8 %v3560
        %v3752 = vunpack.c.1.s8 %v3560
        %v3753 = vunpack.c.2.s8 %v3560
        %v3754 = vunpack.c.3.s8 %v3560
        %v3755 = vunpack.c.0.s8 %v3561
        %v3756 = vunpack.c.1.s8 %v3561
        %v3757 = vunpack.c.2.s8 %v3561
        %v3758 = vunpack.c.3.s8 %v3561
        %v3759 = vunpack.c.0.s8 %v3562
        %v3760 = vunpack.c.1.s8 %v3562
        %v3761 = vunpack.c.2.s8 %v3562
        %v3762 = vunpack.c.3.s8 %v3562
        %v3763 = vunpack.c.0.s8 %v3563
        %v3764 = vunpack.c.1.s8 %v3563
        %v3765 = vunpack.c.2.s8 %v3563
        %v3766 = vunpack.c.3.s8 %v3563
        %v3767 = vunpack.c.0.s8 %v3564
        %v3768 = vunpack.c.1.s8 %v3564
        %v3769 = vunpack.c.2.s8 %v3564
        %v3770 = vunpack.c.3.s8 %v3564
        %v3771 = vunpack.c.0.s8 %v3565
        %v3772 = vunpack.c.1.s8 %v3565
        %v3773 = vunpack.c.2.s8 %v3565
        %v3774 = vunpack.c.3.s8 %v3565
        %v3775 = vunpack.c.0.s8 %v3566
        %v3776 = vunpack.c.1.s8 %v3566
        %v3777 = vunpack.c.2.s8 %v3566
        %v3778 = vunpack.c.3.s8 %v3566
        %v3779 = vunpack.c.0.s8 %v3567
        %v3780 = vunpack.c.1.s8 %v3567
        %v3781 = vunpack.c.2.s8 %v3567
        %v3782 = vunpack.c.3.s8 %v3567
        %v3783 = vunpack.c.0.s8 %v3568
        %v3784 = vunpack.c.1.s8 %v3568
        %v3785 = vunpack.c.2.s8 %v3568
        %v3786 = vunpack.c.3.s8 %v3568
        %v3787 = vunpack.c.0.s8 %v3569
        %v3788 = vunpack.c.1.s8 %v3569
        %v3789 = vunpack.c.2.s8 %v3569
        %v3790 = vunpack.c.3.s8 %v3569
        %v3791 = vunpack.c.0.s8 %v3570
        %v3792 = vunpack.c.1.s8 %v3570
        %v3793 = vunpack.c.2.s8 %v3570
        %v3794 = vunpack.c.3.s8 %v3570
        %v3795 = vunpack.c.0.s8 %v3571
        %v3796 = vunpack.c.1.s8 %v3571
        %v3797 = vunpack.c.2.s8 %v3571
        %v3798 = vunpack.c.3.s8 %v3571
        %v3799 = vunpack.c.0.s8 %v3572
        %v3800 = vunpack.c.1.s8 %v3572
        %v3801 = vunpack.c.2.s8 %v3572
        %v3802 = vunpack.c.3.s8 %v3572
        %v3803 = vunpack.c.0.s8 %v3573
        %v3804 = vunpack.c.1.s8 %v3573
        %v3805 = vunpack.c.2.s8 %v3573
        %v3806 = vunpack.c.3.s8 %v3573
        %v3807 = vunpack.c.0.s8 %v3574
        %v3808 = vunpack.c.1.s8 %v3574
        %v3809 = vunpack.c.2.s8 %v3574
        %v3810 = vunpack.c.3.s8 %v3574
        %v3811 = vunpack.c.0.s8 %v3575
        %v3812 = vunpack.c.1.s8 %v3575
        %v3813 = vunpack.c.2.s8 %v3575
        %v3814 = vunpack.c.3.s8 %v3575
        %v3815 = vunpack.c.0.s8 %v3576
        %v3816 = vunpack.c.1.s8 %v3576
        %v3817 = vunpack.c.2.s8 %v3576
        %v3818 = vunpack.c.3.s8 %v3576
        %v3819 = vunpack.c.0.s8 %v3577
        %v3820 = vunpack.c.1.s8 %v3577
        %v3821 = vunpack.c.2.s8 %v3577
        %v3822 = vunpack.c.3.s8 %v3577
        %v3823 = vunpack.c.0.s8 %v3578
        %v3824 = vunpack.c.1.s8 %v3578
        %v3825 = vunpack.c.2.s8 %v3578
        %v3826 = vunpack.c.3.s8 %v3578
        %v3827 = vunpack.c.0.s8 %v3579
        %v3828 = vunpack.c.1.s8 %v3579
        %v3829 = vunpack.c.2.s8 %v3579
        %v3830 = vunpack.c.3.s8 %v3579
        %v3831 = vunpack.c.0.s8 %v3580
        %v3832 = vunpack.c.1.s8 %v3580
        %v3833 = vunpack.c.2.s8 %v3580
        %v3834 = vunpack.c.3.s8 %v3580
        %v3835 = vunpack.c.0.s8 %v3581
        %v3836 = vunpack.c.1.s8 %v3581
        %v3837 = vunpack.c.2.s8 %v3581
        %v3838 = vunpack.c.3.s8 %v3581
        %v3839 = vunpack.c.0.s8 %v3582
        %v3840 = vunpack.c.1.s8 %v3582
        %v3841 = vunpack.c.2.s8 %v3582
        %v3842 = vunpack.c.3.s8 %v3582
        %v3843 = vunpack.c.0.s8 %v3583
        %v3844 = vunpack.c.1.s8 %v3583
        %v3845 = vunpack.c.2.s8 %v3583
        %v3846 = vunpack.c.3.s8 %v3583
        %v3847 = vunpack.c.0.s8 %v3584
        %v3848 = vunpack.c.1.s8 %v3584
        %v3849 = vunpack.c.2.s8 %v3584
        %v3850 = vunpack.c.3.s8 %v3584
        %v3851 = vunpack.c.0.s8 %v3585
        %v3852 = vunpack.c.1.s8 %v3585
        %v3853 = vunpack.c.2.s8 %v3585
        %v3854 = vunpack.c.3.s8 %v3585
        %v3855 = vunpack.c.0.s8 %v3586
        %v3856 = vunpack.c.1.s8 %v3586
        %v3857 = vunpack.c.2.s8 %v3586
        %v3858 = vunpack.c.3.s8 %v3586
        %v3859 = vunpack.c.0.s8 %v3587
        %v3860 = vunpack.c.1.s8 %v3587
        %v3861 = vunpack.c.2.s8 %v3587
        %v3862 = vunpack.c.3.s8 %v3587
        %v3863 = vunpack.c.0.s8 %v3588
        %v3864 = vunpack.c.1.s8 %v3588
        %v3865 = vunpack.c.2.s8 %v3588
        %v3866 = vunpack.c.3.s8 %v3588
        %v3867 = vunpack.c.0.s8 %v3589
        %v3868 = vunpack.c.1.s8 %v3589
        %v3869 = vunpack.c.2.s8 %v3589
        %v3870 = vunpack.c.3.s8 %v3589
        %v3871 = vunpack.c.0.s8 %v3590
        %v3872 = vunpack.c.1.s8 %v3590
        %v3873 = vunpack.c.2.s8 %v3590
        %v3874 = vunpack.c.3.s8 %v3590
        %v3875 = vunpack.c.0.s8 %v3591
        %v3876 = vunpack.c.1.s8 %v3591
        %v3877 = vunpack.c.2.s8 %v3591
        %v3878 = vunpack.c.3.s8 %v3591
        %v3879 = vunpack.c.0.s8 %v3592
        %v3880 = vunpack.c.1.s8 %v3592
        %v3881 = vunpack.c.2.s8 %v3592
        %v3882 = vunpack.c.3.s8 %v3592
        %v3883 = vunpack.c.0.s8 %v3593
        %v3884 = vunpack.c.1.s8 %v3593
        %v3885 = vunpack.c.2.s8 %v3593
        %v3886 = vunpack.c.3.s8 %v3593
        %v3887 = vunpack.c.0.s8 %v3594
        %v3888 = vunpack.c.1.s8 %v3594
        %v3889 = vunpack.c.2.s8 %v3594
        %v3890 = vunpack.c.3.s8 %v3594
        %v3891 = vunpack.c.0.s8 %v3595
        %v3892 = vunpack.c.1.s8 %v3595
        %v3893 = vunpack.c.2.s8 %v3595
        %v3894 = vunpack.c.3.s8 %v3595
        %v3895 = vunpack.c.0.s8 %v3596
        %v3896 = vunpack.c.1.s8 %v3596
        %v3897 = vunpack.c.2.s8 %v3596
        %v3898 = vunpack.c.3.s8 %v3596
        %v3899 = vunpack.c.0.s8 %v3597
        %v3900 = vunpack.c.1.s8 %v3597
        %v3901 = vunpack.c.2.s8 %v3597
        %v3902 = vunpack.c.3.s8 %v3597
        %v3903 = vunpack.c.0.s8 %v3598
        %v3904 = vunpack.c.1.s8 %v3598
        %v3905 = vunpack.c.2.s8 %v3598
        %v3906 = vunpack.c.3.s8 %v3598
        %v3907 = vunpack.c.0.s8 %v3599
        %v3908 = vunpack.c.1.s8 %v3599
        %v3909 = vunpack.c.2.s8 %v3599
        %v3910 = vunpack.c.3.s8 %v3599
        %v3911 = vunpack.c.0.s8 %v3600
        %v3912 = vunpack.c.1.s8 %v3600
        %v3913 = vunpack.c.2.s8 %v3600
        %v3914 = vunpack.c.3.s8 %v3600
        %v3915 = vunpack.c.0.s8 %v3601
        %v3916 = vunpack.c.1.s8 %v3601
        %v3917 = vunpack.c.2.s8 %v3601
        %v3918 = vunpack.c.3.s8 %v3601
        %v3919 = vunpack.c.0.s8 %v3602
        %v3920 = vunpack.c.1.s8 %v3602
        %v3921 = vunpack.c.2.s8 %v3602
        %v3922 = vunpack.c.3.s8 %v3602
        %v3923 = vunpack.c.0.s8 %v3603
        %v3924 = vunpack.c.1.s8 %v3603
        %v3925 = vunpack.c.2.s8 %v3603
        %v3926 = vunpack.c.3.s8 %v3603
        %v3927 = vunpack.c.0.s8 %v3604
        %v3928 = vunpack.c.1.s8 %v3604
        %v3929 = vunpack.c.2.s8 %v3604
        %v3930 = vunpack.c.3.s8 %v3604
        %v3931 = vunpack.c.0.s8 %v3605
        %v3932 = vunpack.c.1.s8 %v3605
        %v3933 = vunpack.c.2.s8 %v3605
        %v3934 = vunpack.c.3.s8 %v3605
        %v3935 = vunpack.c.0.s8 %v3606
        %v3936 = vunpack.c.1.s8 %v3606
        %v3937 = vunpack.c.2.s8 %v3606
        %v3938 = vunpack.c.3.s8 %v3606
        %v3939 = vunpack.c.0.s8 %v3607
        %v3940 = vunpack.c.1.s8 %v3607
        %v3941 = vunpack.c.2.s8 %v3607
        %v3942 = vunpack.c.3.s8 %v3607
        %v3943 = vunpack.c.0.s8 %v3608
        %v3944 = vunpack.c.1.s8 %v3608
        %v3945 = vunpack.c.2.s8 %v3608
        %v3946 = vunpack.c.3.s8 %v3608
        %v3947 = vunpack.c.0.s8 %v3609
        %v3948 = vunpack.c.1.s8 %v3609
        %v3949 = vunpack.c.2.s8 %v3609
        %v3950 = vunpack.c.3.s8 %v3609
        %v3951 = vunpack.c.0.s8 %v3610
        %v3952 = vunpack.c.1.s8 %v3610
        %v3953 = vunpack.c.2.s8 %v3610
        %v3954 = vunpack.c.3.s8 %v3610
        %v3955 = vunpack.c.0.s8 %v3611
        %v3956 = vunpack.c.1.s8 %v3611
        %v3957 = vunpack.c.2.s8 %v3611
        %v3958 = vunpack.c.3.s8 %v3611
        %v3959 = vunpack.c.0.s8 %v3612
        %v3960 = vunpack.c.1.s8 %v3612
        %v3961 = vunpack.c.2.s8 %v3612
        %v3962 = vunpack.c.3.s8 %v3612
        %v3963 = vunpack.c.0.s8 %v3613
        %v3964 = vunpack.c.1.s8 %v3613
        %v3965 = vunpack.c.2.s8 %v3613
        %v3966 = vunpack.c.3.s8 %v3613
        %v3967 = vunpack.c.0.s8 %v3614
        %v3968 = vunpack.c.1.s8 %v3614
        %v3969 = vunpack.c.2.s8 %v3614
        %v3970 = vunpack.c.3.s8 %v3614
        %v3971 = vunpack.c.0.s8 %v3615
        %v3972 = vunpack.c.1.s8 %v3615
        %v3973 = vunpack.c.2.s8 %v3615
        %v3974 = vunpack.c.3.s8 %v3615
        %v3975 = vunpack.c.0.s8 %v3616
        %v3976 = vunpack.c.1.s8 %v3616
        %v3977 = vunpack.c.2.s8 %v3616
        %v3978 = vunpack.c.3.s8 %v3616
        %v3979 = vunpack.c.0.s8 %v3617
        %v3980 = vunpack.c.1.s8 %v3617
        %v3981 = vunpack.c.2.s8 %v3617
        %v3982 = vunpack.c.3.s8 %v3617
        %v3983 = vunpack.c.0.s8 %v3618
        %v3984 = vunpack.c.1.s8 %v3618
        %v3985 = vunpack.c.2.s8 %v3618
        %v3986 = vunpack.c.3.s8 %v3618
        %v3987 = vunpack.c.0.s8 %v3619
        %v3988 = vunpack.c.1.s8 %v3619
        %v3989 = vunpack.c.2.s8 %v3619
        %v3990 = vunpack.c.3.s8 %v3619
        %v3991 = vunpack.c.0.s8 %v3620
        %v3992 = vunpack.c.1.s8 %v3620
        %v3993 = vunpack.c.2.s8 %v3620
        %v3994 = vunpack.c.3.s8 %v3620
        %v3995 = vunpack.c.0.s8 %v3621
        %v3996 = vunpack.c.1.s8 %v3621
        %v3997 = vunpack.c.2.s8 %v3621
        %v3998 = vunpack.c.3.s8 %v3621
        %v3999 = vunpack.c.0.s8 %v3622
        %v4000 = vunpack.c.1.s8 %v3622
        %v4001 = vunpack.c.2.s8 %v3622
        %v4002 = vunpack.c.3.s8 %v3622
        %v4003 = vunpack.c.0.s8 %v3623
        %v4004 = vunpack.c.1.s8 %v3623
        %v4005 = vunpack.c.2.s8 %v3623
        %v4006 = vunpack.c.3.s8 %v3623
        %v4007 = vunpack.c.0.s8 %v3624
        %v4008 = vunpack.c.1.s8 %v3624
        %v4009 = vunpack.c.2.s8 %v3624
        %v4010 = vunpack.c.3.s8 %v3624
        %v4011 = vunpack.c.0.s8 %v3625
        %v4012 = vunpack.c.1.s8 %v3625
        %v4013 = vunpack.c.2.s8 %v3625
        %v4014 = vunpack.c.3.s8 %v3625
        %v4015 = vunpack.c.0.s8 %v3626
        %v4016 = vunpack.c.1.s8 %v3626
        %v4017 = vunpack.c.2.s8 %v3626
        %v4018 = vunpack.c.3.s8 %v3626
        %v4019 = vunpack.c.0.s8 %v3627
        %v4020 = vunpack.c.1.s8 %v3627
        %v4021 = vunpack.c.2.s8 %v3627
        %v4022 = vunpack.c.3.s8 %v3627
        %v4023 = vunpack.c.0.s8 %v3628
        %v4024 = vunpack.c.1.s8 %v3628
        %v4025 = vunpack.c.2.s8 %v3628
        %v4026 = vunpack.c.3.s8 %v3628
        %v4027 = vunpack.c.0.s8 %v3629
        %v4028 = vunpack.c.1.s8 %v3629
        %v4029 = vunpack.c.2.s8 %v3629
        %v4030 = vunpack.c.3.s8 %v3629
        %v4031 = vunpack.c.0.s8 %v3630
        %v4032 = vunpack.c.1.s8 %v3630
        %v4033 = vunpack.c.2.s8 %v3630
        %v4034 = vunpack.c.3.s8 %v3630
        %v4035 = vunpack.c.0.s8 %v3631
        %v4036 = vunpack.c.1.s8 %v3631
        %v4037 = vunpack.c.2.s8 %v3631
        %v4038 = vunpack.c.3.s8 %v3631
        %v4039 = vunpack.c.0.s8 %v3632
        %v4040 = vunpack.c.1.s8 %v3632
        %v4041 = vunpack.c.2.s8 %v3632
        %v4042 = vunpack.c.3.s8 %v3632
        %v4043 = vunpack.c.0.s8 %v3633
        %v4044 = vunpack.c.1.s8 %v3633
        %v4045 = vunpack.c.2.s8 %v3633
        %v4046 = vunpack.c.3.s8 %v3633
        %v4047 = vunpack.c.0.s8 %v3634
        %v4048 = vunpack.c.1.s8 %v3634
        %v4049 = vunpack.c.2.s8 %v3634
        %v4050 = vunpack.c.3.s8 %v3634
        %v4051 = vunpack.c.0.s8 %v3635
        %v4052 = vunpack.c.1.s8 %v3635
        %v4053 = vunpack.c.2.s8 %v3635
        %v4054 = vunpack.c.3.s8 %v3635
        %v4055 = vunpack.c.0.s8 %v3636
        %v4056 = vunpack.c.1.s8 %v3636
        %v4057 = vunpack.c.2.s8 %v3636
        %v4058 = vunpack.c.3.s8 %v3636
        %v4059 = vunpack.c.0.s8 %v3637
        %v4060 = vunpack.c.1.s8 %v3637
        %v4061 = vunpack.c.2.s8 %v3637
        %v4062 = vunpack.c.3.s8 %v3637
        %v4063 = vunpack.c.0.s8 %v3638
        %v4064 = vunpack.c.1.s8 %v3638
        %v4065 = vunpack.c.2.s8 %v3638
        %v4066 = vunpack.c.3.s8 %v3638
        %v4067 = vunpack.c.0.s8 %v3639
        %v4068 = vunpack.c.1.s8 %v3639
        %v4069 = vunpack.c.2.s8 %v3639
        %v4070 = vunpack.c.3.s8 %v3639
        %v4071 = vunpack.c.0.s8 %v3640
        %v4072 = vunpack.c.1.s8 %v3640
        %v4073 = vunpack.c.2.s8 %v3640
        %v4074 = vunpack.c.3.s8 %v3640
        %v4075 = vunpack.c.0.s8 %v3641
        %v4076 = vunpack.c.1.s8 %v3641
        %v4077 = vunpack.c.2.s8 %v3641
        %v4078 = vunpack.c.3.s8 %v3641
        %v4079 = vunpack.c.0.s8 %v3642
        %v4080 = vunpack.c.1.s8 %v3642
        %v4081 = vunpack.c.2.s8 %v3642
        %v4082 = vunpack.c.3.s8 %v3642
        %v4083 = vunpack.c.0.s8 %v3643
        %v4084 = vunpack.c.1.s8 %v3643
        %v4085 = vunpack.c.2.s8 %v3643
        %v4086 = vunpack.c.3.s8 %v3643
        %v4087 = vunpack.c.0.s8 %v3644
        %v4088 = vunpack.c.1.s8 %v3644
        %v4089 = vunpack.c.2.s8 %v3644
        %v4090 = vunpack.c.3.s8 %v3644
        %v4091 = vunpack.c.0.s8 %v3645
        %v4092 = vunpack.c.1.s8 %v3645
        %v4093 = vunpack.c.2.s8 %v3645
        %v4094 = vunpack.c.3.s8 %v3645
        %v4095 = vunpack.c.0.s8 %v3646
        %v4096 = vunpack.c.1.s8 %v3646
        %v4097 = vunpack.c.2.s8 %v3646
        %v4098 = vunpack.c.3.s8 %v3646
        %v4099 = vunpack.c.0.s8 %v3647
        %v4100 = vunpack.c.1.s8 %v3647
        %v4101 = vunpack.c.2.s8 %v3647
        %v4102 = vunpack.c.3.s8 %v3647
        %v4103 = vunpack.c.0.s8 %v3648
        %v4104 = vunpack.c.1.s8 %v3648
        %v4105 = vunpack.c.2.s8 %v3648
        %v4106 = vunpack.c.3.s8 %v3648
        %v4107 = vunpack.c.0.s8 %v3649
        %v4108 = vunpack.c.1.s8 %v3649
        %v4109 = vunpack.c.2.s8 %v3649
        %v4110 = vunpack.c.3.s8 %v3649
        %v4111 = vunpack.c.0.s8 %v3650
        %v4112 = vunpack.c.1.s8 %v3650
        %v4113 = vunpack.c.2.s8 %v3650
        %v4114 = vunpack.c.3.s8 %v3650
        %v4115 = vunpack.c.0.s8 %v3651
        %v4116 = vunpack.c.1.s8 %v3651
        %v4117 = vunpack.c.2.s8 %v3651
        %v4118 = vunpack.c.3.s8 %v3651
        %v4119 = vunpack.c.0.s8 %v3652
        %v4120 = vunpack.c.1.s8 %v3652
        %v4121 = vunpack.c.2.s8 %v3652
        %v4122 = vunpack.c.3.s8 %v3652
        %v4123 = vunpack.c.0.s8 %v3653
        %v4124 = vunpack.c.1.s8 %v3653
        %v4125 = vunpack.c.2.s8 %v3653
        %v4126 = vunpack.c.3.s8 %v3653
        %v4127 = vunpack.c.0.s8 %v3654
        %v4128 = vunpack.c.1.s8 %v3654
        %v4129 = vunpack.c.2.s8 %v3654
        %v4130 = vunpack.c.3.s8 %v3654
        %v4131 = vunpack.c.0.s8 %v3655
        %v4132 = vunpack.c.1.s8 %v3655
        %v4133 = vunpack.c.2.s8 %v3655
        %v4134 = vunpack.c.3.s8 %v3655
        %v4135 = vunpack.c.0.s8 %v3656
        %v4136 = vunpack.c.1.s8 %v3656
        %v4137 = vunpack.c.2.s8 %v3656
        %v4138 = vunpack.c.3.s8 %v3656
        %v4139 = vunpack.c.0.s8 %v3657
        %v4140 = vunpack.c.1.s8 %v3657
        %v4141 = vunpack.c.2.s8 %v3657
        %v4142 = vunpack.c.3.s8 %v3657
        %v4143 = vunpack.c.0.s8 %v3658
        %v4144 = vunpack.c.1.s8 %v3658
        %v4145 = vunpack.c.2.s8 %v3658
        %v4146 = vunpack.c.3.s8 %v3658
        %v4147 = vunpack.c.0.s8 %v3659
        %v4148 = vunpack.c.1.s8 %v3659
        %v4149 = vunpack.c.2.s8 %v3659
        %v4150 = vunpack.c.3.s8 %v3659
        %v4151 = vunpack.c.0.s8 %v3660
        %v4152 = vunpack.c.1.s8 %v3660
        %v4153 = vunpack.c.2.s8 %v3660
        %v4154 = vunpack.c.3.s8 %v3660
        %v4155 = vunpack.c.0.s8 %v3661
        %v4156 = vunpack.c.1.s8 %v3661
        %v4157 = vunpack.c.2.s8 %v3661
        %v4158 = vunpack.c.3.s8 %v3661
        %v4159 = vunpack.c.0.s8 %v3662
        %v4160 = vunpack.c.1.s8 %v3662
        %v4161 = vunpack.c.2.s8 %v3662
        %v4162 = vunpack.c.3.s8 %v3662
        %v4163 = vunpack.c.0.s8 %v3663
        %v4164 = vunpack.c.1.s8 %v3663
        %v4165 = vunpack.c.2.s8 %v3663
        %v4166 = vunpack.c.3.s8 %v3663
        %v4167 = vunpack.c.0.s8 %v3664
        %v4168 = vunpack.c.1.s8 %v3664
        %v4169 = vunpack.c.2.s8 %v3664
        %v4170 = vunpack.c.3.s8 %v3664
        %v4171 = vunpack.c.0.s8 %v3665
        %v4172 = vunpack.c.1.s8 %v3665
        %v4173 = vunpack.c.2.s8 %v3665
        %v4174 = vunpack.c.3.s8 %v3665
        %v4175 = vunpack.c.0.s8 %v3666
        %v4176 = vunpack.c.1.s8 %v3666
        %v4177 = vunpack.c.2.s8 %v3666
        %v4178 = vunpack.c.3.s8 %v3666
        %vm4179 = vcmp.ne.s32.totalorder %v3667, 0
        %vm4180 = vcmp.ne.s32.totalorder %v3668, 0
        %vm4181 = vcmp.ne.s32.totalorder %v3669, 0
        %vm4182 = vcmp.ne.s32.totalorder %v3670, 0
        %vm4183 = vcmp.ne.s32.totalorder %v3671, 0
        %vm4184 = vcmp.ne.s32.totalorder %v3672, 0
        %vm4185 = vcmp.ne.s32.totalorder %v3673, 0
        %vm4186 = vcmp.ne.s32.totalorder %v3674, 0
        %vm4187 = vcmp.ne.s32.totalorder %v3675, 0
        %vm4188 = vcmp.ne.s32.totalorder %v3676, 0
        %vm4189 = vcmp.ne.s32.totalorder %v3677, 0
        %vm4190 = vcmp.ne.s32.totalorder %v3678, 0
        %vm4191 = vcmp.ne.s32.totalorder %v3679, 0
        %vm4192 = vcmp.ne.s32.totalorder %v3680, 0
        %vm4193 = vcmp.ne.s32.totalorder %v3681, 0
        %vm4194 = vcmp.ne.s32.totalorder %v3682, 0
        %vm4195 = vcmp.ne.s32.totalorder %v3683, 0
        %vm4196 = vcmp.ne.s32.totalorder %v3684, 0
        %vm4197 = vcmp.ne.s32.totalorder %v3685, 0
        %vm4198 = vcmp.ne.s32.totalorder %v3686, 0
        %vm4199 = vcmp.ne.s32.totalorder %v3687, 0
        %vm4200 = vcmp.ne.s32.totalorder %v3688, 0
        %vm4201 = vcmp.ne.s32.totalorder %v3689, 0
        %vm4202 = vcmp.ne.s32.totalorder %v3690, 0
        %vm4203 = vcmp.ne.s32.totalorder %v3691, 0
        %vm4204 = vcmp.ne.s32.totalorder %v3692, 0
        %vm4205 = vcmp.ne.s32.totalorder %v3693, 0
        %vm4206 = vcmp.ne.s32.totalorder %v3694, 0
        %vm4207 = vcmp.ne.s32.totalorder %v3695, 0
        %vm4208 = vcmp.ne.s32.totalorder %v3696, 0
        %vm4209 = vcmp.ne.s32.totalorder %v3697, 0
        %vm4210 = vcmp.ne.s32.totalorder %v3698, 0
        %vm4211 = vcmp.ne.s32.totalorder %v3699, 0
        %vm4212 = vcmp.ne.s32.totalorder %v3700, 0
        %vm4213 = vcmp.ne.s32.totalorder %v3701, 0
        %vm4214 = vcmp.ne.s32.totalorder %v3702, 0
        %vm4215 = vcmp.ne.s32.totalorder %v3703, 0
        %vm4216 = vcmp.ne.s32.totalorder %v3704, 0
        %vm4217 = vcmp.ne.s32.totalorder %v3705, 0
        %vm4218 = vcmp.ne.s32.totalorder %v3706, 0
        %vm4219 = vcmp.ne.s32.totalorder %v3707, 0
        %vm4220 = vcmp.ne.s32.totalorder %v3708, 0
        %vm4221 = vcmp.ne.s32.totalorder %v3709, 0
        %vm4222 = vcmp.ne.s32.totalorder %v3710, 0
        %vm4223 = vcmp.ne.s32.totalorder %v3711, 0
        %vm4224 = vcmp.ne.s32.totalorder %v3712, 0
        %vm4225 = vcmp.ne.s32.totalorder %v3713, 0
        %vm4226 = vcmp.ne.s32.totalorder %v3714, 0
        %vm4227 = vcmp.ne.s32.totalorder %v3715, 0
        %vm4228 = vcmp.ne.s32.totalorder %v3716, 0
        %vm4229 = vcmp.ne.s32.totalorder %v3717, 0
        %vm4230 = vcmp.ne.s32.totalorder %v3718, 0
        %vm4231 = vcmp.ne.s32.totalorder %v3719, 0
        %vm4232 = vcmp.ne.s32.totalorder %v3720, 0
        %vm4233 = vcmp.ne.s32.totalorder %v3721, 0
        %vm4234 = vcmp.ne.s32.totalorder %v3722, 0
        %vm4235 = vcmp.ne.s32.totalorder %v3723, 0
        %vm4236 = vcmp.ne.s32.totalorder %v3724, 0
        %vm4237 = vcmp.ne.s32.totalorder %v3725, 0
        %vm4238 = vcmp.ne.s32.totalorder %v3726, 0
        %vm4239 = vcmp.ne.s32.totalorder %v3727, 0
        %vm4240 = vcmp.ne.s32.totalorder %v3728, 0
        %vm4241 = vcmp.ne.s32.totalorder %v3729, 0
        %vm4242 = vcmp.ne.s32.totalorder %v3730, 0
        %vm4243 = vcmp.ne.s32.totalorder %v3731, 0
        %vm4244 = vcmp.ne.s32.totalorder %v3732, 0
        %vm4245 = vcmp.ne.s32.totalorder %v3733, 0
        %vm4246 = vcmp.ne.s32.totalorder %v3734, 0
        %vm4247 = vcmp.ne.s32.totalorder %v3735, 0
        %vm4248 = vcmp.ne.s32.totalorder %v3736, 0
        %vm4249 = vcmp.ne.s32.totalorder %v3737, 0
        %vm4250 = vcmp.ne.s32.totalorder %v3738, 0
        %vm4251 = vcmp.ne.s32.totalorder %v3739, 0
        %vm4252 = vcmp.ne.s32.totalorder %v3740, 0
        %vm4253 = vcmp.ne.s32.totalorder %v3741, 0
        %vm4254 = vcmp.ne.s32.totalorder %v3742, 0
        %vm4255 = vcmp.ne.s32.totalorder %v3743, 0
        %vm4256 = vcmp.ne.s32.totalorder %v3744, 0
        %vm4257 = vcmp.ne.s32.totalorder %v3745, 0
        %vm4258 = vcmp.ne.s32.totalorder %v3746, 0
        %vm4259 = vcmp.ne.s32.totalorder %v3747, 0
        %vm4260 = vcmp.ne.s32.totalorder %v3748, 0
        %vm4261 = vcmp.ne.s32.totalorder %v3749, 0
        %vm4262 = vcmp.ne.s32.totalorder %v3750, 0
        %vm4263 = vcmp.ne.s32.totalorder %v3751, 0
        %vm4264 = vcmp.ne.s32.totalorder %v3752, 0
        %vm4265 = vcmp.ne.s32.totalorder %v3753, 0
        %vm4266 = vcmp.ne.s32.totalorder %v3754, 0
        %vm4267 = vcmp.ne.s32.totalorder %v3755, 0
        %vm4268 = vcmp.ne.s32.totalorder %v3756, 0
        %vm4269 = vcmp.ne.s32.totalorder %v3757, 0
        %vm4270 = vcmp.ne.s32.totalorder %v3758, 0
        %vm4271 = vcmp.ne.s32.totalorder %v3759, 0
        %vm4272 = vcmp.ne.s32.totalorder %v3760, 0
        %vm4273 = vcmp.ne.s32.totalorder %v3761, 0
        %vm4274 = vcmp.ne.s32.totalorder %v3762, 0
        %vm4275 = vcmp.ne.s32.totalorder %v3763, 0
        %vm4276 = vcmp.ne.s32.totalorder %v3764, 0
        %vm4277 = vcmp.ne.s32.totalorder %v3765, 0
        %vm4278 = vcmp.ne.s32.totalorder %v3766, 0
        %vm4279 = vcmp.ne.s32.totalorder %v3767, 0
        %vm4280 = vcmp.ne.s32.totalorder %v3768, 0
        %vm4281 = vcmp.ne.s32.totalorder %v3769, 0
        %vm4282 = vcmp.ne.s32.totalorder %v3770, 0
        %vm4283 = vcmp.ne.s32.totalorder %v3771, 0
        %vm4284 = vcmp.ne.s32.totalorder %v3772, 0
        %vm4285 = vcmp.ne.s32.totalorder %v3773, 0
        %vm4286 = vcmp.ne.s32.totalorder %v3774, 0
        %vm4287 = vcmp.ne.s32.totalorder %v3775, 0
        %vm4288 = vcmp.ne.s32.totalorder %v3776, 0
        %vm4289 = vcmp.ne.s32.totalorder %v3777, 0
        %vm4290 = vcmp.ne.s32.totalorder %v3778, 0
        %vm4291 = vcmp.ne.s32.totalorder %v3779, 0
        %vm4292 = vcmp.ne.s32.totalorder %v3780, 0
        %vm4293 = vcmp.ne.s32.totalorder %v3781, 0
        %vm4294 = vcmp.ne.s32.totalorder %v3782, 0
        %vm4295 = vcmp.ne.s32.totalorder %v3783, 0
        %vm4296 = vcmp.ne.s32.totalorder %v3784, 0
        %vm4297 = vcmp.ne.s32.totalorder %v3785, 0
        %vm4298 = vcmp.ne.s32.totalorder %v3786, 0
        %vm4299 = vcmp.ne.s32.totalorder %v3787, 0
        %vm4300 = vcmp.ne.s32.totalorder %v3788, 0
        %vm4301 = vcmp.ne.s32.totalorder %v3789, 0
        %vm4302 = vcmp.ne.s32.totalorder %v3790, 0
        %vm4303 = vcmp.ne.s32.totalorder %v3791, 0
        %vm4304 = vcmp.ne.s32.totalorder %v3792, 0
        %vm4305 = vcmp.ne.s32.totalorder %v3793, 0
        %vm4306 = vcmp.ne.s32.totalorder %v3794, 0
        %vm4307 = vcmp.ne.s32.totalorder %v3795, 0
        %vm4308 = vcmp.ne.s32.totalorder %v3796, 0
        %vm4309 = vcmp.ne.s32.totalorder %v3797, 0
        %vm4310 = vcmp.ne.s32.totalorder %v3798, 0
        %vm4311 = vcmp.ne.s32.totalorder %v3799, 0
        %vm4312 = vcmp.ne.s32.totalorder %v3800, 0
        %vm4313 = vcmp.ne.s32.totalorder %v3801, 0
        %vm4314 = vcmp.ne.s32.totalorder %v3802, 0
        %vm4315 = vcmp.ne.s32.totalorder %v3803, 0
        %vm4316 = vcmp.ne.s32.totalorder %v3804, 0
        %vm4317 = vcmp.ne.s32.totalorder %v3805, 0
        %vm4318 = vcmp.ne.s32.totalorder %v3806, 0
        %vm4319 = vcmp.ne.s32.totalorder %v3807, 0
        %vm4320 = vcmp.ne.s32.totalorder %v3808, 0
        %vm4321 = vcmp.ne.s32.totalorder %v3809, 0
        %vm4322 = vcmp.ne.s32.totalorder %v3810, 0
        %vm4323 = vcmp.ne.s32.totalorder %v3811, 0
        %vm4324 = vcmp.ne.s32.totalorder %v3812, 0
        %vm4325 = vcmp.ne.s32.totalorder %v3813, 0
        %vm4326 = vcmp.ne.s32.totalorder %v3814, 0
        %vm4327 = vcmp.ne.s32.totalorder %v3815, 0
        %vm4328 = vcmp.ne.s32.totalorder %v3816, 0
        %vm4329 = vcmp.ne.s32.totalorder %v3817, 0
        %vm4330 = vcmp.ne.s32.totalorder %v3818, 0
        %vm4331 = vcmp.ne.s32.totalorder %v3819, 0
        %vm4332 = vcmp.ne.s32.totalorder %v3820, 0
        %vm4333 = vcmp.ne.s32.totalorder %v3821, 0
        %vm4334 = vcmp.ne.s32.totalorder %v3822, 0
        %vm4335 = vcmp.ne.s32.totalorder %v3823, 0
        %vm4336 = vcmp.ne.s32.totalorder %v3824, 0
        %vm4337 = vcmp.ne.s32.totalorder %v3825, 0
        %vm4338 = vcmp.ne.s32.totalorder %v3826, 0
        %vm4339 = vcmp.ne.s32.totalorder %v3827, 0
        %vm4340 = vcmp.ne.s32.totalorder %v3828, 0
        %vm4341 = vcmp.ne.s32.totalorder %v3829, 0
        %vm4342 = vcmp.ne.s32.totalorder %v3830, 0
        %vm4343 = vcmp.ne.s32.totalorder %v3831, 0
        %vm4344 = vcmp.ne.s32.totalorder %v3832, 0
        %vm4345 = vcmp.ne.s32.totalorder %v3833, 0
        %vm4346 = vcmp.ne.s32.totalorder %v3834, 0
        %vm4347 = vcmp.ne.s32.totalorder %v3835, 0
        %vm4348 = vcmp.ne.s32.totalorder %v3836, 0
        %vm4349 = vcmp.ne.s32.totalorder %v3837, 0
        %vm4350 = vcmp.ne.s32.totalorder %v3838, 0
        %vm4351 = vcmp.ne.s32.totalorder %v3839, 0
        %vm4352 = vcmp.ne.s32.totalorder %v3840, 0
        %vm4353 = vcmp.ne.s32.totalorder %v3841, 0
        %vm4354 = vcmp.ne.s32.totalorder %v3842, 0
        %vm4355 = vcmp.ne.s32.totalorder %v3843, 0
        %vm4356 = vcmp.ne.s32.totalorder %v3844, 0
        %vm4357 = vcmp.ne.s32.totalorder %v3845, 0
        %vm4358 = vcmp.ne.s32.totalorder %v3846, 0
        %vm4359 = vcmp.ne.s32.totalorder %v3847, 0
        %vm4360 = vcmp.ne.s32.totalorder %v3848, 0
        %vm4361 = vcmp.ne.s32.totalorder %v3849, 0
        %vm4362 = vcmp.ne.s32.totalorder %v3850, 0
        %vm4363 = vcmp.ne.s32.totalorder %v3851, 0
        %vm4364 = vcmp.ne.s32.totalorder %v3852, 0
        %vm4365 = vcmp.ne.s32.totalorder %v3853, 0
        %vm4366 = vcmp.ne.s32.totalorder %v3854, 0
        %vm4367 = vcmp.ne.s32.totalorder %v3855, 0
        %vm4368 = vcmp.ne.s32.totalorder %v3856, 0
        %vm4369 = vcmp.ne.s32.totalorder %v3857, 0
        %vm4370 = vcmp.ne.s32.totalorder %v3858, 0
        %vm4371 = vcmp.ne.s32.totalorder %v3859, 0
        %vm4372 = vcmp.ne.s32.totalorder %v3860, 0
        %vm4373 = vcmp.ne.s32.totalorder %v3861, 0
        %vm4374 = vcmp.ne.s32.totalorder %v3862, 0
        %vm4375 = vcmp.ne.s32.totalorder %v3863, 0
        %vm4376 = vcmp.ne.s32.totalorder %v3864, 0
        %vm4377 = vcmp.ne.s32.totalorder %v3865, 0
        %vm4378 = vcmp.ne.s32.totalorder %v3866, 0
        %vm4379 = vcmp.ne.s32.totalorder %v3867, 0
        %vm4380 = vcmp.ne.s32.totalorder %v3868, 0
        %vm4381 = vcmp.ne.s32.totalorder %v3869, 0
        %vm4382 = vcmp.ne.s32.totalorder %v3870, 0
        %vm4383 = vcmp.ne.s32.totalorder %v3871, 0
        %vm4384 = vcmp.ne.s32.totalorder %v3872, 0
        %vm4385 = vcmp.ne.s32.totalorder %v3873, 0
        %vm4386 = vcmp.ne.s32.totalorder %v3874, 0
        %vm4387 = vcmp.ne.s32.totalorder %v3875, 0
        %vm4388 = vcmp.ne.s32.totalorder %v3876, 0
        %vm4389 = vcmp.ne.s32.totalorder %v3877, 0
        %vm4390 = vcmp.ne.s32.totalorder %v3878, 0
        %vm4391 = vcmp.ne.s32.totalorder %v3879, 0
        %vm4392 = vcmp.ne.s32.totalorder %v3880, 0
        %vm4393 = vcmp.ne.s32.totalorder %v3881, 0
        %vm4394 = vcmp.ne.s32.totalorder %v3882, 0
        %vm4395 = vcmp.ne.s32.totalorder %v3883, 0
        %vm4396 = vcmp.ne.s32.totalorder %v3884, 0
        %vm4397 = vcmp.ne.s32.totalorder %v3885, 0
        %vm4398 = vcmp.ne.s32.totalorder %v3886, 0
        %vm4399 = vcmp.ne.s32.totalorder %v3887, 0
        %vm4400 = vcmp.ne.s32.totalorder %v3888, 0
        %vm4401 = vcmp.ne.s32.totalorder %v3889, 0
        %vm4402 = vcmp.ne.s32.totalorder %v3890, 0
        %vm4403 = vcmp.ne.s32.totalorder %v3891, 0
        %vm4404 = vcmp.ne.s32.totalorder %v3892, 0
        %vm4405 = vcmp.ne.s32.totalorder %v3893, 0
        %vm4406 = vcmp.ne.s32.totalorder %v3894, 0
        %vm4407 = vcmp.ne.s32.totalorder %v3895, 0
        %vm4408 = vcmp.ne.s32.totalorder %v3896, 0
        %vm4409 = vcmp.ne.s32.totalorder %v3897, 0
        %vm4410 = vcmp.ne.s32.totalorder %v3898, 0
        %vm4411 = vcmp.ne.s32.totalorder %v3899, 0
        %vm4412 = vcmp.ne.s32.totalorder %v3900, 0
        %vm4413 = vcmp.ne.s32.totalorder %v3901, 0
        %vm4414 = vcmp.ne.s32.totalorder %v3902, 0
        %vm4415 = vcmp.ne.s32.totalorder %v3903, 0
        %vm4416 = vcmp.ne.s32.totalorder %v3904, 0
        %vm4417 = vcmp.ne.s32.totalorder %v3905, 0
        %vm4418 = vcmp.ne.s32.totalorder %v3906, 0
        %vm4419 = vcmp.ne.s32.totalorder %v3907, 0
        %vm4420 = vcmp.ne.s32.totalorder %v3908, 0
        %vm4421 = vcmp.ne.s32.totalorder %v3909, 0
        %vm4422 = vcmp.ne.s32.totalorder %v3910, 0
        %vm4423 = vcmp.ne.s32.totalorder %v3911, 0
        %vm4424 = vcmp.ne.s32.totalorder %v3912, 0
        %vm4425 = vcmp.ne.s32.totalorder %v3913, 0
        %vm4426 = vcmp.ne.s32.totalorder %v3914, 0
        %vm4427 = vcmp.ne.s32.totalorder %v3915, 0
        %vm4428 = vcmp.ne.s32.totalorder %v3916, 0
        %vm4429 = vcmp.ne.s32.totalorder %v3917, 0
        %vm4430 = vcmp.ne.s32.totalorder %v3918, 0
        %vm4431 = vcmp.ne.s32.totalorder %v3919, 0
        %vm4432 = vcmp.ne.s32.totalorder %v3920, 0
        %vm4433 = vcmp.ne.s32.totalorder %v3921, 0
        %vm4434 = vcmp.ne.s32.totalorder %v3922, 0
        %vm4435 = vcmp.ne.s32.totalorder %v3923, 0
        %vm4436 = vcmp.ne.s32.totalorder %v3924, 0
        %vm4437 = vcmp.ne.s32.totalorder %v3925, 0
        %vm4438 = vcmp.ne.s32.totalorder %v3926, 0
        %vm4439 = vcmp.ne.s32.totalorder %v3927, 0
        %vm4440 = vcmp.ne.s32.totalorder %v3928, 0
        %vm4441 = vcmp.ne.s32.totalorder %v3929, 0
        %vm4442 = vcmp.ne.s32.totalorder %v3930, 0
        %vm4443 = vcmp.ne.s32.totalorder %v3931, 0
        %vm4444 = vcmp.ne.s32.totalorder %v3932, 0
        %vm4445 = vcmp.ne.s32.totalorder %v3933, 0
        %vm4446 = vcmp.ne.s32.totalorder %v3934, 0
        %vm4447 = vcmp.ne.s32.totalorder %v3935, 0
        %vm4448 = vcmp.ne.s32.totalorder %v3936, 0
        %vm4449 = vcmp.ne.s32.totalorder %v3937, 0
        %vm4450 = vcmp.ne.s32.totalorder %v3938, 0
        %vm4451 = vcmp.ne.s32.totalorder %v3939, 0
        %vm4452 = vcmp.ne.s32.totalorder %v3940, 0
        %vm4453 = vcmp.ne.s32.totalorder %v3941, 0
        %vm4454 = vcmp.ne.s32.totalorder %v3942, 0
        %vm4455 = vcmp.ne.s32.totalorder %v3943, 0
        %vm4456 = vcmp.ne.s32.totalorder %v3944, 0
        %vm4457 = vcmp.ne.s32.totalorder %v3945, 0
        %vm4458 = vcmp.ne.s32.totalorder %v3946, 0
        %vm4459 = vcmp.ne.s32.totalorder %v3947, 0
        %vm4460 = vcmp.ne.s32.totalorder %v3948, 0
        %vm4461 = vcmp.ne.s32.totalorder %v3949, 0
        %vm4462 = vcmp.ne.s32.totalorder %v3950, 0
        %vm4463 = vcmp.ne.s32.totalorder %v3951, 0
        %vm4464 = vcmp.ne.s32.totalorder %v3952, 0
        %vm4465 = vcmp.ne.s32.totalorder %v3953, 0
        %vm4466 = vcmp.ne.s32.totalorder %v3954, 0
        %vm4467 = vcmp.ne.s32.totalorder %v3955, 0
        %vm4468 = vcmp.ne.s32.totalorder %v3956, 0
        %vm4469 = vcmp.ne.s32.totalorder %v3957, 0
        %vm4470 = vcmp.ne.s32.totalorder %v3958, 0
        %vm4471 = vcmp.ne.s32.totalorder %v3959, 0
        %vm4472 = vcmp.ne.s32.totalorder %v3960, 0
        %vm4473 = vcmp.ne.s32.totalorder %v3961, 0
        %vm4474 = vcmp.ne.s32.totalorder %v3962, 0
        %vm4475 = vcmp.ne.s32.totalorder %v3963, 0
        %vm4476 = vcmp.ne.s32.totalorder %v3964, 0
        %vm4477 = vcmp.ne.s32.totalorder %v3965, 0
        %vm4478 = vcmp.ne.s32.totalorder %v3966, 0
        %vm4479 = vcmp.ne.s32.totalorder %v3967, 0
        %vm4480 = vcmp.ne.s32.totalorder %v3968, 0
        %vm4481 = vcmp.ne.s32.totalorder %v3969, 0
        %vm4482 = vcmp.ne.s32.totalorder %v3970, 0
        %vm4483 = vcmp.ne.s32.totalorder %v3971, 0
        %vm4484 = vcmp.ne.s32.totalorder %v3972, 0
        %vm4485 = vcmp.ne.s32.totalorder %v3973, 0
        %vm4486 = vcmp.ne.s32.totalorder %v3974, 0
        %vm4487 = vcmp.ne.s32.totalorder %v3975, 0
        %vm4488 = vcmp.ne.s32.totalorder %v3976, 0
        %vm4489 = vcmp.ne.s32.totalorder %v3977, 0
        %vm4490 = vcmp.ne.s32.totalorder %v3978, 0
        %vm4491 = vcmp.ne.s32.totalorder %v3979, 0
        %vm4492 = vcmp.ne.s32.totalorder %v3980, 0
        %vm4493 = vcmp.ne.s32.totalorder %v3981, 0
        %vm4494 = vcmp.ne.s32.totalorder %v3982, 0
        %vm4495 = vcmp.ne.s32.totalorder %v3983, 0
        %vm4496 = vcmp.ne.s32.totalorder %v3984, 0
        %vm4497 = vcmp.ne.s32.totalorder %v3985, 0
        %vm4498 = vcmp.ne.s32.totalorder %v3986, 0
        %vm4499 = vcmp.ne.s32.totalorder %v3987, 0
        %vm4500 = vcmp.ne.s32.totalorder %v3988, 0
        %vm4501 = vcmp.ne.s32.totalorder %v3989, 0
        %vm4502 = vcmp.ne.s32.totalorder %v3990, 0
        %vm4503 = vcmp.ne.s32.totalorder %v3991, 0
        %vm4504 = vcmp.ne.s32.totalorder %v3992, 0
        %vm4505 = vcmp.ne.s32.totalorder %v3993, 0
        %vm4506 = vcmp.ne.s32.totalorder %v3994, 0
        %vm4507 = vcmp.ne.s32.totalorder %v3995, 0
        %vm4508 = vcmp.ne.s32.totalorder %v3996, 0
        %vm4509 = vcmp.ne.s32.totalorder %v3997, 0
        %vm4510 = vcmp.ne.s32.totalorder %v3998, 0
        %vm4511 = vcmp.ne.s32.totalorder %v3999, 0
        %vm4512 = vcmp.ne.s32.totalorder %v4000, 0
        %vm4513 = vcmp.ne.s32.totalorder %v4001, 0
        %vm4514 = vcmp.ne.s32.totalorder %v4002, 0
        %vm4515 = vcmp.ne.s32.totalorder %v4003, 0
        %vm4516 = vcmp.ne.s32.totalorder %v4004, 0
        %vm4517 = vcmp.ne.s32.totalorder %v4005, 0
        %vm4518 = vcmp.ne.s32.totalorder %v4006, 0
        %vm4519 = vcmp.ne.s32.totalorder %v4007, 0
        %vm4520 = vcmp.ne.s32.totalorder %v4008, 0
        %vm4521 = vcmp.ne.s32.totalorder %v4009, 0
        %vm4522 = vcmp.ne.s32.totalorder %v4010, 0
        %vm4523 = vcmp.ne.s32.totalorder %v4011, 0
        %vm4524 = vcmp.ne.s32.totalorder %v4012, 0
        %vm4525 = vcmp.ne.s32.totalorder %v4013, 0
        %vm4526 = vcmp.ne.s32.totalorder %v4014, 0
        %vm4527 = vcmp.ne.s32.totalorder %v4015, 0
        %vm4528 = vcmp.ne.s32.totalorder %v4016, 0
        %vm4529 = vcmp.ne.s32.totalorder %v4017, 0
        %vm4530 = vcmp.ne.s32.totalorder %v4018, 0
        %vm4531 = vcmp.ne.s32.totalorder %v4019, 0
        %vm4532 = vcmp.ne.s32.totalorder %v4020, 0
        %vm4533 = vcmp.ne.s32.totalorder %v4021, 0
        %vm4534 = vcmp.ne.s32.totalorder %v4022, 0
        %vm4535 = vcmp.ne.s32.totalorder %v4023, 0
        %vm4536 = vcmp.ne.s32.totalorder %v4024, 0
        %vm4537 = vcmp.ne.s32.totalorder %v4025, 0
        %vm4538 = vcmp.ne.s32.totalorder %v4026, 0
        %vm4539 = vcmp.ne.s32.totalorder %v4027, 0
        %vm4540 = vcmp.ne.s32.totalorder %v4028, 0
        %vm4541 = vcmp.ne.s32.totalorder %v4029, 0
        %vm4542 = vcmp.ne.s32.totalorder %v4030, 0
        %vm4543 = vcmp.ne.s32.totalorder %v4031, 0
        %vm4544 = vcmp.ne.s32.totalorder %v4032, 0
        %vm4545 = vcmp.ne.s32.totalorder %v4033, 0
        %vm4546 = vcmp.ne.s32.totalorder %v4034, 0
        %vm4547 = vcmp.ne.s32.totalorder %v4035, 0
        %vm4548 = vcmp.ne.s32.totalorder %v4036, 0
        %vm4549 = vcmp.ne.s32.totalorder %v4037, 0
        %vm4550 = vcmp.ne.s32.totalorder %v4038, 0
        %vm4551 = vcmp.ne.s32.totalorder %v4039, 0
        %vm4552 = vcmp.ne.s32.totalorder %v4040, 0
        %vm4553 = vcmp.ne.s32.totalorder %v4041, 0
        %vm4554 = vcmp.ne.s32.totalorder %v4042, 0
        %vm4555 = vcmp.ne.s32.totalorder %v4043, 0
        %vm4556 = vcmp.ne.s32.totalorder %v4044, 0
        %vm4557 = vcmp.ne.s32.totalorder %v4045, 0
        %vm4558 = vcmp.ne.s32.totalorder %v4046, 0
        %vm4559 = vcmp.ne.s32.totalorder %v4047, 0
        %vm4560 = vcmp.ne.s32.totalorder %v4048, 0
        %vm4561 = vcmp.ne.s32.totalorder %v4049, 0
        %vm4562 = vcmp.ne.s32.totalorder %v4050, 0
        %vm4563 = vcmp.ne.s32.totalorder %v4051, 0
        %vm4564 = vcmp.ne.s32.totalorder %v4052, 0
        %vm4565 = vcmp.ne.s32.totalorder %v4053, 0
        %vm4566 = vcmp.ne.s32.totalorder %v4054, 0
        %vm4567 = vcmp.ne.s32.totalorder %v4055, 0
        %vm4568 = vcmp.ne.s32.totalorder %v4056, 0
        %vm4569 = vcmp.ne.s32.totalorder %v4057, 0
        %vm4570 = vcmp.ne.s32.totalorder %v4058, 0
        %vm4571 = vcmp.ne.s32.totalorder %v4059, 0
        %vm4572 = vcmp.ne.s32.totalorder %v4060, 0
        %vm4573 = vcmp.ne.s32.totalorder %v4061, 0
        %vm4574 = vcmp.ne.s32.totalorder %v4062, 0
        %vm4575 = vcmp.ne.s32.totalorder %v4063, 0
        %vm4576 = vcmp.ne.s32.totalorder %v4064, 0
        %vm4577 = vcmp.ne.s32.totalorder %v4065, 0
        %vm4578 = vcmp.ne.s32.totalorder %v4066, 0
        %vm4579 = vcmp.ne.s32.totalorder %v4067, 0
        %vm4580 = vcmp.ne.s32.totalorder %v4068, 0
        %vm4581 = vcmp.ne.s32.totalorder %v4069, 0
        %vm4582 = vcmp.ne.s32.totalorder %v4070, 0
        %vm4583 = vcmp.ne.s32.totalorder %v4071, 0
        %vm4584 = vcmp.ne.s32.totalorder %v4072, 0
        %vm4585 = vcmp.ne.s32.totalorder %v4073, 0
        %vm4586 = vcmp.ne.s32.totalorder %v4074, 0
        %vm4587 = vcmp.ne.s32.totalorder %v4075, 0
        %vm4588 = vcmp.ne.s32.totalorder %v4076, 0
        %vm4589 = vcmp.ne.s32.totalorder %v4077, 0
        %vm4590 = vcmp.ne.s32.totalorder %v4078, 0
        %vm4591 = vcmp.ne.s32.totalorder %v4079, 0
        %vm4592 = vcmp.ne.s32.totalorder %v4080, 0
        %vm4593 = vcmp.ne.s32.totalorder %v4081, 0
        %vm4594 = vcmp.ne.s32.totalorder %v4082, 0
        %vm4595 = vcmp.ne.s32.totalorder %v4083, 0
        %vm4596 = vcmp.ne.s32.totalorder %v4084, 0
        %vm4597 = vcmp.ne.s32.totalorder %v4085, 0
        %vm4598 = vcmp.ne.s32.totalorder %v4086, 0
        %vm4599 = vcmp.ne.s32.totalorder %v4087, 0
        %vm4600 = vcmp.ne.s32.totalorder %v4088, 0
        %vm4601 = vcmp.ne.s32.totalorder %v4089, 0
        %vm4602 = vcmp.ne.s32.totalorder %v4090, 0
        %vm4603 = vcmp.ne.s32.totalorder %v4091, 0
        %vm4604 = vcmp.ne.s32.totalorder %v4092, 0
        %vm4605 = vcmp.ne.s32.totalorder %v4093, 0
        %vm4606 = vcmp.ne.s32.totalorder %v4094, 0
        %vm4607 = vcmp.ne.s32.totalorder %v4095, 0
        %vm4608 = vcmp.ne.s32.totalorder %v4096, 0
        %vm4609 = vcmp.ne.s32.totalorder %v4097, 0
        %vm4610 = vcmp.ne.s32.totalorder %v4098, 0
        %vm4611 = vcmp.ne.s32.totalorder %v4099, 0
        %vm4612 = vcmp.ne.s32.totalorder %v4100, 0
        %vm4613 = vcmp.ne.s32.totalorder %v4101, 0
        %vm4614 = vcmp.ne.s32.totalorder %v4102, 0
        %vm4615 = vcmp.ne.s32.totalorder %v4103, 0
        %vm4616 = vcmp.ne.s32.totalorder %v4104, 0
        %vm4617 = vcmp.ne.s32.totalorder %v4105, 0
        %vm4618 = vcmp.ne.s32.totalorder %v4106, 0
        %vm4619 = vcmp.ne.s32.totalorder %v4107, 0
        %vm4620 = vcmp.ne.s32.totalorder %v4108, 0
        %vm4621 = vcmp.ne.s32.totalorder %v4109, 0
        %vm4622 = vcmp.ne.s32.totalorder %v4110, 0
        %vm4623 = vcmp.ne.s32.totalorder %v4111, 0
        %vm4624 = vcmp.ne.s32.totalorder %v4112, 0
        %vm4625 = vcmp.ne.s32.totalorder %v4113, 0
        %vm4626 = vcmp.ne.s32.totalorder %v4114, 0
        %vm4627 = vcmp.ne.s32.totalorder %v4115, 0
        %vm4628 = vcmp.ne.s32.totalorder %v4116, 0
        %vm4629 = vcmp.ne.s32.totalorder %v4117, 0
        %vm4630 = vcmp.ne.s32.totalorder %v4118, 0
        %vm4631 = vcmp.ne.s32.totalorder %v4119, 0
        %vm4632 = vcmp.ne.s32.totalorder %v4120, 0
        %vm4633 = vcmp.ne.s32.totalorder %v4121, 0
        %vm4634 = vcmp.ne.s32.totalorder %v4122, 0
        %vm4635 = vcmp.ne.s32.totalorder %v4123, 0
        %vm4636 = vcmp.ne.s32.totalorder %v4124, 0
        %vm4637 = vcmp.ne.s32.totalorder %v4125, 0
        %vm4638 = vcmp.ne.s32.totalorder %v4126, 0
        %vm4639 = vcmp.ne.s32.totalorder %v4127, 0
        %vm4640 = vcmp.ne.s32.totalorder %v4128, 0
        %vm4641 = vcmp.ne.s32.totalorder %v4129, 0
        %vm4642 = vcmp.ne.s32.totalorder %v4130, 0
        %vm4643 = vcmp.ne.s32.totalorder %v4131, 0
        %vm4644 = vcmp.ne.s32.totalorder %v4132, 0
        %vm4645 = vcmp.ne.s32.totalorder %v4133, 0
        %vm4646 = vcmp.ne.s32.totalorder %v4134, 0
        %vm4647 = vcmp.ne.s32.totalorder %v4135, 0
        %vm4648 = vcmp.ne.s32.totalorder %v4136, 0
        %vm4649 = vcmp.ne.s32.totalorder %v4137, 0
        %vm4650 = vcmp.ne.s32.totalorder %v4138, 0
        %vm4651 = vcmp.ne.s32.totalorder %v4139, 0
        %vm4652 = vcmp.ne.s32.totalorder %v4140, 0
        %vm4653 = vcmp.ne.s32.totalorder %v4141, 0
        %vm4654 = vcmp.ne.s32.totalorder %v4142, 0
        %vm4655 = vcmp.ne.s32.totalorder %v4143, 0
        %vm4656 = vcmp.ne.s32.totalorder %v4144, 0
        %vm4657 = vcmp.ne.s32.totalorder %v4145, 0
        %vm4658 = vcmp.ne.s32.totalorder %v4146, 0
        %vm4659 = vcmp.ne.s32.totalorder %v4147, 0
        %vm4660 = vcmp.ne.s32.totalorder %v4148, 0
        %vm4661 = vcmp.ne.s32.totalorder %v4149, 0
        %vm4662 = vcmp.ne.s32.totalorder %v4150, 0
        %vm4663 = vcmp.ne.s32.totalorder %v4151, 0
        %vm4664 = vcmp.ne.s32.totalorder %v4152, 0
        %vm4665 = vcmp.ne.s32.totalorder %v4153, 0
        %vm4666 = vcmp.ne.s32.totalorder %v4154, 0
        %vm4667 = vcmp.ne.s32.totalorder %v4155, 0
        %vm4668 = vcmp.ne.s32.totalorder %v4156, 0
        %vm4669 = vcmp.ne.s32.totalorder %v4157, 0
        %vm4670 = vcmp.ne.s32.totalorder %v4158, 0
        %vm4671 = vcmp.ne.s32.totalorder %v4159, 0
        %vm4672 = vcmp.ne.s32.totalorder %v4160, 0
        %vm4673 = vcmp.ne.s32.totalorder %v4161, 0
        %vm4674 = vcmp.ne.s32.totalorder %v4162, 0
        %vm4675 = vcmp.ne.s32.totalorder %v4163, 0
        %vm4676 = vcmp.ne.s32.totalorder %v4164, 0
        %vm4677 = vcmp.ne.s32.totalorder %v4165, 0
        %vm4678 = vcmp.ne.s32.totalorder %v4166, 0
        %vm4679 = vcmp.ne.s32.totalorder %v4167, 0
        %vm4680 = vcmp.ne.s32.totalorder %v4168, 0
        %vm4681 = vcmp.ne.s32.totalorder %v4169, 0
        %vm4682 = vcmp.ne.s32.totalorder %v4170, 0
        %vm4683 = vcmp.ne.s32.totalorder %v4171, 0
        %vm4684 = vcmp.ne.s32.totalorder %v4172, 0
        %vm4685 = vcmp.ne.s32.totalorder %v4173, 0
        %vm4686 = vcmp.ne.s32.totalorder %v4174, 0
        %vm4687 = vcmp.ne.s32.totalorder %v4175, 0
        %vm4688 = vcmp.ne.s32.totalorder %v4176, 0
        %vm4689 = vcmp.ne.s32.totalorder %v4177, 0
        %vm4690 = vcmp.ne.s32.totalorder %v4178, 0
        %v4691 = vsel %vm4179, %v1619, -9e+15
        %v4692 = vsel %vm4180, %v1620, -9e+15
        %v4693 = vsel %vm4181, %v1621, -9e+15
        %v4694 = vsel %vm4182, %v1622, -9e+15
        %v4695 = vsel %vm4183, %v1623, -9e+15
        %v4696 = vsel %vm4184, %v1624, -9e+15
        %v4697 = vsel %vm4185, %v1625, -9e+15
        %v4698 = vsel %vm4186, %v1626, -9e+15
        %v4699 = vsel %vm4187, %v1627, -9e+15
        %v4700 = vsel %vm4188, %v1628, -9e+15
        %v4701 = vsel %vm4189, %v1629, -9e+15
        %v4702 = vsel %vm4190, %v1630, -9e+15
        %v4703 = vsel %vm4191, %v1631, -9e+15
        %v4704 = vsel %vm4192, %v1632, -9e+15
        %v4705 = vsel %vm4193, %v1633, -9e+15
        %v4706 = vsel %vm4194, %v1634, -9e+15
        %v4707 = vsel %vm4195, %v1635, -9e+15
        %v4708 = vsel %vm4196, %v1636, -9e+15
        %v4709 = vsel %vm4197, %v1637, -9e+15
        %v4710 = vsel %vm4198, %v1638, -9e+15
        %v4711 = vsel %vm4199, %v1639, -9e+15
        %v4712 = vsel %vm4200, %v1640, -9e+15
        %v4713 = vsel %vm4201, %v1641, -9e+15
        %v4714 = vsel %vm4202, %v1642, -9e+15
        %v4715 = vsel %vm4203, %v1643, -9e+15
        %v4716 = vsel %vm4204, %v1644, -9e+15
        %v4717 = vsel %vm4205, %v1645, -9e+15
        %v4718 = vsel %vm4206, %v1646, -9e+15
        %v4719 = vsel %vm4207, %v1647, -9e+15
        %v4720 = vsel %vm4208, %v1648, -9e+15
        %v4721 = vsel %vm4209, %v1649, -9e+15
        %v4722 = vsel %vm4210, %v1650, -9e+15
        %v4723 = vsel %vm4211, %v1651, -9e+15
        %v4724 = vsel %vm4212, %v1652, -9e+15
        %v4725 = vsel %vm4213, %v1653, -9e+15
        %v4726 = vsel %vm4214, %v1654, -9e+15
        %v4727 = vsel %vm4215, %v1655, -9e+15
        %v4728 = vsel %vm4216, %v1656, -9e+15
        %v4729 = vsel %vm4217, %v1657, -9e+15
        %v4730 = vsel %vm4218, %v1658, -9e+15
        %v4731 = vsel %vm4219, %v1659, -9e+15
        %v4732 = vsel %vm4220, %v1660, -9e+15
        %v4733 = vsel %vm4221, %v1661, -9e+15
        %v4734 = vsel %vm4222, %v1662, -9e+15
        %v4735 = vsel %vm4223, %v1663, -9e+15
        %v4736 = vsel %vm4224, %v1664, -9e+15
        %v4737 = vsel %vm4225, %v1665, -9e+15
        %v4738 = vsel %vm4226, %v1666, -9e+15
        %v4739 = vsel %vm4227, %v1667, -9e+15
        %v4740 = vsel %vm4228, %v1668, -9e+15
        %v4741 = vsel %vm4229, %v1669, -9e+15
        %v4742 = vsel %vm4230, %v1670, -9e+15
        %v4743 = vsel %vm4231, %v1671, -9e+15
        %v4744 = vsel %vm4232, %v1672, -9e+15
        %v4745 = vsel %vm4233, %v1673, -9e+15
        %v4746 = vsel %vm4234, %v1674, -9e+15
        %v4747 = vsel %vm4235, %v1675, -9e+15
        %v4748 = vsel %vm4236, %v1676, -9e+15
        %v4749 = vsel %vm4237, %v1677, -9e+15
        %v4750 = vsel %vm4238, %v1678, -9e+15
        %v4751 = vsel %vm4239, %v1679, -9e+15
        %v4752 = vsel %vm4240, %v1680, -9e+15
        %v4753 = vsel %vm4241, %v1681, -9e+15
        %v4754 = vsel %vm4242, %v1682, -9e+15
        %v4755 = vsel %vm4243, %v1683, -9e+15
        %v4756 = vsel %vm4244, %v1684, -9e+15
        %v4757 = vsel %vm4245, %v1685, -9e+15
        %v4758 = vsel %vm4246, %v1686, -9e+15
        %v4759 = vsel %vm4247, %v1687, -9e+15
        %v4760 = vsel %vm4248, %v1688, -9e+15
        %v4761 = vsel %vm4249, %v1689, -9e+15
        %v4762 = vsel %vm4250, %v1690, -9e+15
        %v4763 = vsel %vm4251, %v1691, -9e+15
        %v4764 = vsel %vm4252, %v1692, -9e+15
        %v4765 = vsel %vm4253, %v1693, -9e+15
        %v4766 = vsel %vm4254, %v1694, -9e+15
        %v4767 = vsel %vm4255, %v1695, -9e+15
        %v4768 = vsel %vm4256, %v1696, -9e+15
        %v4769 = vsel %vm4257, %v1697, -9e+15
        %v4770 = vsel %vm4258, %v1698, -9e+15
        %v4771 = vsel %vm4259, %v1699, -9e+15
        %v4772 = vsel %vm4260, %v1700, -9e+15
        %v4773 = vsel %vm4261, %v1701, -9e+15
        %v4774 = vsel %vm4262, %v1702, -9e+15
        %v4775 = vsel %vm4263, %v1703, -9e+15
        %v4776 = vsel %vm4264, %v1704, -9e+15
        %v4777 = vsel %vm4265, %v1705, -9e+15
        %v4778 = vsel %vm4266, %v1706, -9e+15
        %v4779 = vsel %vm4267, %v1707, -9e+15
        %v4780 = vsel %vm4268, %v1708, -9e+15
        %v4781 = vsel %vm4269, %v1709, -9e+15
        %v4782 = vsel %vm4270, %v1710, -9e+15
        %v4783 = vsel %vm4271, %v1711, -9e+15
        %v4784 = vsel %vm4272, %v1712, -9e+15
        %v4785 = vsel %vm4273, %v1713, -9e+15
        %v4786 = vsel %vm4274, %v1714, -9e+15
        %v4787 = vsel %vm4275, %v1715, -9e+15
        %v4788 = vsel %vm4276, %v1716, -9e+15
        %v4789 = vsel %vm4277, %v1717, -9e+15
        %v4790 = vsel %vm4278, %v1718, -9e+15
        %v4791 = vsel %vm4279, %v1719, -9e+15
        %v4792 = vsel %vm4280, %v1720, -9e+15
        %v4793 = vsel %vm4281, %v1721, -9e+15
        %v4794 = vsel %vm4282, %v1722, -9e+15
        %v4795 = vsel %vm4283, %v1723, -9e+15
        %v4796 = vsel %vm4284, %v1724, -9e+15
        %v4797 = vsel %vm4285, %v1725, -9e+15
        %v4798 = vsel %vm4286, %v1726, -9e+15
        %v4799 = vsel %vm4287, %v1727, -9e+15
        %v4800 = vsel %vm4288, %v1728, -9e+15
        %v4801 = vsel %vm4289, %v1729, -9e+15
        %v4802 = vsel %vm4290, %v1730, -9e+15
        %v4803 = vsel %vm4291, %v1731, -9e+15
        %v4804 = vsel %vm4292, %v1732, -9e+15
        %v4805 = vsel %vm4293, %v1733, -9e+15
        %v4806 = vsel %vm4294, %v1734, -9e+15
        %v4807 = vsel %vm4295, %v1735, -9e+15
        %v4808 = vsel %vm4296, %v1736, -9e+15
        %v4809 = vsel %vm4297, %v1737, -9e+15
        %v4810 = vsel %vm4298, %v1738, -9e+15
        %v4811 = vsel %vm4299, %v1739, -9e+15
        %v4812 = vsel %vm4300, %v1740, -9e+15
        %v4813 = vsel %vm4301, %v1741, -9e+15
        %v4814 = vsel %vm4302, %v1742, -9e+15
        %v4815 = vsel %vm4303, %v1743, -9e+15
        %v4816 = vsel %vm4304, %v1744, -9e+15
        %v4817 = vsel %vm4305, %v1745, -9e+15
        %v4818 = vsel %vm4306, %v1746, -9e+15
        %v4819 = vsel %vm4307, %v1747, -9e+15
        %v4820 = vsel %vm4308, %v1748, -9e+15
        %v4821 = vsel %vm4309, %v1749, -9e+15
        %v4822 = vsel %vm4310, %v1750, -9e+15
        %v4823 = vsel %vm4311, %v1751, -9e+15
        %v4824 = vsel %vm4312, %v1752, -9e+15
        %v4825 = vsel %vm4313, %v1753, -9e+15
        %v4826 = vsel %vm4314, %v1754, -9e+15
        %v4827 = vsel %vm4315, %v1755, -9e+15
        %v4828 = vsel %vm4316, %v1756, -9e+15
        %v4829 = vsel %vm4317, %v1757, -9e+15
        %v4830 = vsel %vm4318, %v1758, -9e+15
        %v4831 = vsel %vm4319, %v1759, -9e+15
        %v4832 = vsel %vm4320, %v1760, -9e+15
        %v4833 = vsel %vm4321, %v1761, -9e+15
        %v4834 = vsel %vm4322, %v1762, -9e+15
        %v4835 = vsel %vm4323, %v1763, -9e+15
        %v4836 = vsel %vm4324, %v1764, -9e+15
        %v4837 = vsel %vm4325, %v1765, -9e+15
        %v4838 = vsel %vm4326, %v1766, -9e+15
        %v4839 = vsel %vm4327, %v1767, -9e+15
        %v4840 = vsel %vm4328, %v1768, -9e+15
        %v4841 = vsel %vm4329, %v1769, -9e+15
        %v4842 = vsel %vm4330, %v1770, -9e+15
        %v4843 = vsel %vm4331, %v1771, -9e+15
        %v4844 = vsel %vm4332, %v1772, -9e+15
        %v4845 = vsel %vm4333, %v1773, -9e+15
        %v4846 = vsel %vm4334, %v1774, -9e+15
        %v4847 = vsel %vm4335, %v1775, -9e+15
        %v4848 = vsel %vm4336, %v1776, -9e+15
        %v4849 = vsel %vm4337, %v1777, -9e+15
        %v4850 = vsel %vm4338, %v1778, -9e+15
        %v4851 = vsel %vm4339, %v1779, -9e+15
        %v4852 = vsel %vm4340, %v1780, -9e+15
        %v4853 = vsel %vm4341, %v1781, -9e+15
        %v4854 = vsel %vm4342, %v1782, -9e+15
        %v4855 = vsel %vm4343, %v1783, -9e+15
        %v4856 = vsel %vm4344, %v1784, -9e+15
        %v4857 = vsel %vm4345, %v1785, -9e+15
        %v4858 = vsel %vm4346, %v1786, -9e+15
        %v4859 = vsel %vm4347, %v1787, -9e+15
        %v4860 = vsel %vm4348, %v1788, -9e+15
        %v4861 = vsel %vm4349, %v1789, -9e+15
        %v4862 = vsel %vm4350, %v1790, -9e+15
        %v4863 = vsel %vm4351, %v1791, -9e+15
        %v4864 = vsel %vm4352, %v1792, -9e+15
        %v4865 = vsel %vm4353, %v1793, -9e+15
        %v4866 = vsel %vm4354, %v1794, -9e+15
        %v4867 = vsel %vm4355, %v1795, -9e+15
        %v4868 = vsel %vm4356, %v1796, -9e+15
        %v4869 = vsel %vm4357, %v1797, -9e+15
        %v4870 = vsel %vm4358, %v1798, -9e+15
        %v4871 = vsel %vm4359, %v1799, -9e+15
        %v4872 = vsel %vm4360, %v1800, -9e+15
        %v4873 = vsel %vm4361, %v1801, -9e+15
        %v4874 = vsel %vm4362, %v1802, -9e+15
        %v4875 = vsel %vm4363, %v1803, -9e+15
        %v4876 = vsel %vm4364, %v1804, -9e+15
        %v4877 = vsel %vm4365, %v1805, -9e+15
        %v4878 = vsel %vm4366, %v1806, -9e+15
        %v4879 = vsel %vm4367, %v1807, -9e+15
        %v4880 = vsel %vm4368, %v1808, -9e+15
        %v4881 = vsel %vm4369, %v1809, -9e+15
        %v4882 = vsel %vm4370, %v1810, -9e+15
        %v4883 = vsel %vm4371, %v1811, -9e+15
        %v4884 = vsel %vm4372, %v1812, -9e+15
        %v4885 = vsel %vm4373, %v1813, -9e+15
        %v4886 = vsel %vm4374, %v1814, -9e+15
        %v4887 = vsel %vm4375, %v1815, -9e+15
        %v4888 = vsel %vm4376, %v1816, -9e+15
        %v4889 = vsel %vm4377, %v1817, -9e+15
        %v4890 = vsel %vm4378, %v1818, -9e+15
        %v4891 = vsel %vm4379, %v1819, -9e+15
        %v4892 = vsel %vm4380, %v1820, -9e+15
        %v4893 = vsel %vm4381, %v1821, -9e+15
        %v4894 = vsel %vm4382, %v1822, -9e+15
        %v4895 = vsel %vm4383, %v1823, -9e+15
        %v4896 = vsel %vm4384, %v1824, -9e+15
        %v4897 = vsel %vm4385, %v1825, -9e+15
        %v4898 = vsel %vm4386, %v1826, -9e+15
        %v4899 = vsel %vm4387, %v1827, -9e+15
        %v4900 = vsel %vm4388, %v1828, -9e+15
        %v4901 = vsel %vm4389, %v1829, -9e+15
        %v4902 = vsel %vm4390, %v1830, -9e+15
        %v4903 = vsel %vm4391, %v1831, -9e+15
        %v4904 = vsel %vm4392, %v1832, -9e+15
        %v4905 = vsel %vm4393, %v1833, -9e+15
        %v4906 = vsel %vm4394, %v1834, -9e+15
        %v4907 = vsel %vm4395, %v1835, -9e+15
        %v4908 = vsel %vm4396, %v1836, -9e+15
        %v4909 = vsel %vm4397, %v1837, -9e+15
        %v4910 = vsel %vm4398, %v1838, -9e+15
        %v4911 = vsel %vm4399, %v1839, -9e+15
        %v4912 = vsel %vm4400, %v1840, -9e+15
        %v4913 = vsel %vm4401, %v1841, -9e+15
        %v4914 = vsel %vm4402, %v1842, -9e+15
        %v4915 = vsel %vm4403, %v1843, -9e+15
        %v4916 = vsel %vm4404, %v1844, -9e+15
        %v4917 = vsel %vm4405, %v1845, -9e+15
        %v4918 = vsel %vm4406, %v1846, -9e+15
        %v4919 = vsel %vm4407, %v1847, -9e+15
        %v4920 = vsel %vm4408, %v1848, -9e+15
        %v4921 = vsel %vm4409, %v1849, -9e+15
        %v4922 = vsel %vm4410, %v1850, -9e+15
        %v4923 = vsel %vm4411, %v1851, -9e+15
        %v4924 = vsel %vm4412, %v1852, -9e+15
        %v4925 = vsel %vm4413, %v1853, -9e+15
        %v4926 = vsel %vm4414, %v1854, -9e+15
        %v4927 = vsel %vm4415, %v1855, -9e+15
        %v4928 = vsel %vm4416, %v1856, -9e+15
        %v4929 = vsel %vm4417, %v1857, -9e+15
        %v4930 = vsel %vm4418, %v1858, -9e+15
        %v4931 = vsel %vm4419, %v1859, -9e+15
        %v4932 = vsel %vm4420, %v1860, -9e+15
        %v4933 = vsel %vm4421, %v1861, -9e+15
        %v4934 = vsel %vm4422, %v1862, -9e+15
        %v4935 = vsel %vm4423, %v1863, -9e+15
        %v4936 = vsel %vm4424, %v1864, -9e+15
        %v4937 = vsel %vm4425, %v1865, -9e+15
        %v4938 = vsel %vm4426, %v1866, -9e+15
        %v4939 = vsel %vm4427, %v1867, -9e+15
        %v4940 = vsel %vm4428, %v1868, -9e+15
        %v4941 = vsel %vm4429, %v1869, -9e+15
        %v4942 = vsel %vm4430, %v1870, -9e+15
        %v4943 = vsel %vm4431, %v1871, -9e+15
        %v4944 = vsel %vm4432, %v1872, -9e+15
        %v4945 = vsel %vm4433, %v1873, -9e+15
        %v4946 = vsel %vm4434, %v1874, -9e+15
        %v4947 = vsel %vm4435, %v1875, -9e+15
        %v4948 = vsel %vm4436, %v1876, -9e+15
        %v4949 = vsel %vm4437, %v1877, -9e+15
        %v4950 = vsel %vm4438, %v1878, -9e+15
        %v4951 = vsel %vm4439, %v1879, -9e+15
        %v4952 = vsel %vm4440, %v1880, -9e+15
        %v4953 = vsel %vm4441, %v1881, -9e+15
        %v4954 = vsel %vm4442, %v1882, -9e+15
        %v4955 = vsel %vm4443, %v1883, -9e+15
        %v4956 = vsel %vm4444, %v1884, -9e+15
        %v4957 = vsel %vm4445, %v1885, -9e+15
        %v4958 = vsel %vm4446, %v1886, -9e+15
        %v4959 = vsel %vm4447, %v1887, -9e+15
        %v4960 = vsel %vm4448, %v1888, -9e+15
        %v4961 = vsel %vm4449, %v1889, -9e+15
        %v4962 = vsel %vm4450, %v1890, -9e+15
        %v4963 = vsel %vm4451, %v1891, -9e+15
        %v4964 = vsel %vm4452, %v1892, -9e+15
        %v4965 = vsel %vm4453, %v1893, -9e+15
        %v4966 = vsel %vm4454, %v1894, -9e+15
        %v4967 = vsel %vm4455, %v1895, -9e+15
        %v4968 = vsel %vm4456, %v1896, -9e+15
        %v4969 = vsel %vm4457, %v1897, -9e+15
        %v4970 = vsel %vm4458, %v1898, -9e+15
        %v4971 = vsel %vm4459, %v1899, -9e+15
        %v4972 = vsel %vm4460, %v1900, -9e+15
        %v4973 = vsel %vm4461, %v1901, -9e+15
        %v4974 = vsel %vm4462, %v1902, -9e+15
        %v4975 = vsel %vm4463, %v1903, -9e+15
        %v4976 = vsel %vm4464, %v1904, -9e+15
        %v4977 = vsel %vm4465, %v1905, -9e+15
        %v4978 = vsel %vm4466, %v1906, -9e+15
        %v4979 = vsel %vm4467, %v1907, -9e+15
        %v4980 = vsel %vm4468, %v1908, -9e+15
        %v4981 = vsel %vm4469, %v1909, -9e+15
        %v4982 = vsel %vm4470, %v1910, -9e+15
        %v4983 = vsel %vm4471, %v1911, -9e+15
        %v4984 = vsel %vm4472, %v1912, -9e+15
        %v4985 = vsel %vm4473, %v1913, -9e+15
        %v4986 = vsel %vm4474, %v1914, -9e+15
        %v4987 = vsel %vm4475, %v1915, -9e+15
        %v4988 = vsel %vm4476, %v1916, -9e+15
        %v4989 = vsel %vm4477, %v1917, -9e+15
        %v4990 = vsel %vm4478, %v1918, -9e+15
        %v4991 = vsel %vm4479, %v1919, -9e+15
        %v4992 = vsel %vm4480, %v1920, -9e+15
        %v4993 = vsel %vm4481, %v1921, -9e+15
        %v4994 = vsel %vm4482, %v1922, -9e+15
        %v4995 = vsel %vm4483, %v1923, -9e+15
        %v4996 = vsel %vm4484, %v1924, -9e+15
        %v4997 = vsel %vm4485, %v1925, -9e+15
        %v4998 = vsel %vm4486, %v1926, -9e+15
        %v4999 = vsel %vm4487, %v1927, -9e+15
        %v5000 = vsel %vm4488, %v1928, -9e+15
        %v5001 = vsel %vm4489, %v1929, -9e+15
        %v5002 = vsel %vm4490, %v1930, -9e+15
        %v5003 = vsel %vm4491, %v1931, -9e+15
        %v5004 = vsel %vm4492, %v1932, -9e+15
        %v5005 = vsel %vm4493, %v1933, -9e+15
        %v5006 = vsel %vm4494, %v1934, -9e+15
        %v5007 = vsel %vm4495, %v1935, -9e+15
        %v5008 = vsel %vm4496, %v1936, -9e+15
        %v5009 = vsel %vm4497, %v1937, -9e+15
        %v5010 = vsel %vm4498, %v1938, -9e+15
        %v5011 = vsel %vm4499, %v1939, -9e+15
        %v5012 = vsel %vm4500, %v1940, -9e+15
        %v5013 = vsel %vm4501, %v1941, -9e+15
        %v5014 = vsel %vm4502, %v1942, -9e+15
        %v5015 = vsel %vm4503, %v1943, -9e+15
        %v5016 = vsel %vm4504, %v1944, -9e+15
        %v5017 = vsel %vm4505, %v1945, -9e+15
        %v5018 = vsel %vm4506, %v1946, -9e+15
        %v5019 = vsel %vm4507, %v1947, -9e+15
        %v5020 = vsel %vm4508, %v1948, -9e+15
        %v5021 = vsel %vm4509, %v1949, -9e+15
        %v5022 = vsel %vm4510, %v1950, -9e+15
        %v5023 = vsel %vm4511, %v1951, -9e+15
        %v5024 = vsel %vm4512, %v1952, -9e+15
        %v5025 = vsel %vm4513, %v1953, -9e+15
        %v5026 = vsel %vm4514, %v1954, -9e+15
        %v5027 = vsel %vm4515, %v1955, -9e+15
        %v5028 = vsel %vm4516, %v1956, -9e+15
        %v5029 = vsel %vm4517, %v1957, -9e+15
        %v5030 = vsel %vm4518, %v1958, -9e+15
        %v5031 = vsel %vm4519, %v1959, -9e+15
        %v5032 = vsel %vm4520, %v1960, -9e+15
        %v5033 = vsel %vm4521, %v1961, -9e+15
        %v5034 = vsel %vm4522, %v1962, -9e+15
        %v5035 = vsel %vm4523, %v1963, -9e+15
        %v5036 = vsel %vm4524, %v1964, -9e+15
        %v5037 = vsel %vm4525, %v1965, -9e+15
        %v5038 = vsel %vm4526, %v1966, -9e+15
        %v5039 = vsel %vm4527, %v1967, -9e+15
        %v5040 = vsel %vm4528, %v1968, -9e+15
        %v5041 = vsel %vm4529, %v1969, -9e+15
        %v5042 = vsel %vm4530, %v1970, -9e+15
        %v5043 = vsel %vm4531, %v1971, -9e+15
        %v5044 = vsel %vm4532, %v1972, -9e+15
        %v5045 = vsel %vm4533, %v1973, -9e+15
        %v5046 = vsel %vm4534, %v1974, -9e+15
        %v5047 = vsel %vm4535, %v1975, -9e+15
        %v5048 = vsel %vm4536, %v1976, -9e+15
        %v5049 = vsel %vm4537, %v1977, -9e+15
        %v5050 = vsel %vm4538, %v1978, -9e+15
        %v5051 = vsel %vm4539, %v1979, -9e+15
        %v5052 = vsel %vm4540, %v1980, -9e+15
        %v5053 = vsel %vm4541, %v1981, -9e+15
        %v5054 = vsel %vm4542, %v1982, -9e+15
        %v5055 = vsel %vm4543, %v1983, -9e+15
        %v5056 = vsel %vm4544, %v1984, -9e+15
        %v5057 = vsel %vm4545, %v1985, -9e+15
        %v5058 = vsel %vm4546, %v1986, -9e+15
        %v5059 = vsel %vm4547, %v1987, -9e+15
        %v5060 = vsel %vm4548, %v1988, -9e+15
        %v5061 = vsel %vm4549, %v1989, -9e+15
        %v5062 = vsel %vm4550, %v1990, -9e+15
        %v5063 = vsel %vm4551, %v1991, -9e+15
        %v5064 = vsel %vm4552, %v1992, -9e+15
        %v5065 = vsel %vm4553, %v1993, -9e+15
        %v5066 = vsel %vm4554, %v1994, -9e+15
        %v5067 = vsel %vm4555, %v1995, -9e+15
        %v5068 = vsel %vm4556, %v1996, -9e+15
        %v5069 = vsel %vm4557, %v1997, -9e+15
        %v5070 = vsel %vm4558, %v1998, -9e+15
        %v5071 = vsel %vm4559, %v1999, -9e+15
        %v5072 = vsel %vm4560, %v2000, -9e+15
        %v5073 = vsel %vm4561, %v2001, -9e+15
        %v5074 = vsel %vm4562, %v2002, -9e+15
        %v5075 = vsel %vm4563, %v2003, -9e+15
        %v5076 = vsel %vm4564, %v2004, -9e+15
        %v5077 = vsel %vm4565, %v2005, -9e+15
        %v5078 = vsel %vm4566, %v2006, -9e+15
        %v5079 = vsel %vm4567, %v2007, -9e+15
        %v5080 = vsel %vm4568, %v2008, -9e+15
        %v5081 = vsel %vm4569, %v2009, -9e+15
        %v5082 = vsel %vm4570, %v2010, -9e+15
        %v5083 = vsel %vm4571, %v2011, -9e+15
        %v5084 = vsel %vm4572, %v2012, -9e+15
        %v5085 = vsel %vm4573, %v2013, -9e+15
        %v5086 = vsel %vm4574, %v2014, -9e+15
        %v5087 = vsel %vm4575, %v2015, -9e+15
        %v5088 = vsel %vm4576, %v2016, -9e+15
        %v5089 = vsel %vm4577, %v2017, -9e+15
        %v5090 = vsel %vm4578, %v2018, -9e+15
        %v5091 = vsel %vm4579, %v2019, -9e+15
        %v5092 = vsel %vm4580, %v2020, -9e+15
        %v5093 = vsel %vm4581, %v2021, -9e+15
        %v5094 = vsel %vm4582, %v2022, -9e+15
        %v5095 = vsel %vm4583, %v2023, -9e+15
        %v5096 = vsel %vm4584, %v2024, -9e+15
        %v5097 = vsel %vm4585, %v2025, -9e+15
        %v5098 = vsel %vm4586, %v2026, -9e+15
        %v5099 = vsel %vm4587, %v2027, -9e+15
        %v5100 = vsel %vm4588, %v2028, -9e+15
        %v5101 = vsel %vm4589, %v2029, -9e+15
        %v5102 = vsel %vm4590, %v2030, -9e+15
        %v5103 = vsel %vm4591, %v2031, -9e+15
        %v5104 = vsel %vm4592, %v2032, -9e+15
        %v5105 = vsel %vm4593, %v2033, -9e+15
        %v5106 = vsel %vm4594, %v2034, -9e+15
        %v5107 = vsel %vm4595, %v2035, -9e+15
        %v5108 = vsel %vm4596, %v2036, -9e+15
        %v5109 = vsel %vm4597, %v2037, -9e+15
        %v5110 = vsel %vm4598, %v2038, -9e+15
        %v5111 = vsel %vm4599, %v2039, -9e+15
        %v5112 = vsel %vm4600, %v2040, -9e+15
        %v5113 = vsel %vm4601, %v2041, -9e+15
        %v5114 = vsel %vm4602, %v2042, -9e+15
        %v5115 = vsel %vm4603, %v2043, -9e+15
        %v5116 = vsel %vm4604, %v2044, -9e+15
        %v5117 = vsel %vm4605, %v2045, -9e+15
        %v5118 = vsel %vm4606, %v2046, -9e+15
        %v5119 = vsel %vm4607, %v2047, -9e+15
        %v5120 = vsel %vm4608, %v2048, -9e+15
        %v5121 = vsel %vm4609, %v2049, -9e+15
        %v5122 = vsel %vm4610, %v2050, -9e+15
        %v5123 = vsel %vm4611, %v2051, -9e+15
        %v5124 = vsel %vm4612, %v2052, -9e+15
        %v5125 = vsel %vm4613, %v2053, -9e+15
        %v5126 = vsel %vm4614, %v2054, -9e+15
        %v5127 = vsel %vm4615, %v2055, -9e+15
        %v5128 = vsel %vm4616, %v2056, -9e+15
        %v5129 = vsel %vm4617, %v2057, -9e+15
        %v5130 = vsel %vm4618, %v2058, -9e+15
        %v5131 = vsel %vm4619, %v2059, -9e+15
        %v5132 = vsel %vm4620, %v2060, -9e+15
        %v5133 = vsel %vm4621, %v2061, -9e+15
        %v5134 = vsel %vm4622, %v2062, -9e+15
        %v5135 = vsel %vm4623, %v2063, -9e+15
        %v5136 = vsel %vm4624, %v2064, -9e+15
        %v5137 = vsel %vm4625, %v2065, -9e+15
        %v5138 = vsel %vm4626, %v2066, -9e+15
        %v5139 = vsel %vm4627, %v2067, -9e+15
        %v5140 = vsel %vm4628, %v2068, -9e+15
        %v5141 = vsel %vm4629, %v2069, -9e+15
        %v5142 = vsel %vm4630, %v2070, -9e+15
        %v5143 = vsel %vm4631, %v2071, -9e+15
        %v5144 = vsel %vm4632, %v2072, -9e+15
        %v5145 = vsel %vm4633, %v2073, -9e+15
        %v5146 = vsel %vm4634, %v2074, -9e+15
        %v5147 = vsel %vm4635, %v2075, -9e+15
        %v5148 = vsel %vm4636, %v2076, -9e+15
        %v5149 = vsel %vm4637, %v2077, -9e+15
        %v5150 = vsel %vm4638, %v2078, -9e+15
        %v5151 = vsel %vm4639, %v2079, -9e+15
        %v5152 = vsel %vm4640, %v2080, -9e+15
        %v5153 = vsel %vm4641, %v2081, -9e+15
        %v5154 = vsel %vm4642, %v2082, -9e+15
        %v5155 = vsel %vm4643, %v2083, -9e+15
        %v5156 = vsel %vm4644, %v2084, -9e+15
        %v5157 = vsel %vm4645, %v2085, -9e+15
        %v5158 = vsel %vm4646, %v2086, -9e+15
        %v5159 = vsel %vm4647, %v2087, -9e+15
        %v5160 = vsel %vm4648, %v2088, -9e+15
        %v5161 = vsel %vm4649, %v2089, -9e+15
        %v5162 = vsel %vm4650, %v2090, -9e+15
        %v5163 = vsel %vm4651, %v2091, -9e+15
        %v5164 = vsel %vm4652, %v2092, -9e+15
        %v5165 = vsel %vm4653, %v2093, -9e+15
        %v5166 = vsel %vm4654, %v2094, -9e+15
        %v5167 = vsel %vm4655, %v2095, -9e+15
        %v5168 = vsel %vm4656, %v2096, -9e+15
        %v5169 = vsel %vm4657, %v2097, -9e+15
        %v5170 = vsel %vm4658, %v2098, -9e+15
        %v5171 = vsel %vm4659, %v2099, -9e+15
        %v5172 = vsel %vm4660, %v2100, -9e+15
        %v5173 = vsel %vm4661, %v2101, -9e+15
        %v5174 = vsel %vm4662, %v2102, -9e+15
        %v5175 = vsel %vm4663, %v2103, -9e+15
        %v5176 = vsel %vm4664, %v2104, -9e+15
        %v5177 = vsel %vm4665, %v2105, -9e+15
        %v5178 = vsel %vm4666, %v2106, -9e+15
        %v5179 = vsel %vm4667, %v2107, -9e+15
        %v5180 = vsel %vm4668, %v2108, -9e+15
        %v5181 = vsel %vm4669, %v2109, -9e+15
        %v5182 = vsel %vm4670, %v2110, -9e+15
        %v5183 = vsel %vm4671, %v2111, -9e+15
        %v5184 = vsel %vm4672, %v2112, -9e+15
        %v5185 = vsel %vm4673, %v2113, -9e+15
        %v5186 = vsel %vm4674, %v2114, -9e+15
        %v5187 = vsel %vm4675, %v2115, -9e+15
        %v5188 = vsel %vm4676, %v2116, -9e+15
        %v5189 = vsel %vm4677, %v2117, -9e+15
        %v5190 = vsel %vm4678, %v2118, -9e+15
        %v5191 = vsel %vm4679, %v2119, -9e+15
        %v5192 = vsel %vm4680, %v2120, -9e+15
        %v5193 = vsel %vm4681, %v2121, -9e+15
        %v5194 = vsel %vm4682, %v2122, -9e+15
        %v5195 = vsel %vm4683, %v2123, -9e+15
        %v5196 = vsel %vm4684, %v2124, -9e+15
        %v5197 = vsel %vm4685, %v2125, -9e+15
        %v5198 = vsel %vm4686, %v2126, -9e+15
        %v5199 = vsel %vm4687, %v2127, -9e+15
        %v5200 = vsel %vm4688, %v2128, -9e+15
        %v5201 = vsel %vm4689, %v2129, -9e+15
        %v5202 = vsel %vm4690, %v2130, -9e+15
        %v5203 = vmax.f32 %v4691, %v4692
        %v5204 = vmax.f32 %v5203, %v4693
        %v5205 = vmax.f32 %v5204, %v4694
        %v5206 = vmax.f32 %v5205, %v4695
        %v5207 = vmax.f32 %v5206, %v4696
        %v5208 = vmax.f32 %v5207, %v4697
        %v5209 = vmax.f32 %v5208, %v4698
        %5210 = vmax.xlane.f32.xlu0 %v5209
        %v5211 = vpop.xlane.xlu0 %5210
        %v5212 = vmax.f32 %v4699, %v4700
        %v5213 = vmax.f32 %v5212, %v4701
        %v5214 = vmax.f32 %v5213, %v4702
        %v5215 = vmax.f32 %v5214, %v4703
        %v5216 = vmax.f32 %v5215, %v4704
        %v5217 = vmax.f32 %v5216, %v4705
        %v5218 = vmax.f32 %v5217, %v4706
        %5219 = vmax.xlane.f32.xlu0 %v5218
        %v5220 = vpop.xlane.xlu0 %5219
        %v5221 = vmax.f32 %v4707, %v4708
        %v5222 = vmax.f32 %v5221, %v4709
        %v5223 = vmax.f32 %v5222, %v4710
        %v5224 = vmax.f32 %v5223, %v4711
        %v5225 = vmax.f32 %v5224, %v4712
        %v5226 = vmax.f32 %v5225, %v4713
        %v5227 = vmax.f32 %v5226, %v4714
        %5228 = vmax.xlane.f32.xlu0 %v5227
        %v5229 = vpop.xlane.xlu0 %5228
        %v5230 = vmax.f32 %v4715, %v4716
        %v5231 = vmax.f32 %v5230, %v4717
        %v5232 = vmax.f32 %v5231, %v4718
        %v5233 = vmax.f32 %v5232, %v4719
        %v5234 = vmax.f32 %v5233, %v4720
        %v5235 = vmax.f32 %v5234, %v4721
        %v5236 = vmax.f32 %v5235, %v4722
        %5237 = vmax.xlane.f32.xlu0 %v5236
        %v5238 = vpop.xlane.xlu0 %5237
        %v5239 = vmax.f32 %v4723, %v4724
        %v5240 = vmax.f32 %v5239, %v4725
        %v5241 = vmax.f32 %v5240, %v4726
        %v5242 = vmax.f32 %v5241, %v4727
        %v5243 = vmax.f32 %v5242, %v4728
        %v5244 = vmax.f32 %v5243, %v4729
        %v5245 = vmax.f32 %v5244, %v4730
        %5246 = vmax.xlane.f32.xlu0 %v5245
        %v5247 = vpop.xlane.xlu0 %5246
        %v5248 = vmax.f32 %v4731, %v4732
        %v5249 = vmax.f32 %v5248, %v4733
        %v5250 = vmax.f32 %v5249, %v4734
        %v5251 = vmax.f32 %v5250, %v4735
        %v5252 = vmax.f32 %v5251, %v4736
        %v5253 = vmax.f32 %v5252, %v4737
        %v5254 = vmax.f32 %v5253, %v4738
        %5255 = vmax.xlane.f32.xlu0 %v5254
        %v5256 = vpop.xlane.xlu0 %5255
        %v5257 = vmax.f32 %v4739, %v4740
        %v5258 = vmax.f32 %v5257, %v4741
        %v5259 = vmax.f32 %v5258, %v4742
        %v5260 = vmax.f32 %v5259, %v4743
        %v5261 = vmax.f32 %v5260, %v4744
        %v5262 = vmax.f32 %v5261, %v4745
        %v5263 = vmax.f32 %v5262, %v4746
        %5264 = vmax.xlane.f32.xlu0 %v5263
        %v5265 = vpop.xlane.xlu0 %5264
        %v5266 = vmax.f32 %v4747, %v4748
        %v5267 = vmax.f32 %v5266, %v4749
        %v5268 = vmax.f32 %v5267, %v4750
        %v5269 = vmax.f32 %v5268, %v4751
        %v5270 = vmax.f32 %v5269, %v4752
        %v5271 = vmax.f32 %v5270, %v4753
        %v5272 = vmax.f32 %v5271, %v4754
        %5273 = vmax.xlane.f32.xlu0 %v5272
        %v5274 = vpop.xlane.xlu0 %5273
        %v5275 = vmax.f32 %v4755, %v4756
        %v5276 = vmax.f32 %v5275, %v4757
        %v5277 = vmax.f32 %v5276, %v4758
        %v5278 = vmax.f32 %v5277, %v4759
        %v5279 = vmax.f32 %v5278, %v4760
        %v5280 = vmax.f32 %v5279, %v4761
        %v5281 = vmax.f32 %v5280, %v4762
        %5282 = vmax.xlane.f32.xlu0 %v5281
        %v5283 = vpop.xlane.xlu0 %5282
        %v5284 = vmax.f32 %v4763, %v4764
        %v5285 = vmax.f32 %v5284, %v4765
        %v5286 = vmax.f32 %v5285, %v4766
        %v5287 = vmax.f32 %v5286, %v4767
        %v5288 = vmax.f32 %v5287, %v4768
        %v5289 = vmax.f32 %v5288, %v4769
        %v5290 = vmax.f32 %v5289, %v4770
        %5291 = vmax.xlane.f32.xlu0 %v5290
        %v5292 = vpop.xlane.xlu0 %5291
        %v5293 = vmax.f32 %v4771, %v4772
        %v5294 = vmax.f32 %v5293, %v4773
        %v5295 = vmax.f32 %v5294, %v4774
        %v5296 = vmax.f32 %v5295, %v4775
        %v5297 = vmax.f32 %v5296, %v4776
        %v5298 = vmax.f32 %v5297, %v4777
        %v5299 = vmax.f32 %v5298, %v4778
        %5300 = vmax.xlane.f32.xlu0 %v5299
        %v5301 = vpop.xlane.xlu0 %5300
        %v5302 = vmax.f32 %v4779, %v4780
        %v5303 = vmax.f32 %v5302, %v4781
        %v5304 = vmax.f32 %v5303, %v4782
        %v5305 = vmax.f32 %v5304, %v4783
        %v5306 = vmax.f32 %v5305, %v4784
        %v5307 = vmax.f32 %v5306, %v4785
        %v5308 = vmax.f32 %v5307, %v4786
        %5309 = vmax.xlane.f32.xlu0 %v5308
        %v5310 = vpop.xlane.xlu0 %5309
        %v5311 = vmax.f32 %v4787, %v4788
        %v5312 = vmax.f32 %v5311, %v4789
        %v5313 = vmax.f32 %v5312, %v4790
        %v5314 = vmax.f32 %v5313, %v4791
        %v5315 = vmax.f32 %v5314, %v4792
        %v5316 = vmax.f32 %v5315, %v4793
        %v5317 = vmax.f32 %v5316, %v4794
        %5318 = vmax.xlane.f32.xlu0 %v5317
        %v5319 = vpop.xlane.xlu0 %5318
        %v5320 = vmax.f32 %v4795, %v4796
        %v5321 = vmax.f32 %v5320, %v4797
        %v5322 = vmax.f32 %v5321, %v4798
        %v5323 = vmax.f32 %v5322, %v4799
        %v5324 = vmax.f32 %v5323, %v4800
        %v5325 = vmax.f32 %v5324, %v4801
        %v5326 = vmax.f32 %v5325, %v4802
        %5327 = vmax.xlane.f32.xlu0 %v5326
        %v5328 = vpop.xlane.xlu0 %5327
        %v5329 = vmax.f32 %v4803, %v4804
        %v5330 = vmax.f32 %v5329, %v4805
        %v5331 = vmax.f32 %v5330, %v4806
        %v5332 = vmax.f32 %v5331, %v4807
        %v5333 = vmax.f32 %v5332, %v4808
        %v5334 = vmax.f32 %v5333, %v4809
        %v5335 = vmax.f32 %v5334, %v4810
        %5336 = vmax.xlane.f32.xlu0 %v5335
        %v5337 = vpop.xlane.xlu0 %5336
        %v5338 = vmax.f32 %v4811, %v4812
        %v5339 = vmax.f32 %v5338, %v4813
        %v5340 = vmax.f32 %v5339, %v4814
        %v5341 = vmax.f32 %v5340, %v4815
        %v5342 = vmax.f32 %v5341, %v4816
        %v5343 = vmax.f32 %v5342, %v4817
        %v5344 = vmax.f32 %v5343, %v4818
        %5345 = vmax.xlane.f32.xlu0 %v5344
        %v5346 = vpop.xlane.xlu0 %5345
        %v5347 = vmax.f32 %v4819, %v4820
        %v5348 = vmax.f32 %v5347, %v4821
        %v5349 = vmax.f32 %v5348, %v4822
        %v5350 = vmax.f32 %v5349, %v4823
        %v5351 = vmax.f32 %v5350, %v4824
        %v5352 = vmax.f32 %v5351, %v4825
        %v5353 = vmax.f32 %v5352, %v4826
        %5354 = vmax.xlane.f32.xlu0 %v5353
        %v5355 = vpop.xlane.xlu0 %5354
        %v5356 = vmax.f32 %v4827, %v4828
        %v5357 = vmax.f32 %v5356, %v4829
        %v5358 = vmax.f32 %v5357, %v4830
        %v5359 = vmax.f32 %v5358, %v4831
        %v5360 = vmax.f32 %v5359, %v4832
        %v5361 = vmax.f32 %v5360, %v4833
        %v5362 = vmax.f32 %v5361, %v4834
        %5363 = vmax.xlane.f32.xlu0 %v5362
        %v5364 = vpop.xlane.xlu0 %5363
        %v5365 = vmax.f32 %v4835, %v4836
        %v5366 = vmax.f32 %v5365, %v4837
        %v5367 = vmax.f32 %v5366, %v4838
        %v5368 = vmax.f32 %v5367, %v4839
        %v5369 = vmax.f32 %v5368, %v4840
        %v5370 = vmax.f32 %v5369, %v4841
        %v5371 = vmax.f32 %v5370, %v4842
        %5372 = vmax.xlane.f32.xlu0 %v5371
        %v5373 = vpop.xlane.xlu0 %5372
        %v5374 = vmax.f32 %v4843, %v4844
        %v5375 = vmax.f32 %v5374, %v4845
        %v5376 = vmax.f32 %v5375, %v4846
        %v5377 = vmax.f32 %v5376, %v4847
        %v5378 = vmax.f32 %v5377, %v4848
        %v5379 = vmax.f32 %v5378, %v4849
        %v5380 = vmax.f32 %v5379, %v4850
        %5381 = vmax.xlane.f32.xlu0 %v5380
        %v5382 = vpop.xlane.xlu0 %5381
        %v5383 = vmax.f32 %v4851, %v4852
        %v5384 = vmax.f32 %v5383, %v4853
        %v5385 = vmax.f32 %v5384, %v4854
        %v5386 = vmax.f32 %v5385, %v4855
        %v5387 = vmax.f32 %v5386, %v4856
        %v5388 = vmax.f32 %v5387, %v4857
        %v5389 = vmax.f32 %v5388, %v4858
        %5390 = vmax.xlane.f32.xlu0 %v5389
        %v5391 = vpop.xlane.xlu0 %5390
        %v5392 = vmax.f32 %v4859, %v4860
        %v5393 = vmax.f32 %v5392, %v4861
        %v5394 = vmax.f32 %v5393, %v4862
        %v5395 = vmax.f32 %v5394, %v4863
        %v5396 = vmax.f32 %v5395, %v4864
        %v5397 = vmax.f32 %v5396, %v4865
        %v5398 = vmax.f32 %v5397, %v4866
        %5399 = vmax.xlane.f32.xlu0 %v5398
        %v5400 = vpop.xlane.xlu0 %5399
        %v5401 = vmax.f32 %v4867, %v4868
        %v5402 = vmax.f32 %v5401, %v4869
        %v5403 = vmax.f32 %v5402, %v4870
        %v5404 = vmax.f32 %v5403, %v4871
        %v5405 = vmax.f32 %v5404, %v4872
        %v5406 = vmax.f32 %v5405, %v4873
        %v5407 = vmax.f32 %v5406, %v4874
        %5408 = vmax.xlane.f32.xlu0 %v5407
        %v5409 = vpop.xlane.xlu0 %5408
        %v5410 = vmax.f32 %v4875, %v4876
        %v5411 = vmax.f32 %v5410, %v4877
        %v5412 = vmax.f32 %v5411, %v4878
        %v5413 = vmax.f32 %v5412, %v4879
        %v5414 = vmax.f32 %v5413, %v4880
        %v5415 = vmax.f32 %v5414, %v4881
        %v5416 = vmax.f32 %v5415, %v4882
        %5417 = vmax.xlane.f32.xlu0 %v5416
        %v5418 = vpop.xlane.xlu0 %5417
        %v5419 = vmax.f32 %v4883, %v4884
        %v5420 = vmax.f32 %v5419, %v4885
        %v5421 = vmax.f32 %v5420, %v4886
        %v5422 = vmax.f32 %v5421, %v4887
        %v5423 = vmax.f32 %v5422, %v4888
        %v5424 = vmax.f32 %v5423, %v4889
        %v5425 = vmax.f32 %v5424, %v4890
        %5426 = vmax.xlane.f32.xlu0 %v5425
        %v5427 = vpop.xlane.xlu0 %5426
        %v5428 = vmax.f32 %v4891, %v4892
        %v5429 = vmax.f32 %v5428, %v4893
        %v5430 = vmax.f32 %v5429, %v4894
        %v5431 = vmax.f32 %v5430, %v4895
        %v5432 = vmax.f32 %v5431, %v4896
        %v5433 = vmax.f32 %v5432, %v4897
        %v5434 = vmax.f32 %v5433, %v4898
        %5435 = vmax.xlane.f32.xlu0 %v5434
        %v5436 = vpop.xlane.xlu0 %5435
        %v5437 = vmax.f32 %v4899, %v4900
        %v5438 = vmax.f32 %v5437, %v4901
        %v5439 = vmax.f32 %v5438, %v4902
        %v5440 = vmax.f32 %v5439, %v4903
        %v5441 = vmax.f32 %v5440, %v4904
        %v5442 = vmax.f32 %v5441, %v4905
        %v5443 = vmax.f32 %v5442, %v4906
        %5444 = vmax.xlane.f32.xlu0 %v5443
        %v5445 = vpop.xlane.xlu0 %5444
        %v5446 = vmax.f32 %v4907, %v4908
        %v5447 = vmax.f32 %v5446, %v4909
        %v5448 = vmax.f32 %v5447, %v4910
        %v5449 = vmax.f32 %v5448, %v4911
        %v5450 = vmax.f32 %v5449, %v4912
        %v5451 = vmax.f32 %v5450, %v4913
        %v5452 = vmax.f32 %v5451, %v4914
        %5453 = vmax.xlane.f32.xlu0 %v5452
        %v5454 = vpop.xlane.xlu0 %5453
        %v5455 = vmax.f32 %v4915, %v4916
        %v5456 = vmax.f32 %v5455, %v4917
        %v5457 = vmax.f32 %v5456, %v4918
        %v5458 = vmax.f32 %v5457, %v4919
        %v5459 = vmax.f32 %v5458, %v4920
        %v5460 = vmax.f32 %v5459, %v4921
        %v5461 = vmax.f32 %v5460, %v4922
        %5462 = vmax.xlane.f32.xlu0 %v5461
        %v5463 = vpop.xlane.xlu0 %5462
        %v5464 = vmax.f32 %v4923, %v4924
        %v5465 = vmax.f32 %v5464, %v4925
        %v5466 = vmax.f32 %v5465, %v4926
        %v5467 = vmax.f32 %v5466, %v4927
        %v5468 = vmax.f32 %v5467, %v4928
        %v5469 = vmax.f32 %v5468, %v4929
        %v5470 = vmax.f32 %v5469, %v4930
        %5471 = vmax.xlane.f32.xlu0 %v5470
        %v5472 = vpop.xlane.xlu0 %5471
        %v5473 = vmax.f32 %v4931, %v4932
        %v5474 = vmax.f32 %v5473, %v4933
        %v5475 = vmax.f32 %v5474, %v4934
        %v5476 = vmax.f32 %v5475, %v4935
        %v5477 = vmax.f32 %v5476, %v4936
        %v5478 = vmax.f32 %v5477, %v4937
        %v5479 = vmax.f32 %v5478, %v4938
        %5480 = vmax.xlane.f32.xlu0 %v5479
        %v5481 = vpop.xlane.xlu0 %5480
        %v5482 = vmax.f32 %v4939, %v4940
        %v5483 = vmax.f32 %v5482, %v4941
        %v5484 = vmax.f32 %v5483, %v4942
        %v5485 = vmax.f32 %v5484, %v4943
        %v5486 = vmax.f32 %v5485, %v4944
        %v5487 = vmax.f32 %v5486, %v4945
        %v5488 = vmax.f32 %v5487, %v4946
        %5489 = vmax.xlane.f32.xlu0 %v5488
        %v5490 = vpop.xlane.xlu0 %5489
        %v5491 = vmax.f32 %v4947, %v4948
        %v5492 = vmax.f32 %v5491, %v4949
        %v5493 = vmax.f32 %v5492, %v4950
        %v5494 = vmax.f32 %v5493, %v4951
        %v5495 = vmax.f32 %v5494, %v4952
        %v5496 = vmax.f32 %v5495, %v4953
        %v5497 = vmax.f32 %v5496, %v4954
        %5498 = vmax.xlane.f32.xlu0 %v5497
        %v5499 = vpop.xlane.xlu0 %5498
        %v5500 = vmax.f32 %v4955, %v4956
        %v5501 = vmax.f32 %v5500, %v4957
        %v5502 = vmax.f32 %v5501, %v4958
        %v5503 = vmax.f32 %v5502, %v4959
        %v5504 = vmax.f32 %v5503, %v4960
        %v5505 = vmax.f32 %v5504, %v4961
        %v5506 = vmax.f32 %v5505, %v4962
        %5507 = vmax.xlane.f32.xlu0 %v5506
        %v5508 = vpop.xlane.xlu0 %5507
        %v5509 = vmax.f32 %v4963, %v4964
        %v5510 = vmax.f32 %v5509, %v4965
        %v5511 = vmax.f32 %v5510, %v4966
        %v5512 = vmax.f32 %v5511, %v4967
        %v5513 = vmax.f32 %v5512, %v4968
        %v5514 = vmax.f32 %v5513, %v4969
        %v5515 = vmax.f32 %v5514, %v4970
        %5516 = vmax.xlane.f32.xlu0 %v5515
        %v5517 = vpop.xlane.xlu0 %5516
        %v5518 = vmax.f32 %v4971, %v4972
        %v5519 = vmax.f32 %v5518, %v4973
        %v5520 = vmax.f32 %v5519, %v4974
        %v5521 = vmax.f32 %v5520, %v4975
        %v5522 = vmax.f32 %v5521, %v4976
        %v5523 = vmax.f32 %v5522, %v4977
        %v5524 = vmax.f32 %v5523, %v4978
        %5525 = vmax.xlane.f32.xlu0 %v5524
        %v5526 = vpop.xlane.xlu0 %5525
        %v5527 = vmax.f32 %v4979, %v4980
        %v5528 = vmax.f32 %v5527, %v4981
        %v5529 = vmax.f32 %v5528, %v4982
        %v5530 = vmax.f32 %v5529, %v4983
        %v5531 = vmax.f32 %v5530, %v4984
        %v5532 = vmax.f32 %v5531, %v4985
        %v5533 = vmax.f32 %v5532, %v4986
        %5534 = vmax.xlane.f32.xlu0 %v5533
        %v5535 = vpop.xlane.xlu0 %5534
        %v5536 = vmax.f32 %v4987, %v4988
        %v5537 = vmax.f32 %v5536, %v4989
        %v5538 = vmax.f32 %v5537, %v4990
        %v5539 = vmax.f32 %v5538, %v4991
        %v5540 = vmax.f32 %v5539, %v4992
        %v5541 = vmax.f32 %v5540, %v4993
        %v5542 = vmax.f32 %v5541, %v4994
        %5543 = vmax.xlane.f32.xlu0 %v5542
        %v5544 = vpop.xlane.xlu0 %5543
        %v5545 = vmax.f32 %v4995, %v4996
        %v5546 = vmax.f32 %v5545, %v4997
        %v5547 = vmax.f32 %v5546, %v4998
        %v5548 = vmax.f32 %v5547, %v4999
        %v5549 = vmax.f32 %v5548, %v5000
        %v5550 = vmax.f32 %v5549, %v5001
        %v5551 = vmax.f32 %v5550, %v5002
        %5552 = vmax.xlane.f32.xlu0 %v5551
        %v5553 = vpop.xlane.xlu0 %5552
        %v5554 = vmax.f32 %v5003, %v5004
        %v5555 = vmax.f32 %v5554, %v5005
        %v5556 = vmax.f32 %v5555, %v5006
        %v5557 = vmax.f32 %v5556, %v5007
        %v5558 = vmax.f32 %v5557, %v5008
        %v5559 = vmax.f32 %v5558, %v5009
        %v5560 = vmax.f32 %v5559, %v5010
        %5561 = vmax.xlane.f32.xlu0 %v5560
        %v5562 = vpop.xlane.xlu0 %5561
        %v5563 = vmax.f32 %v5011, %v5012
        %v5564 = vmax.f32 %v5563, %v5013
        %v5565 = vmax.f32 %v5564, %v5014
        %v5566 = vmax.f32 %v5565, %v5015
        %v5567 = vmax.f32 %v5566, %v5016
        %v5568 = vmax.f32 %v5567, %v5017
        %v5569 = vmax.f32 %v5568, %v5018
        %5570 = vmax.xlane.f32.xlu0 %v5569
        %v5571 = vpop.xlane.xlu0 %5570
        %v5572 = vmax.f32 %v5019, %v5020
        %v5573 = vmax.f32 %v5572, %v5021
        %v5574 = vmax.f32 %v5573, %v5022
        %v5575 = vmax.f32 %v5574, %v5023
        %v5576 = vmax.f32 %v5575, %v5024
        %v5577 = vmax.f32 %v5576, %v5025
        %v5578 = vmax.f32 %v5577, %v5026
        %5579 = vmax.xlane.f32.xlu0 %v5578
        %v5580 = vpop.xlane.xlu0 %5579
        %v5581 = vmax.f32 %v5027, %v5028
        %v5582 = vmax.f32 %v5581, %v5029
        %v5583 = vmax.f32 %v5582, %v5030
        %v5584 = vmax.f32 %v5583, %v5031
        %v5585 = vmax.f32 %v5584, %v5032
        %v5586 = vmax.f32 %v5585, %v5033
        %v5587 = vmax.f32 %v5586, %v5034
        %5588 = vmax.xlane.f32.xlu0 %v5587
        %v5589 = vpop.xlane.xlu0 %5588
        %v5590 = vmax.f32 %v5035, %v5036
        %v5591 = vmax.f32 %v5590, %v5037
        %v5592 = vmax.f32 %v5591, %v5038
        %v5593 = vmax.f32 %v5592, %v5039
        %v5594 = vmax.f32 %v5593, %v5040
        %v5595 = vmax.f32 %v5594, %v5041
        %v5596 = vmax.f32 %v5595, %v5042
        %5597 = vmax.xlane.f32.xlu0 %v5596
        %v5598 = vpop.xlane.xlu0 %5597
        %v5599 = vmax.f32 %v5043, %v5044
        %v5600 = vmax.f32 %v5599, %v5045
        %v5601 = vmax.f32 %v5600, %v5046
        %v5602 = vmax.f32 %v5601, %v5047
        %v5603 = vmax.f32 %v5602, %v5048
        %v5604 = vmax.f32 %v5603, %v5049
        %v5605 = vmax.f32 %v5604, %v5050
        %5606 = vmax.xlane.f32.xlu0 %v5605
        %v5607 = vpop.xlane.xlu0 %5606
        %v5608 = vmax.f32 %v5051, %v5052
        %v5609 = vmax.f32 %v5608, %v5053
        %v5610 = vmax.f32 %v5609, %v5054
        %v5611 = vmax.f32 %v5610, %v5055
        %v5612 = vmax.f32 %v5611, %v5056
        %v5613 = vmax.f32 %v5612, %v5057
        %v5614 = vmax.f32 %v5613, %v5058
        %5615 = vmax.xlane.f32.xlu0 %v5614
        %v5616 = vpop.xlane.xlu0 %5615
        %v5617 = vmax.f32 %v5059, %v5060
        %v5618 = vmax.f32 %v5617, %v5061
        %v5619 = vmax.f32 %v5618, %v5062
        %v5620 = vmax.f32 %v5619, %v5063
        %v5621 = vmax.f32 %v5620, %v5064
        %v5622 = vmax.f32 %v5621, %v5065
        %v5623 = vmax.f32 %v5622, %v5066
        %5624 = vmax.xlane.f32.xlu0 %v5623
        %v5625 = vpop.xlane.xlu0 %5624
        %v5626 = vmax.f32 %v5067, %v5068
        %v5627 = vmax.f32 %v5626, %v5069
        %v5628 = vmax.f32 %v5627, %v5070
        %v5629 = vmax.f32 %v5628, %v5071
        %v5630 = vmax.f32 %v5629, %v5072
        %v5631 = vmax.f32 %v5630, %v5073
        %v5632 = vmax.f32 %v5631, %v5074
        %5633 = vmax.xlane.f32.xlu0 %v5632
        %v5634 = vpop.xlane.xlu0 %5633
        %v5635 = vmax.f32 %v5075, %v5076
        %v5636 = vmax.f32 %v5635, %v5077
        %v5637 = vmax.f32 %v5636, %v5078
        %v5638 = vmax.f32 %v5637, %v5079
        %v5639 = vmax.f32 %v5638, %v5080
        %v5640 = vmax.f32 %v5639, %v5081
        %v5641 = vmax.f32 %v5640, %v5082
        %5642 = vmax.xlane.f32.xlu0 %v5641
        %v5643 = vpop.xlane.xlu0 %5642
        %v5644 = vmax.f32 %v5083, %v5084
        %v5645 = vmax.f32 %v5644, %v5085
        %v5646 = vmax.f32 %v5645, %v5086
        %v5647 = vmax.f32 %v5646, %v5087
        %v5648 = vmax.f32 %v5647, %v5088
        %v5649 = vmax.f32 %v5648, %v5089
        %v5650 = vmax.f32 %v5649, %v5090
        %5651 = vmax.xlane.f32.xlu0 %v5650
        %v5652 = vpop.xlane.xlu0 %5651
        %v5653 = vmax.f32 %v5091, %v5092
        %v5654 = vmax.f32 %v5653, %v5093
        %v5655 = vmax.f32 %v5654, %v5094
        %v5656 = vmax.f32 %v5655, %v5095
        %v5657 = vmax.f32 %v5656, %v5096
        %v5658 = vmax.f32 %v5657, %v5097
        %v5659 = vmax.f32 %v5658, %v5098
        %5660 = vmax.xlane.f32.xlu0 %v5659
        %v5661 = vpop.xlane.xlu0 %5660
        %v5662 = vmax.f32 %v5099, %v5100
        %v5663 = vmax.f32 %v5662, %v5101
        %v5664 = vmax.f32 %v5663, %v5102
        %v5665 = vmax.f32 %v5664, %v5103
        %v5666 = vmax.f32 %v5665, %v5104
        %v5667 = vmax.f32 %v5666, %v5105
        %v5668 = vmax.f32 %v5667, %v5106
        %5669 = vmax.xlane.f32.xlu0 %v5668
        %v5670 = vpop.xlane.xlu0 %5669
        %v5671 = vmax.f32 %v5107, %v5108
        %v5672 = vmax.f32 %v5671, %v5109
        %v5673 = vmax.f32 %v5672, %v5110
        %v5674 = vmax.f32 %v5673, %v5111
        %v5675 = vmax.f32 %v5674, %v5112
        %v5676 = vmax.f32 %v5675, %v5113
        %v5677 = vmax.f32 %v5676, %v5114
        %5678 = vmax.xlane.f32.xlu0 %v5677
        %v5679 = vpop.xlane.xlu0 %5678
        %v5680 = vmax.f32 %v5115, %v5116
        %v5681 = vmax.f32 %v5680, %v5117
        %v5682 = vmax.f32 %v5681, %v5118
        %v5683 = vmax.f32 %v5682, %v5119
        %v5684 = vmax.f32 %v5683, %v5120
        %v5685 = vmax.f32 %v5684, %v5121
        %v5686 = vmax.f32 %v5685, %v5122
        %5687 = vmax.xlane.f32.xlu0 %v5686
        %v5688 = vpop.xlane.xlu0 %5687
        %v5689 = vmax.f32 %v5123, %v5124
        %v5690 = vmax.f32 %v5689, %v5125
        %v5691 = vmax.f32 %v5690, %v5126
        %v5692 = vmax.f32 %v5691, %v5127
        %v5693 = vmax.f32 %v5692, %v5128
        %v5694 = vmax.f32 %v5693, %v5129
        %v5695 = vmax.f32 %v5694, %v5130
        %5696 = vmax.xlane.f32.xlu0 %v5695
        %v5697 = vpop.xlane.xlu0 %5696
        %v5698 = vmax.f32 %v5131, %v5132
        %v5699 = vmax.f32 %v5698, %v5133
        %v5700 = vmax.f32 %v5699, %v5134
        %v5701 = vmax.f32 %v5700, %v5135
        %v5702 = vmax.f32 %v5701, %v5136
        %v5703 = vmax.f32 %v5702, %v5137
        %v5704 = vmax.f32 %v5703, %v5138
        %5705 = vmax.xlane.f32.xlu0 %v5704
        %v5706 = vpop.xlane.xlu0 %5705
        %v5707 = vmax.f32 %v5139, %v5140
        %v5708 = vmax.f32 %v5707, %v5141
        %v5709 = vmax.f32 %v5708, %v5142
        %v5710 = vmax.f32 %v5709, %v5143
        %v5711 = vmax.f32 %v5710, %v5144
        %v5712 = vmax.f32 %v5711, %v5145
        %v5713 = vmax.f32 %v5712, %v5146
        %5714 = vmax.xlane.f32.xlu0 %v5713
        %v5715 = vpop.xlane.xlu0 %5714
        %v5716 = vmax.f32 %v5147, %v5148
        %v5717 = vmax.f32 %v5716, %v5149
        %v5718 = vmax.f32 %v5717, %v5150
        %v5719 = vmax.f32 %v5718, %v5151
        %v5720 = vmax.f32 %v5719, %v5152
        %v5721 = vmax.f32 %v5720, %v5153
        %v5722 = vmax.f32 %v5721, %v5154
        %5723 = vmax.xlane.f32.xlu0 %v5722
        %v5724 = vpop.xlane.xlu0 %5723
        %v5725 = vmax.f32 %v5155, %v5156
        %v5726 = vmax.f32 %v5725, %v5157
        %v5727 = vmax.f32 %v5726, %v5158
        %v5728 = vmax.f32 %v5727, %v5159
        %v5729 = vmax.f32 %v5728, %v5160
        %v5730 = vmax.f32 %v5729, %v5161
        %v5731 = vmax.f32 %v5730, %v5162
        %5732 = vmax.xlane.f32.xlu0 %v5731
        %v5733 = vpop.xlane.xlu0 %5732
        %v5734 = vmax.f32 %v5163, %v5164
        %v5735 = vmax.f32 %v5734, %v5165
        %v5736 = vmax.f32 %v5735, %v5166
        %v5737 = vmax.f32 %v5736, %v5167
        %v5738 = vmax.f32 %v5737, %v5168
        %v5739 = vmax.f32 %v5738, %v5169
        %v5740 = vmax.f32 %v5739, %v5170
        %5741 = vmax.xlane.f32.xlu0 %v5740
        %v5742 = vpop.xlane.xlu0 %5741
        %v5743 = vmax.f32 %v5171, %v5172
        %v5744 = vmax.f32 %v5743, %v5173
        %v5745 = vmax.f32 %v5744, %v5174
        %v5746 = vmax.f32 %v5745, %v5175
        %v5747 = vmax.f32 %v5746, %v5176
        %v5748 = vmax.f32 %v5747, %v5177
        %v5749 = vmax.f32 %v5748, %v5178
        %5750 = vmax.xlane.f32.xlu0 %v5749
        %v5751 = vpop.xlane.xlu0 %5750
        %v5752 = vmax.f32 %v5179, %v5180
        %v5753 = vmax.f32 %v5752, %v5181
        %v5754 = vmax.f32 %v5753, %v5182
        %v5755 = vmax.f32 %v5754, %v5183
        %v5756 = vmax.f32 %v5755, %v5184
        %v5757 = vmax.f32 %v5756, %v5185
        %v5758 = vmax.f32 %v5757, %v5186
        %5759 = vmax.xlane.f32.xlu0 %v5758
        %v5760 = vpop.xlane.xlu0 %5759
        %v5761 = vmax.f32 %v5187, %v5188
        %v5762 = vmax.f32 %v5761, %v5189
        %v5763 = vmax.f32 %v5762, %v5190
        %v5764 = vmax.f32 %v5763, %v5191
        %v5765 = vmax.f32 %v5764, %v5192
        %v5766 = vmax.f32 %v5765, %v5193
        %v5767 = vmax.f32 %v5766, %v5194
        %5768 = vmax.xlane.f32.xlu0 %v5767
        %v5769 = vpop.xlane.xlu0 %5768
        %v5770 = vmax.f32 %v5195, %v5196
        %v5771 = vmax.f32 %v5770, %v5197
        %v5772 = vmax.f32 %v5771, %v5198
        %v5773 = vmax.f32 %v5772, %v5199
        %v5774 = vmax.f32 %v5773, %v5200
        %v5775 = vmax.f32 %v5774, %v5201
        %v5776 = vmax.f32 %v5775, %v5202
        %5777 = vmax.xlane.f32.xlu0 %v5776
        %v5778 = vpop.xlane.xlu0 %5777
        %v5779 = vsub.f32 %v4691, %v5211
        %v5780 = vsub.f32 %v4692, %v5211
        %v5781 = vsub.f32 %v4693, %v5211
        %v5782 = vsub.f32 %v4694, %v5211
        %v5783 = vsub.f32 %v4695, %v5211
        %v5784 = vsub.f32 %v4696, %v5211
        %v5785 = vsub.f32 %v4697, %v5211
        %v5786 = vsub.f32 %v4698, %v5211
        %v5787 = vsub.f32 %v4699, %v5220
        %v5788 = vsub.f32 %v4700, %v5220
        %v5789 = vsub.f32 %v4701, %v5220
        %v5790 = vsub.f32 %v4702, %v5220
        %v5791 = vsub.f32 %v4703, %v5220
        %v5792 = vsub.f32 %v4704, %v5220
        %v5793 = vsub.f32 %v4705, %v5220
        %v5794 = vsub.f32 %v4706, %v5220
        %v5795 = vsub.f32 %v4707, %v5229
        %v5796 = vsub.f32 %v4708, %v5229
        %v5797 = vsub.f32 %v4709, %v5229
        %v5798 = vsub.f32 %v4710, %v5229
        %v5799 = vsub.f32 %v4711, %v5229
        %v5800 = vsub.f32 %v4712, %v5229
        %v5801 = vsub.f32 %v4713, %v5229
        %v5802 = vsub.f32 %v4714, %v5229
        %v5803 = vsub.f32 %v4715, %v5238
        %v5804 = vsub.f32 %v4716, %v5238
        %v5805 = vsub.f32 %v4717, %v5238
        %v5806 = vsub.f32 %v4718, %v5238
        %v5807 = vsub.f32 %v4719, %v5238
        %v5808 = vsub.f32 %v4720, %v5238
        %v5809 = vsub.f32 %v4721, %v5238
        %v5810 = vsub.f32 %v4722, %v5238
        %v5811 = vsub.f32 %v4723, %v5247
        %v5812 = vsub.f32 %v4724, %v5247
        %v5813 = vsub.f32 %v4725, %v5247
        %v5814 = vsub.f32 %v4726, %v5247
        %v5815 = vsub.f32 %v4727, %v5247
        %v5816 = vsub.f32 %v4728, %v5247
        %v5817 = vsub.f32 %v4729, %v5247
        %v5818 = vsub.f32 %v4730, %v5247
        %v5819 = vsub.f32 %v4731, %v5256
        %v5820 = vsub.f32 %v4732, %v5256
        %v5821 = vsub.f32 %v4733, %v5256
        %v5822 = vsub.f32 %v4734, %v5256
        %v5823 = vsub.f32 %v4735, %v5256
        %v5824 = vsub.f32 %v4736, %v5256
        %v5825 = vsub.f32 %v4737, %v5256
        %v5826 = vsub.f32 %v4738, %v5256
        %v5827 = vsub.f32 %v4739, %v5265
        %v5828 = vsub.f32 %v4740, %v5265
        %v5829 = vsub.f32 %v4741, %v5265
        %v5830 = vsub.f32 %v4742, %v5265
        %v5831 = vsub.f32 %v4743, %v5265
        %v5832 = vsub.f32 %v4744, %v5265
        %v5833 = vsub.f32 %v4745, %v5265
        %v5834 = vsub.f32 %v4746, %v5265
        %v5835 = vsub.f32 %v4747, %v5274
        %v5836 = vsub.f32 %v4748, %v5274
        %v5837 = vsub.f32 %v4749, %v5274
        %v5838 = vsub.f32 %v4750, %v5274
        %v5839 = vsub.f32 %v4751, %v5274
        %v5840 = vsub.f32 %v4752, %v5274
        %v5841 = vsub.f32 %v4753, %v5274
        %v5842 = vsub.f32 %v4754, %v5274
        %v5843 = vsub.f32 %v4755, %v5283
        %v5844 = vsub.f32 %v4756, %v5283
        %v5845 = vsub.f32 %v4757, %v5283
        %v5846 = vsub.f32 %v4758, %v5283
        %v5847 = vsub.f32 %v4759, %v5283
        %v5848 = vsub.f32 %v4760, %v5283
        %v5849 = vsub.f32 %v4761, %v5283
        %v5850 = vsub.f32 %v4762, %v5283
        %v5851 = vsub.f32 %v4763, %v5292
        %v5852 = vsub.f32 %v4764, %v5292
        %v5853 = vsub.f32 %v4765, %v5292
        %v5854 = vsub.f32 %v4766, %v5292
        %v5855 = vsub.f32 %v4767, %v5292
        %v5856 = vsub.f32 %v4768, %v5292
        %v5857 = vsub.f32 %v4769, %v5292
        %v5858 = vsub.f32 %v4770, %v5292
        %v5859 = vsub.f32 %v4771, %v5301
        %v5860 = vsub.f32 %v4772, %v5301
        %v5861 = vsub.f32 %v4773, %v5301
        %v5862 = vsub.f32 %v4774, %v5301
        %v5863 = vsub.f32 %v4775, %v5301
        %v5864 = vsub.f32 %v4776, %v5301
        %v5865 = vsub.f32 %v4777, %v5301
        %v5866 = vsub.f32 %v4778, %v5301
        %v5867 = vsub.f32 %v4779, %v5310
        %v5868 = vsub.f32 %v4780, %v5310
        %v5869 = vsub.f32 %v4781, %v5310
        %v5870 = vsub.f32 %v4782, %v5310
        %v5871 = vsub.f32 %v4783, %v5310
        %v5872 = vsub.f32 %v4784, %v5310
        %v5873 = vsub.f32 %v4785, %v5310
        %v5874 = vsub.f32 %v4786, %v5310
        %v5875 = vsub.f32 %v4787, %v5319
        %v5876 = vsub.f32 %v4788, %v5319
        %v5877 = vsub.f32 %v4789, %v5319
        %v5878 = vsub.f32 %v4790, %v5319
        %v5879 = vsub.f32 %v4791, %v5319
        %v5880 = vsub.f32 %v4792, %v5319
        %v5881 = vsub.f32 %v4793, %v5319
        %v5882 = vsub.f32 %v4794, %v5319
        %v5883 = vsub.f32 %v4795, %v5328
        %v5884 = vsub.f32 %v4796, %v5328
        %v5885 = vsub.f32 %v4797, %v5328
        %v5886 = vsub.f32 %v4798, %v5328
        %v5887 = vsub.f32 %v4799, %v5328
        %v5888 = vsub.f32 %v4800, %v5328
        %v5889 = vsub.f32 %v4801, %v5328
        %v5890 = vsub.f32 %v4802, %v5328
        %v5891 = vsub.f32 %v4803, %v5337
        %v5892 = vsub.f32 %v4804, %v5337
        %v5893 = vsub.f32 %v4805, %v5337
        %v5894 = vsub.f32 %v4806, %v5337
        %v5895 = vsub.f32 %v4807, %v5337
        %v5896 = vsub.f32 %v4808, %v5337
        %v5897 = vsub.f32 %v4809, %v5337
        %v5898 = vsub.f32 %v4810, %v5337
        %v5899 = vsub.f32 %v4811, %v5346
        %v5900 = vsub.f32 %v4812, %v5346
        %v5901 = vsub.f32 %v4813, %v5346
        %v5902 = vsub.f32 %v4814, %v5346
        %v5903 = vsub.f32 %v4815, %v5346
        %v5904 = vsub.f32 %v4816, %v5346
        %v5905 = vsub.f32 %v4817, %v5346
        %v5906 = vsub.f32 %v4818, %v5346
        %v5907 = vsub.f32 %v4819, %v5355
        %v5908 = vsub.f32 %v4820, %v5355
        %v5909 = vsub.f32 %v4821, %v5355
        %v5910 = vsub.f32 %v4822, %v5355
        %v5911 = vsub.f32 %v4823, %v5355
        %v5912 = vsub.f32 %v4824, %v5355
        %v5913 = vsub.f32 %v4825, %v5355
        %v5914 = vsub.f32 %v4826, %v5355
        %v5915 = vsub.f32 %v4827, %v5364
        %v5916 = vsub.f32 %v4828, %v5364
        %v5917 = vsub.f32 %v4829, %v5364
        %v5918 = vsub.f32 %v4830, %v5364
        %v5919 = vsub.f32 %v4831, %v5364
        %v5920 = vsub.f32 %v4832, %v5364
        %v5921 = vsub.f32 %v4833, %v5364
        %v5922 = vsub.f32 %v4834, %v5364
        %v5923 = vsub.f32 %v4835, %v5373
        %v5924 = vsub.f32 %v4836, %v5373
        %v5925 = vsub.f32 %v4837, %v5373
        %v5926 = vsub.f32 %v4838, %v5373
        %v5927 = vsub.f32 %v4839, %v5373
        %v5928 = vsub.f32 %v4840, %v5373
        %v5929 = vsub.f32 %v4841, %v5373
        %v5930 = vsub.f32 %v4842, %v5373
        %v5931 = vsub.f32 %v4843, %v5382
        %v5932 = vsub.f32 %v4844, %v5382
        %v5933 = vsub.f32 %v4845, %v5382
        %v5934 = vsub.f32 %v4846, %v5382
        %v5935 = vsub.f32 %v4847, %v5382
        %v5936 = vsub.f32 %v4848, %v5382
        %v5937 = vsub.f32 %v4849, %v5382
        %v5938 = vsub.f32 %v4850, %v5382
        %v5939 = vsub.f32 %v4851, %v5391
        %v5940 = vsub.f32 %v4852, %v5391
        %v5941 = vsub.f32 %v4853, %v5391
        %v5942 = vsub.f32 %v4854, %v5391
        %v5943 = vsub.f32 %v4855, %v5391
        %v5944 = vsub.f32 %v4856, %v5391
        %v5945 = vsub.f32 %v4857, %v5391
        %v5946 = vsub.f32 %v4858, %v5391
        %v5947 = vsub.f32 %v4859, %v5400
        %v5948 = vsub.f32 %v4860, %v5400
        %v5949 = vsub.f32 %v4861, %v5400
        %v5950 = vsub.f32 %v4862, %v5400
        %v5951 = vsub.f32 %v4863, %v5400
        %v5952 = vsub.f32 %v4864, %v5400
        %v5953 = vsub.f32 %v4865, %v5400
        %v5954 = vsub.f32 %v4866, %v5400
        %v5955 = vsub.f32 %v4867, %v5409
        %v5956 = vsub.f32 %v4868, %v5409
        %v5957 = vsub.f32 %v4869, %v5409
        %v5958 = vsub.f32 %v4870, %v5409
        %v5959 = vsub.f32 %v4871, %v5409
        %v5960 = vsub.f32 %v4872, %v5409
        %v5961 = vsub.f32 %v4873, %v5409
        %v5962 = vsub.f32 %v4874, %v5409
        %v5963 = vsub.f32 %v4875, %v5418
        %v5964 = vsub.f32 %v4876, %v5418
        %v5965 = vsub.f32 %v4877, %v5418
        %v5966 = vsub.f32 %v4878, %v5418
        %v5967 = vsub.f32 %v4879, %v5418
        %v5968 = vsub.f32 %v4880, %v5418
        %v5969 = vsub.f32 %v4881, %v5418
        %v5970 = vsub.f32 %v4882, %v5418
        %v5971 = vsub.f32 %v4883, %v5427
        %v5972 = vsub.f32 %v4884, %v5427
        %v5973 = vsub.f32 %v4885, %v5427
        %v5974 = vsub.f32 %v4886, %v5427
        %v5975 = vsub.f32 %v4887, %v5427
        %v5976 = vsub.f32 %v4888, %v5427
        %v5977 = vsub.f32 %v4889, %v5427
        %v5978 = vsub.f32 %v4890, %v5427
        %v5979 = vsub.f32 %v4891, %v5436
        %v5980 = vsub.f32 %v4892, %v5436
        %v5981 = vsub.f32 %v4893, %v5436
        %v5982 = vsub.f32 %v4894, %v5436
        %v5983 = vsub.f32 %v4895, %v5436
        %v5984 = vsub.f32 %v4896, %v5436
        %v5985 = vsub.f32 %v4897, %v5436
        %v5986 = vsub.f32 %v4898, %v5436
        %v5987 = vsub.f32 %v4899, %v5445
        %v5988 = vsub.f32 %v4900, %v5445
        %v5989 = vsub.f32 %v4901, %v5445
        %v5990 = vsub.f32 %v4902, %v5445
        %v5991 = vsub.f32 %v4903, %v5445
        %v5992 = vsub.f32 %v4904, %v5445
        %v5993 = vsub.f32 %v4905, %v5445
        %v5994 = vsub.f32 %v4906, %v5445
        %v5995 = vsub.f32 %v4907, %v5454
        %v5996 = vsub.f32 %v4908, %v5454
        %v5997 = vsub.f32 %v4909, %v5454
        %v5998 = vsub.f32 %v4910, %v5454
        %v5999 = vsub.f32 %v4911, %v5454
        %v6000 = vsub.f32 %v4912, %v5454
        %v6001 = vsub.f32 %v4913, %v5454
        %v6002 = vsub.f32 %v4914, %v5454
        %v6003 = vsub.f32 %v4915, %v5463
        %v6004 = vsub.f32 %v4916, %v5463
        %v6005 = vsub.f32 %v4917, %v5463
        %v6006 = vsub.f32 %v4918, %v5463
        %v6007 = vsub.f32 %v4919, %v5463
        %v6008 = vsub.f32 %v4920, %v5463
        %v6009 = vsub.f32 %v4921, %v5463
        %v6010 = vsub.f32 %v4922, %v5463
        %v6011 = vsub.f32 %v4923, %v5472
        %v6012 = vsub.f32 %v4924, %v5472
        %v6013 = vsub.f32 %v4925, %v5472
        %v6014 = vsub.f32 %v4926, %v5472
        %v6015 = vsub.f32 %v4927, %v5472
        %v6016 = vsub.f32 %v4928, %v5472
        %v6017 = vsub.f32 %v4929, %v5472
        %v6018 = vsub.f32 %v4930, %v5472
        %v6019 = vsub.f32 %v4931, %v5481
        %v6020 = vsub.f32 %v4932, %v5481
        %v6021 = vsub.f32 %v4933, %v5481
        %v6022 = vsub.f32 %v4934, %v5481
        %v6023 = vsub.f32 %v4935, %v5481
        %v6024 = vsub.f32 %v4936, %v5481
        %v6025 = vsub.f32 %v4937, %v5481
        %v6026 = vsub.f32 %v4938, %v5481
        %v6027 = vsub.f32 %v4939, %v5490
        %v6028 = vsub.f32 %v4940, %v5490
        %v6029 = vsub.f32 %v4941, %v5490
        %v6030 = vsub.f32 %v4942, %v5490
        %v6031 = vsub.f32 %v4943, %v5490
        %v6032 = vsub.f32 %v4944, %v5490
        %v6033 = vsub.f32 %v4945, %v5490
        %v6034 = vsub.f32 %v4946, %v5490
        %v6035 = vsub.f32 %v4947, %v5499
        %v6036 = vsub.f32 %v4948, %v5499
        %v6037 = vsub.f32 %v4949, %v5499
        %v6038 = vsub.f32 %v4950, %v5499
        %v6039 = vsub.f32 %v4951, %v5499
        %v6040 = vsub.f32 %v4952, %v5499
        %v6041 = vsub.f32 %v4953, %v5499
        %v6042 = vsub.f32 %v4954, %v5499
        %v6043 = vsub.f32 %v4955, %v5508
        %v6044 = vsub.f32 %v4956, %v5508
        %v6045 = vsub.f32 %v4957, %v5508
        %v6046 = vsub.f32 %v4958, %v5508
        %v6047 = vsub.f32 %v4959, %v5508
        %v6048 = vsub.f32 %v4960, %v5508
        %v6049 = vsub.f32 %v4961, %v5508
        %v6050 = vsub.f32 %v4962, %v5508
        %v6051 = vsub.f32 %v4963, %v5517
        %v6052 = vsub.f32 %v4964, %v5517
        %v6053 = vsub.f32 %v4965, %v5517
        %v6054 = vsub.f32 %v4966, %v5517
        %v6055 = vsub.f32 %v4967, %v5517
        %v6056 = vsub.f32 %v4968, %v5517
        %v6057 = vsub.f32 %v4969, %v5517
        %v6058 = vsub.f32 %v4970, %v5517
        %v6059 = vsub.f32 %v4971, %v5526
        %v6060 = vsub.f32 %v4972, %v5526
        %v6061 = vsub.f32 %v4973, %v5526
        %v6062 = vsub.f32 %v4974, %v5526
        %v6063 = vsub.f32 %v4975, %v5526
        %v6064 = vsub.f32 %v4976, %v5526
        %v6065 = vsub.f32 %v4977, %v5526
        %v6066 = vsub.f32 %v4978, %v5526
        %v6067 = vsub.f32 %v4979, %v5535
        %v6068 = vsub.f32 %v4980, %v5535
        %v6069 = vsub.f32 %v4981, %v5535
        %v6070 = vsub.f32 %v4982, %v5535
        %v6071 = vsub.f32 %v4983, %v5535
        %v6072 = vsub.f32 %v4984, %v5535
        %v6073 = vsub.f32 %v4985, %v5535
        %v6074 = vsub.f32 %v4986, %v5535
        %v6075 = vsub.f32 %v4987, %v5544
        %v6076 = vsub.f32 %v4988, %v5544
        %v6077 = vsub.f32 %v4989, %v5544
        %v6078 = vsub.f32 %v4990, %v5544
        %v6079 = vsub.f32 %v4991, %v5544
        %v6080 = vsub.f32 %v4992, %v5544
        %v6081 = vsub.f32 %v4993, %v5544
        %v6082 = vsub.f32 %v4994, %v5544
        %v6083 = vsub.f32 %v4995, %v5553
        %v6084 = vsub.f32 %v4996, %v5553
        %v6085 = vsub.f32 %v4997, %v5553
        %v6086 = vsub.f32 %v4998, %v5553
        %v6087 = vsub.f32 %v4999, %v5553
        %v6088 = vsub.f32 %v5000, %v5553
        %v6089 = vsub.f32 %v5001, %v5553
        %v6090 = vsub.f32 %v5002, %v5553
        %v6091 = vsub.f32 %v5003, %v5562
        %v6092 = vsub.f32 %v5004, %v5562
        %v6093 = vsub.f32 %v5005, %v5562
        %v6094 = vsub.f32 %v5006, %v5562
        %v6095 = vsub.f32 %v5007, %v5562
        %v6096 = vsub.f32 %v5008, %v5562
        %v6097 = vsub.f32 %v5009, %v5562
        %v6098 = vsub.f32 %v5010, %v5562
        %v6099 = vsub.f32 %v5011, %v5571
        %v6100 = vsub.f32 %v5012, %v5571
        %v6101 = vsub.f32 %v5013, %v5571
        %v6102 = vsub.f32 %v5014, %v5571
        %v6103 = vsub.f32 %v5015, %v5571
        %v6104 = vsub.f32 %v5016, %v5571
        %v6105 = vsub.f32 %v5017, %v5571
        %v6106 = vsub.f32 %v5018, %v5571
        %v6107 = vsub.f32 %v5019, %v5580
        %v6108 = vsub.f32 %v5020, %v5580
        %v6109 = vsub.f32 %v5021, %v5580
        %v6110 = vsub.f32 %v5022, %v5580
        %v6111 = vsub.f32 %v5023, %v5580
        %v6112 = vsub.f32 %v5024, %v5580
        %v6113 = vsub.f32 %v5025, %v5580
        %v6114 = vsub.f32 %v5026, %v5580
        %v6115 = vsub.f32 %v5027, %v5589
        %v6116 = vsub.f32 %v5028, %v5589
        %v6117 = vsub.f32 %v5029, %v5589
        %v6118 = vsub.f32 %v5030, %v5589
        %v6119 = vsub.f32 %v5031, %v5589
        %v6120 = vsub.f32 %v5032, %v5589
        %v6121 = vsub.f32 %v5033, %v5589
        %v6122 = vsub.f32 %v5034, %v5589
        %v6123 = vsub.f32 %v5035, %v5598
        %v6124 = vsub.f32 %v5036, %v5598
        %v6125 = vsub.f32 %v5037, %v5598
        %v6126 = vsub.f32 %v5038, %v5598
        %v6127 = vsub.f32 %v5039, %v5598
        %v6128 = vsub.f32 %v5040, %v5598
        %v6129 = vsub.f32 %v5041, %v5598
        %v6130 = vsub.f32 %v5042, %v5598
        %v6131 = vsub.f32 %v5043, %v5607
        %v6132 = vsub.f32 %v5044, %v5607
        %v6133 = vsub.f32 %v5045, %v5607
        %v6134 = vsub.f32 %v5046, %v5607
        %v6135 = vsub.f32 %v5047, %v5607
        %v6136 = vsub.f32 %v5048, %v5607
        %v6137 = vsub.f32 %v5049, %v5607
        %v6138 = vsub.f32 %v5050, %v5607
        %v6139 = vsub.f32 %v5051, %v5616
        %v6140 = vsub.f32 %v5052, %v5616
        %v6141 = vsub.f32 %v5053, %v5616
        %v6142 = vsub.f32 %v5054, %v5616
        %v6143 = vsub.f32 %v5055, %v5616
        %v6144 = vsub.f32 %v5056, %v5616
        %v6145 = vsub.f32 %v5057, %v5616
        %v6146 = vsub.f32 %v5058, %v5616
        %v6147 = vsub.f32 %v5059, %v5625
        %v6148 = vsub.f32 %v5060, %v5625
        %v6149 = vsub.f32 %v5061, %v5625
        %v6150 = vsub.f32 %v5062, %v5625
        %v6151 = vsub.f32 %v5063, %v5625
        %v6152 = vsub.f32 %v5064, %v5625
        %v6153 = vsub.f32 %v5065, %v5625
        %v6154 = vsub.f32 %v5066, %v5625
        %v6155 = vsub.f32 %v5067, %v5634
        %v6156 = vsub.f32 %v5068, %v5634
        %v6157 = vsub.f32 %v5069, %v5634
        %v6158 = vsub.f32 %v5070, %v5634
        %v6159 = vsub.f32 %v5071, %v5634
        %v6160 = vsub.f32 %v5072, %v5634
        %v6161 = vsub.f32 %v5073, %v5634
        %v6162 = vsub.f32 %v5074, %v5634
        %v6163 = vsub.f32 %v5075, %v5643
        %v6164 = vsub.f32 %v5076, %v5643
        %v6165 = vsub.f32 %v5077, %v5643
        %v6166 = vsub.f32 %v5078, %v5643
        %v6167 = vsub.f32 %v5079, %v5643
        %v6168 = vsub.f32 %v5080, %v5643
        %v6169 = vsub.f32 %v5081, %v5643
        %v6170 = vsub.f32 %v5082, %v5643
        %v6171 = vsub.f32 %v5083, %v5652
        %v6172 = vsub.f32 %v5084, %v5652
        %v6173 = vsub.f32 %v5085, %v5652
        %v6174 = vsub.f32 %v5086, %v5652
        %v6175 = vsub.f32 %v5087, %v5652
        %v6176 = vsub.f32 %v5088, %v5652
        %v6177 = vsub.f32 %v5089, %v5652
        %v6178 = vsub.f32 %v5090, %v5652
        %v6179 = vsub.f32 %v5091, %v5661
        %v6180 = vsub.f32 %v5092, %v5661
        %v6181 = vsub.f32 %v5093, %v5661
        %v6182 = vsub.f32 %v5094, %v5661
        %v6183 = vsub.f32 %v5095, %v5661
        %v6184 = vsub.f32 %v5096, %v5661
        %v6185 = vsub.f32 %v5097, %v5661
        %v6186 = vsub.f32 %v5098, %v5661
        %v6187 = vsub.f32 %v5099, %v5670
        %v6188 = vsub.f32 %v5100, %v5670
        %v6189 = vsub.f32 %v5101, %v5670
        %v6190 = vsub.f32 %v5102, %v5670
        %v6191 = vsub.f32 %v5103, %v5670
        %v6192 = vsub.f32 %v5104, %v5670
        %v6193 = vsub.f32 %v5105, %v5670
        %v6194 = vsub.f32 %v5106, %v5670
        %v6195 = vsub.f32 %v5107, %v5679
        %v6196 = vsub.f32 %v5108, %v5679
        %v6197 = vsub.f32 %v5109, %v5679
        %v6198 = vsub.f32 %v5110, %v5679
        %v6199 = vsub.f32 %v5111, %v5679
        %v6200 = vsub.f32 %v5112, %v5679
        %v6201 = vsub.f32 %v5113, %v5679
        %v6202 = vsub.f32 %v5114, %v5679
        %v6203 = vsub.f32 %v5115, %v5688
        %v6204 = vsub.f32 %v5116, %v5688
        %v6205 = vsub.f32 %v5117, %v5688
        %v6206 = vsub.f32 %v5118, %v5688
        %v6207 = vsub.f32 %v5119, %v5688
        %v6208 = vsub.f32 %v5120, %v5688
        %v6209 = vsub.f32 %v5121, %v5688
        %v6210 = vsub.f32 %v5122, %v5688
        %v6211 = vsub.f32 %v5123, %v5697
        %v6212 = vsub.f32 %v5124, %v5697
        %v6213 = vsub.f32 %v5125, %v5697
        %v6214 = vsub.f32 %v5126, %v5697
        %v6215 = vsub.f32 %v5127, %v5697
        %v6216 = vsub.f32 %v5128, %v5697
        %v6217 = vsub.f32 %v5129, %v5697
        %v6218 = vsub.f32 %v5130, %v5697
        %v6219 = vsub.f32 %v5131, %v5706
        %v6220 = vsub.f32 %v5132, %v5706
        %v6221 = vsub.f32 %v5133, %v5706
        %v6222 = vsub.f32 %v5134, %v5706
        %v6223 = vsub.f32 %v5135, %v5706
        %v6224 = vsub.f32 %v5136, %v5706
        %v6225 = vsub.f32 %v5137, %v5706
        %v6226 = vsub.f32 %v5138, %v5706
        %v6227 = vsub.f32 %v5139, %v5715
        %v6228 = vsub.f32 %v5140, %v5715
        %v6229 = vsub.f32 %v5141, %v5715
        %v6230 = vsub.f32 %v5142, %v5715
        %v6231 = vsub.f32 %v5143, %v5715
        %v6232 = vsub.f32 %v5144, %v5715
        %v6233 = vsub.f32 %v5145, %v5715
        %v6234 = vsub.f32 %v5146, %v5715
        %v6235 = vsub.f32 %v5147, %v5724
        %v6236 = vsub.f32 %v5148, %v5724
        %v6237 = vsub.f32 %v5149, %v5724
        %v6238 = vsub.f32 %v5150, %v5724
        %v6239 = vsub.f32 %v5151, %v5724
        %v6240 = vsub.f32 %v5152, %v5724
        %v6241 = vsub.f32 %v5153, %v5724
        %v6242 = vsub.f32 %v5154, %v5724
        %v6243 = vsub.f32 %v5155, %v5733
        %v6244 = vsub.f32 %v5156, %v5733
        %v6245 = vsub.f32 %v5157, %v5733
        %v6246 = vsub.f32 %v5158, %v5733
        %v6247 = vsub.f32 %v5159, %v5733
        %v6248 = vsub.f32 %v5160, %v5733
        %v6249 = vsub.f32 %v5161, %v5733
        %v6250 = vsub.f32 %v5162, %v5733
        %v6251 = vsub.f32 %v5163, %v5742
        %v6252 = vsub.f32 %v5164, %v5742
        %v6253 = vsub.f32 %v5165, %v5742
        %v6254 = vsub.f32 %v5166, %v5742
        %v6255 = vsub.f32 %v5167, %v5742
        %v6256 = vsub.f32 %v5168, %v5742
        %v6257 = vsub.f32 %v5169, %v5742
        %v6258 = vsub.f32 %v5170, %v5742
        %v6259 = vsub.f32 %v5171, %v5751
        %v6260 = vsub.f32 %v5172, %v5751
        %v6261 = vsub.f32 %v5173, %v5751
        %v6262 = vsub.f32 %v5174, %v5751
        %v6263 = vsub.f32 %v5175, %v5751
        %v6264 = vsub.f32 %v5176, %v5751
        %v6265 = vsub.f32 %v5177, %v5751
        %v6266 = vsub.f32 %v5178, %v5751
        %v6267 = vsub.f32 %v5179, %v5760
        %v6268 = vsub.f32 %v5180, %v5760
        %v6269 = vsub.f32 %v5181, %v5760
        %v6270 = vsub.f32 %v5182, %v5760
        %v6271 = vsub.f32 %v5183, %v5760
        %v6272 = vsub.f32 %v5184, %v5760
        %v6273 = vsub.f32 %v5185, %v5760
        %v6274 = vsub.f32 %v5186, %v5760
        %v6275 = vsub.f32 %v5187, %v5769
        %v6276 = vsub.f32 %v5188, %v5769
        %v6277 = vsub.f32 %v5189, %v5769
        %v6278 = vsub.f32 %v5190, %v5769
        %v6279 = vsub.f32 %v5191, %v5769
        %v6280 = vsub.f32 %v5192, %v5769
        %v6281 = vsub.f32 %v5193, %v5769
        %v6282 = vsub.f32 %v5194, %v5769
        %v6283 = vsub.f32 %v5195, %v5778
        %v6284 = vsub.f32 %v5196, %v5778
        %v6285 = vsub.f32 %v5197, %v5778
        %v6286 = vsub.f32 %v5198, %v5778
        %v6287 = vsub.f32 %v5199, %v5778
        %v6288 = vsub.f32 %v5200, %v5778
        %v6289 = vsub.f32 %v5201, %v5778
        %v6290 = vsub.f32 %v5202, %v5778
        %v6291 = vmul.f32 %v5779, 1.442695
        %v6292 = vpow.pop %v6291
        %v6293 = vmul.f32 %v5780, 1.442695
        %v6294 = vpow.pop %v6293
        %v6295 = vmul.f32 %v5781, 1.442695
        %v6296 = vpow.pop %v6295
        %v6297 = vmul.f32 %v5782, 1.442695
        %v6298 = vpow.pop %v6297
        %v6299 = vmul.f32 %v5783, 1.442695
        %v6300 = vpow.pop %v6299
        %v6301 = vmul.f32 %v5784, 1.442695
        %v6302 = vpow.pop %v6301
        %v6303 = vmul.f32 %v5785, 1.442695
        %v6304 = vpow.pop %v6303
        %v6305 = vmul.f32 %v5786, 1.442695
        %v6306 = vpow.pop %v6305
        %v6307 = vmul.f32 %v5787, 1.442695
        %v6308 = vpow.pop %v6307
        %v6309 = vmul.f32 %v5788, 1.442695
        %v6310 = vpow.pop %v6309
        %v6311 = vmul.f32 %v5789, 1.442695
        %v6312 = vpow.pop %v6311
        %v6313 = vmul.f32 %v5790, 1.442695
        %v6314 = vpow.pop %v6313
        %v6315 = vmul.f32 %v5791, 1.442695
        %v6316 = vpow.pop %v6315
        %v6317 = vmul.f32 %v5792, 1.442695
        %v6318 = vpow.pop %v6317
        %v6319 = vmul.f32 %v5793, 1.442695
        %v6320 = vpow.pop %v6319
        %v6321 = vmul.f32 %v5794, 1.442695
        %v6322 = vpow.pop %v6321
        %v6323 = vmul.f32 %v5795, 1.442695
        %v6324 = vpow.pop %v6323
        %v6325 = vmul.f32 %v5796, 1.442695
        %v6326 = vpow.pop %v6325
        %v6327 = vmul.f32 %v5797, 1.442695
        %v6328 = vpow.pop %v6327
        %v6329 = vmul.f32 %v5798, 1.442695
        %v6330 = vpow.pop %v6329
        %v6331 = vmul.f32 %v5799, 1.442695
        %v6332 = vpow.pop %v6331
        %v6333 = vmul.f32 %v5800, 1.442695
        %v6334 = vpow.pop %v6333
        %v6335 = vmul.f32 %v5801, 1.442695
        %v6336 = vpow.pop %v6335
        %v6337 = vmul.f32 %v5802, 1.442695
        %v6338 = vpow.pop %v6337
        %v6339 = vmul.f32 %v5803, 1.442695
        %v6340 = vpow.pop %v6339
        %v6341 = vmul.f32 %v5804, 1.442695
        %v6342 = vpow.pop %v6341
        %v6343 = vmul.f32 %v5805, 1.442695
        %v6344 = vpow.pop %v6343
        %v6345 = vmul.f32 %v5806, 1.442695
        %v6346 = vpow.pop %v6345
        %v6347 = vmul.f32 %v5807, 1.442695
        %v6348 = vpow.pop %v6347
        %v6349 = vmul.f32 %v5808, 1.442695
        %v6350 = vpow.pop %v6349
        %v6351 = vmul.f32 %v5809, 1.442695
        %v6352 = vpow.pop %v6351
        %v6353 = vmul.f32 %v5810, 1.442695
        %v6354 = vpow.pop %v6353
        %v6355 = vmul.f32 %v5811, 1.442695
        %v6356 = vpow.pop %v6355
        %v6357 = vmul.f32 %v5812, 1.442695
        %v6358 = vpow.pop %v6357
        %v6359 = vmul.f32 %v5813, 1.442695
        %v6360 = vpow.pop %v6359
        %v6361 = vmul.f32 %v5814, 1.442695
        %v6362 = vpow.pop %v6361
        %v6363 = vmul.f32 %v5815, 1.442695
        %v6364 = vpow.pop %v6363
        %v6365 = vmul.f32 %v5816, 1.442695
        %v6366 = vpow.pop %v6365
        %v6367 = vmul.f32 %v5817, 1.442695
        %v6368 = vpow.pop %v6367
        %v6369 = vmul.f32 %v5818, 1.442695
        %v6370 = vpow.pop %v6369
        %v6371 = vmul.f32 %v5819, 1.442695
        %v6372 = vpow.pop %v6371
        %v6373 = vmul.f32 %v5820, 1.442695
        %v6374 = vpow.pop %v6373
        %v6375 = vmul.f32 %v5821, 1.442695
        %v6376 = vpow.pop %v6375
        %v6377 = vmul.f32 %v5822, 1.442695
        %v6378 = vpow.pop %v6377
        %v6379 = vmul.f32 %v5823, 1.442695
        %v6380 = vpow.pop %v6379
        %v6381 = vmul.f32 %v5824, 1.442695
        %v6382 = vpow.pop %v6381
        %v6383 = vmul.f32 %v5825, 1.442695
        %v6384 = vpow.pop %v6383
        %v6385 = vmul.f32 %v5826, 1.442695
        %v6386 = vpow.pop %v6385
        %v6387 = vmul.f32 %v5827, 1.442695
        %v6388 = vpow.pop %v6387
        %v6389 = vmul.f32 %v5828, 1.442695
        %v6390 = vpow.pop %v6389
        %v6391 = vmul.f32 %v5829, 1.442695
        %v6392 = vpow.pop %v6391
        %v6393 = vmul.f32 %v5830, 1.442695
        %v6394 = vpow.pop %v6393
        %v6395 = vmul.f32 %v5831, 1.442695
        %v6396 = vpow.pop %v6395
        %v6397 = vmul.f32 %v5832, 1.442695
        %v6398 = vpow.pop %v6397
        %v6399 = vmul.f32 %v5833, 1.442695
        %v6400 = vpow.pop %v6399
        %v6401 = vmul.f32 %v5834, 1.442695
        %v6402 = vpow.pop %v6401
        %v6403 = vmul.f32 %v5835, 1.442695
        %v6404 = vpow.pop %v6403
        %v6405 = vmul.f32 %v5836, 1.442695
        %v6406 = vpow.pop %v6405
        %v6407 = vmul.f32 %v5837, 1.442695
        %v6408 = vpow.pop %v6407
        %v6409 = vmul.f32 %v5838, 1.442695
        %v6410 = vpow.pop %v6409
        %v6411 = vmul.f32 %v5839, 1.442695
        %v6412 = vpow.pop %v6411
        %v6413 = vmul.f32 %v5840, 1.442695
        %v6414 = vpow.pop %v6413
        %v6415 = vmul.f32 %v5841, 1.442695
        %v6416 = vpow.pop %v6415
        %v6417 = vmul.f32 %v5842, 1.442695
        %v6418 = vpow.pop %v6417
        %v6419 = vmul.f32 %v5843, 1.442695
        %v6420 = vpow.pop %v6419
        %v6421 = vmul.f32 %v5844, 1.442695
        %v6422 = vpow.pop %v6421
        %v6423 = vmul.f32 %v5845, 1.442695
        %v6424 = vpow.pop %v6423
        %v6425 = vmul.f32 %v5846, 1.442695
        %v6426 = vpow.pop %v6425
        %v6427 = vmul.f32 %v5847, 1.442695
        %v6428 = vpow.pop %v6427
        %v6429 = vmul.f32 %v5848, 1.442695
        %v6430 = vpow.pop %v6429
        %v6431 = vmul.f32 %v5849, 1.442695
        %v6432 = vpow.pop %v6431
        %v6433 = vmul.f32 %v5850, 1.442695
        %v6434 = vpow.pop %v6433
        %v6435 = vmul.f32 %v5851, 1.442695
        %v6436 = vpow.pop %v6435
        %v6437 = vmul.f32 %v5852, 1.442695
        %v6438 = vpow.pop %v6437
        %v6439 = vmul.f32 %v5853, 1.442695
        %v6440 = vpow.pop %v6439
        %v6441 = vmul.f32 %v5854, 1.442695
        %v6442 = vpow.pop %v6441
        %v6443 = vmul.f32 %v5855, 1.442695
        %v6444 = vpow.pop %v6443
        %v6445 = vmul.f32 %v5856, 1.442695
        %v6446 = vpow.pop %v6445
        %v6447 = vmul.f32 %v5857, 1.442695
        %v6448 = vpow.pop %v6447
        %v6449 = vmul.f32 %v5858, 1.442695
        %v6450 = vpow.pop %v6449
        %v6451 = vmul.f32 %v5859, 1.442695
        %v6452 = vpow.pop %v6451
        %v6453 = vmul.f32 %v5860, 1.442695
        %v6454 = vpow.pop %v6453
        %v6455 = vmul.f32 %v5861, 1.442695
        %v6456 = vpow.pop %v6455
        %v6457 = vmul.f32 %v5862, 1.442695
        %v6458 = vpow.pop %v6457
        %v6459 = vmul.f32 %v5863, 1.442695
        %v6460 = vpow.pop %v6459
        %v6461 = vmul.f32 %v5864, 1.442695
        %v6462 = vpow.pop %v6461
        %v6463 = vmul.f32 %v5865, 1.442695
        %v6464 = vpow.pop %v6463
        %v6465 = vmul.f32 %v5866, 1.442695
        %v6466 = vpow.pop %v6465
        %v6467 = vmul.f32 %v5867, 1.442695
        %v6468 = vpow.pop %v6467
        %v6469 = vmul.f32 %v5868, 1.442695
        %v6470 = vpow.pop %v6469
        %v6471 = vmul.f32 %v5869, 1.442695
        %v6472 = vpow.pop %v6471
        %v6473 = vmul.f32 %v5870, 1.442695
        %v6474 = vpow.pop %v6473
        %v6475 = vmul.f32 %v5871, 1.442695
        %v6476 = vpow.pop %v6475
        %v6477 = vmul.f32 %v5872, 1.442695
        %v6478 = vpow.pop %v6477
        %v6479 = vmul.f32 %v5873, 1.442695
        %v6480 = vpow.pop %v6479
        %v6481 = vmul.f32 %v5874, 1.442695
        %v6482 = vpow.pop %v6481
        %v6483 = vmul.f32 %v5875, 1.442695
        %v6484 = vpow.pop %v6483
        %v6485 = vmul.f32 %v5876, 1.442695
        %v6486 = vpow.pop %v6485
        %v6487 = vmul.f32 %v5877, 1.442695
        %v6488 = vpow.pop %v6487
        %v6489 = vmul.f32 %v5878, 1.442695
        %v6490 = vpow.pop %v6489
        %v6491 = vmul.f32 %v5879, 1.442695
        %v6492 = vpow.pop %v6491
        %v6493 = vmul.f32 %v5880, 1.442695
        %v6494 = vpow.pop %v6493
        %v6495 = vmul.f32 %v5881, 1.442695
        %v6496 = vpow.pop %v6495
        %v6497 = vmul.f32 %v5882, 1.442695
        %v6498 = vpow.pop %v6497
        %v6499 = vmul.f32 %v5883, 1.442695
        %v6500 = vpow.pop %v6499
        %v6501 = vmul.f32 %v5884, 1.442695
        %v6502 = vpow.pop %v6501
        %v6503 = vmul.f32 %v5885, 1.442695
        %v6504 = vpow.pop %v6503
        %v6505 = vmul.f32 %v5886, 1.442695
        %v6506 = vpow.pop %v6505
        %v6507 = vmul.f32 %v5887, 1.442695
        %v6508 = vpow.pop %v6507
        %v6509 = vmul.f32 %v5888, 1.442695
        %v6510 = vpow.pop %v6509
        %v6511 = vmul.f32 %v5889, 1.442695
        %v6512 = vpow.pop %v6511
        %v6513 = vmul.f32 %v5890, 1.442695
        %v6514 = vpow.pop %v6513
        %v6515 = vmul.f32 %v5891, 1.442695
        %v6516 = vpow.pop %v6515
        %v6517 = vmul.f32 %v5892, 1.442695
        %v6518 = vpow.pop %v6517
        %v6519 = vmul.f32 %v5893, 1.442695
        %v6520 = vpow.pop %v6519
        %v6521 = vmul.f32 %v5894, 1.442695
        %v6522 = vpow.pop %v6521
        %v6523 = vmul.f32 %v5895, 1.442695
        %v6524 = vpow.pop %v6523
        %v6525 = vmul.f32 %v5896, 1.442695
        %v6526 = vpow.pop %v6525
        %v6527 = vmul.f32 %v5897, 1.442695
        %v6528 = vpow.pop %v6527
        %v6529 = vmul.f32 %v5898, 1.442695
        %v6530 = vpow.pop %v6529
        %v6531 = vmul.f32 %v5899, 1.442695
        %v6532 = vpow.pop %v6531
        %v6533 = vmul.f32 %v5900, 1.442695
        %v6534 = vpow.pop %v6533
        %v6535 = vmul.f32 %v5901, 1.442695
        %v6536 = vpow.pop %v6535
        %v6537 = vmul.f32 %v5902, 1.442695
        %v6538 = vpow.pop %v6537
        %v6539 = vmul.f32 %v5903, 1.442695
        %v6540 = vpow.pop %v6539
        %v6541 = vmul.f32 %v5904, 1.442695
        %v6542 = vpow.pop %v6541
        %v6543 = vmul.f32 %v5905, 1.442695
        %v6544 = vpow.pop %v6543
        %v6545 = vmul.f32 %v5906, 1.442695
        %v6546 = vpow.pop %v6545
        %v6547 = vmul.f32 %v5907, 1.442695
        %v6548 = vpow.pop %v6547
        %v6549 = vmul.f32 %v5908, 1.442695
        %v6550 = vpow.pop %v6549
        %v6551 = vmul.f32 %v5909, 1.442695
        %v6552 = vpow.pop %v6551
        %v6553 = vmul.f32 %v5910, 1.442695
        %v6554 = vpow.pop %v6553
        %v6555 = vmul.f32 %v5911, 1.442695
        %v6556 = vpow.pop %v6555
        %v6557 = vmul.f32 %v5912, 1.442695
        %v6558 = vpow.pop %v6557
        %v6559 = vmul.f32 %v5913, 1.442695
        %v6560 = vpow.pop %v6559
        %v6561 = vmul.f32 %v5914, 1.442695
        %v6562 = vpow.pop %v6561
        %v6563 = vmul.f32 %v5915, 1.442695
        %v6564 = vpow.pop %v6563
        %v6565 = vmul.f32 %v5916, 1.442695
        %v6566 = vpow.pop %v6565
        %v6567 = vmul.f32 %v5917, 1.442695
        %v6568 = vpow.pop %v6567
        %v6569 = vmul.f32 %v5918, 1.442695
        %v6570 = vpow.pop %v6569
        %v6571 = vmul.f32 %v5919, 1.442695
        %v6572 = vpow.pop %v6571
        %v6573 = vmul.f32 %v5920, 1.442695
        %v6574 = vpow.pop %v6573
        %v6575 = vmul.f32 %v5921, 1.442695
        %v6576 = vpow.pop %v6575
        %v6577 = vmul.f32 %v5922, 1.442695
        %v6578 = vpow.pop %v6577
        %v6579 = vmul.f32 %v5923, 1.442695
        %v6580 = vpow.pop %v6579
        %v6581 = vmul.f32 %v5924, 1.442695
        %v6582 = vpow.pop %v6581
        %v6583 = vmul.f32 %v5925, 1.442695
        %v6584 = vpow.pop %v6583
        %v6585 = vmul.f32 %v5926, 1.442695
        %v6586 = vpow.pop %v6585
        %v6587 = vmul.f32 %v5927, 1.442695
        %v6588 = vpow.pop %v6587
        %v6589 = vmul.f32 %v5928, 1.442695
        %v6590 = vpow.pop %v6589
        %v6591 = vmul.f32 %v5929, 1.442695
        %v6592 = vpow.pop %v6591
        %v6593 = vmul.f32 %v5930, 1.442695
        %v6594 = vpow.pop %v6593
        %v6595 = vmul.f32 %v5931, 1.442695
        %v6596 = vpow.pop %v6595
        %v6597 = vmul.f32 %v5932, 1.442695
        %v6598 = vpow.pop %v6597
        %v6599 = vmul.f32 %v5933, 1.442695
        %v6600 = vpow.pop %v6599
        %v6601 = vmul.f32 %v5934, 1.442695
        %v6602 = vpow.pop %v6601
        %v6603 = vmul.f32 %v5935, 1.442695
        %v6604 = vpow.pop %v6603
        %v6605 = vmul.f32 %v5936, 1.442695
        %v6606 = vpow.pop %v6605
        %v6607 = vmul.f32 %v5937, 1.442695
        %v6608 = vpow.pop %v6607
        %v6609 = vmul.f32 %v5938, 1.442695
        %v6610 = vpow.pop %v6609
        %v6611 = vmul.f32 %v5939, 1.442695
        %v6612 = vpow.pop %v6611
        %v6613 = vmul.f32 %v5940, 1.442695
        %v6614 = vpow.pop %v6613
        %v6615 = vmul.f32 %v5941, 1.442695
        %v6616 = vpow.pop %v6615
        %v6617 = vmul.f32 %v5942, 1.442695
        %v6618 = vpow.pop %v6617
        %v6619 = vmul.f32 %v5943, 1.442695
        %v6620 = vpow.pop %v6619
        %v6621 = vmul.f32 %v5944, 1.442695
        %v6622 = vpow.pop %v6621
        %v6623 = vmul.f32 %v5945, 1.442695
        %v6624 = vpow.pop %v6623
        %v6625 = vmul.f32 %v5946, 1.442695
        %v6626 = vpow.pop %v6625
        %v6627 = vmul.f32 %v5947, 1.442695
        %v6628 = vpow.pop %v6627
        %v6629 = vmul.f32 %v5948, 1.442695
        %v6630 = vpow.pop %v6629
        %v6631 = vmul.f32 %v5949, 1.442695
        %v6632 = vpow.pop %v6631
        %v6633 = vmul.f32 %v5950, 1.442695
        %v6634 = vpow.pop %v6633
        %v6635 = vmul.f32 %v5951, 1.442695
        %v6636 = vpow.pop %v6635
        %v6637 = vmul.f32 %v5952, 1.442695
        %v6638 = vpow.pop %v6637
        %v6639 = vmul.f32 %v5953, 1.442695
        %v6640 = vpow.pop %v6639
        %v6641 = vmul.f32 %v5954, 1.442695
        %v6642 = vpow.pop %v6641
        %v6643 = vmul.f32 %v5955, 1.442695
        %v6644 = vpow.pop %v6643
        %v6645 = vmul.f32 %v5956, 1.442695
        %v6646 = vpow.pop %v6645
        %v6647 = vmul.f32 %v5957, 1.442695
        %v6648 = vpow.pop %v6647
        %v6649 = vmul.f32 %v5958, 1.442695
        %v6650 = vpow.pop %v6649
        %v6651 = vmul.f32 %v5959, 1.442695
        %v6652 = vpow.pop %v6651
        %v6653 = vmul.f32 %v5960, 1.442695
        %v6654 = vpow.pop %v6653
        %v6655 = vmul.f32 %v5961, 1.442695
        %v6656 = vpow.pop %v6655
        %v6657 = vmul.f32 %v5962, 1.442695
        %v6658 = vpow.pop %v6657
        %v6659 = vmul.f32 %v5963, 1.442695
        %v6660 = vpow.pop %v6659
        %v6661 = vmul.f32 %v5964, 1.442695
        %v6662 = vpow.pop %v6661
        %v6663 = vmul.f32 %v5965, 1.442695
        %v6664 = vpow.pop %v6663
        %v6665 = vmul.f32 %v5966, 1.442695
        %v6666 = vpow.pop %v6665
        %v6667 = vmul.f32 %v5967, 1.442695
        %v6668 = vpow.pop %v6667
        %v6669 = vmul.f32 %v5968, 1.442695
        %v6670 = vpow.pop %v6669
        %v6671 = vmul.f32 %v5969, 1.442695
        %v6672 = vpow.pop %v6671
        %v6673 = vmul.f32 %v5970, 1.442695
        %v6674 = vpow.pop %v6673
        %v6675 = vmul.f32 %v5971, 1.442695
        %v6676 = vpow.pop %v6675
        %v6677 = vmul.f32 %v5972, 1.442695
        %v6678 = vpow.pop %v6677
        %v6679 = vmul.f32 %v5973, 1.442695
        %v6680 = vpow.pop %v6679
        %v6681 = vmul.f32 %v5974, 1.442695
        %v6682 = vpow.pop %v6681
        %v6683 = vmul.f32 %v5975, 1.442695
        %v6684 = vpow.pop %v6683
        %v6685 = vmul.f32 %v5976, 1.442695
        %v6686 = vpow.pop %v6685
        %v6687 = vmul.f32 %v5977, 1.442695
        %v6688 = vpow.pop %v6687
        %v6689 = vmul.f32 %v5978, 1.442695
        %v6690 = vpow.pop %v6689
        %v6691 = vmul.f32 %v5979, 1.442695
        %v6692 = vpow.pop %v6691
        %v6693 = vmul.f32 %v5980, 1.442695
        %v6694 = vpow.pop %v6693
        %v6695 = vmul.f32 %v5981, 1.442695
        %v6696 = vpow.pop %v6695
        %v6697 = vmul.f32 %v5982, 1.442695
        %v6698 = vpow.pop %v6697
        %v6699 = vmul.f32 %v5983, 1.442695
        %v6700 = vpow.pop %v6699
        %v6701 = vmul.f32 %v5984, 1.442695
        %v6702 = vpow.pop %v6701
        %v6703 = vmul.f32 %v5985, 1.442695
        %v6704 = vpow.pop %v6703
        %v6705 = vmul.f32 %v5986, 1.442695
        %v6706 = vpow.pop %v6705
        %v6707 = vmul.f32 %v5987, 1.442695
        %v6708 = vpow.pop %v6707
        %v6709 = vmul.f32 %v5988, 1.442695
        %v6710 = vpow.pop %v6709
        %v6711 = vmul.f32 %v5989, 1.442695
        %v6712 = vpow.pop %v6711
        %v6713 = vmul.f32 %v5990, 1.442695
        %v6714 = vpow.pop %v6713
        %v6715 = vmul.f32 %v5991, 1.442695
        %v6716 = vpow.pop %v6715
        %v6717 = vmul.f32 %v5992, 1.442695
        %v6718 = vpow.pop %v6717
        %v6719 = vmul.f32 %v5993, 1.442695
        %v6720 = vpow.pop %v6719
        %v6721 = vmul.f32 %v5994, 1.442695
        %v6722 = vpow.pop %v6721
        %v6723 = vmul.f32 %v5995, 1.442695
        %v6724 = vpow.pop %v6723
        %v6725 = vmul.f32 %v5996, 1.442695
        %v6726 = vpow.pop %v6725
        %v6727 = vmul.f32 %v5997, 1.442695
        %v6728 = vpow.pop %v6727
        %v6729 = vmul.f32 %v5998, 1.442695
        %v6730 = vpow.pop %v6729
        %v6731 = vmul.f32 %v5999, 1.442695
        %v6732 = vpow.pop %v6731
        %v6733 = vmul.f32 %v6000, 1.442695
        %v6734 = vpow.pop %v6733
        %v6735 = vmul.f32 %v6001, 1.442695
        %v6736 = vpow.pop %v6735
        %v6737 = vmul.f32 %v6002, 1.442695
        %v6738 = vpow.pop %v6737
        %v6739 = vmul.f32 %v6003, 1.442695
        %v6740 = vpow.pop %v6739
        %v6741 = vmul.f32 %v6004, 1.442695
        %v6742 = vpow.pop %v6741
        %v6743 = vmul.f32 %v6005, 1.442695
        %v6744 = vpow.pop %v6743
        %v6745 = vmul.f32 %v6006, 1.442695
        %v6746 = vpow.pop %v6745
        %v6747 = vmul.f32 %v6007, 1.442695
        %v6748 = vpow.pop %v6747
        %v6749 = vmul.f32 %v6008, 1.442695
        %v6750 = vpow.pop %v6749
        %v6751 = vmul.f32 %v6009, 1.442695
        %v6752 = vpow.pop %v6751
        %v6753 = vmul.f32 %v6010, 1.442695
        %v6754 = vpow.pop %v6753
        %v6755 = vmul.f32 %v6011, 1.442695
        %v6756 = vpow.pop %v6755
        %v6757 = vmul.f32 %v6012, 1.442695
        %v6758 = vpow.pop %v6757
        %v6759 = vmul.f32 %v6013, 1.442695
        %v6760 = vpow.pop %v6759
        %v6761 = vmul.f32 %v6014, 1.442695
        %v6762 = vpow.pop %v6761
        %v6763 = vmul.f32 %v6015, 1.442695
        %v6764 = vpow.pop %v6763
        %v6765 = vmul.f32 %v6016, 1.442695
        %v6766 = vpow.pop %v6765
        %v6767 = vmul.f32 %v6017, 1.442695
        %v6768 = vpow.pop %v6767
        %v6769 = vmul.f32 %v6018, 1.442695
        %v6770 = vpow.pop %v6769
        %v6771 = vmul.f32 %v6019, 1.442695
        %v6772 = vpow.pop %v6771
        %v6773 = vmul.f32 %v6020, 1.442695
        %v6774 = vpow.pop %v6773
        %v6775 = vmul.f32 %v6021, 1.442695
        %v6776 = vpow.pop %v6775
        %v6777 = vmul.f32 %v6022, 1.442695
        %v6778 = vpow.pop %v6777
        %v6779 = vmul.f32 %v6023, 1.442695
        %v6780 = vpow.pop %v6779
        %v6781 = vmul.f32 %v6024, 1.442695
        %v6782 = vpow.pop %v6781
        %v6783 = vmul.f32 %v6025, 1.442695
        %v6784 = vpow.pop %v6783
        %v6785 = vmul.f32 %v6026, 1.442695
        %v6786 = vpow.pop %v6785
        %v6787 = vmul.f32 %v6027, 1.442695
        %v6788 = vpow.pop %v6787
        %v6789 = vmul.f32 %v6028, 1.442695
        %v6790 = vpow.pop %v6789
        %v6791 = vmul.f32 %v6029, 1.442695
        %v6792 = vpow.pop %v6791
        %v6793 = vmul.f32 %v6030, 1.442695
        %v6794 = vpow.pop %v6793
        %v6795 = vmul.f32 %v6031, 1.442695
        %v6796 = vpow.pop %v6795
        %v6797 = vmul.f32 %v6032, 1.442695
        %v6798 = vpow.pop %v6797
        %v6799 = vmul.f32 %v6033, 1.442695
        %v6800 = vpow.pop %v6799
        %v6801 = vmul.f32 %v6034, 1.442695
        %v6802 = vpow.pop %v6801
        %v6803 = vmul.f32 %v6035, 1.442695
        %v6804 = vpow.pop %v6803
        %v6805 = vmul.f32 %v6036, 1.442695
        %v6806 = vpow.pop %v6805
        %v6807 = vmul.f32 %v6037, 1.442695
        %v6808 = vpow.pop %v6807
        %v6809 = vmul.f32 %v6038, 1.442695
        %v6810 = vpow.pop %v6809
        %v6811 = vmul.f32 %v6039, 1.442695
        %v6812 = vpow.pop %v6811
        %v6813 = vmul.f32 %v6040, 1.442695
        %v6814 = vpow.pop %v6813
        %v6815 = vmul.f32 %v6041, 1.442695
        %v6816 = vpow.pop %v6815
        %v6817 = vmul.f32 %v6042, 1.442695
        %v6818 = vpow.pop %v6817
        %v6819 = vmul.f32 %v6043, 1.442695
        %v6820 = vpow.pop %v6819
        %v6821 = vmul.f32 %v6044, 1.442695
        %v6822 = vpow.pop %v6821
        %v6823 = vmul.f32 %v6045, 1.442695
        %v6824 = vpow.pop %v6823
        %v6825 = vmul.f32 %v6046, 1.442695
        %v6826 = vpow.pop %v6825
        %v6827 = vmul.f32 %v6047, 1.442695
        %v6828 = vpow.pop %v6827
        %v6829 = vmul.f32 %v6048, 1.442695
        %v6830 = vpow.pop %v6829
        %v6831 = vmul.f32 %v6049, 1.442695
        %v6832 = vpow.pop %v6831
        %v6833 = vmul.f32 %v6050, 1.442695
        %v6834 = vpow.pop %v6833
        %v6835 = vmul.f32 %v6051, 1.442695
        %v6836 = vpow.pop %v6835
        %v6837 = vmul.f32 %v6052, 1.442695
        %v6838 = vpow.pop %v6837
        %v6839 = vmul.f32 %v6053, 1.442695
        %v6840 = vpow.pop %v6839
        %v6841 = vmul.f32 %v6054, 1.442695
        %v6842 = vpow.pop %v6841
        %v6843 = vmul.f32 %v6055, 1.442695
        %v6844 = vpow.pop %v6843
        %v6845 = vmul.f32 %v6056, 1.442695
        %v6846 = vpow.pop %v6845
        %v6847 = vmul.f32 %v6057, 1.442695
        %v6848 = vpow.pop %v6847
        %v6849 = vmul.f32 %v6058, 1.442695
        %v6850 = vpow.pop %v6849
        %v6851 = vmul.f32 %v6059, 1.442695
        %v6852 = vpow.pop %v6851
        %v6853 = vmul.f32 %v6060, 1.442695
        %v6854 = vpow.pop %v6853
        %v6855 = vmul.f32 %v6061, 1.442695
        %v6856 = vpow.pop %v6855
        %v6857 = vmul.f32 %v6062, 1.442695
        %v6858 = vpow.pop %v6857
        %v6859 = vmul.f32 %v6063, 1.442695
        %v6860 = vpow.pop %v6859
        %v6861 = vmul.f32 %v6064, 1.442695
        %v6862 = vpow.pop %v6861
        %v6863 = vmul.f32 %v6065, 1.442695
        %v6864 = vpow.pop %v6863
        %v6865 = vmul.f32 %v6066, 1.442695
        %v6866 = vpow.pop %v6865
        %v6867 = vmul.f32 %v6067, 1.442695
        %v6868 = vpow.pop %v6867
        %v6869 = vmul.f32 %v6068, 1.442695
        %v6870 = vpow.pop %v6869
        %v6871 = vmul.f32 %v6069, 1.442695
        %v6872 = vpow.pop %v6871
        %v6873 = vmul.f32 %v6070, 1.442695
        %v6874 = vpow.pop %v6873
        %v6875 = vmul.f32 %v6071, 1.442695
        %v6876 = vpow.pop %v6875
        %v6877 = vmul.f32 %v6072, 1.442695
        %v6878 = vpow.pop %v6877
        %v6879 = vmul.f32 %v6073, 1.442695
        %v6880 = vpow.pop %v6879
        %v6881 = vmul.f32 %v6074, 1.442695
        %v6882 = vpow.pop %v6881
        %v6883 = vmul.f32 %v6075, 1.442695
        %v6884 = vpow.pop %v6883
        %v6885 = vmul.f32 %v6076, 1.442695
        %v6886 = vpow.pop %v6885
        %v6887 = vmul.f32 %v6077, 1.442695
        %v6888 = vpow.pop %v6887
        %v6889 = vmul.f32 %v6078, 1.442695
        %v6890 = vpow.pop %v6889
        %v6891 = vmul.f32 %v6079, 1.442695
        %v6892 = vpow.pop %v6891
        %v6893 = vmul.f32 %v6080, 1.442695
        %v6894 = vpow.pop %v6893
        %v6895 = vmul.f32 %v6081, 1.442695
        %v6896 = vpow.pop %v6895
        %v6897 = vmul.f32 %v6082, 1.442695
        %v6898 = vpow.pop %v6897
        %v6899 = vmul.f32 %v6083, 1.442695
        %v6900 = vpow.pop %v6899
        %v6901 = vmul.f32 %v6084, 1.442695
        %v6902 = vpow.pop %v6901
        %v6903 = vmul.f32 %v6085, 1.442695
        %v6904 = vpow.pop %v6903
        %v6905 = vmul.f32 %v6086, 1.442695
        %v6906 = vpow.pop %v6905
        %v6907 = vmul.f32 %v6087, 1.442695
        %v6908 = vpow.pop %v6907
        %v6909 = vmul.f32 %v6088, 1.442695
        %v6910 = vpow.pop %v6909
        %v6911 = vmul.f32 %v6089, 1.442695
        %v6912 = vpow.pop %v6911
        %v6913 = vmul.f32 %v6090, 1.442695
        %v6914 = vpow.pop %v6913
        %v6915 = vmul.f32 %v6091, 1.442695
        %v6916 = vpow.pop %v6915
        %v6917 = vmul.f32 %v6092, 1.442695
        %v6918 = vpow.pop %v6917
        %v6919 = vmul.f32 %v6093, 1.442695
        %v6920 = vpow.pop %v6919
        %v6921 = vmul.f32 %v6094, 1.442695
        %v6922 = vpow.pop %v6921
        %v6923 = vmul.f32 %v6095, 1.442695
        %v6924 = vpow.pop %v6923
        %v6925 = vmul.f32 %v6096, 1.442695
        %v6926 = vpow.pop %v6925
        %v6927 = vmul.f32 %v6097, 1.442695
        %v6928 = vpow.pop %v6927
        %v6929 = vmul.f32 %v6098, 1.442695
        %v6930 = vpow.pop %v6929
        %v6931 = vmul.f32 %v6099, 1.442695
        %v6932 = vpow.pop %v6931
        %v6933 = vmul.f32 %v6100, 1.442695
        %v6934 = vpow.pop %v6933
        %v6935 = vmul.f32 %v6101, 1.442695
        %v6936 = vpow.pop %v6935
        %v6937 = vmul.f32 %v6102, 1.442695
        %v6938 = vpow.pop %v6937
        %v6939 = vmul.f32 %v6103, 1.442695
        %v6940 = vpow.pop %v6939
        %v6941 = vmul.f32 %v6104, 1.442695
        %v6942 = vpow.pop %v6941
        %v6943 = vmul.f32 %v6105, 1.442695
        %v6944 = vpow.pop %v6943
        %v6945 = vmul.f32 %v6106, 1.442695
        %v6946 = vpow.pop %v6945
        %v6947 = vmul.f32 %v6107, 1.442695
        %v6948 = vpow.pop %v6947
        %v6949 = vmul.f32 %v6108, 1.442695
        %v6950 = vpow.pop %v6949
        %v6951 = vmul.f32 %v6109, 1.442695
        %v6952 = vpow.pop %v6951
        %v6953 = vmul.f32 %v6110, 1.442695
        %v6954 = vpow.pop %v6953
        %v6955 = vmul.f32 %v6111, 1.442695
        %v6956 = vpow.pop %v6955
        %v6957 = vmul.f32 %v6112, 1.442695
        %v6958 = vpow.pop %v6957
        %v6959 = vmul.f32 %v6113, 1.442695
        %v6960 = vpow.pop %v6959
        %v6961 = vmul.f32 %v6114, 1.442695
        %v6962 = vpow.pop %v6961
        %v6963 = vmul.f32 %v6115, 1.442695
        %v6964 = vpow.pop %v6963
        %v6965 = vmul.f32 %v6116, 1.442695
        %v6966 = vpow.pop %v6965
        %v6967 = vmul.f32 %v6117, 1.442695
        %v6968 = vpow.pop %v6967
        %v6969 = vmul.f32 %v6118, 1.442695
        %v6970 = vpow.pop %v6969
        %v6971 = vmul.f32 %v6119, 1.442695
        %v6972 = vpow.pop %v6971
        %v6973 = vmul.f32 %v6120, 1.442695
        %v6974 = vpow.pop %v6973
        %v6975 = vmul.f32 %v6121, 1.442695
        %v6976 = vpow.pop %v6975
        %v6977 = vmul.f32 %v6122, 1.442695
        %v6978 = vpow.pop %v6977
        %v6979 = vmul.f32 %v6123, 1.442695
        %v6980 = vpow.pop %v6979
        %v6981 = vmul.f32 %v6124, 1.442695
        %v6982 = vpow.pop %v6981
        %v6983 = vmul.f32 %v6125, 1.442695
        %v6984 = vpow.pop %v6983
        %v6985 = vmul.f32 %v6126, 1.442695
        %v6986 = vpow.pop %v6985
        %v6987 = vmul.f32 %v6127, 1.442695
        %v6988 = vpow.pop %v6987
        %v6989 = vmul.f32 %v6128, 1.442695
        %v6990 = vpow.pop %v6989
        %v6991 = vmul.f32 %v6129, 1.442695
        %v6992 = vpow.pop %v6991
        %v6993 = vmul.f32 %v6130, 1.442695
        %v6994 = vpow.pop %v6993
        %v6995 = vmul.f32 %v6131, 1.442695
        %v6996 = vpow.pop %v6995
        %v6997 = vmul.f32 %v6132, 1.442695
        %v6998 = vpow.pop %v6997
        %v6999 = vmul.f32 %v6133, 1.442695
        %v7000 = vpow.pop %v6999
        %v7001 = vmul.f32 %v6134, 1.442695
        %v7002 = vpow.pop %v7001
        %v7003 = vmul.f32 %v6135, 1.442695
        %v7004 = vpow.pop %v7003
        %v7005 = vmul.f32 %v6136, 1.442695
        %v7006 = vpow.pop %v7005
        %v7007 = vmul.f32 %v6137, 1.442695
        %v7008 = vpow.pop %v7007
        %v7009 = vmul.f32 %v6138, 1.442695
        %v7010 = vpow.pop %v7009
        %v7011 = vmul.f32 %v6139, 1.442695
        %v7012 = vpow.pop %v7011
        %v7013 = vmul.f32 %v6140, 1.442695
        %v7014 = vpow.pop %v7013
        %v7015 = vmul.f32 %v6141, 1.442695
        %v7016 = vpow.pop %v7015
        %v7017 = vmul.f32 %v6142, 1.442695
        %v7018 = vpow.pop %v7017
        %v7019 = vmul.f32 %v6143, 1.442695
        %v7020 = vpow.pop %v7019
        %v7021 = vmul.f32 %v6144, 1.442695
        %v7022 = vpow.pop %v7021
        %v7023 = vmul.f32 %v6145, 1.442695
        %v7024 = vpow.pop %v7023
        %v7025 = vmul.f32 %v6146, 1.442695
        %v7026 = vpow.pop %v7025
        %v7027 = vmul.f32 %v6147, 1.442695
        %v7028 = vpow.pop %v7027
        %v7029 = vmul.f32 %v6148, 1.442695
        %v7030 = vpow.pop %v7029
        %v7031 = vmul.f32 %v6149, 1.442695
        %v7032 = vpow.pop %v7031
        %v7033 = vmul.f32 %v6150, 1.442695
        %v7034 = vpow.pop %v7033
        %v7035 = vmul.f32 %v6151, 1.442695
        %v7036 = vpow.pop %v7035
        %v7037 = vmul.f32 %v6152, 1.442695
        %v7038 = vpow.pop %v7037
        %v7039 = vmul.f32 %v6153, 1.442695
        %v7040 = vpow.pop %v7039
        %v7041 = vmul.f32 %v6154, 1.442695
        %v7042 = vpow.pop %v7041
        %v7043 = vmul.f32 %v6155, 1.442695
        %v7044 = vpow.pop %v7043
        %v7045 = vmul.f32 %v6156, 1.442695
        %v7046 = vpow.pop %v7045
        %v7047 = vmul.f32 %v6157, 1.442695
        %v7048 = vpow.pop %v7047
        %v7049 = vmul.f32 %v6158, 1.442695
        %v7050 = vpow.pop %v7049
        %v7051 = vmul.f32 %v6159, 1.442695
        %v7052 = vpow.pop %v7051
        %v7053 = vmul.f32 %v6160, 1.442695
        %v7054 = vpow.pop %v7053
        %v7055 = vmul.f32 %v6161, 1.442695
        %v7056 = vpow.pop %v7055
        %v7057 = vmul.f32 %v6162, 1.442695
        %v7058 = vpow.pop %v7057
        %v7059 = vmul.f32 %v6163, 1.442695
        %v7060 = vpow.pop %v7059
        %v7061 = vmul.f32 %v6164, 1.442695
        %v7062 = vpow.pop %v7061
        %v7063 = vmul.f32 %v6165, 1.442695
        %v7064 = vpow.pop %v7063
        %v7065 = vmul.f32 %v6166, 1.442695
        %v7066 = vpow.pop %v7065
        %v7067 = vmul.f32 %v6167, 1.442695
        %v7068 = vpow.pop %v7067
        %v7069 = vmul.f32 %v6168, 1.442695
        %v7070 = vpow.pop %v7069
        %v7071 = vmul.f32 %v6169, 1.442695
        %v7072 = vpow.pop %v7071
        %v7073 = vmul.f32 %v6170, 1.442695
        %v7074 = vpow.pop %v7073
        %v7075 = vmul.f32 %v6171, 1.442695
        %v7076 = vpow.pop %v7075
        %v7077 = vmul.f32 %v6172, 1.442695
        %v7078 = vpow.pop %v7077
        %v7079 = vmul.f32 %v6173, 1.442695
        %v7080 = vpow.pop %v7079
        %v7081 = vmul.f32 %v6174, 1.442695
        %v7082 = vpow.pop %v7081
        %v7083 = vmul.f32 %v6175, 1.442695
        %v7084 = vpow.pop %v7083
        %v7085 = vmul.f32 %v6176, 1.442695
        %v7086 = vpow.pop %v7085
        %v7087 = vmul.f32 %v6177, 1.442695
        %v7088 = vpow.pop %v7087
        %v7089 = vmul.f32 %v6178, 1.442695
        %v7090 = vpow.pop %v7089
        %v7091 = vmul.f32 %v6179, 1.442695
        %v7092 = vpow.pop %v7091
        %v7093 = vmul.f32 %v6180, 1.442695
        %v7094 = vpow.pop %v7093
        %v7095 = vmul.f32 %v6181, 1.442695
        %v7096 = vpow.pop %v7095
        %v7097 = vmul.f32 %v6182, 1.442695
        %v7098 = vpow.pop %v7097
        %v7099 = vmul.f32 %v6183, 1.442695
        %v7100 = vpow.pop %v7099
        %v7101 = vmul.f32 %v6184, 1.442695
        %v7102 = vpow.pop %v7101
        %v7103 = vmul.f32 %v6185, 1.442695
        %v7104 = vpow.pop %v7103
        %v7105 = vmul.f32 %v6186, 1.442695
        %v7106 = vpow.pop %v7105
        %v7107 = vmul.f32 %v6187, 1.442695
        %v7108 = vpow.pop %v7107
        %v7109 = vmul.f32 %v6188, 1.442695
        %v7110 = vpow.pop %v7109
        %v7111 = vmul.f32 %v6189, 1.442695
        %v7112 = vpow.pop %v7111
        %v7113 = vmul.f32 %v6190, 1.442695
        %v7114 = vpow.pop %v7113
        %v7115 = vmul.f32 %v6191, 1.442695
        %v7116 = vpow.pop %v7115
        %v7117 = vmul.f32 %v6192, 1.442695
        %v7118 = vpow.pop %v7117
        %v7119 = vmul.f32 %v6193, 1.442695
        %v7120 = vpow.pop %v7119
        %v7121 = vmul.f32 %v6194, 1.442695
        %v7122 = vpow.pop %v7121
        %v7123 = vmul.f32 %v6195, 1.442695
        %v7124 = vpow.pop %v7123
        %v7125 = vmul.f32 %v6196, 1.442695
        %v7126 = vpow.pop %v7125
        %v7127 = vmul.f32 %v6197, 1.442695
        %v7128 = vpow.pop %v7127
        %v7129 = vmul.f32 %v6198, 1.442695
        %v7130 = vpow.pop %v7129
        %v7131 = vmul.f32 %v6199, 1.442695
        %v7132 = vpow.pop %v7131
        %v7133 = vmul.f32 %v6200, 1.442695
        %v7134 = vpow.pop %v7133
        %v7135 = vmul.f32 %v6201, 1.442695
        %v7136 = vpow.pop %v7135
        %v7137 = vmul.f32 %v6202, 1.442695
        %v7138 = vpow.pop %v7137
        %v7139 = vmul.f32 %v6203, 1.442695
        %v7140 = vpow.pop %v7139
        %v7141 = vmul.f32 %v6204, 1.442695
        %v7142 = vpow.pop %v7141
        %v7143 = vmul.f32 %v6205, 1.442695
        %v7144 = vpow.pop %v7143
        %v7145 = vmul.f32 %v6206, 1.442695
        %v7146 = vpow.pop %v7145
        %v7147 = vmul.f32 %v6207, 1.442695
        %v7148 = vpow.pop %v7147
        %v7149 = vmul.f32 %v6208, 1.442695
        %v7150 = vpow.pop %v7149
        %v7151 = vmul.f32 %v6209, 1.442695
        %v7152 = vpow.pop %v7151
        %v7153 = vmul.f32 %v6210, 1.442695
        %v7154 = vpow.pop %v7153
        %v7155 = vmul.f32 %v6211, 1.442695
        %v7156 = vpow.pop %v7155
        %v7157 = vmul.f32 %v6212, 1.442695
        %v7158 = vpow.pop %v7157
        %v7159 = vmul.f32 %v6213, 1.442695
        %v7160 = vpow.pop %v7159
        %v7161 = vmul.f32 %v6214, 1.442695
        %v7162 = vpow.pop %v7161
        %v7163 = vmul.f32 %v6215, 1.442695
        %v7164 = vpow.pop %v7163
        %v7165 = vmul.f32 %v6216, 1.442695
        %v7166 = vpow.pop %v7165
        %v7167 = vmul.f32 %v6217, 1.442695
        %v7168 = vpow.pop %v7167
        %v7169 = vmul.f32 %v6218, 1.442695
        %v7170 = vpow.pop %v7169
        %v7171 = vmul.f32 %v6219, 1.442695
        %v7172 = vpow.pop %v7171
        %v7173 = vmul.f32 %v6220, 1.442695
        %v7174 = vpow.pop %v7173
        %v7175 = vmul.f32 %v6221, 1.442695
        %v7176 = vpow.pop %v7175
        %v7177 = vmul.f32 %v6222, 1.442695
        %v7178 = vpow.pop %v7177
        %v7179 = vmul.f32 %v6223, 1.442695
        %v7180 = vpow.pop %v7179
        %v7181 = vmul.f32 %v6224, 1.442695
        %v7182 = vpow.pop %v7181
        %v7183 = vmul.f32 %v6225, 1.442695
        %v7184 = vpow.pop %v7183
        %v7185 = vmul.f32 %v6226, 1.442695
        %v7186 = vpow.pop %v7185
        %v7187 = vmul.f32 %v6227, 1.442695
        %v7188 = vpow.pop %v7187
        %v7189 = vmul.f32 %v6228, 1.442695
        %v7190 = vpow.pop %v7189
        %v7191 = vmul.f32 %v6229, 1.442695
        %v7192 = vpow.pop %v7191
        %v7193 = vmul.f32 %v6230, 1.442695
        %v7194 = vpow.pop %v7193
        %v7195 = vmul.f32 %v6231, 1.442695
        %v7196 = vpow.pop %v7195
        %v7197 = vmul.f32 %v6232, 1.442695
        %v7198 = vpow.pop %v7197
        %v7199 = vmul.f32 %v6233, 1.442695
        %v7200 = vpow.pop %v7199
        %v7201 = vmul.f32 %v6234, 1.442695
        %v7202 = vpow.pop %v7201
        %v7203 = vmul.f32 %v6235, 1.442695
        %v7204 = vpow.pop %v7203
        %v7205 = vmul.f32 %v6236, 1.442695
        %v7206 = vpow.pop %v7205
        %v7207 = vmul.f32 %v6237, 1.442695
        %v7208 = vpow.pop %v7207
        %v7209 = vmul.f32 %v6238, 1.442695
        %v7210 = vpow.pop %v7209
        %v7211 = vmul.f32 %v6239, 1.442695
        %v7212 = vpow.pop %v7211
        %v7213 = vmul.f32 %v6240, 1.442695
        %v7214 = vpow.pop %v7213
        %v7215 = vmul.f32 %v6241, 1.442695
        %v7216 = vpow.pop %v7215
        %v7217 = vmul.f32 %v6242, 1.442695
        %v7218 = vpow.pop %v7217
        %v7219 = vmul.f32 %v6243, 1.442695
        %v7220 = vpow.pop %v7219
        %v7221 = vmul.f32 %v6244, 1.442695
        %v7222 = vpow.pop %v7221
        %v7223 = vmul.f32 %v6245, 1.442695
        %v7224 = vpow.pop %v7223
        %v7225 = vmul.f32 %v6246, 1.442695
        %v7226 = vpow.pop %v7225
        %v7227 = vmul.f32 %v6247, 1.442695
        %v7228 = vpow.pop %v7227
        %v7229 = vmul.f32 %v6248, 1.442695
        %v7230 = vpow.pop %v7229
        %v7231 = vmul.f32 %v6249, 1.442695
        %v7232 = vpow.pop %v7231
        %v7233 = vmul.f32 %v6250, 1.442695
        %v7234 = vpow.pop %v7233
        %v7235 = vmul.f32 %v6251, 1.442695
        %v7236 = vpow.pop %v7235
        %v7237 = vmul.f32 %v6252, 1.442695
        %v7238 = vpow.pop %v7237
        %v7239 = vmul.f32 %v6253, 1.442695
        %v7240 = vpow.pop %v7239
        %v7241 = vmul.f32 %v6254, 1.442695
        %v7242 = vpow.pop %v7241
        %v7243 = vmul.f32 %v6255, 1.442695
        %v7244 = vpow.pop %v7243
        %v7245 = vmul.f32 %v6256, 1.442695
        %v7246 = vpow.pop %v7245
        %v7247 = vmul.f32 %v6257, 1.442695
        %v7248 = vpow.pop %v7247
        %v7249 = vmul.f32 %v6258, 1.442695
        %v7250 = vpow.pop %v7249
        %v7251 = vmul.f32 %v6259, 1.442695
        %v7252 = vpow.pop %v7251
        %v7253 = vmul.f32 %v6260, 1.442695
        %v7254 = vpow.pop %v7253
        %v7255 = vmul.f32 %v6261, 1.442695
        %v7256 = vpow.pop %v7255
        %v7257 = vmul.f32 %v6262, 1.442695
        %v7258 = vpow.pop %v7257
        %v7259 = vmul.f32 %v6263, 1.442695
        %v7260 = vpow.pop %v7259
        %v7261 = vmul.f32 %v6264, 1.442695
        %v7262 = vpow.pop %v7261
        %v7263 = vmul.f32 %v6265, 1.442695
        %v7264 = vpow.pop %v7263
        %v7265 = vmul.f32 %v6266, 1.442695
        %v7266 = vpow.pop %v7265
        %v7267 = vmul.f32 %v6267, 1.442695
        %v7268 = vpow.pop %v7267
        %v7269 = vmul.f32 %v6268, 1.442695
        %v7270 = vpow.pop %v7269
        %v7271 = vmul.f32 %v6269, 1.442695
        %v7272 = vpow.pop %v7271
        %v7273 = vmul.f32 %v6270, 1.442695
        %v7274 = vpow.pop %v7273
        %v7275 = vmul.f32 %v6271, 1.442695
        %v7276 = vpow.pop %v7275
        %v7277 = vmul.f32 %v6272, 1.442695
        %v7278 = vpow.pop %v7277
        %v7279 = vmul.f32 %v6273, 1.442695
        %v7280 = vpow.pop %v7279
        %v7281 = vmul.f32 %v6274, 1.442695
        %v7282 = vpow.pop %v7281
        %v7283 = vmul.f32 %v6275, 1.442695
        %v7284 = vpow.pop %v7283
        %v7285 = vmul.f32 %v6276, 1.442695
        %v7286 = vpow.pop %v7285
        %v7287 = vmul.f32 %v6277, 1.442695
        %v7288 = vpow.pop %v7287
        %v7289 = vmul.f32 %v6278, 1.442695
        %v7290 = vpow.pop %v7289
        %v7291 = vmul.f32 %v6279, 1.442695
        %v7292 = vpow.pop %v7291
        %v7293 = vmul.f32 %v6280, 1.442695
        %v7294 = vpow.pop %v7293
        %v7295 = vmul.f32 %v6281, 1.442695
        %v7296 = vpow.pop %v7295
        %v7297 = vmul.f32 %v6282, 1.442695
        %v7298 = vpow.pop %v7297
        %v7299 = vmul.f32 %v6283, 1.442695
        %v7300 = vpow.pop %v7299
        %v7301 = vmul.f32 %v6284, 1.442695
        %v7302 = vpow.pop %v7301
        %v7303 = vmul.f32 %v6285, 1.442695
        %v7304 = vpow.pop %v7303
        %v7305 = vmul.f32 %v6286, 1.442695
        %v7306 = vpow.pop %v7305
        %v7307 = vmul.f32 %v6287, 1.442695
        %v7308 = vpow.pop %v7307
        %v7309 = vmul.f32 %v6288, 1.442695
        %v7310 = vpow.pop %v7309
        %v7311 = vmul.f32 %v6289, 1.442695
        %v7312 = vpow.pop %v7311
        %v7313 = vmul.f32 %v6290, 1.442695
        %v7314 = vpow.pop %v7313
        %v7315 = vadd.f32 %v6292, %v6294
        %v7316 = vadd.f32 %v7315, %v6296
        %v7317 = vadd.f32 %v7316, %v6298
        %v7318 = vadd.f32 %v7317, %v6300
        %v7319 = vadd.f32 %v7318, %v6302
        %v7320 = vadd.f32 %v7319, %v6304
        %v7321 = vadd.f32 %v7320, %v6306
        %7322 = vadd.xlane.f32.xlu0 %v7321
        %v7323 = vpop.xlane.xlu0 %7322
        %v7324 = vadd.f32 %v6308, %v6310
        %v7325 = vadd.f32 %v7324, %v6312
        %v7326 = vadd.f32 %v7325, %v6314
        %v7327 = vadd.f32 %v7326, %v6316
        %v7328 = vadd.f32 %v7327, %v6318
        %v7329 = vadd.f32 %v7328, %v6320
        %v7330 = vadd.f32 %v7329, %v6322
        %7331 = vadd.xlane.f32.xlu0 %v7330
        %v7332 = vpop.xlane.xlu0 %7331
        %v7333 = vadd.f32 %v6324, %v6326
        %v7334 = vadd.f32 %v7333, %v6328
        %v7335 = vadd.f32 %v7334, %v6330
        %v7336 = vadd.f32 %v7335, %v6332
        %v7337 = vadd.f32 %v7336, %v6334
        %v7338 = vadd.f32 %v7337, %v6336
        %v7339 = vadd.f32 %v7338, %v6338
        %7340 = vadd.xlane.f32.xlu0 %v7339
        %v7341 = vpop.xlane.xlu0 %7340
        %v7342 = vadd.f32 %v6340, %v6342
        %v7343 = vadd.f32 %v7342, %v6344
        %v7344 = vadd.f32 %v7343, %v6346
        %v7345 = vadd.f32 %v7344, %v6348
        %v7346 = vadd.f32 %v7345, %v6350
        %v7347 = vadd.f32 %v7346, %v6352
        %v7348 = vadd.f32 %v7347, %v6354
        %7349 = vadd.xlane.f32.xlu0 %v7348
        %v7350 = vpop.xlane.xlu0 %7349
        %v7351 = vadd.f32 %v6356, %v6358
        %v7352 = vadd.f32 %v7351, %v6360
        %v7353 = vadd.f32 %v7352, %v6362
        %v7354 = vadd.f32 %v7353, %v6364
        %v7355 = vadd.f32 %v7354, %v6366
        %v7356 = vadd.f32 %v7355, %v6368
        %v7357 = vadd.f32 %v7356, %v6370
        %7358 = vadd.xlane.f32.xlu0 %v7357
        %v7359 = vpop.xlane.xlu0 %7358
        %v7360 = vadd.f32 %v6372, %v6374
        %v7361 = vadd.f32 %v7360, %v6376
        %v7362 = vadd.f32 %v7361, %v6378
        %v7363 = vadd.f32 %v7362, %v6380
        %v7364 = vadd.f32 %v7363, %v6382
        %v7365 = vadd.f32 %v7364, %v6384
        %v7366 = vadd.f32 %v7365, %v6386
        %7367 = vadd.xlane.f32.xlu0 %v7366
        %v7368 = vpop.xlane.xlu0 %7367
        %v7369 = vadd.f32 %v6388, %v6390
        %v7370 = vadd.f32 %v7369, %v6392
        %v7371 = vadd.f32 %v7370, %v6394
        %v7372 = vadd.f32 %v7371, %v6396
        %v7373 = vadd.f32 %v7372, %v6398
        %v7374 = vadd.f32 %v7373, %v6400
        %v7375 = vadd.f32 %v7374, %v6402
        %7376 = vadd.xlane.f32.xlu0 %v7375
        %v7377 = vpop.xlane.xlu0 %7376
        %v7378 = vadd.f32 %v6404, %v6406
        %v7379 = vadd.f32 %v7378, %v6408
        %v7380 = vadd.f32 %v7379, %v6410
        %v7381 = vadd.f32 %v7380, %v6412
        %v7382 = vadd.f32 %v7381, %v6414
        %v7383 = vadd.f32 %v7382, %v6416
        %v7384 = vadd.f32 %v7383, %v6418
        %7385 = vadd.xlane.f32.xlu0 %v7384
        %v7386 = vpop.xlane.xlu0 %7385
        %v7387 = vadd.f32 %v6420, %v6422
        %v7388 = vadd.f32 %v7387, %v6424
        %v7389 = vadd.f32 %v7388, %v6426
        %v7390 = vadd.f32 %v7389, %v6428
        %v7391 = vadd.f32 %v7390, %v6430
        %v7392 = vadd.f32 %v7391, %v6432
        %v7393 = vadd.f32 %v7392, %v6434
        %7394 = vadd.xlane.f32.xlu0 %v7393
        %v7395 = vpop.xlane.xlu0 %7394
        %v7396 = vadd.f32 %v6436, %v6438
        %v7397 = vadd.f32 %v7396, %v6440
        %v7398 = vadd.f32 %v7397, %v6442
        %v7399 = vadd.f32 %v7398, %v6444
        %v7400 = vadd.f32 %v7399, %v6446
        %v7401 = vadd.f32 %v7400, %v6448
        %v7402 = vadd.f32 %v7401, %v6450
        %7403 = vadd.xlane.f32.xlu0 %v7402
        %v7404 = vpop.xlane.xlu0 %7403
        %v7405 = vadd.f32 %v6452, %v6454
        %v7406 = vadd.f32 %v7405, %v6456
        %v7407 = vadd.f32 %v7406, %v6458
        %v7408 = vadd.f32 %v7407, %v6460
        %v7409 = vadd.f32 %v7408, %v6462
        %v7410 = vadd.f32 %v7409, %v6464
        %v7411 = vadd.f32 %v7410, %v6466
        %7412 = vadd.xlane.f32.xlu0 %v7411
        %v7413 = vpop.xlane.xlu0 %7412
        %v7414 = vadd.f32 %v6468, %v6470
        %v7415 = vadd.f32 %v7414, %v6472
        %v7416 = vadd.f32 %v7415, %v6474
        %v7417 = vadd.f32 %v7416, %v6476
        %v7418 = vadd.f32 %v7417, %v6478
        %v7419 = vadd.f32 %v7418, %v6480
        %v7420 = vadd.f32 %v7419, %v6482
        %7421 = vadd.xlane.f32.xlu0 %v7420
        %v7422 = vpop.xlane.xlu0 %7421
        %v7423 = vadd.f32 %v6484, %v6486
        %v7424 = vadd.f32 %v7423, %v6488
        %v7425 = vadd.f32 %v7424, %v6490
        %v7426 = vadd.f32 %v7425, %v6492
        %v7427 = vadd.f32 %v7426, %v6494
        %v7428 = vadd.f32 %v7427, %v6496
        %v7429 = vadd.f32 %v7428, %v6498
        %7430 = vadd.xlane.f32.xlu0 %v7429
        %v7431 = vpop.xlane.xlu0 %7430
        %v7432 = vadd.f32 %v6500, %v6502
        %v7433 = vadd.f32 %v7432, %v6504
        %v7434 = vadd.f32 %v7433, %v6506
        %v7435 = vadd.f32 %v7434, %v6508
        %v7436 = vadd.f32 %v7435, %v6510
        %v7437 = vadd.f32 %v7436, %v6512
        %v7438 = vadd.f32 %v7437, %v6514
        %7439 = vadd.xlane.f32.xlu0 %v7438
        %v7440 = vpop.xlane.xlu0 %7439
        %v7441 = vadd.f32 %v6516, %v6518
        %v7442 = vadd.f32 %v7441, %v6520
        %v7443 = vadd.f32 %v7442, %v6522
        %v7444 = vadd.f32 %v7443, %v6524
        %v7445 = vadd.f32 %v7444, %v6526
        %v7446 = vadd.f32 %v7445, %v6528
        %v7447 = vadd.f32 %v7446, %v6530
        %7448 = vadd.xlane.f32.xlu0 %v7447
        %v7449 = vpop.xlane.xlu0 %7448
        %v7450 = vadd.f32 %v6532, %v6534
        %v7451 = vadd.f32 %v7450, %v6536
        %v7452 = vadd.f32 %v7451, %v6538
        %v7453 = vadd.f32 %v7452, %v6540
        %v7454 = vadd.f32 %v7453, %v6542
        %v7455 = vadd.f32 %v7454, %v6544
        %v7456 = vadd.f32 %v7455, %v6546
        %7457 = vadd.xlane.f32.xlu0 %v7456
        %v7458 = vpop.xlane.xlu0 %7457
        %v7459 = vadd.f32 %v6548, %v6550
        %v7460 = vadd.f32 %v7459, %v6552
        %v7461 = vadd.f32 %v7460, %v6554
        %v7462 = vadd.f32 %v7461, %v6556
        %v7463 = vadd.f32 %v7462, %v6558
        %v7464 = vadd.f32 %v7463, %v6560
        %v7465 = vadd.f32 %v7464, %v6562
        %7466 = vadd.xlane.f32.xlu0 %v7465
        %v7467 = vpop.xlane.xlu0 %7466
        %v7468 = vadd.f32 %v6564, %v6566
        %v7469 = vadd.f32 %v7468, %v6568
        %v7470 = vadd.f32 %v7469, %v6570
        %v7471 = vadd.f32 %v7470, %v6572
        %v7472 = vadd.f32 %v7471, %v6574
        %v7473 = vadd.f32 %v7472, %v6576
        %v7474 = vadd.f32 %v7473, %v6578
        %7475 = vadd.xlane.f32.xlu0 %v7474
        %v7476 = vpop.xlane.xlu0 %7475
        %v7477 = vadd.f32 %v6580, %v6582
        %v7478 = vadd.f32 %v7477, %v6584
        %v7479 = vadd.f32 %v7478, %v6586
        %v7480 = vadd.f32 %v7479, %v6588
        %v7481 = vadd.f32 %v7480, %v6590
        %v7482 = vadd.f32 %v7481, %v6592
        %v7483 = vadd.f32 %v7482, %v6594
        %7484 = vadd.xlane.f32.xlu0 %v7483
        %v7485 = vpop.xlane.xlu0 %7484
        %v7486 = vadd.f32 %v6596, %v6598
        %v7487 = vadd.f32 %v7486, %v6600
        %v7488 = vadd.f32 %v7487, %v6602
        %v7489 = vadd.f32 %v7488, %v6604
        %v7490 = vadd.f32 %v7489, %v6606
        %v7491 = vadd.f32 %v7490, %v6608
        %v7492 = vadd.f32 %v7491, %v6610
        %7493 = vadd.xlane.f32.xlu0 %v7492
        %v7494 = vpop.xlane.xlu0 %7493
        %v7495 = vadd.f32 %v6612, %v6614
        %v7496 = vadd.f32 %v7495, %v6616
        %v7497 = vadd.f32 %v7496, %v6618
        %v7498 = vadd.f32 %v7497, %v6620
        %v7499 = vadd.f32 %v7498, %v6622
        %v7500 = vadd.f32 %v7499, %v6624
        %v7501 = vadd.f32 %v7500, %v6626
        %7502 = vadd.xlane.f32.xlu0 %v7501
        %v7503 = vpop.xlane.xlu0 %7502
        %v7504 = vadd.f32 %v6628, %v6630
        %v7505 = vadd.f32 %v7504, %v6632
        %v7506 = vadd.f32 %v7505, %v6634
        %v7507 = vadd.f32 %v7506, %v6636
        %v7508 = vadd.f32 %v7507, %v6638
        %v7509 = vadd.f32 %v7508, %v6640
        %v7510 = vadd.f32 %v7509, %v6642
        %7511 = vadd.xlane.f32.xlu0 %v7510
        %v7512 = vpop.xlane.xlu0 %7511
        %v7513 = vadd.f32 %v6644, %v6646
        %v7514 = vadd.f32 %v7513, %v6648
        %v7515 = vadd.f32 %v7514, %v6650
        %v7516 = vadd.f32 %v7515, %v6652
        %v7517 = vadd.f32 %v7516, %v6654
        %v7518 = vadd.f32 %v7517, %v6656
        %v7519 = vadd.f32 %v7518, %v6658
        %7520 = vadd.xlane.f32.xlu0 %v7519
        %v7521 = vpop.xlane.xlu0 %7520
        %v7522 = vadd.f32 %v6660, %v6662
        %v7523 = vadd.f32 %v7522, %v6664
        %v7524 = vadd.f32 %v7523, %v6666
        %v7525 = vadd.f32 %v7524, %v6668
        %v7526 = vadd.f32 %v7525, %v6670
        %v7527 = vadd.f32 %v7526, %v6672
        %v7528 = vadd.f32 %v7527, %v6674
        %7529 = vadd.xlane.f32.xlu0 %v7528
        %v7530 = vpop.xlane.xlu0 %7529
        %v7531 = vadd.f32 %v6676, %v6678
        %v7532 = vadd.f32 %v7531, %v6680
        %v7533 = vadd.f32 %v7532, %v6682
        %v7534 = vadd.f32 %v7533, %v6684
        %v7535 = vadd.f32 %v7534, %v6686
        %v7536 = vadd.f32 %v7535, %v6688
        %v7537 = vadd.f32 %v7536, %v6690
        %7538 = vadd.xlane.f32.xlu0 %v7537
        %v7539 = vpop.xlane.xlu0 %7538
        %v7540 = vadd.f32 %v6692, %v6694
        %v7541 = vadd.f32 %v7540, %v6696
        %v7542 = vadd.f32 %v7541, %v6698
        %v7543 = vadd.f32 %v7542, %v6700
        %v7544 = vadd.f32 %v7543, %v6702
        %v7545 = vadd.f32 %v7544, %v6704
        %v7546 = vadd.f32 %v7545, %v6706
        %7547 = vadd.xlane.f32.xlu0 %v7546
        %v7548 = vpop.xlane.xlu0 %7547
        %v7549 = vadd.f32 %v6708, %v6710
        %v7550 = vadd.f32 %v7549, %v6712
        %v7551 = vadd.f32 %v7550, %v6714
        %v7552 = vadd.f32 %v7551, %v6716
        %v7553 = vadd.f32 %v7552, %v6718
        %v7554 = vadd.f32 %v7553, %v6720
        %v7555 = vadd.f32 %v7554, %v6722
        %7556 = vadd.xlane.f32.xlu0 %v7555
        %v7557 = vpop.xlane.xlu0 %7556
        %v7558 = vadd.f32 %v6724, %v6726
        %v7559 = vadd.f32 %v7558, %v6728
        %v7560 = vadd.f32 %v7559, %v6730
        %v7561 = vadd.f32 %v7560, %v6732
        %v7562 = vadd.f32 %v7561, %v6734
        %v7563 = vadd.f32 %v7562, %v6736
        %v7564 = vadd.f32 %v7563, %v6738
        %7565 = vadd.xlane.f32.xlu0 %v7564
        %v7566 = vpop.xlane.xlu0 %7565
        %v7567 = vadd.f32 %v6740, %v6742
        %v7568 = vadd.f32 %v7567, %v6744
        %v7569 = vadd.f32 %v7568, %v6746
        %v7570 = vadd.f32 %v7569, %v6748
        %v7571 = vadd.f32 %v7570, %v6750
        %v7572 = vadd.f32 %v7571, %v6752
        %v7573 = vadd.f32 %v7572, %v6754
        %7574 = vadd.xlane.f32.xlu0 %v7573
        %v7575 = vpop.xlane.xlu0 %7574
        %v7576 = vadd.f32 %v6756, %v6758
        %v7577 = vadd.f32 %v7576, %v6760
        %v7578 = vadd.f32 %v7577, %v6762
        %v7579 = vadd.f32 %v7578, %v6764
        %v7580 = vadd.f32 %v7579, %v6766
        %v7581 = vadd.f32 %v7580, %v6768
        %v7582 = vadd.f32 %v7581, %v6770
        %7583 = vadd.xlane.f32.xlu0 %v7582
        %v7584 = vpop.xlane.xlu0 %7583
        %v7585 = vadd.f32 %v6772, %v6774
        %v7586 = vadd.f32 %v7585, %v6776
        %v7587 = vadd.f32 %v7586, %v6778
        %v7588 = vadd.f32 %v7587, %v6780
        %v7589 = vadd.f32 %v7588, %v6782
        %v7590 = vadd.f32 %v7589, %v6784
        %v7591 = vadd.f32 %v7590, %v6786
        %7592 = vadd.xlane.f32.xlu0 %v7591
        %v7593 = vpop.xlane.xlu0 %7592
        %v7594 = vadd.f32 %v6788, %v6790
        %v7595 = vadd.f32 %v7594, %v6792
        %v7596 = vadd.f32 %v7595, %v6794
        %v7597 = vadd.f32 %v7596, %v6796
        %v7598 = vadd.f32 %v7597, %v6798
        %v7599 = vadd.f32 %v7598, %v6800
        %v7600 = vadd.f32 %v7599, %v6802
        %7601 = vadd.xlane.f32.xlu0 %v7600
        %v7602 = vpop.xlane.xlu0 %7601
        %v7603 = vadd.f32 %v6804, %v6806
        %v7604 = vadd.f32 %v7603, %v6808
        %v7605 = vadd.f32 %v7604, %v6810
        %v7606 = vadd.f32 %v7605, %v6812
        %v7607 = vadd.f32 %v7606, %v6814
        %v7608 = vadd.f32 %v7607, %v6816
        %v7609 = vadd.f32 %v7608, %v6818
        %7610 = vadd.xlane.f32.xlu0 %v7609
        %v7611 = vpop.xlane.xlu0 %7610
        %v7612 = vadd.f32 %v6820, %v6822
        %v7613 = vadd.f32 %v7612, %v6824
        %v7614 = vadd.f32 %v7613, %v6826
        %v7615 = vadd.f32 %v7614, %v6828
        %v7616 = vadd.f32 %v7615, %v6830
        %v7617 = vadd.f32 %v7616, %v6832
        %v7618 = vadd.f32 %v7617, %v6834
        %7619 = vadd.xlane.f32.xlu0 %v7618
        %v7620 = vpop.xlane.xlu0 %7619
        %v7621 = vadd.f32 %v6836, %v6838
        %v7622 = vadd.f32 %v7621, %v6840
        %v7623 = vadd.f32 %v7622, %v6842
        %v7624 = vadd.f32 %v7623, %v6844
        %v7625 = vadd.f32 %v7624, %v6846
        %v7626 = vadd.f32 %v7625, %v6848
        %v7627 = vadd.f32 %v7626, %v6850
        %7628 = vadd.xlane.f32.xlu0 %v7627
        %v7629 = vpop.xlane.xlu0 %7628
        %v7630 = vadd.f32 %v6852, %v6854
        %v7631 = vadd.f32 %v7630, %v6856
        %v7632 = vadd.f32 %v7631, %v6858
        %v7633 = vadd.f32 %v7632, %v6860
        %v7634 = vadd.f32 %v7633, %v6862
        %v7635 = vadd.f32 %v7634, %v6864
        %v7636 = vadd.f32 %v7635, %v6866
        %7637 = vadd.xlane.f32.xlu0 %v7636
        %v7638 = vpop.xlane.xlu0 %7637
        %v7639 = vadd.f32 %v6868, %v6870
        %v7640 = vadd.f32 %v7639, %v6872
        %v7641 = vadd.f32 %v7640, %v6874
        %v7642 = vadd.f32 %v7641, %v6876
        %v7643 = vadd.f32 %v7642, %v6878
        %v7644 = vadd.f32 %v7643, %v6880
        %v7645 = vadd.f32 %v7644, %v6882
        %7646 = vadd.xlane.f32.xlu0 %v7645
        %v7647 = vpop.xlane.xlu0 %7646
        %v7648 = vadd.f32 %v6884, %v6886
        %v7649 = vadd.f32 %v7648, %v6888
        %v7650 = vadd.f32 %v7649, %v6890
        %v7651 = vadd.f32 %v7650, %v6892
        %v7652 = vadd.f32 %v7651, %v6894
        %v7653 = vadd.f32 %v7652, %v6896
        %v7654 = vadd.f32 %v7653, %v6898
        %7655 = vadd.xlane.f32.xlu0 %v7654
        %v7656 = vpop.xlane.xlu0 %7655
        %v7657 = vadd.f32 %v6900, %v6902
        %v7658 = vadd.f32 %v7657, %v6904
        %v7659 = vadd.f32 %v7658, %v6906
        %v7660 = vadd.f32 %v7659, %v6908
        %v7661 = vadd.f32 %v7660, %v6910
        %v7662 = vadd.f32 %v7661, %v6912
        %v7663 = vadd.f32 %v7662, %v6914
        %7664 = vadd.xlane.f32.xlu0 %v7663
        %v7665 = vpop.xlane.xlu0 %7664
        %v7666 = vadd.f32 %v6916, %v6918
        %v7667 = vadd.f32 %v7666, %v6920
        %v7668 = vadd.f32 %v7667, %v6922
        %v7669 = vadd.f32 %v7668, %v6924
        %v7670 = vadd.f32 %v7669, %v6926
        %v7671 = vadd.f32 %v7670, %v6928
        %v7672 = vadd.f32 %v7671, %v6930
        %7673 = vadd.xlane.f32.xlu0 %v7672
        %v7674 = vpop.xlane.xlu0 %7673
        %v7675 = vadd.f32 %v6932, %v6934
        %v7676 = vadd.f32 %v7675, %v6936
        %v7677 = vadd.f32 %v7676, %v6938
        %v7678 = vadd.f32 %v7677, %v6940
        %v7679 = vadd.f32 %v7678, %v6942
        %v7680 = vadd.f32 %v7679, %v6944
        %v7681 = vadd.f32 %v7680, %v6946
        %7682 = vadd.xlane.f32.xlu0 %v7681
        %v7683 = vpop.xlane.xlu0 %7682
        %v7684 = vadd.f32 %v6948, %v6950
        %v7685 = vadd.f32 %v7684, %v6952
        %v7686 = vadd.f32 %v7685, %v6954
        %v7687 = vadd.f32 %v7686, %v6956
        %v7688 = vadd.f32 %v7687, %v6958
        %v7689 = vadd.f32 %v7688, %v6960
        %v7690 = vadd.f32 %v7689, %v6962
        %7691 = vadd.xlane.f32.xlu0 %v7690
        %v7692 = vpop.xlane.xlu0 %7691
        %v7693 = vadd.f32 %v6964, %v6966
        %v7694 = vadd.f32 %v7693, %v6968
        %v7695 = vadd.f32 %v7694, %v6970
        %v7696 = vadd.f32 %v7695, %v6972
        %v7697 = vadd.f32 %v7696, %v6974
        %v7698 = vadd.f32 %v7697, %v6976
        %v7699 = vadd.f32 %v7698, %v6978
        %7700 = vadd.xlane.f32.xlu0 %v7699
        %v7701 = vpop.xlane.xlu0 %7700
        %v7702 = vadd.f32 %v6980, %v6982
        %v7703 = vadd.f32 %v7702, %v6984
        %v7704 = vadd.f32 %v7703, %v6986
        %v7705 = vadd.f32 %v7704, %v6988
        %v7706 = vadd.f32 %v7705, %v6990
        %v7707 = vadd.f32 %v7706, %v6992
        %v7708 = vadd.f32 %v7707, %v6994
        %7709 = vadd.xlane.f32.xlu0 %v7708
        %v7710 = vpop.xlane.xlu0 %7709
        %v7711 = vadd.f32 %v6996, %v6998
        %v7712 = vadd.f32 %v7711, %v7000
        %v7713 = vadd.f32 %v7712, %v7002
        %v7714 = vadd.f32 %v7713, %v7004
        %v7715 = vadd.f32 %v7714, %v7006
        %v7716 = vadd.f32 %v7715, %v7008
        %v7717 = vadd.f32 %v7716, %v7010
        %7718 = vadd.xlane.f32.xlu0 %v7717
        %v7719 = vpop.xlane.xlu0 %7718
        %v7720 = vadd.f32 %v7012, %v7014
        %v7721 = vadd.f32 %v7720, %v7016
        %v7722 = vadd.f32 %v7721, %v7018
        %v7723 = vadd.f32 %v7722, %v7020
        %v7724 = vadd.f32 %v7723, %v7022
        %v7725 = vadd.f32 %v7724, %v7024
        %v7726 = vadd.f32 %v7725, %v7026
        %7727 = vadd.xlane.f32.xlu0 %v7726
        %v7728 = vpop.xlane.xlu0 %7727
        %v7729 = vadd.f32 %v7028, %v7030
        %v7730 = vadd.f32 %v7729, %v7032
        %v7731 = vadd.f32 %v7730, %v7034
        %v7732 = vadd.f32 %v7731, %v7036
        %v7733 = vadd.f32 %v7732, %v7038
        %v7734 = vadd.f32 %v7733, %v7040
        %v7735 = vadd.f32 %v7734, %v7042
        %7736 = vadd.xlane.f32.xlu0 %v7735
        %v7737 = vpop.xlane.xlu0 %7736
        %v7738 = vadd.f32 %v7044, %v7046
        %v7739 = vadd.f32 %v7738, %v7048
        %v7740 = vadd.f32 %v7739, %v7050
        %v7741 = vadd.f32 %v7740, %v7052
        %v7742 = vadd.f32 %v7741, %v7054
        %v7743 = vadd.f32 %v7742, %v7056
        %v7744 = vadd.f32 %v7743, %v7058
        %7745 = vadd.xlane.f32.xlu0 %v7744
        %v7746 = vpop.xlane.xlu0 %7745
        %v7747 = vadd.f32 %v7060, %v7062
        %v7748 = vadd.f32 %v7747, %v7064
        %v7749 = vadd.f32 %v7748, %v7066
        %v7750 = vadd.f32 %v7749, %v7068
        %v7751 = vadd.f32 %v7750, %v7070
        %v7752 = vadd.f32 %v7751, %v7072
        %v7753 = vadd.f32 %v7752, %v7074
        %7754 = vadd.xlane.f32.xlu0 %v7753
        %v7755 = vpop.xlane.xlu0 %7754
        %v7756 = vadd.f32 %v7076, %v7078
        %v7757 = vadd.f32 %v7756, %v7080
        %v7758 = vadd.f32 %v7757, %v7082
        %v7759 = vadd.f32 %v7758, %v7084
        %v7760 = vadd.f32 %v7759, %v7086
        %v7761 = vadd.f32 %v7760, %v7088
        %v7762 = vadd.f32 %v7761, %v7090
        %7763 = vadd.xlane.f32.xlu0 %v7762
        %v7764 = vpop.xlane.xlu0 %7763
        %v7765 = vadd.f32 %v7092, %v7094
        %v7766 = vadd.f32 %v7765, %v7096
        %v7767 = vadd.f32 %v7766, %v7098
        %v7768 = vadd.f32 %v7767, %v7100
        %v7769 = vadd.f32 %v7768, %v7102
        %v7770 = vadd.f32 %v7769, %v7104
        %v7771 = vadd.f32 %v7770, %v7106
        %7772 = vadd.xlane.f32.xlu0 %v7771
        %v7773 = vpop.xlane.xlu0 %7772
        %v7774 = vadd.f32 %v7108, %v7110
        %v7775 = vadd.f32 %v7774, %v7112
        %v7776 = vadd.f32 %v7775, %v7114
        %v7777 = vadd.f32 %v7776, %v7116
        %v7778 = vadd.f32 %v7777, %v7118
        %v7779 = vadd.f32 %v7778, %v7120
        %v7780 = vadd.f32 %v7779, %v7122
        %7781 = vadd.xlane.f32.xlu0 %v7780
        %v7782 = vpop.xlane.xlu0 %7781
        %v7783 = vadd.f32 %v7124, %v7126
        %v7784 = vadd.f32 %v7783, %v7128
        %v7785 = vadd.f32 %v7784, %v7130
        %v7786 = vadd.f32 %v7785, %v7132
        %v7787 = vadd.f32 %v7786, %v7134
        %v7788 = vadd.f32 %v7787, %v7136
        %v7789 = vadd.f32 %v7788, %v7138
        %7790 = vadd.xlane.f32.xlu0 %v7789
        %v7791 = vpop.xlane.xlu0 %7790
        %v7792 = vadd.f32 %v7140, %v7142
        %v7793 = vadd.f32 %v7792, %v7144
        %v7794 = vadd.f32 %v7793, %v7146
        %v7795 = vadd.f32 %v7794, %v7148
        %v7796 = vadd.f32 %v7795, %v7150
        %v7797 = vadd.f32 %v7796, %v7152
        %v7798 = vadd.f32 %v7797, %v7154
        %7799 = vadd.xlane.f32.xlu0 %v7798
        %v7800 = vpop.xlane.xlu0 %7799
        %v7801 = vadd.f32 %v7156, %v7158
        %v7802 = vadd.f32 %v7801, %v7160
        %v7803 = vadd.f32 %v7802, %v7162
        %v7804 = vadd.f32 %v7803, %v7164
        %v7805 = vadd.f32 %v7804, %v7166
        %v7806 = vadd.f32 %v7805, %v7168
        %v7807 = vadd.f32 %v7806, %v7170
        %7808 = vadd.xlane.f32.xlu0 %v7807
        %v7809 = vpop.xlane.xlu0 %7808
        %v7810 = vadd.f32 %v7172, %v7174
        %v7811 = vadd.f32 %v7810, %v7176
        %v7812 = vadd.f32 %v7811, %v7178
        %v7813 = vadd.f32 %v7812, %v7180
        %v7814 = vadd.f32 %v7813, %v7182
        %v7815 = vadd.f32 %v7814, %v7184
        %v7816 = vadd.f32 %v7815, %v7186
        %7817 = vadd.xlane.f32.xlu0 %v7816
        %v7818 = vpop.xlane.xlu0 %7817
        %v7819 = vadd.f32 %v7188, %v7190
        %v7820 = vadd.f32 %v7819, %v7192
        %v7821 = vadd.f32 %v7820, %v7194
        %v7822 = vadd.f32 %v7821, %v7196
        %v7823 = vadd.f32 %v7822, %v7198
        %v7824 = vadd.f32 %v7823, %v7200
        %v7825 = vadd.f32 %v7824, %v7202
        %7826 = vadd.xlane.f32.xlu0 %v7825
        %v7827 = vpop.xlane.xlu0 %7826
        %v7828 = vadd.f32 %v7204, %v7206
        %v7829 = vadd.f32 %v7828, %v7208
        %v7830 = vadd.f32 %v7829, %v7210
        %v7831 = vadd.f32 %v7830, %v7212
        %v7832 = vadd.f32 %v7831, %v7214
        %v7833 = vadd.f32 %v7832, %v7216
        %v7834 = vadd.f32 %v7833, %v7218
        %7835 = vadd.xlane.f32.xlu0 %v7834
        %v7836 = vpop.xlane.xlu0 %7835
        %v7837 = vadd.f32 %v7220, %v7222
        %v7838 = vadd.f32 %v7837, %v7224
        %v7839 = vadd.f32 %v7838, %v7226
        %v7840 = vadd.f32 %v7839, %v7228
        %v7841 = vadd.f32 %v7840, %v7230
        %v7842 = vadd.f32 %v7841, %v7232
        %v7843 = vadd.f32 %v7842, %v7234
        %7844 = vadd.xlane.f32.xlu0 %v7843
        %v7845 = vpop.xlane.xlu0 %7844
        %v7846 = vadd.f32 %v7236, %v7238
        %v7847 = vadd.f32 %v7846, %v7240
        %v7848 = vadd.f32 %v7847, %v7242
        %v7849 = vadd.f32 %v7848, %v7244
        %v7850 = vadd.f32 %v7849, %v7246
        %v7851 = vadd.f32 %v7850, %v7248
        %v7852 = vadd.f32 %v7851, %v7250
        %7853 = vadd.xlane.f32.xlu0 %v7852
        %v7854 = vpop.xlane.xlu0 %7853
        %v7855 = vadd.f32 %v7252, %v7254
        %v7856 = vadd.f32 %v7855, %v7256
        %v7857 = vadd.f32 %v7856, %v7258
        %v7858 = vadd.f32 %v7857, %v7260
        %v7859 = vadd.f32 %v7858, %v7262
        %v7860 = vadd.f32 %v7859, %v7264
        %v7861 = vadd.f32 %v7860, %v7266
        %7862 = vadd.xlane.f32.xlu0 %v7861
        %v7863 = vpop.xlane.xlu0 %7862
        %v7864 = vadd.f32 %v7268, %v7270
        %v7865 = vadd.f32 %v7864, %v7272
        %v7866 = vadd.f32 %v7865, %v7274
        %v7867 = vadd.f32 %v7866, %v7276
        %v7868 = vadd.f32 %v7867, %v7278
        %v7869 = vadd.f32 %v7868, %v7280
        %v7870 = vadd.f32 %v7869, %v7282
        %7871 = vadd.xlane.f32.xlu0 %v7870
        %v7872 = vpop.xlane.xlu0 %7871
        %v7873 = vadd.f32 %v7284, %v7286
        %v7874 = vadd.f32 %v7873, %v7288
        %v7875 = vadd.f32 %v7874, %v7290
        %v7876 = vadd.f32 %v7875, %v7292
        %v7877 = vadd.f32 %v7876, %v7294
        %v7878 = vadd.f32 %v7877, %v7296
        %v7879 = vadd.f32 %v7878, %v7298
        %7880 = vadd.xlane.f32.xlu0 %v7879
        %v7881 = vpop.xlane.xlu0 %7880
        %v7882 = vadd.f32 %v7300, %v7302
        %v7883 = vadd.f32 %v7882, %v7304
        %v7884 = vadd.f32 %v7883, %v7306
        %v7885 = vadd.f32 %v7884, %v7308
        %v7886 = vadd.f32 %v7885, %v7310
        %v7887 = vadd.f32 %v7886, %v7312
        %v7888 = vadd.f32 %v7887, %v7314
        %7889 = vadd.xlane.f32.xlu0 %v7888
        %v7890 = vpop.xlane.xlu0 %7889
        %v7891 = vld [vmem:[%s0] sm:$0xff]
        %v7892 = vld [vmem:[%s0 + $0x8] sm:$0xff]
        %v7893 = vld [vmem:[%s0 + $0x10] sm:$0xff]
        %v7894 = vld [vmem:[%s0 + $0x18] sm:$0xff]
        %v7895 = vld [vmem:[%s0 + $0x20] sm:$0xff]
        %v7896 = vld [vmem:[%s0 + $0x28] sm:$0xff]
        %v7897 = vld [vmem:[%s0 + $0x30] sm:$0xff]
        %v7898 = vld [vmem:[%s0 + $0x38] sm:$0xff]
        %v7899 = vld [vmem:[%s0 + $0x40] sm:$0xff]
        %v7900 = vld [vmem:[%s0 + $0x48] sm:$0xff]
        %v7901 = vld [vmem:[%s0 + $0x50] sm:$0xff]
        %v7902 = vld [vmem:[%s0 + $0x58] sm:$0xff]
        %v7903 = vld [vmem:[%s0 + $0x60] sm:$0xff]
        %v7904 = vld [vmem:[%s0 + $0x68] sm:$0xff]
        %v7905 = vld [vmem:[%s0 + $0x70] sm:$0xff]
        %v7906 = vld [vmem:[%s0 + $0x78] sm:$0xff]
        %v7907 = vld [vmem:[%s0 + $0x80] sm:$0xff]
        %v7908 = vld [vmem:[%s0 + $0x88] sm:$0xff]
        %v7909 = vld [vmem:[%s0 + $0x90] sm:$0xff]
        %v7910 = vld [vmem:[%s0 + $0x98] sm:$0xff]
        %v7911 = vld [vmem:[%s0 + $0xa0] sm:$0xff]
        %v7912 = vld [vmem:[%s0 + $0xa8] sm:$0xff]
        %v7913 = vld [vmem:[%s0 + $0xb0] sm:$0xff]
        %v7914 = vld [vmem:[%s0 + $0xb8] sm:$0xff]
        %v7915 = vld [vmem:[%s0 + $0xc0] sm:$0xff]
        %v7916 = vld [vmem:[%s0 + $0xc8] sm:$0xff]
        %v7917 = vld [vmem:[%s0 + $0xd0] sm:$0xff]
        %v7918 = vld [vmem:[%s0 + $0xd8] sm:$0xff]
        %v7919 = vld [vmem:[%s0 + $0xe0] sm:$0xff]
        %v7920 = vld [vmem:[%s0 + $0xe8] sm:$0xff]
        %v7921 = vld [vmem:[%s0 + $0xf0] sm:$0xff]
        %v7922 = vld [vmem:[%s0 + $0xf8] sm:$0xff]
        %v7923 = vld [vmem:[%s0 + $0x100] sm:$0xff]
        %v7924 = vld [vmem:[%s0 + $0x108] sm:$0xff]
        %v7925 = vld [vmem:[%s0 + $0x110] sm:$0xff]
        %v7926 = vld [vmem:[%s0 + $0x118] sm:$0xff]
        %v7927 = vld [vmem:[%s0 + $0x120] sm:$0xff]
        %v7928 = vld [vmem:[%s0 + $0x128] sm:$0xff]
        %v7929 = vld [vmem:[%s0 + $0x130] sm:$0xff]
        %v7930 = vld [vmem:[%s0 + $0x138] sm:$0xff]
        %v7931 = vld [vmem:[%s0 + $0x140] sm:$0xff]
        %v7932 = vld [vmem:[%s0 + $0x148] sm:$0xff]
        %v7933 = vld [vmem:[%s0 + $0x150] sm:$0xff]
        %v7934 = vld [vmem:[%s0 + $0x158] sm:$0xff]
        %v7935 = vld [vmem:[%s0 + $0x160] sm:$0xff]
        %v7936 = vld [vmem:[%s0 + $0x168] sm:$0xff]
        %v7937 = vld [vmem:[%s0 + $0x170] sm:$0xff]
        %v7938 = vld [vmem:[%s0 + $0x178] sm:$0xff]
        %v7939 = vld [vmem:[%s0 + $0x180] sm:$0xff]
        %v7940 = vld [vmem:[%s0 + $0x188] sm:$0xff]
        %v7941 = vld [vmem:[%s0 + $0x190] sm:$0xff]
        %v7942 = vld [vmem:[%s0 + $0x198] sm:$0xff]
        %v7943 = vld [vmem:[%s0 + $0x1a0] sm:$0xff]
        %v7944 = vld [vmem:[%s0 + $0x1a8] sm:$0xff]
        %v7945 = vld [vmem:[%s0 + $0x1b0] sm:$0xff]
        %v7946 = vld [vmem:[%s0 + $0x1b8] sm:$0xff]
        %v7947 = vld [vmem:[%s0 + $0x1c0] sm:$0xff]
        %v7948 = vld [vmem:[%s0 + $0x1c8] sm:$0xff]
        %v7949 = vld [vmem:[%s0 + $0x1d0] sm:$0xff]
        %v7950 = vld [vmem:[%s0 + $0x1d8] sm:$0xff]
        %v7951 = vld [vmem:[%s0 + $0x1e0] sm:$0xff]
        %v7952 = vld [vmem:[%s0 + $0x1e8] sm:$0xff]
        %v7953 = vld [vmem:[%s0 + $0x1f0] sm:$0xff]
        %v7954 = vld [vmem:[%s0 + $0x1f8] sm:$0xff]
        %v7955 = vld [vmem:[%s0 + $0x200] sm:$0xff]
        %v7956 = vld [vmem:[%s0 + $0x208] sm:$0xff]
        %v7957 = vld [vmem:[%s0 + $0x210] sm:$0xff]
        %v7958 = vld [vmem:[%s0 + $0x218] sm:$0xff]
        %v7959 = vld [vmem:[%s0 + $0x220] sm:$0xff]
        %v7960 = vld [vmem:[%s0 + $0x228] sm:$0xff]
        %v7961 = vld [vmem:[%s0 + $0x230] sm:$0xff]
        %v7962 = vld [vmem:[%s0 + $0x238] sm:$0xff]
        %v7963 = vld [vmem:[%s0 + $0x240] sm:$0xff]
        %v7964 = vld [vmem:[%s0 + $0x248] sm:$0xff]
        %v7965 = vld [vmem:[%s0 + $0x250] sm:$0xff]
        %v7966 = vld [vmem:[%s0 + $0x258] sm:$0xff]
        %v7967 = vld [vmem:[%s0 + $0x260] sm:$0xff]
        %v7968 = vld [vmem:[%s0 + $0x268] sm:$0xff]
        %v7969 = vld [vmem:[%s0 + $0x270] sm:$0xff]
        %v7970 = vld [vmem:[%s0 + $0x278] sm:$0xff]
        %v7971 = vld [vmem:[%s0 + $0x280] sm:$0xff]
        %v7972 = vld [vmem:[%s0 + $0x288] sm:$0xff]
        %v7973 = vld [vmem:[%s0 + $0x290] sm:$0xff]
        %v7974 = vld [vmem:[%s0 + $0x298] sm:$0xff]
        %v7975 = vld [vmem:[%s0 + $0x2a0] sm:$0xff]
        %v7976 = vld [vmem:[%s0 + $0x2a8] sm:$0xff]
        %v7977 = vld [vmem:[%s0 + $0x2b0] sm:$0xff]
        %v7978 = vld [vmem:[%s0 + $0x2b8] sm:$0xff]
        %v7979 = vld [vmem:[%s0 + $0x2c0] sm:$0xff]
        %v7980 = vld [vmem:[%s0 + $0x2c8] sm:$0xff]
        %v7981 = vld [vmem:[%s0 + $0x2d0] sm:$0xff]
        %v7982 = vld [vmem:[%s0 + $0x2d8] sm:$0xff]
        %v7983 = vld [vmem:[%s0 + $0x2e0] sm:$0xff]
        %v7984 = vld [vmem:[%s0 + $0x2e8] sm:$0xff]
        %v7985 = vld [vmem:[%s0 + $0x2f0] sm:$0xff]
        %v7986 = vld [vmem:[%s0 + $0x2f8] sm:$0xff]
        %v7987 = vld [vmem:[%s0 + $0x300] sm:$0xff]
        %v7988 = vld [vmem:[%s0 + $0x308] sm:$0xff]
        %v7989 = vld [vmem:[%s0 + $0x310] sm:$0xff]
        %v7990 = vld [vmem:[%s0 + $0x318] sm:$0xff]
        %v7991 = vld [vmem:[%s0 + $0x320] sm:$0xff]
        %v7992 = vld [vmem:[%s0 + $0x328] sm:$0xff]
        %v7993 = vld [vmem:[%s0 + $0x330] sm:$0xff]
        %v7994 = vld [vmem:[%s0 + $0x338] sm:$0xff]
        %v7995 = vld [vmem:[%s0 + $0x340] sm:$0xff]
        %v7996 = vld [vmem:[%s0 + $0x348] sm:$0xff]
        %v7997 = vld [vmem:[%s0 + $0x350] sm:$0xff]
        %v7998 = vld [vmem:[%s0 + $0x358] sm:$0xff]
        %v7999 = vld [vmem:[%s0 + $0x360] sm:$0xff]
        %v8000 = vld [vmem:[%s0 + $0x368] sm:$0xff]
        %v8001 = vld [vmem:[%s0 + $0x370] sm:$0xff]
        %v8002 = vld [vmem:[%s0 + $0x378] sm:$0xff]
        %v8003 = vld [vmem:[%s0 + $0x380] sm:$0xff]
        %v8004 = vld [vmem:[%s0 + $0x388] sm:$0xff]
        %v8005 = vld [vmem:[%s0 + $0x390] sm:$0xff]
        %v8006 = vld [vmem:[%s0 + $0x398] sm:$0xff]
        %v8007 = vld [vmem:[%s0 + $0x3a0] sm:$0xff]
        %v8008 = vld [vmem:[%s0 + $0x3a8] sm:$0xff]
        %v8009 = vld [vmem:[%s0 + $0x3b0] sm:$0xff]
        %v8010 = vld [vmem:[%s0 + $0x3b8] sm:$0xff]
        %v8011 = vld [vmem:[%s0 + $0x3c0] sm:$0xff]
        %v8012 = vld [vmem:[%s0 + $0x3c8] sm:$0xff]
        %v8013 = vld [vmem:[%s0 + $0x3d0] sm:$0xff]
        %v8014 = vld [vmem:[%s0 + $0x3d8] sm:$0xff]
        %v8015 = vld [vmem:[%s0 + $0x3e0] sm:$0xff]
        %v8016 = vld [vmem:[%s0 + $0x3e8] sm:$0xff]
        %v8017 = vld [vmem:[%s0 + $0x3f0] sm:$0xff]
        %v8018 = vld [vmem:[%s0 + $0x3f8] sm:$0xff]
        %8019 = vmatprep.subr.mxu0 0.0
        %8020 = vmatpush1.msra.mxu0 %v7891
        %8021 = vmatprep.subr.mxu0 0.0
        %8022 = vmatpush1.msra.mxu0 %v7892
        %8023 = vmatprep.subr.mxu0 0.0
        %8024 = vmatpush1.msra.mxu0 %v7893
        %8025 = vmatprep.subr.mxu0 0.0
        %8026 = vmatpush1.msra.mxu0 %v7894
        %8027 = vmatprep.subr.mxu0 0.0
        %8028 = vmatpush1.msra.mxu0 %v7895
        %8029 = vmatprep.subr.mxu0 0.0
        %8030 = vmatpush1.msra.mxu0 %v7896
        %8031 = vmatprep.subr.mxu0 0.0
        %8032 = vmatpush1.msra.mxu0 %v7897
        %8033 = vmatprep.subr.mxu0 0.0
        %8034 = vmatpush1.msra.mxu0 %v7898
        %8035 = vmatprep.subr.mxu0 0.0
        %8036 = vmatpush1.msra.mxu0 %v7899
        %8037 = vmatprep.subr.mxu0 0.0
        %8038 = vmatpush1.msra.mxu0 %v7900
        %8039 = vmatprep.subr.mxu0 0.0
        %8040 = vmatpush1.msra.mxu0 %v7901
        %8041 = vmatprep.subr.mxu0 0.0
        %8042 = vmatpush1.msra.mxu0 %v7902
        %8043 = vmatprep.subr.mxu0 0.0
        %8044 = vmatpush1.msra.mxu0 %v7903
        %8045 = vmatprep.subr.mxu0 0.0
        %8046 = vmatpush1.msra.mxu0 %v7904
        %8047 = vmatprep.subr.mxu0 0.0
        %8048 = vmatpush1.msra.mxu0 %v7905
        %8049 = vmatprep.subr.mxu0 0.0
        %8050 = vmatpush1.msra.mxu0 %v7906
        %8051 = vmatprep.subr.mxu0 0.0
        %8052 = vmatpush1.msra.mxu0 %v7907
        %8053 = vmatprep.subr.mxu0 0.0
        %8054 = vmatpush1.msra.mxu0 %v7908
        %8055 = vmatprep.subr.mxu0 0.0
        %8056 = vmatpush1.msra.mxu0 %v7909
        %8057 = vmatprep.subr.mxu0 0.0
        %8058 = vmatpush1.msra.mxu0 %v7910
        %8059 = vmatprep.subr.mxu0 0.0
        %8060 = vmatpush1.msra.mxu0 %v7911
        %8061 = vmatprep.subr.mxu0 0.0
        %8062 = vmatpush1.msra.mxu0 %v7912
        %8063 = vmatprep.subr.mxu0 0.0
        %8064 = vmatpush1.msra.mxu0 %v7913
        %8065 = vmatprep.subr.mxu0 0.0
        %8066 = vmatpush1.msra.mxu0 %v7914
        %8067 = vmatprep.subr.mxu0 0.0
        %8068 = vmatpush1.msra.mxu0 %v7915
        %8069 = vmatprep.subr.mxu0 0.0
        %8070 = vmatpush1.msra.mxu0 %v7916
        %8071 = vmatprep.subr.mxu0 0.0
        %8072 = vmatpush1.msra.mxu0 %v7917
        %8073 = vmatprep.subr.mxu0 0.0
        %8074 = vmatpush1.msra.mxu0 %v7918
        %8075 = vmatprep.subr.mxu0 0.0
        %8076 = vmatpush1.msra.mxu0 %v7919
        %8077 = vmatprep.subr.mxu0 0.0
        %8078 = vmatpush1.msra.mxu0 %v7920
        %8079 = vmatprep.subr.mxu0 0.0
        %8080 = vmatpush1.msra.mxu0 %v7921
        %8081 = vmatprep.subr.mxu0 0.0
        %8082 = vmatpush1.msra.mxu0 %v7922
        %8083 = vmatprep.mubr.f32.mxu0 %v6294
        %8084 = vmatmul.mubr.f32.gmra.mrb[0].mxu0 %v6292
        %v8085 = vpop.f32.mrb[0].mxu0
        %v8086 = vadd.f32 0.0, %v8085
        %v8087 = vpop.f32.mrb[0].mxu0
        %8088 = vmatprep.mubr.f32.mxu0 %v6310
        %8089 = vmatmul.mubr.f32.gmra.mrb[0].mxu0 %v6308
        %v8090 = vpop.f32.mrb[0].mxu0
        %v8091 = vadd.f32 0.0, %v8090
        %v8092 = vpop.f32.mrb[0].mxu0
        %8093 = vmatprep.mubr.f32.mxu0 %v6326
        %8094 = vmatmul.mubr.f32.gmra.mrb[0].mxu0 %v6324
        %v8095 = vpop.f32.mrb[0].mxu0
        %v8096 = vadd.f32 0.0, %v8095
        %v8097 = vpop.f32.mrb[0].mxu0
        %8098 = vmatprep.mubr.f32.mxu0 %v6342
        %8099 = vmatmul.mubr.f32.gmra.mrb[0].mxu0 %v6340
        %v8100 = vpop.f32.mrb[0].mxu0
        %v8101 = vadd.f32 0.0, %v8100
        %v8102 = vpop.f32.mrb[0].mxu0
        %8103 = vmatprep.mubr.f32.mxu0 %v6358
        %8104 = vmatmul.mubr.f32.gmra.mrb[0].mxu0 %v6356
        %v8105 = vpop.f32.mrb[0].mxu0
        %v8106 = vadd.f32 0.0, %v8105
        %v8107 = vpop.f32.mrb[0].mxu0
        %8108 = vmatprep.mubr.f32.mxu0 %v6374
        %8109 = vmatmul.mubr.f32.gmra.mrb[0].mxu0 %v6372
        %v8110 = vpop.f32.mrb[0].mxu0
        %v8111 = vadd.f32 0.0, %v8110
        %v8112 = vpop.f32.mrb[0].mxu0
        %8113 = vmatprep.mubr.f32.mxu0 %v6390
        %8114 = vmatmul.mubr.f32.gmra.mrb[0].mxu0 %v6388
        %v8115 = vpop.f32.mrb[0].mxu0
        %v8116 = vadd.f32 0.0, %v8115
        %v8117 = vpop.f32.mrb[0].mxu0
        %8118 = vmatprep.mubr.f32.mxu0 %v6406
        %8119 = vmatmul.mubr.f32.gmra.mrb[0].mxu0 %v6404
        %v8120 = vpop.f32.mrb[0].mxu0
        %v8121 = vadd.f32 0.0, %v8120
        %v8122 = vpop.f32.mrb[0].mxu0
        %8123 = vmatprep.mubr.f32.mxu0 %v6422
        %8124 = vmatmul.mubr.f32.gmra.mrb[0].mxu0 %v6420
        %v8125 = vpop.f32.mrb[0].mxu0
        %v8126 = vadd.f32 0.0, %v8125
        %v8127 = vpop.f32.mrb[0].mxu0
        %8128 = vmatprep.mubr.f32.mxu0 %v6438
        %8129 = vmatmul.mubr.f32.gmra.mrb[0].mxu0 %v6436
        %v8130 = vpop.f32.mrb[0].mxu0
        %v8131 = vadd.f32 0.0, %v8130
        %v8132 = vpop.f32.mrb[0].mxu0
        %8133 = vmatprep.mubr.f32.mxu0 %v6454
        %8134 = vmatmul.mubr.f32.gmra.mrb[0].mxu0 %v6452
        %v8135 = vpop.f32.mrb[0].mxu0
        %v8136 = vadd.f32 0.0, %v8135
        %v8137 = vpop.f32.mrb[0].mxu0
        %8138 = vmatprep.mubr.f32.mxu0 %v6470
        %8139 = vmatmul.mubr.f32.gmra.mrb[0].mxu0 %v6468
        %v8140 = vpop.f32.mrb[0].mxu0
        %v8141 = vadd.f32 0.0, %v8140
        %v8142 = vpop.f32.mrb[0].mxu0
        %8143 = vmatprep.mubr.f32.mxu0 %v6486
        %8144 = vmatmul.mubr.f32.gmra.mrb[0].mxu0 %v6484
        %v8145 = vpop.f32.mrb[0].mxu0
        %v8146 = vadd.f32 0.0, %v8145
        %v8147 = vpop.f32.mrb[0].mxu0
        %8148 = vmatprep.mubr.f32.mxu0 %v6502
        %8149 = vmatmul.mubr.f32.gmra.mrb[0].mxu0 %v6500
        %v8150 = vpop.f32.mrb[0].mxu0
        %v8151 = vadd.f32 0.0, %v8150
        %v8152 = vpop.f32.mrb[0].mxu0
        %8153 = vmatprep.mubr.f32.mxu0 %v6518
        %8154 = vmatmul.mubr.f32.gmra.mrb[0].mxu0 %v6516
        %v8155 = vpop.f32.mrb[0].mxu0
        %v8156 = vadd.f32 0.0, %v8155
        %v8157 = vpop.f32.mrb[0].mxu0
        %8158 = vmatprep.mubr.f32.mxu0 %v6534
        %8159 = vmatmul.mubr.f32.gmra.mrb[0].mxu0 %v6532
        %v8160 = vpop.f32.mrb[0].mxu0
        %v8161 = vadd.f32 0.0, %v8160
        %v8162 = vpop.f32.mrb[0].mxu0
        %8163 = vmatprep.mubr.f32.mxu0 %v6550
        %8164 = vmatmul.mubr.f32.gmra.mrb[0].mxu0 %v6548
        %v8165 = vpop.f32.mrb[0].mxu0
        %v8166 = vadd.f32 0.0, %v8165
        %v8167 = vpop.f32.mrb[0].mxu0
        %8168 = vmatprep.mubr.f32.mxu0 %v6566
        %8169 = vmatmul.mubr.f32.gmra.mrb[0].mxu0 %v6564
        %v8170 = vpop.f32.mrb[0].mxu0
        %v8171 = vadd.f32 0.0, %v8170
        %v8172 = vpop.f32.mrb[0].mxu0
        %8173 = vmatprep.mubr.f32.mxu0 %v6582
        %8174 = vmatmul.mubr.f32.gmra.mrb[0].mxu0 %v6580
        %v8175 = vpop.f32.mrb[0].mxu0
        %v8176 = vadd.f32 0.0, %v8175
        %v8177 = vpop.f32.mrb[0].mxu0
        %8178 = vmatprep.mubr.f32.mxu0 %v6598
        %8179 = vmatmul.mubr.f32.gmra.mrb[0].mxu0 %v6596
        %v8180 = vpop.f32.mrb[0].mxu0
        %v8181 = vadd.f32 0.0, %v8180
        %v8182 = vpop.f32.mrb[0].mxu0
        %8183 = vmatprep.mubr.f32.mxu0 %v6614
        %8184 = vmatmul.mubr.f32.gmra.mrb[0].mxu0 %v6612
        %v8185 = vpop.f32.mrb[0].mxu0
        %v8186 = vadd.f32 0.0, %v8185
        %v8187 = vpop.f32.mrb[0].mxu0
        %8188 = vmatprep.mubr.f32.mxu0 %v6630
        %8189 = vmatmul.mubr.f32.gmra.mrb[0].mxu0 %v6628
        %v8190 = vpop.f32.mrb[0].mxu0
        %v8191 = vadd.f32 0.0, %v8190
        %v8192 = vpop.f32.mrb[0].mxu0
        %8193 = vmatprep.mubr.f32.mxu0 %v6646
        %8194 = vmatmul.mubr.f32.gmra.mrb[0].mxu0 %v6644
        %v8195 = vpop.f32.mrb[0].mxu0
        %v8196 = vadd.f32 0.0, %v8195
        %v8197 = vpop.f32.mrb[0].mxu0
        %8198 = vmatprep.mubr.f32.mxu0 %v6662
        %8199 = vmatmul.mubr.f32.gmra.mrb[0].mxu0 %v6660
        %v8200 = vpop.f32.mrb[0].mxu0
        %v8201 = vadd.f32 0.0, %v8200
        %v8202 = vpop.f32.mrb[0].mxu0
        %8203 = vmatprep.mubr.f32.mxu0 %v6678
        %8204 = vmatmul.mubr.f32.gmra.mrb[0].mxu0 %v6676
        %v8205 = vpop.f32.mrb[0].mxu0
        %v8206 = vadd.f32 0.0, %v8205
        %v8207 = vpop.f32.mrb[0].mxu0
        %8208 = vmatprep.mubr.f32.mxu0 %v6694
        %8209 = vmatmul.mubr.f32.gmra.mrb[0].mxu0 %v6692
        %v8210 = vpop.f32.mrb[0].mxu0
        %v8211 = vadd.f32 0.0, %v8210
        %v8212 = vpop.f32.mrb[0].mxu0
        %8213 = vmatprep.mubr.f32.mxu0 %v6710
        %8214 = vmatmul.mubr.f32.gmra.mrb[0].mxu0 %v6708
        %v8215 = vpop.f32.mrb[0].mxu0
        %v8216 = vadd.f32 0.0, %v8215
        %v8217 = vpop.f32.mrb[0].mxu0
        %8218 = vmatprep.mubr.f32.mxu0 %v6726
        %8219 = vmatmul.mubr.f32.gmra.mrb[0].mxu0 %v6724
        %v8220 = vpop.f32.mrb[0].mxu0
        %v8221 = vadd.f32 0.0, %v8220
        %v8222 = vpop.f32.mrb[0].mxu0
        %8223 = vmatprep.mubr.f32.mxu0 %v6742
        %8224 = vmatmul.mubr.f32.gmra.mrb[0].mxu0 %v6740
        %v8225 = vpop.f32.mrb[0].mxu0
        %v8226 = vadd.f32 0.0, %v8225
        %v8227 = vpop.f32.mrb[0].mxu0
        %8228 = vmatprep.mubr.f32.mxu0 %v6758
        %8229 = vmatmul.mubr.f32.gmra.mrb[0].mxu0 %v6756
        %v8230 = vpop.f32.mrb[0].mxu0
        %v8231 = vadd.f32 0.0, %v8230
        %v8232 = vpop.f32.mrb[0].mxu0
        %8233 = vmatprep.mubr.f32.mxu0 %v6774
        %8234 = vmatmul.mubr.f32.gmra.mrb[0].mxu0 %v6772
        %v8235 = vpop.f32.mrb[0].mxu0
        %v8236 = vadd.f32 0.0, %v8235
        %v8237 = vpop.f32.mrb[0].mxu0
        %8238 = vmatprep.mubr.f32.mxu0 %v6790
        %8239 = vmatmul.mubr.f32.gmra.mrb[0].mxu0 %v6788
        %v8240 = vpop.f32.mrb[0].mxu0
        %v8241 = vadd.f32 0.0, %v8240
        %v8242 = vpop.f32.mrb[0].mxu0
        %8243 = vmatprep.mubr.f32.mxu0 %v6806
        %8244 = vmatmul.mubr.f32.gmra.mrb[0].mxu0 %v6804
        %v8245 = vpop.f32.mrb[0].mxu0
        %v8246 = vadd.f32 0.0, %v8245
        %v8247 = vpop.f32.mrb[0].mxu0
        %8248 = vmatprep.mubr.f32.mxu0 %v6822
        %8249 = vmatmul.mubr.f32.gmra.mrb[0].mxu0 %v6820
        %v8250 = vpop.f32.mrb[0].mxu0
        %v8251 = vadd.f32 0.0, %v8250
        %v8252 = vpop.f32.mrb[0].mxu0
        %8253 = vmatprep.mubr.f32.mxu0 %v6838
        %8254 = vmatmul.mubr.f32.gmra.mrb[0].mxu0 %v6836
        %v8255 = vpop.f32.mrb[0].mxu0
        %v8256 = vadd.f32 0.0, %v8255
        %v8257 = vpop.f32.mrb[0].mxu0
        %8258 = vmatprep.mubr.f32.mxu0 %v6854
        %8259 = vmatmul.mubr.f32.gmra.mrb[0].mxu0 %v6852
        %v8260 = vpop.f32.mrb[0].mxu0
        %v8261 = vadd.f32 0.0, %v8260
        %v8262 = vpop.f32.mrb[0].mxu0
        %8263 = vmatprep.mubr.f32.mxu0 %v6870
        %8264 = vmatmul.mubr.f32.gmra.mrb[0].mxu0 %v6868
        %v8265 = vpop.f32.mrb[0].mxu0
        %v8266 = vadd.f32 0.0, %v8265
        %v8267 = vpop.f32.mrb[0].mxu0
        %8268 = vmatprep.mubr.f32.mxu0 %v6886
        %8269 = vmatmul.mubr.f32.gmra.mrb[0].mxu0 %v6884
        %v8270 = vpop.f32.mrb[0].mxu0
        %v8271 = vadd.f32 0.0, %v8270
        %v8272 = vpop.f32.mrb[0].mxu0
        %8273 = vmatprep.mubr.f32.mxu0 %v6902
        %8274 = vmatmul.mubr.f32.gmra.mrb[0].mxu0 %v6900
        %v8275 = vpop.f32.mrb[0].mxu0
        %v8276 = vadd.f32 0.0, %v8275
        %v8277 = vpop.f32.mrb[0].mxu0
        %8278 = vmatprep.mubr.f32.mxu0 %v6918
        %8279 = vmatmul.mubr.f32.gmra.mrb[0].mxu0 %v6916
        %v8280 = vpop.f32.mrb[0].mxu0
        %v8281 = vadd.f32 0.0, %v8280
        %v8282 = vpop.f32.mrb[0].mxu0
        %8283 = vmatprep.mubr.f32.mxu0 %v6934
        %8284 = vmatmul.mubr.f32.gmra.mrb[0].mxu0 %v6932
        %v8285 = vpop.f32.mrb[0].mxu0
        %v8286 = vadd.f32 0.0, %v8285
        %v8287 = vpop.f32.mrb[0].mxu0
        %8288 = vmatprep.mubr.f32.mxu0 %v6950
        %8289 = vmatmul.mubr.f32.gmra.mrb[0].mxu0 %v6948
        %v8290 = vpop.f32.mrb[0].mxu0
        %v8291 = vadd.f32 0.0, %v8290
        %v8292 = vpop.f32.mrb[0].mxu0
        %8293 = vmatprep.mubr.f32.mxu0 %v6966
        %8294 = vmatmul.mubr.f32.gmra.mrb[0].mxu0 %v6964
        %v8295 = vpop.f32.mrb[0].mxu0
        %v8296 = vadd.f32 0.0, %v8295
        %v8297 = vpop.f32.mrb[0].mxu0
        %8298 = vmatprep.mubr.f32.mxu0 %v6982
        %8299 = vmatmul.mubr.f32.gmra.mrb[0].mxu0 %v6980
        %v8300 = vpop.f32.mrb[0].mxu0
        %v8301 = vadd.f32 0.0, %v8300
        %v8302 = vpop.f32.mrb[0].mxu0
        %8303 = vmatprep.mubr.f32.mxu0 %v6998
        %8304 = vmatmul.mubr.f32.gmra.mrb[0].mxu0 %v6996
        %v8305 = vpop.f32.mrb[0].mxu0
        %v8306 = vadd.f32 0.0, %v8305
        %v8307 = vpop.f32.mrb[0].mxu0
        %8308 = vmatprep.mubr.f32.mxu0 %v7014
        %8309 = vmatmul.mubr.f32.gmra.mrb[0].mxu0 %v7012
        %v8310 = vpop.f32.mrb[0].mxu0
        %v8311 = vadd.f32 0.0, %v8310
        %v8312 = vpop.f32.mrb[0].mxu0
        %8313 = vmatprep.mubr.f32.mxu0 %v7030
        %8314 = vmatmul.mubr.f32.gmra.mrb[0].mxu0 %v7028
        %v8315 = vpop.f32.mrb[0].mxu0
        %v8316 = vadd.f32 0.0, %v8315
        %v8317 = vpop.f32.mrb[0].mxu0
        %8318 = vmatprep.mubr.f32.mxu0 %v7046
        %8319 = vmatmul.mubr.f32.gmra.mrb[0].mxu0 %v7044
        %v8320 = vpop.f32.mrb[0].mxu0
        %v8321 = vadd.f32 0.0, %v8320
        %v8322 = vpop.f32.mrb[0].mxu0
        %8323 = vmatprep.mubr.f32.mxu0 %v7062
        %8324 = vmatmul.mubr.f32.gmra.mrb[0].mxu0 %v7060
        %v8325 = vpop.f32.mrb[0].mxu0
        %v8326 = vadd.f32 0.0, %v8325
        %v8327 = vpop.f32.mrb[0].mxu0
        %8328 = vmatprep.mubr.f32.mxu0 %v7078
        %8329 = vmatmul.mubr.f32.gmra.mrb[0].mxu0 %v7076
        %v8330 = vpop.f32.mrb[0].mxu0
        %v8331 = vadd.f32 0.0, %v8330
        %v8332 = vpop.f32.mrb[0].mxu0
        %8333 = vmatprep.mubr.f32.mxu0 %v7094
        %8334 = vmatmul.mubr.f32.gmra.mrb[0].mxu0 %v7092
        %v8335 = vpop.f32.mrb[0].mxu0
        %v8336 = vadd.f32 0.0, %v8335
        %v8337 = vpop.f32.mrb[0].mxu0
        %8338 = vmatprep.mubr.f32.mxu0 %v7110
        %8339 = vmatmul.mubr.f32.gmra.mrb[0].mxu0 %v7108
        %v8340 = vpop.f32.mrb[0].mxu0
        %v8341 = vadd.f32 0.0, %v8340
        %v8342 = vpop.f32.mrb[0].mxu0
        %8343 = vmatprep.mubr.f32.mxu0 %v7126
        %8344 = vmatmul.mubr.f32.gmra.mrb[0].mxu0 %v7124
        %v8345 = vpop.f32.mrb[0].mxu0
        %v8346 = vadd.f32 0.0, %v8345
        %v8347 = vpop.f32.mrb[0].mxu0
        %8348 = vmatprep.mubr.f32.mxu0 %v7142
        %8349 = vmatmul.mubr.f32.gmra.mrb[0].mxu0 %v7140
        %v8350 = vpop.f32.mrb[0].mxu0
        %v8351 = vadd.f32 0.0, %v8350
        %v8352 = vpop.f32.mrb[0].mxu0
        %8353 = vmatprep.mubr.f32.mxu0 %v7158
        %8354 = vmatmul.mubr.f32.gmra.mrb[0].mxu0 %v7156
        %v8355 = vpop.f32.mrb[0].mxu0
        %v8356 = vadd.f32 0.0, %v8355
        %v8357 = vpop.f32.mrb[0].mxu0
        %8358 = vmatprep.mubr.f32.mxu0 %v7174
        %8359 = vmatmul.mubr.f32.gmra.mrb[0].mxu0 %v7172
        %v8360 = vpop.f32.mrb[0].mxu0
        %v8361 = vadd.f32 0.0, %v8360
        %v8362 = vpop.f32.mrb[0].mxu0
        %8363 = vmatprep.mubr.f32.mxu0 %v7190
        %8364 = vmatmul.mubr.f32.gmra.mrb[0].mxu0 %v7188
        %v8365 = vpop.f32.mrb[0].mxu0
        %v8366 = vadd.f32 0.0, %v8365
        %v8367 = vpop.f32.mrb[0].mxu0
        %8368 = vmatprep.mubr.f32.mxu0 %v7206
        %8369 = vmatmul.mubr.f32.gmra.mrb[0].mxu0 %v7204
        %v8370 = vpop.f32.mrb[0].mxu0
        %v8371 = vadd.f32 0.0, %v8370
        %v8372 = vpop.f32.mrb[0].mxu0
        %8373 = vmatprep.mubr.f32.mxu0 %v7222
        %8374 = vmatmul.mubr.f32.gmra.mrb[0].mxu0 %v7220
        %v8375 = vpop.f32.mrb[0].mxu0
        %v8376 = vadd.f32 0.0, %v8375
        %v8377 = vpop.f32.mrb[0].mxu0
        %8378 = vmatprep.mubr.f32.mxu0 %v7238
        %8379 = vmatmul.mubr.f32.gmra.mrb[0].mxu0 %v7236
        %v8380 = vpop.f32.mrb[0].mxu0
        %v8381 = vadd.f32 0.0, %v8380
        %v8382 = vpop.f32.mrb[0].mxu0
        %8383 = vmatprep.mubr.f32.mxu0 %v7254
        %8384 = vmatmul.mubr.f32.gmra.mrb[0].mxu0 %v7252
        %v8385 = vpop.f32.mrb[0].mxu0
        %v8386 = vadd.f32 0.0, %v8385
        %v8387 = vpop.f32.mrb[0].mxu0
        %8388 = vmatprep.mubr.f32.mxu0 %v7270
        %8389 = vmatmul.mubr.f32.gmra.mrb[0].mxu0 %v7268
        %v8390 = vpop.f32.mrb[0].mxu0
        %v8391 = vadd.f32 0.0, %v8390
        %v8392 = vpop.f32.mrb[0].mxu0
        %8393 = vmatprep.mubr.f32.mxu0 %v7286
        %8394 = vmatmul.mubr.f32.gmra.mrb[0].mxu0 %v7284
        %v8395 = vpop.f32.mrb[0].mxu0
        %v8396 = vadd.f32 0.0, %v8395
        %v8397 = vpop.f32.mrb[0].mxu0
        %8398 = vmatprep.mubr.f32.mxu0 %v7302
        %8399 = vmatmul.mubr.f32.gmra.mrb[0].mxu0 %v7300
        %v8400 = vpop.f32.mrb[0].mxu0
        %v8401 = vadd.f32 0.0, %v8400
        %v8402 = vpop.f32.mrb[0].mxu0
        %8403 = vdwg.mxu0
        %8404 = vmatprep.subr.mxu0 0.0
        %8405 = vmatpush1.msra.mxu0 %v7923
        %8406 = vmatprep.subr.mxu0 0.0
        %8407 = vmatpush1.msra.mxu0 %v7924
        %8408 = vmatprep.subr.mxu0 0.0
        %8409 = vmatpush1.msra.mxu0 %v7925
        %8410 = vmatprep.subr.mxu0 0.0
        %8411 = vmatpush1.msra.mxu0 %v7926
        %8412 = vmatprep.subr.mxu0 0.0
        %8413 = vmatpush1.msra.mxu0 %v7927
        %8414 = vmatprep.subr.mxu0 0.0
        %8415 = vmatpush1.msra.mxu0 %v7928
        %8416 = vmatprep.subr.mxu0 0.0
        %8417 = vmatpush1.msra.mxu0 %v7929
        %8418 = vmatprep.subr.mxu0 0.0
        %8419 = vmatpush1.msra.mxu0 %v7930
        %8420 = vmatprep.subr.mxu0 0.0
        %8421 = vmatpush1.msra.mxu0 %v7931
        %8422 = vmatprep.subr.mxu0 0.0
        %8423 = vmatpush1.msra.mxu0 %v7932
        %8424 = vmatprep.subr.mxu0 0.0
        %8425 = vmatpush1.msra.mxu0 %v7933
        %8426 = vmatprep.subr.mxu0 0.0
        %8427 = vmatpush1.msra.mxu0 %v7934
        %8428 = vmatprep.subr.mxu0 0.0
        %8429 = vmatpush1.msra.mxu0 %v7935
        %8430 = vmatprep.subr.mxu0 0.0
        %8431 = vmatpush1.msra.mxu0 %v7936
        %8432 = vmatprep.subr.mxu0 0.0
        %8433 = vmatpush1.msra.mxu0 %v7937
        %8434 = vmatprep.subr.mxu0 0.0
        %8435 = vmatpush1.msra.mxu0 %v7938
        %8436 = vmatprep.subr.mxu0 0.0
        %8437 = vmatpush1.msra.mxu0 %v7939
        %8438 = vmatprep.subr.mxu0 0.0
        %8439 = vmatpush1.msra.mxu0 %v7940
        %8440 = vmatprep.subr.mxu0 0.0
        %8441 = vmatpush1.msra.mxu0 %v7941
        %8442 = vmatprep.subr.mxu0 0.0
        %8443 = vmatpush1.msra.mxu0 %v7942
        %8444 = vmatprep.subr.mxu0 0.0
        %8445 = vmatpush1.msra.mxu0 %v7943
        %8446 = vmatprep.subr.mxu0 0.0
        %8447 = vmatpush1.msra.mxu0 %v7944
        %8448 = vmatprep.subr.mxu0 0.0
        %8449 = vmatpush1.msra.mxu0 %v7945
        %8450 = vmatprep.subr.mxu0 0.0
        %8451 = vmatpush1.msra.mxu0 %v7946
        %8452 = vmatprep.subr.mxu0 0.0
        %8453 = vmatpush1.msra.mxu0 %v7947
        %8454 = vmatprep.subr.mxu0 0.0
        %8455 = vmatpush1.msra.mxu0 %v7948
        %8456 = vmatprep.subr.mxu0 0.0
        %8457 = vmatpush1.msra.mxu0 %v7949
        %8458 = vmatprep.subr.mxu0 0.0
        %8459 = vmatpush1.msra.mxu0 %v7950
        %8460 = vmatprep.subr.mxu0 0.0
        %8461 = vmatpush1.msra.mxu0 %v7951
        %8462 = vmatprep.subr.mxu0 0.0
        %8463 = vmatpush1.msra.mxu0 %v7952
        %8464 = vmatprep.subr.mxu0 0.0
        %8465 = vmatpush1.msra.mxu0 %v7953
        %8466 = vmatprep.subr.mxu0 0.0
        %8467 = vmatpush1.msra.mxu0 %v7954
        %8468 = vmatprep.mubr.f32.mxu0 %v6298
        %8469 = vmatmul.mubr.f32.gmra.mrb[0].mxu0 %v6296
        %v8470 = vpop.f32.mrb[0].mxu0
        %v8471 = vadd.f32 %v8086, %v8470
        %v8472 = vpop.f32.mrb[0].mxu0
        %8473 = vmatprep.mubr.f32.mxu0 %v6314
        %8474 = vmatmul.mubr.f32.gmra.mrb[0].mxu0 %v6312
        %v8475 = vpop.f32.mrb[0].mxu0
        %v8476 = vadd.f32 %v8091, %v8475
        %v8477 = vpop.f32.mrb[0].mxu0
        %8478 = vmatprep.mubr.f32.mxu0 %v6330
        %8479 = vmatmul.mubr.f32.gmra.mrb[0].mxu0 %v6328
        %v8480 = vpop.f32.mrb[0].mxu0
        %v8481 = vadd.f32 %v8096, %v8480
        %v8482 = vpop.f32.mrb[0].mxu0
        %8483 = vmatprep.mubr.f32.mxu0 %v6346
        %8484 = vmatmul.mubr.f32.gmra.mrb[0].mxu0 %v6344
        %v8485 = vpop.f32.mrb[0].mxu0
        %v8486 = vadd.f32 %v8101, %v8485
        %v8487 = vpop.f32.mrb[0].mxu0
        %8488 = vmatprep.mubr.f32.mxu0 %v6362
        %8489 = vmatmul.mubr.f32.gmra.mrb[0].mxu0 %v6360
        %v8490 = vpop.f32.mrb[0].mxu0
        %v8491 = vadd.f32 %v8106, %v8490
        %v8492 = vpop.f32.mrb[0].mxu0
        %8493 = vmatprep.mubr.f32.mxu0 %v6378
        %8494 = vmatmul.mubr.f32.gmra.mrb[0].mxu0 %v6376
        %v8495 = vpop.f32.mrb[0].mxu0
        %v8496 = vadd.f32 %v8111, %v8495
        %v8497 = vpop.f32.mrb[0].mxu0
        %8498 = vmatprep.mubr.f32.mxu0 %v6394
        %8499 = vmatmul.mubr.f32.gmra.mrb[0].mxu0 %v6392
        %v8500 = vpop.f32.mrb[0].mxu0
        %v8501 = vadd.f32 %v8116, %v8500
        %v8502 = vpop.f32.mrb[0].mxu0
        %8503 = vmatprep.mubr.f32.mxu0 %v6410
        %8504 = vmatmul.mubr.f32.gmra.mrb[0].mxu0 %v6408
        %v8505 = vpop.f32.mrb[0].mxu0
        %v8506 = vadd.f32 %v8121, %v8505
        %v8507 = vpop.f32.mrb[0].mxu0
        %8508 = vmatprep.mubr.f32.mxu0 %v6426
        %8509 = vmatmul.mubr.f32.gmra.mrb[0].mxu0 %v6424
        %v8510 = vpop.f32.mrb[0].mxu0
        %v8511 = vadd.f32 %v8126, %v8510
        %v8512 = vpop.f32.mrb[0].mxu0
        %8513 = vmatprep.mubr.f32.mxu0 %v6442
        %8514 = vmatmul.mubr.f32.gmra.mrb[0].mxu0 %v6440
        %v8515 = vpop.f32.mrb[0].mxu0
        %v8516 = vadd.f32 %v8131, %v8515
        %v8517 = vpop.f32.mrb[0].mxu0
        %8518 = vmatprep.mubr.f32.mxu0 %v6458
        %8519 = vmatmul.mubr.f32.gmra.mrb[0].mxu0 %v6456
        %v8520 = vpop.f32.mrb[0].mxu0
        %v8521 = vadd.f32 %v8136, %v8520
        %v8522 = vpop.f32.mrb[0].mxu0
        %8523 = vmatprep.mubr.f32.mxu0 %v6474
        %8524 = vmatmul.mubr.f32.gmra.mrb[0].mxu0 %v6472
        %v8525 = vpop.f32.mrb[0].mxu0
        %v8526 = vadd.f32 %v8141, %v8525
        %v8527 = vpop.f32.mrb[0].mxu0
        %8528 = vmatprep.mubr.f32.mxu0 %v6490
        %8529 = vmatmul.mubr.f32.gmra.mrb[0].mxu0 %v6488
        %v8530 = vpop.f32.mrb[0].mxu0
        %v8531 = vadd.f32 %v8146, %v8530
        %v8532 = vpop.f32.mrb[0].mxu0
        %8533 = vmatprep.mubr.f32.mxu0 %v6506
        %8534 = vmatmul.mubr.f32.gmra.mrb[0].mxu0 %v6504
        %v8535 = vpop.f32.mrb[0].mxu0
        %v8536 = vadd.f32 %v8151, %v8535
        %v8537 = vpop.f32.mrb[0].mxu0
        %8538 = vmatprep.mubr.f32.mxu0 %v6522
        %8539 = vmatmul.mubr.f32.gmra.mrb[0].mxu0 %v6520
        %v8540 = vpop.f32.mrb[0].mxu0
        %v8541 = vadd.f32 %v8156, %v8540
        %v8542 = vpop.f32.mrb[0].mxu0
        %8543 = vmatprep.mubr.f32.mxu0 %v6538
        %8544 = vmatmul.mubr.f32.gmra.mrb[0].mxu0 %v6536
        %v8545 = vpop.f32.mrb[0].mxu0
        %v8546 = vadd.f32 %v8161, %v8545
        %v8547 = vpop.f32.mrb[0].mxu0
        %8548 = vmatprep.mubr.f32.mxu0 %v6554
        %8549 = vmatmul.mubr.f32.gmra.mrb[0].mxu0 %v6552
        %v8550 = vpop.f32.mrb[0].mxu0
        %v8551 = vadd.f32 %v8166, %v8550
        %v8552 = vpop.f32.mrb[0].mxu0
        %8553 = vmatprep.mubr.f32.mxu0 %v6570
        %8554 = vmatmul.mubr.f32.gmra.mrb[0].mxu0 %v6568
        %v8555 = vpop.f32.mrb[0].mxu0
        %v8556 = vadd.f32 %v8171, %v8555
        %v8557 = vpop.f32.mrb[0].mxu0
        %8558 = vmatprep.mubr.f32.mxu0 %v6586
        %8559 = vmatmul.mubr.f32.gmra.mrb[0].mxu0 %v6584
        %v8560 = vpop.f32.mrb[0].mxu0
        %v8561 = vadd.f32 %v8176, %v8560
        %v8562 = vpop.f32.mrb[0].mxu0
        %8563 = vmatprep.mubr.f32.mxu0 %v6602
        %8564 = vmatmul.mubr.f32.gmra.mrb[0].mxu0 %v6600
        %v8565 = vpop.f32.mrb[0].mxu0
        %v8566 = vadd.f32 %v8181, %v8565
        %v8567 = vpop.f32.mrb[0].mxu0
        %8568 = vmatprep.mubr.f32.mxu0 %v6618
        %8569 = vmatmul.mubr.f32.gmra.mrb[0].mxu0 %v6616
        %v8570 = vpop.f32.mrb[0].mxu0
        %v8571 = vadd.f32 %v8186, %v8570
        %v8572 = vpop.f32.mrb[0].mxu0
        %8573 = vmatprep.mubr.f32.mxu0 %v6634
        %8574 = vmatmul.mubr.f32.gmra.mrb[0].mxu0 %v6632
        %v8575 = vpop.f32.mrb[0].mxu0
        %v8576 = vadd.f32 %v8191, %v8575
        %v8577 = vpop.f32.mrb[0].mxu0
        %8578 = vmatprep.mubr.f32.mxu0 %v6650
        %8579 = vmatmul.mubr.f32.gmra.mrb[0].mxu0 %v6648
        %v8580 = vpop.f32.mrb[0].mxu0
        %v8581 = vadd.f32 %v8196, %v8580
        %v8582 = vpop.f32.mrb[0].mxu0
        %8583 = vmatprep.mubr.f32.mxu0 %v6666
        %8584 = vmatmul.mubr.f32.gmra.mrb[0].mxu0 %v6664
        %v8585 = vpop.f32.mrb[0].mxu0
        %v8586 = vadd.f32 %v8201, %v8585
        %v8587 = vpop.f32.mrb[0].mxu0
        %8588 = vmatprep.mubr.f32.mxu0 %v6682
        %8589 = vmatmul.mubr.f32.gmra.mrb[0].mxu0 %v6680
        %v8590 = vpop.f32.mrb[0].mxu0
        %v8591 = vadd.f32 %v8206, %v8590
        %v8592 = vpop.f32.mrb[0].mxu0
        %8593 = vmatprep.mubr.f32.mxu0 %v6698
        %8594 = vmatmul.mubr.f32.gmra.mrb[0].mxu0 %v6696
        %v8595 = vpop.f32.mrb[0].mxu0
        %v8596 = vadd.f32 %v8211, %v8595
        %v8597 = vpop.f32.mrb[0].mxu0
        %8598 = vmatprep.mubr.f32.mxu0 %v6714
        %8599 = vmatmul.mubr.f32.gmra.mrb[0].mxu0 %v6712
        %v8600 = vpop.f32.mrb[0].mxu0
        %v8601 = vadd.f32 %v8216, %v8600
        %v8602 = vpop.f32.mrb[0].mxu0
        %8603 = vmatprep.mubr.f32.mxu0 %v6730
        %8604 = vmatmul.mubr.f32.gmra.mrb[0].mxu0 %v6728
        %v8605 = vpop.f32.mrb[0].mxu0
        %v8606 = vadd.f32 %v8221, %v8605
        %v8607 = vpop.f32.mrb[0].mxu0
        %8608 = vmatprep.mubr.f32.mxu0 %v6746
        %8609 = vmatmul.mubr.f32.gmra.mrb[0].mxu0 %v6744
        %v8610 = vpop.f32.mrb[0].mxu0
        %v8611 = vadd.f32 %v8226, %v8610
        %v8612 = vpop.f32.mrb[0].mxu0
        %8613 = vmatprep.mubr.f32.mxu0 %v6762
        %8614 = vmatmul.mubr.f32.gmra.mrb[0].mxu0 %v6760
        %v8615 = vpop.f32.mrb[0].mxu0
        %v8616 = vadd.f32 %v8231, %v8615
        %v8617 = vpop.f32.mrb[0].mxu0
        %8618 = vmatprep.mubr.f32.mxu0 %v6778
        %8619 = vmatmul.mubr.f32.gmra.mrb[0].mxu0 %v6776
        %v8620 = vpop.f32.mrb[0].mxu0
        %v8621 = vadd.f32 %v8236, %v8620
        %v8622 = vpop.f32.mrb[0].mxu0
        %8623 = vmatprep.mubr.f32.mxu0 %v6794
        %8624 = vmatmul.mubr.f32.gmra.mrb[0].mxu0 %v6792
        %v8625 = vpop.f32.mrb[0].mxu0
        %v8626 = vadd.f32 %v8241, %v8625
        %v8627 = vpop.f32.mrb[0].mxu0
        %8628 = vmatprep.mubr.f32.mxu0 %v6810
        %8629 = vmatmul.mubr.f32.gmra.mrb[0].mxu0 %v6808
        %v8630 = vpop.f32.mrb[0].mxu0
        %v8631 = vadd.f32 %v8246, %v8630
        %v8632 = vpop.f32.mrb[0].mxu0
        %8633 = vmatprep.mubr.f32.mxu0 %v6826
        %8634 = vmatmul.mubr.f32.gmra.mrb[0].mxu0 %v6824
        %v8635 = vpop.f32.mrb[0].mxu0
        %v8636 = vadd.f32 %v8251, %v8635
        %v8637 = vpop.f32.mrb[0].mxu0
        %8638 = vmatprep.mubr.f32.mxu0 %v6842
        %8639 = vmatmul.mubr.f32.gmra.mrb[0].mxu0 %v6840
        %v8640 = vpop.f32.mrb[0].mxu0
        %v8641 = vadd.f32 %v8256, %v8640
        %v8642 = vpop.f32.mrb[0].mxu0
        %8643 = vmatprep.mubr.f32.mxu0 %v6858
        %8644 = vmatmul.mubr.f32.gmra.mrb[0].mxu0 %v6856
        %v8645 = vpop.f32.mrb[0].mxu0
        %v8646 = vadd.f32 %v8261, %v8645
        %v8647 = vpop.f32.mrb[0].mxu0
        %8648 = vmatprep.mubr.f32.mxu0 %v6874
        %8649 = vmatmul.mubr.f32.gmra.mrb[0].mxu0 %v6872
        %v8650 = vpop.f32.mrb[0].mxu0
        %v8651 = vadd.f32 %v8266, %v8650
        %v8652 = vpop.f32.mrb[0].mxu0
        %8653 = vmatprep.mubr.f32.mxu0 %v6890
        %8654 = vmatmul.mubr.f32.gmra.mrb[0].mxu0 %v6888
        %v8655 = vpop.f32.mrb[0].mxu0
        %v8656 = vadd.f32 %v8271, %v8655
        %v8657 = vpop.f32.mrb[0].mxu0
        %8658 = vmatprep.mubr.f32.mxu0 %v6906
        %8659 = vmatmul.mubr.f32.gmra.mrb[0].mxu0 %v6904
        %v8660 = vpop.f32.mrb[0].mxu0
        %v8661 = vadd.f32 %v8276, %v8660
        %v8662 = vpop.f32.mrb[0].mxu0
        %8663 = vmatprep.mubr.f32.mxu0 %v6922
        %8664 = vmatmul.mubr.f32.gmra.mrb[0].mxu0 %v6920
        %v8665 = vpop.f32.mrb[0].mxu0
        %v8666 = vadd.f32 %v8281, %v8665
        %v8667 = vpop.f32.mrb[0].mxu0
        %8668 = vmatprep.mubr.f32.mxu0 %v6938
        %8669 = vmatmul.mubr.f32.gmra.mrb[0].mxu0 %v6936
        %v8670 = vpop.f32.mrb[0].mxu0
        %v8671 = vadd.f32 %v8286, %v8670
        %v8672 = vpop.f32.mrb[0].mxu0
        %8673 = vmatprep.mubr.f32.mxu0 %v6954
        %8674 = vmatmul.mubr.f32.gmra.mrb[0].mxu0 %v6952
        %v8675 = vpop.f32.mrb[0].mxu0
        %v8676 = vadd.f32 %v8291, %v8675
        %v8677 = vpop.f32.mrb[0].mxu0
        %8678 = vmatprep.mubr.f32.mxu0 %v6970
        %8679 = vmatmul.mubr.f32.gmra.mrb[0].mxu0 %v6968
        %v8680 = vpop.f32.mrb[0].mxu0
        %v8681 = vadd.f32 %v8296, %v8680
        %v8682 = vpop.f32.mrb[0].mxu0
        %8683 = vmatprep.mubr.f32.mxu0 %v6986
        %8684 = vmatmul.mubr.f32.gmra.mrb[0].mxu0 %v6984
        %v8685 = vpop.f32.mrb[0].mxu0
        %v8686 = vadd.f32 %v8301, %v8685
        %v8687 = vpop.f32.mrb[0].mxu0
        %8688 = vmatprep.mubr.f32.mxu0 %v7002
        %8689 = vmatmul.mubr.f32.gmra.mrb[0].mxu0 %v7000
        %v8690 = vpop.f32.mrb[0].mxu0
        %v8691 = vadd.f32 %v8306, %v8690
        %v8692 = vpop.f32.mrb[0].mxu0
        %8693 = vmatprep.mubr.f32.mxu0 %v7018
        %8694 = vmatmul.mubr.f32.gmra.mrb[0].mxu0 %v7016
        %v8695 = vpop.f32.mrb[0].mxu0
        %v8696 = vadd.f32 %v8311, %v8695
        %v8697 = vpop.f32.mrb[0].mxu0
        %8698 = vmatprep.mubr.f32.mxu0 %v7034
        %8699 = vmatmul.mubr.f32.gmra.mrb[0].mxu0 %v7032
        %v8700 = vpop.f32.mrb[0].mxu0
        %v8701 = vadd.f32 %v8316, %v8700
        %v8702 = vpop.f32.mrb[0].mxu0
        %8703 = vmatprep.mubr.f32.mxu0 %v7050
        %8704 = vmatmul.mubr.f32.gmra.mrb[0].mxu0 %v7048
        %v8705 = vpop.f32.mrb[0].mxu0
        %v8706 = vadd.f32 %v8321, %v8705
        %v8707 = vpop.f32.mrb[0].mxu0
        %8708 = vmatprep.mubr.f32.mxu0 %v7066
        %8709 = vmatmul.mubr.f32.gmra.mrb[0].mxu0 %v7064
        %v8710 = vpop.f32.mrb[0].mxu0
        %v8711 = vadd.f32 %v8326, %v8710
        %v8712 = vpop.f32.mrb[0].mxu0
        %8713 = vmatprep.mubr.f32.mxu0 %v7082
        %8714 = vmatmul.mubr.f32.gmra.mrb[0].mxu0 %v7080
        %v8715 = vpop.f32.mrb[0].mxu0
        %v8716 = vadd.f32 %v8331, %v8715
        %v8717 = vpop.f32.mrb[0].mxu0
        %8718 = vmatprep.mubr.f32.mxu0 %v7098
        %8719 = vmatmul.mubr.f32.gmra.mrb[0].mxu0 %v7096
        %v8720 = vpop.f32.mrb[0].mxu0
        %v8721 = vadd.f32 %v8336, %v8720
        %v8722 = vpop.f32.mrb[0].mxu0
        %8723 = vmatprep.mubr.f32.mxu0 %v7114
        %8724 = vmatmul.mubr.f32.gmra.mrb[0].mxu0 %v7112
        %v8725 = vpop.f32.mrb[0].mxu0
        %v8726 = vadd.f32 %v8341, %v8725
        %v8727 = vpop.f32.mrb[0].mxu0
        %8728 = vmatprep.mubr.f32.mxu0 %v7130
        %8729 = vmatmul.mubr.f32.gmra.mrb[0].mxu0 %v7128
        %v8730 = vpop.f32.mrb[0].mxu0
        %v8731 = vadd.f32 %v8346, %v8730
        %v8732 = vpop.f32.mrb[0].mxu0
        %8733 = vmatprep.mubr.f32.mxu0 %v7146
        %8734 = vmatmul.mubr.f32.gmra.mrb[0].mxu0 %v7144
        %v8735 = vpop.f32.mrb[0].mxu0
        %v8736 = vadd.f32 %v8351, %v8735
        %v8737 = vpop.f32.mrb[0].mxu0
        %8738 = vmatprep.mubr.f32.mxu0 %v7162
        %8739 = vmatmul.mubr.f32.gmra.mrb[0].mxu0 %v7160
        %v8740 = vpop.f32.mrb[0].mxu0
        %v8741 = vadd.f32 %v8356, %v8740
        %v8742 = vpop.f32.mrb[0].mxu0
        %8743 = vmatprep.mubr.f32.mxu0 %v7178
        %8744 = vmatmul.mubr.f32.gmra.mrb[0].mxu0 %v7176
        %v8745 = vpop.f32.mrb[0].mxu0
        %v8746 = vadd.f32 %v8361, %v8745
        %v8747 = vpop.f32.mrb[0].mxu0
        %8748 = vmatprep.mubr.f32.mxu0 %v7194
        %8749 = vmatmul.mubr.f32.gmra.mrb[0].mxu0 %v7192
        %v8750 = vpop.f32.mrb[0].mxu0
        %v8751 = vadd.f32 %v8366, %v8750
        %v8752 = vpop.f32.mrb[0].mxu0
        %8753 = vmatprep.mubr.f32.mxu0 %v7210
        %8754 = vmatmul.mubr.f32.gmra.mrb[0].mxu0 %v7208
        %v8755 = vpop.f32.mrb[0].mxu0
        %v8756 = vadd.f32 %v8371, %v8755
        %v8757 = vpop.f32.mrb[0].mxu0
        %8758 = vmatprep.mubr.f32.mxu0 %v7226
        %8759 = vmatmul.mubr.f32.gmra.mrb[0].mxu0 %v7224
        %v8760 = vpop.f32.mrb[0].mxu0
        %v8761 = vadd.f32 %v8376, %v8760
        %v8762 = vpop.f32.mrb[0].mxu0
        %8763 = vmatprep.mubr.f32.mxu0 %v7242
        %8764 = vmatmul.mubr.f32.gmra.mrb[0].mxu0 %v7240
        %v8765 = vpop.f32.mrb[0].mxu0
        %v8766 = vadd.f32 %v8381, %v8765
        %v8767 = vpop.f32.mrb[0].mxu0
        %8768 = vmatprep.mubr.f32.mxu0 %v7258
        %8769 = vmatmul.mubr.f32.gmra.mrb[0].mxu0 %v7256
        %v8770 = vpop.f32.mrb[0].mxu0
        %v8771 = vadd.f32 %v8386, %v8770
        %v8772 = vpop.f32.mrb[0].mxu0
        %8773 = vmatprep.mubr.f32.mxu0 %v7274
        %8774 = vmatmul.mubr.f32.gmra.mrb[0].mxu0 %v7272
        %v8775 = vpop.f32.mrb[0].mxu0
        %v8776 = vadd.f32 %v8391, %v8775
        %v8777 = vpop.f32.mrb[0].mxu0
        %8778 = vmatprep.mubr.f32.mxu0 %v7290
        %8779 = vmatmul.mubr.f32.gmra.mrb[0].mxu0 %v7288
        %v8780 = vpop.f32.mrb[0].mxu0
        %v8781 = vadd.f32 %v8396, %v8780
        %v8782 = vpop.f32.mrb[0].mxu0
        %8783 = vmatprep.mubr.f32.mxu0 %v7306
        %8784 = vmatmul.mubr.f32.gmra.mrb[0].mxu0 %v7304
        %v8785 = vpop.f32.mrb[0].mxu0
        %v8786 = vadd.f32 %v8401, %v8785
        %v8787 = vpop.f32.mrb[0].mxu0
        %8788 = vdwg.mxu0
        %8789 = vmatprep.subr.mxu0 0.0
        %8790 = vmatpush1.msra.mxu0 %v7955
        %8791 = vmatprep.subr.mxu0 0.0
        %8792 = vmatpush1.msra.mxu0 %v7956
        %8793 = vmatprep.subr.mxu0 0.0
        %8794 = vmatpush1.msra.mxu0 %v7957
        %8795 = vmatprep.subr.mxu0 0.0
        %8796 = vmatpush1.msra.mxu0 %v7958
        %8797 = vmatprep.subr.mxu0 0.0
        %8798 = vmatpush1.msra.mxu0 %v7959
        %8799 = vmatprep.subr.mxu0 0.0
        %8800 = vmatpush1.msra.mxu0 %v7960
        %8801 = vmatprep.subr.mxu0 0.0
        %8802 = vmatpush1.msra.mxu0 %v7961
        %8803 = vmatprep.subr.mxu0 0.0
        %8804 = vmatpush1.msra.mxu0 %v7962
        %8805 = vmatprep.subr.mxu0 0.0
        %8806 = vmatpush1.msra.mxu0 %v7963
        %8807 = vmatprep.subr.mxu0 0.0
        %8808 = vmatpush1.msra.mxu0 %v7964
        %8809 = vmatprep.subr.mxu0 0.0
        %8810 = vmatpush1.msra.mxu0 %v7965
        %8811 = vmatprep.subr.mxu0 0.0
        %8812 = vmatpush1.msra.mxu0 %v7966
        %8813 = vmatprep.subr.mxu0 0.0
        %8814 = vmatpush1.msra.mxu0 %v7967
        %8815 = vmatprep.subr.mxu0 0.0
        %8816 = vmatpush1.msra.mxu0 %v7968
        %8817 = vmatprep.subr.mxu0 0.0
        %8818 = vmatpush1.msra.mxu0 %v7969
        %8819 = vmatprep.subr.mxu0 0.0
        %8820 = vmatpush1.msra.mxu0 %v7970
        %8821 = vmatprep.subr.mxu0 0.0
        %8822 = vmatpush1.msra.mxu0 %v7971
        %8823 = vmatprep.subr.mxu0 0.0
        %8824 = vmatpush1.msra.mxu0 %v7972
        %8825 = vmatprep.subr.mxu0 0.0
        %8826 = vmatpush1.msra.mxu0 %v7973
        %8827 = vmatprep.subr.mxu0 0.0
        %8828 = vmatpush1.msra.mxu0 %v7974
        %8829 = vmatprep.subr.mxu0 0.0
        %8830 = vmatpush1.msra.mxu0 %v7975
        %8831 = vmatprep.subr.mxu0 0.0
        %8832 = vmatpush1.msra.mxu0 %v7976
        %8833 = vmatprep.subr.mxu0 0.0
        %8834 = vmatpush1.msra.mxu0 %v7977
        %8835 = vmatprep.subr.mxu0 0.0
        %8836 = vmatpush1.msra.mxu0 %v7978
        %8837 = vmatprep.subr.mxu0 0.0
        %8838 = vmatpush1.msra.mxu0 %v7979
        %8839 = vmatprep.subr.mxu0 0.0
        %8840 = vmatpush1.msra.mxu0 %v7980
        %8841 = vmatprep.subr.mxu0 0.0
        %8842 = vmatpush1.msra.mxu0 %v7981
        %8843 = vmatprep.subr.mxu0 0.0
        %8844 = vmatpush1.msra.mxu0 %v7982
        %8845 = vmatprep.subr.mxu0 0.0
        %8846 = vmatpush1.msra.mxu0 %v7983
        %8847 = vmatprep.subr.mxu0 0.0
        %8848 = vmatpush1.msra.mxu0 %v7984
        %8849 = vmatprep.subr.mxu0 0.0
        %8850 = vmatpush1.msra.mxu0 %v7985
        %8851 = vmatprep.subr.mxu0 0.0
        %8852 = vmatpush1.msra.mxu0 %v7986
        %8853 = vmatprep.mubr.f32.mxu0 %v6302
        %8854 = vmatmul.mubr.f32.gmra.mrb[0].mxu0 %v6300
        %v8855 = vpop.f32.mrb[0].mxu0
        %v8856 = vadd.f32 %v8471, %v8855
        %v8857 = vpop.f32.mrb[0].mxu0
        %8858 = vmatprep.mubr.f32.mxu0 %v6318
        %8859 = vmatmul.mubr.f32.gmra.mrb[0].mxu0 %v6316
        %v8860 = vpop.f32.mrb[0].mxu0
        %v8861 = vadd.f32 %v8476, %v8860
        %v8862 = vpop.f32.mrb[0].mxu0
        %8863 = vmatprep.mubr.f32.mxu0 %v6334
        %8864 = vmatmul.mubr.f32.gmra.mrb[0].mxu0 %v6332
        %v8865 = vpop.f32.mrb[0].mxu0
        %v8866 = vadd.f32 %v8481, %v8865
        %v8867 = vpop.f32.mrb[0].mxu0
        %8868 = vmatprep.mubr.f32.mxu0 %v6350
        %8869 = vmatmul.mubr.f32.gmra.mrb[0].mxu0 %v6348
        %v8870 = vpop.f32.mrb[0].mxu0
        %v8871 = vadd.f32 %v8486, %v8870
        %v8872 = vpop.f32.mrb[0].mxu0
        %8873 = vmatprep.mubr.f32.mxu0 %v6366
        %8874 = vmatmul.mubr.f32.gmra.mrb[0].mxu0 %v6364
        %v8875 = vpop.f32.mrb[0].mxu0
        %v8876 = vadd.f32 %v8491, %v8875
        %v8877 = vpop.f32.mrb[0].mxu0
        %8878 = vmatprep.mubr.f32.mxu0 %v6382
        %8879 = vmatmul.mubr.f32.gmra.mrb[0].mxu0 %v6380
        %v8880 = vpop.f32.mrb[0].mxu0
        %v8881 = vadd.f32 %v8496, %v8880
        %v8882 = vpop.f32.mrb[0].mxu0
        %8883 = vmatprep.mubr.f32.mxu0 %v6398
        %8884 = vmatmul.mubr.f32.gmra.mrb[0].mxu0 %v6396
        %v8885 = vpop.f32.mrb[0].mxu0
        %v8886 = vadd.f32 %v8501, %v8885
        %v8887 = vpop.f32.mrb[0].mxu0
        %8888 = vmatprep.mubr.f32.mxu0 %v6414
        %8889 = vmatmul.mubr.f32.gmra.mrb[0].mxu0 %v6412
        %v8890 = vpop.f32.mrb[0].mxu0
        %v8891 = vadd.f32 %v8506, %v8890
        %v8892 = vpop.f32.mrb[0].mxu0
        %8893 = vmatprep.mubr.f32.mxu0 %v6430
        %8894 = vmatmul.mubr.f32.gmra.mrb[0].mxu0 %v6428
        %v8895 = vpop.f32.mrb[0].mxu0
        %v8896 = vadd.f32 %v8511, %v8895
        %v8897 = vpop.f32.mrb[0].mxu0
        %8898 = vmatprep.mubr.f32.mxu0 %v6446
        %8899 = vmatmul.mubr.f32.gmra.mrb[0].mxu0 %v6444
        %v8900 = vpop.f32.mrb[0].mxu0
        %v8901 = vadd.f32 %v8516, %v8900
        %v8902 = vpop.f32.mrb[0].mxu0
        %8903 = vmatprep.mubr.f32.mxu0 %v6462
        %8904 = vmatmul.mubr.f32.gmra.mrb[0].mxu0 %v6460
        %v8905 = vpop.f32.mrb[0].mxu0
        %v8906 = vadd.f32 %v8521, %v8905
        %v8907 = vpop.f32.mrb[0].mxu0
        %8908 = vmatprep.mubr.f32.mxu0 %v6478
        %8909 = vmatmul.mubr.f32.gmra.mrb[0].mxu0 %v6476
        %v8910 = vpop.f32.mrb[0].mxu0
        %v8911 = vadd.f32 %v8526, %v8910
        %v8912 = vpop.f32.mrb[0].mxu0
        %8913 = vmatprep.mubr.f32.mxu0 %v6494
        %8914 = vmatmul.mubr.f32.gmra.mrb[0].mxu0 %v6492
        %v8915 = vpop.f32.mrb[0].mxu0
        %v8916 = vadd.f32 %v8531, %v8915
        %v8917 = vpop.f32.mrb[0].mxu0
        %8918 = vmatprep.mubr.f32.mxu0 %v6510
        %8919 = vmatmul.mubr.f32.gmra.mrb[0].mxu0 %v6508
        %v8920 = vpop.f32.mrb[0].mxu0
        %v8921 = vadd.f32 %v8536, %v8920
        %v8922 = vpop.f32.mrb[0].mxu0
        %8923 = vmatprep.mubr.f32.mxu0 %v6526
        %8924 = vmatmul.mubr.f32.gmra.mrb[0].mxu0 %v6524
        %v8925 = vpop.f32.mrb[0].mxu0
        %v8926 = vadd.f32 %v8541, %v8925
        %v8927 = vpop.f32.mrb[0].mxu0
        %8928 = vmatprep.mubr.f32.mxu0 %v6542
        %8929 = vmatmul.mubr.f32.gmra.mrb[0].mxu0 %v6540
        %v8930 = vpop.f32.mrb[0].mxu0
        %v8931 = vadd.f32 %v8546, %v8930
        %v8932 = vpop.f32.mrb[0].mxu0
        %8933 = vmatprep.mubr.f32.mxu0 %v6558
        %8934 = vmatmul.mubr.f32.gmra.mrb[0].mxu0 %v6556
        %v8935 = vpop.f32.mrb[0].mxu0
        %v8936 = vadd.f32 %v8551, %v8935
        %v8937 = vpop.f32.mrb[0].mxu0
        %8938 = vmatprep.mubr.f32.mxu0 %v6574
        %8939 = vmatmul.mubr.f32.gmra.mrb[0].mxu0 %v6572
        %v8940 = vpop.f32.mrb[0].mxu0
        %v8941 = vadd.f32 %v8556, %v8940
        %v8942 = vpop.f32.mrb[0].mxu0
        %8943 = vmatprep.mubr.f32.mxu0 %v6590
        %8944 = vmatmul.mubr.f32.gmra.mrb[0].mxu0 %v6588
        %v8945 = vpop.f32.mrb[0].mxu0
        %v8946 = vadd.f32 %v8561, %v8945
        %v8947 = vpop.f32.mrb[0].mxu0
        %8948 = vmatprep.mubr.f32.mxu0 %v6606
        %8949 = vmatmul.mubr.f32.gmra.mrb[0].mxu0 %v6604
        %v8950 = vpop.f32.mrb[0].mxu0
        %v8951 = vadd.f32 %v8566, %v8950
        %v8952 = vpop.f32.mrb[0].mxu0
        %8953 = vmatprep.mubr.f32.mxu0 %v6622
        %8954 = vmatmul.mubr.f32.gmra.mrb[0].mxu0 %v6620
        %v8955 = vpop.f32.mrb[0].mxu0
        %v8956 = vadd.f32 %v8571, %v8955
        %v8957 = vpop.f32.mrb[0].mxu0
        %8958 = vmatprep.mubr.f32.mxu0 %v6638
        %8959 = vmatmul.mubr.f32.gmra.mrb[0].mxu0 %v6636
        %v8960 = vpop.f32.mrb[0].mxu0
        %v8961 = vadd.f32 %v8576, %v8960
        %v8962 = vpop.f32.mrb[0].mxu0
        %8963 = vmatprep.mubr.f32.mxu0 %v6654
        %8964 = vmatmul.mubr.f32.gmra.mrb[0].mxu0 %v6652
        %v8965 = vpop.f32.mrb[0].mxu0
        %v8966 = vadd.f32 %v8581, %v8965
        %v8967 = vpop.f32.mrb[0].mxu0
        %8968 = vmatprep.mubr.f32.mxu0 %v6670
        %8969 = vmatmul.mubr.f32.gmra.mrb[0].mxu0 %v6668
        %v8970 = vpop.f32.mrb[0].mxu0
        %v8971 = vadd.f32 %v8586, %v8970
        %v8972 = vpop.f32.mrb[0].mxu0
        %8973 = vmatprep.mubr.f32.mxu0 %v6686
        %8974 = vmatmul.mubr.f32.gmra.mrb[0].mxu0 %v6684
        %v8975 = vpop.f32.mrb[0].mxu0
        %v8976 = vadd.f32 %v8591, %v8975
        %v8977 = vpop.f32.mrb[0].mxu0
        %8978 = vmatprep.mubr.f32.mxu0 %v6702
        %8979 = vmatmul.mubr.f32.gmra.mrb[0].mxu0 %v6700
        %v8980 = vpop.f32.mrb[0].mxu0
        %v8981 = vadd.f32 %v8596, %v8980
        %v8982 = vpop.f32.mrb[0].mxu0
        %8983 = vmatprep.mubr.f32.mxu0 %v6718
        %8984 = vmatmul.mubr.f32.gmra.mrb[0].mxu0 %v6716
        %v8985 = vpop.f32.mrb[0].mxu0
        %v8986 = vadd.f32 %v8601, %v8985
        %v8987 = vpop.f32.mrb[0].mxu0
        %8988 = vmatprep.mubr.f32.mxu0 %v6734
        %8989 = vmatmul.mubr.f32.gmra.mrb[0].mxu0 %v6732
        %v8990 = vpop.f32.mrb[0].mxu0
        %v8991 = vadd.f32 %v8606, %v8990
        %v8992 = vpop.f32.mrb[0].mxu0
        %8993 = vmatprep.mubr.f32.mxu0 %v6750
        %8994 = vmatmul.mubr.f32.gmra.mrb[0].mxu0 %v6748
        %v8995 = vpop.f32.mrb[0].mxu0
        %v8996 = vadd.f32 %v8611, %v8995
        %v8997 = vpop.f32.mrb[0].mxu0
        %8998 = vmatprep.mubr.f32.mxu0 %v6766
        %8999 = vmatmul.mubr.f32.gmra.mrb[0].mxu0 %v6764
        %v9000 = vpop.f32.mrb[0].mxu0
        %v9001 = vadd.f32 %v8616, %v9000
        %v9002 = vpop.f32.mrb[0].mxu0
        %9003 = vmatprep.mubr.f32.mxu0 %v6782
        %9004 = vmatmul.mubr.f32.gmra.mrb[0].mxu0 %v6780
        %v9005 = vpop.f32.mrb[0].mxu0
        %v9006 = vadd.f32 %v8621, %v9005
        %v9007 = vpop.f32.mrb[0].mxu0
        %9008 = vmatprep.mubr.f32.mxu0 %v6798
        %9009 = vmatmul.mubr.f32.gmra.mrb[0].mxu0 %v6796
        %v9010 = vpop.f32.mrb[0].mxu0
        %v9011 = vadd.f32 %v8626, %v9010
        %v9012 = vpop.f32.mrb[0].mxu0
        %9013 = vmatprep.mubr.f32.mxu0 %v6814
        %9014 = vmatmul.mubr.f32.gmra.mrb[0].mxu0 %v6812
        %v9015 = vpop.f32.mrb[0].mxu0
        %v9016 = vadd.f32 %v8631, %v9015
        %v9017 = vpop.f32.mrb[0].mxu0
        %9018 = vmatprep.mubr.f32.mxu0 %v6830
        %9019 = vmatmul.mubr.f32.gmra.mrb[0].mxu0 %v6828
        %v9020 = vpop.f32.mrb[0].mxu0
        %v9021 = vadd.f32 %v8636, %v9020
        %v9022 = vpop.f32.mrb[0].mxu0
        %9023 = vmatprep.mubr.f32.mxu0 %v6846
        %9024 = vmatmul.mubr.f32.gmra.mrb[0].mxu0 %v6844
        %v9025 = vpop.f32.mrb[0].mxu0
        %v9026 = vadd.f32 %v8641, %v9025
        %v9027 = vpop.f32.mrb[0].mxu0
        %9028 = vmatprep.mubr.f32.mxu0 %v6862
        %9029 = vmatmul.mubr.f32.gmra.mrb[0].mxu0 %v6860
        %v9030 = vpop.f32.mrb[0].mxu0
        %v9031 = vadd.f32 %v8646, %v9030
        %v9032 = vpop.f32.mrb[0].mxu0
        %9033 = vmatprep.mubr.f32.mxu0 %v6878
        %9034 = vmatmul.mubr.f32.gmra.mrb[0].mxu0 %v6876
        %v9035 = vpop.f32.mrb[0].mxu0
        %v9036 = vadd.f32 %v8651, %v9035
        %v9037 = vpop.f32.mrb[0].mxu0
        %9038 = vmatprep.mubr.f32.mxu0 %v6894
        %9039 = vmatmul.mubr.f32.gmra.mrb[0].mxu0 %v6892
        %v9040 = vpop.f32.mrb[0].mxu0
        %v9041 = vadd.f32 %v8656, %v9040
        %v9042 = vpop.f32.mrb[0].mxu0
        %9043 = vmatprep.mubr.f32.mxu0 %v6910
        %9044 = vmatmul.mubr.f32.gmra.mrb[0].mxu0 %v6908
        %v9045 = vpop.f32.mrb[0].mxu0
        %v9046 = vadd.f32 %v8661, %v9045
        %v9047 = vpop.f32.mrb[0].mxu0
        %9048 = vmatprep.mubr.f32.mxu0 %v6926
        %9049 = vmatmul.mubr.f32.gmra.mrb[0].mxu0 %v6924
        %v9050 = vpop.f32.mrb[0].mxu0
        %v9051 = vadd.f32 %v8666, %v9050
        %v9052 = vpop.f32.mrb[0].mxu0
        %9053 = vmatprep.mubr.f32.mxu0 %v6942
        %9054 = vmatmul.mubr.f32.gmra.mrb[0].mxu0 %v6940
        %v9055 = vpop.f32.mrb[0].mxu0
        %v9056 = vadd.f32 %v8671, %v9055
        %v9057 = vpop.f32.mrb[0].mxu0
        %9058 = vmatprep.mubr.f32.mxu0 %v6958
        %9059 = vmatmul.mubr.f32.gmra.mrb[0].mxu0 %v6956
        %v9060 = vpop.f32.mrb[0].mxu0
        %v9061 = vadd.f32 %v8676, %v9060
        %v9062 = vpop.f32.mrb[0].mxu0
        %9063 = vmatprep.mubr.f32.mxu0 %v6974
        %9064 = vmatmul.mubr.f32.gmra.mrb[0].mxu0 %v6972
        %v9065 = vpop.f32.mrb[0].mxu0
        %v9066 = vadd.f32 %v8681, %v9065
        %v9067 = vpop.f32.mrb[0].mxu0
        %9068 = vmatprep.mubr.f32.mxu0 %v6990
        %9069 = vmatmul.mubr.f32.gmra.mrb[0].mxu0 %v6988
        %v9070 = vpop.f32.mrb[0].mxu0
        %v9071 = vadd.f32 %v8686, %v9070
        %v9072 = vpop.f32.mrb[0].mxu0
        %9073 = vmatprep.mubr.f32.mxu0 %v7006
        %9074 = vmatmul.mubr.f32.gmra.mrb[0].mxu0 %v7004
        %v9075 = vpop.f32.mrb[0].mxu0
        %v9076 = vadd.f32 %v8691, %v9075
        %v9077 = vpop.f32.mrb[0].mxu0
        %9078 = vmatprep.mubr.f32.mxu0 %v7022
        %9079 = vmatmul.mubr.f32.gmra.mrb[0].mxu0 %v7020
        %v9080 = vpop.f32.mrb[0].mxu0
        %v9081 = vadd.f32 %v8696, %v9080
        %v9082 = vpop.f32.mrb[0].mxu0
        %9083 = vmatprep.mubr.f32.mxu0 %v7038
        %9084 = vmatmul.mubr.f32.gmra.mrb[0].mxu0 %v7036
        %v9085 = vpop.f32.mrb[0].mxu0
        %v9086 = vadd.f32 %v8701, %v9085
        %v9087 = vpop.f32.mrb[0].mxu0
        %9088 = vmatprep.mubr.f32.mxu0 %v7054
        %9089 = vmatmul.mubr.f32.gmra.mrb[0].mxu0 %v7052
        %v9090 = vpop.f32.mrb[0].mxu0
        %v9091 = vadd.f32 %v8706, %v9090
        %v9092 = vpop.f32.mrb[0].mxu0
        %9093 = vmatprep.mubr.f32.mxu0 %v7070
        %9094 = vmatmul.mubr.f32.gmra.mrb[0].mxu0 %v7068
        %v9095 = vpop.f32.mrb[0].mxu0
        %v9096 = vadd.f32 %v8711, %v9095
        %v9097 = vpop.f32.mrb[0].mxu0
        %9098 = vmatprep.mubr.f32.mxu0 %v7086
        %9099 = vmatmul.mubr.f32.gmra.mrb[0].mxu0 %v7084
        %v9100 = vpop.f32.mrb[0].mxu0
        %v9101 = vadd.f32 %v8716, %v9100
        %v9102 = vpop.f32.mrb[0].mxu0
        %9103 = vmatprep.mubr.f32.mxu0 %v7102
        %9104 = vmatmul.mubr.f32.gmra.mrb[0].mxu0 %v7100
        %v9105 = vpop.f32.mrb[0].mxu0
        %v9106 = vadd.f32 %v8721, %v9105
        %v9107 = vpop.f32.mrb[0].mxu0
        %9108 = vmatprep.mubr.f32.mxu0 %v7118
        %9109 = vmatmul.mubr.f32.gmra.mrb[0].mxu0 %v7116
        %v9110 = vpop.f32.mrb[0].mxu0
        %v9111 = vadd.f32 %v8726, %v9110
        %v9112 = vpop.f32.mrb[0].mxu0
        %9113 = vmatprep.mubr.f32.mxu0 %v7134
        %9114 = vmatmul.mubr.f32.gmra.mrb[0].mxu0 %v7132
        %v9115 = vpop.f32.mrb[0].mxu0
        %v9116 = vadd.f32 %v8731, %v9115
        %v9117 = vpop.f32.mrb[0].mxu0
        %9118 = vmatprep.mubr.f32.mxu0 %v7150
        %9119 = vmatmul.mubr.f32.gmra.mrb[0].mxu0 %v7148
        %v9120 = vpop.f32.mrb[0].mxu0
        %v9121 = vadd.f32 %v8736, %v9120
        %v9122 = vpop.f32.mrb[0].mxu0
        %9123 = vmatprep.mubr.f32.mxu0 %v7166
        %9124 = vmatmul.mubr.f32.gmra.mrb[0].mxu0 %v7164
        %v9125 = vpop.f32.mrb[0].mxu0
        %v9126 = vadd.f32 %v8741, %v9125
        %v9127 = vpop.f32.mrb[0].mxu0
        %9128 = vmatprep.mubr.f32.mxu0 %v7182
        %9129 = vmatmul.mubr.f32.gmra.mrb[0].mxu0 %v7180
        %v9130 = vpop.f32.mrb[0].mxu0
        %v9131 = vadd.f32 %v8746, %v9130
        %v9132 = vpop.f32.mrb[0].mxu0
        %9133 = vmatprep.mubr.f32.mxu0 %v7198
        %9134 = vmatmul.mubr.f32.gmra.mrb[0].mxu0 %v7196
        %v9135 = vpop.f32.mrb[0].mxu0
        %v9136 = vadd.f32 %v8751, %v9135
        %v9137 = vpop.f32.mrb[0].mxu0
        %9138 = vmatprep.mubr.f32.mxu0 %v7214
        %9139 = vmatmul.mubr.f32.gmra.mrb[0].mxu0 %v7212
        %v9140 = vpop.f32.mrb[0].mxu0
        %v9141 = vadd.f32 %v8756, %v9140
        %v9142 = vpop.f32.mrb[0].mxu0
        %9143 = vmatprep.mubr.f32.mxu0 %v7230
        %9144 = vmatmul.mubr.f32.gmra.mrb[0].mxu0 %v7228
        %v9145 = vpop.f32.mrb[0].mxu0
        %v9146 = vadd.f32 %v8761, %v9145
        %v9147 = vpop.f32.mrb[0].mxu0
        %9148 = vmatprep.mubr.f32.mxu0 %v7246
        %9149 = vmatmul.mubr.f32.gmra.mrb[0].mxu0 %v7244
        %v9150 = vpop.f32.mrb[0].mxu0
        %v9151 = vadd.f32 %v8766, %v9150
        %v9152 = vpop.f32.mrb[0].mxu0
        %9153 = vmatprep.mubr.f32.mxu0 %v7262
        %9154 = vmatmul.mubr.f32.gmra.mrb[0].mxu0 %v7260
        %v9155 = vpop.f32.mrb[0].mxu0
        %v9156 = vadd.f32 %v8771, %v9155
        %v9157 = vpop.f32.mrb[0].mxu0
        %9158 = vmatprep.mubr.f32.mxu0 %v7278
        %9159 = vmatmul.mubr.f32.gmra.mrb[0].mxu0 %v7276
        %v9160 = vpop.f32.mrb[0].mxu0
        %v9161 = vadd.f32 %v8776, %v9160
        %v9162 = vpop.f32.mrb[0].mxu0
        %9163 = vmatprep.mubr.f32.mxu0 %v7294
        %9164 = vmatmul.mubr.f32.gmra.mrb[0].mxu0 %v7292
        %v9165 = vpop.f32.mrb[0].mxu0
        %v9166 = vadd.f32 %v8781, %v9165
        %v9167 = vpop.f32.mrb[0].mxu0
        %9168 = vmatprep.mubr.f32.mxu0 %v7310
        %9169 = vmatmul.mubr.f32.gmra.mrb[0].mxu0 %v7308
        %v9170 = vpop.f32.mrb[0].mxu0
        %v9171 = vadd.f32 %v8786, %v9170
        %v9172 = vpop.f32.mrb[0].mxu0
        %9173 = vdwg.mxu0
        %9174 = vmatprep.subr.mxu0 0.0
        %9175 = vmatpush1.msra.mxu0 %v7987
        %9176 = vmatprep.subr.mxu0 0.0
        %9177 = vmatpush1.msra.mxu0 %v7988
        %9178 = vmatprep.subr.mxu0 0.0
        %9179 = vmatpush1.msra.mxu0 %v7989
        %9180 = vmatprep.subr.mxu0 0.0
        %9181 = vmatpush1.msra.mxu0 %v7990
        %9182 = vmatprep.subr.mxu0 0.0
        %9183 = vmatpush1.msra.mxu0 %v7991
        %9184 = vmatprep.subr.mxu0 0.0
        %9185 = vmatpush1.msra.mxu0 %v7992
        %9186 = vmatprep.subr.mxu0 0.0
        %9187 = vmatpush1.msra.mxu0 %v7993
        %9188 = vmatprep.subr.mxu0 0.0
        %9189 = vmatpush1.msra.mxu0 %v7994
        %9190 = vmatprep.subr.mxu0 0.0
        %9191 = vmatpush1.msra.mxu0 %v7995
        %9192 = vmatprep.subr.mxu0 0.0
        %9193 = vmatpush1.msra.mxu0 %v7996
        %9194 = vmatprep.subr.mxu0 0.0
        %9195 = vmatpush1.msra.mxu0 %v7997
        %9196 = vmatprep.subr.mxu0 0.0
        %9197 = vmatpush1.msra.mxu0 %v7998
        %9198 = vmatprep.subr.mxu0 0.0
        %9199 = vmatpush1.msra.mxu0 %v7999
        %9200 = vmatprep.subr.mxu0 0.0
        %9201 = vmatpush1.msra.mxu0 %v8000
        %9202 = vmatprep.subr.mxu0 0.0
        %9203 = vmatpush1.msra.mxu0 %v8001
        %9204 = vmatprep.subr.mxu0 0.0
        %9205 = vmatpush1.msra.mxu0 %v8002
        %9206 = vmatprep.subr.mxu0 0.0
        %9207 = vmatpush1.msra.mxu0 %v8003
        %9208 = vmatprep.subr.mxu0 0.0
        %9209 = vmatpush1.msra.mxu0 %v8004
        %9210 = vmatprep.subr.mxu0 0.0
        %9211 = vmatpush1.msra.mxu0 %v8005
        %9212 = vmatprep.subr.mxu0 0.0
        %9213 = vmatpush1.msra.mxu0 %v8006
        %9214 = vmatprep.subr.mxu0 0.0
        %9215 = vmatpush1.msra.mxu0 %v8007
        %9216 = vmatprep.subr.mxu0 0.0
        %9217 = vmatpush1.msra.mxu0 %v8008
        %9218 = vmatprep.subr.mxu0 0.0
        %9219 = vmatpush1.msra.mxu0 %v8009
        %9220 = vmatprep.subr.mxu0 0.0
        %9221 = vmatpush1.msra.mxu0 %v8010
        %9222 = vmatprep.subr.mxu0 0.0
        %9223 = vmatpush1.msra.mxu0 %v8011
        %9224 = vmatprep.subr.mxu0 0.0
        %9225 = vmatpush1.msra.mxu0 %v8012
        %9226 = vmatprep.subr.mxu0 0.0
        %9227 = vmatpush1.msra.mxu0 %v8013
        %9228 = vmatprep.subr.mxu0 0.0
        %9229 = vmatpush1.msra.mxu0 %v8014
        %9230 = vmatprep.subr.mxu0 0.0
        %9231 = vmatpush1.msra.mxu0 %v8015
        %9232 = vmatprep.subr.mxu0 0.0
        %9233 = vmatpush1.msra.mxu0 %v8016
        %9234 = vmatprep.subr.mxu0 0.0
        %9235 = vmatpush1.msra.mxu0 %v8017
        %9236 = vmatprep.subr.mxu0 0.0
        %9237 = vmatpush1.msra.mxu0 %v8018
        %9238 = vmatprep.mubr.f32.mxu0 %v6306
        %9239 = vmatmul.mubr.f32.gmra.mrb[0].mxu0 %v6304
        %v9240 = vpop.f32.mrb[0].mxu0
        %v9241 = vadd.f32 %v8856, %v9240
        %v9242 = vpop.f32.mrb[0].mxu0
        %9243 = vmatprep.mubr.f32.mxu0 %v6322
        %9244 = vmatmul.mubr.f32.gmra.mrb[0].mxu0 %v6320
        %v9245 = vpop.f32.mrb[0].mxu0
        %v9246 = vadd.f32 %v8861, %v9245
        %v9247 = vpop.f32.mrb[0].mxu0
        %9248 = vmatprep.mubr.f32.mxu0 %v6338
        %9249 = vmatmul.mubr.f32.gmra.mrb[0].mxu0 %v6336
        %v9250 = vpop.f32.mrb[0].mxu0
        %v9251 = vadd.f32 %v8866, %v9250
        %v9252 = vpop.f32.mrb[0].mxu0
        %9253 = vmatprep.mubr.f32.mxu0 %v6354
        %9254 = vmatmul.mubr.f32.gmra.mrb[0].mxu0 %v6352
        %v9255 = vpop.f32.mrb[0].mxu0
        %v9256 = vadd.f32 %v8871, %v9255
        %v9257 = vpop.f32.mrb[0].mxu0
        %9258 = vmatprep.mubr.f32.mxu0 %v6370
        %9259 = vmatmul.mubr.f32.gmra.mrb[0].mxu0 %v6368
        %v9260 = vpop.f32.mrb[0].mxu0
        %v9261 = vadd.f32 %v8876, %v9260
        %v9262 = vpop.f32.mrb[0].mxu0
        %9263 = vmatprep.mubr.f32.mxu0 %v6386
        %9264 = vmatmul.mubr.f32.gmra.mrb[0].mxu0 %v6384
        %v9265 = vpop.f32.mrb[0].mxu0
        %v9266 = vadd.f32 %v8881, %v9265
        %v9267 = vpop.f32.mrb[0].mxu0
        %9268 = vmatprep.mubr.f32.mxu0 %v6402
        %9269 = vmatmul.mubr.f32.gmra.mrb[0].mxu0 %v6400
        %v9270 = vpop.f32.mrb[0].mxu0
        %v9271 = vadd.f32 %v8886, %v9270
        %v9272 = vpop.f32.mrb[0].mxu0
        %9273 = vmatprep.mubr.f32.mxu0 %v6418
        %9274 = vmatmul.mubr.f32.gmra.mrb[0].mxu0 %v6416
        %v9275 = vpop.f32.mrb[0].mxu0
        %v9276 = vadd.f32 %v8891, %v9275
        %v9277 = vpop.f32.mrb[0].mxu0
        %9278 = vmatprep.mubr.f32.mxu0 %v6434
        %9279 = vmatmul.mubr.f32.gmra.mrb[0].mxu0 %v6432
        %v9280 = vpop.f32.mrb[0].mxu0
        %v9281 = vadd.f32 %v8896, %v9280
        %v9282 = vpop.f32.mrb[0].mxu0
        %9283 = vmatprep.mubr.f32.mxu0 %v6450
        %9284 = vmatmul.mubr.f32.gmra.mrb[0].mxu0 %v6448
        %v9285 = vpop.f32.mrb[0].mxu0
        %v9286 = vadd.f32 %v8901, %v9285
        %v9287 = vpop.f32.mrb[0].mxu0
        %9288 = vmatprep.mubr.f32.mxu0 %v6466
        %9289 = vmatmul.mubr.f32.gmra.mrb[0].mxu0 %v6464
        %v9290 = vpop.f32.mrb[0].mxu0
        %v9291 = vadd.f32 %v8906, %v9290
        %v9292 = vpop.f32.mrb[0].mxu0
        %9293 = vmatprep.mubr.f32.mxu0 %v6482
        %9294 = vmatmul.mubr.f32.gmra.mrb[0].mxu0 %v6480
        %v9295 = vpop.f32.mrb[0].mxu0
        %v9296 = vadd.f32 %v8911, %v9295
        %v9297 = vpop.f32.mrb[0].mxu0
        %9298 = vmatprep.mubr.f32.mxu0 %v6498
        %9299 = vmatmul.mubr.f32.gmra.mrb[0].mxu0 %v6496
        %v9300 = vpop.f32.mrb[0].mxu0
        %v9301 = vadd.f32 %v8916, %v9300
        %v9302 = vpop.f32.mrb[0].mxu0
        %9303 = vmatprep.mubr.f32.mxu0 %v6514
        %9304 = vmatmul.mubr.f32.gmra.mrb[0].mxu0 %v6512
        %v9305 = vpop.f32.mrb[0].mxu0
        %v9306 = vadd.f32 %v8921, %v9305
        %v9307 = vpop.f32.mrb[0].mxu0
        %9308 = vmatprep.mubr.f32.mxu0 %v6530
        %9309 = vmatmul.mubr.f32.gmra.mrb[0].mxu0 %v6528
        %v9310 = vpop.f32.mrb[0].mxu0
        %v9311 = vadd.f32 %v8926, %v9310
        %v9312 = vpop.f32.mrb[0].mxu0
        %9313 = vmatprep.mubr.f32.mxu0 %v6546
        %9314 = vmatmul.mubr.f32.gmra.mrb[0].mxu0 %v6544
        %v9315 = vpop.f32.mrb[0].mxu0
        %v9316 = vadd.f32 %v8931, %v9315
        %v9317 = vpop.f32.mrb[0].mxu0
        %9318 = vmatprep.mubr.f32.mxu0 %v6562
        %9319 = vmatmul.mubr.f32.gmra.mrb[0].mxu0 %v6560
        %v9320 = vpop.f32.mrb[0].mxu0
        %v9321 = vadd.f32 %v8936, %v9320
        %v9322 = vpop.f32.mrb[0].mxu0
        %9323 = vmatprep.mubr.f32.mxu0 %v6578
        %9324 = vmatmul.mubr.f32.gmra.mrb[0].mxu0 %v6576
        %v9325 = vpop.f32.mrb[0].mxu0
        %v9326 = vadd.f32 %v8941, %v9325
        %v9327 = vpop.f32.mrb[0].mxu0
        %9328 = vmatprep.mubr.f32.mxu0 %v6594
        %9329 = vmatmul.mubr.f32.gmra.mrb[0].mxu0 %v6592
        %v9330 = vpop.f32.mrb[0].mxu0
        %v9331 = vadd.f32 %v8946, %v9330
        %v9332 = vpop.f32.mrb[0].mxu0
        %9333 = vmatprep.mubr.f32.mxu0 %v6610
        %9334 = vmatmul.mubr.f32.gmra.mrb[0].mxu0 %v6608
        %v9335 = vpop.f32.mrb[0].mxu0
        %v9336 = vadd.f32 %v8951, %v9335
        %v9337 = vpop.f32.mrb[0].mxu0
        %9338 = vmatprep.mubr.f32.mxu0 %v6626
        %9339 = vmatmul.mubr.f32.gmra.mrb[0].mxu0 %v6624
        %v9340 = vpop.f32.mrb[0].mxu0
        %v9341 = vadd.f32 %v8956, %v9340
        %v9342 = vpop.f32.mrb[0].mxu0
        %9343 = vmatprep.mubr.f32.mxu0 %v6642
        %9344 = vmatmul.mubr.f32.gmra.mrb[0].mxu0 %v6640
        %v9345 = vpop.f32.mrb[0].mxu0
        %v9346 = vadd.f32 %v8961, %v9345
        %v9347 = vpop.f32.mrb[0].mxu0
        %9348 = vmatprep.mubr.f32.mxu0 %v6658
        %9349 = vmatmul.mubr.f32.gmra.mrb[0].mxu0 %v6656
        %v9350 = vpop.f32.mrb[0].mxu0
        %v9351 = vadd.f32 %v8966, %v9350
        %v9352 = vpop.f32.mrb[0].mxu0
        %9353 = vmatprep.mubr.f32.mxu0 %v6674
        %9354 = vmatmul.mubr.f32.gmra.mrb[0].mxu0 %v6672
        %v9355 = vpop.f32.mrb[0].mxu0
        %v9356 = vadd.f32 %v8971, %v9355
        %v9357 = vpop.f32.mrb[0].mxu0
        %9358 = vmatprep.mubr.f32.mxu0 %v6690
        %9359 = vmatmul.mubr.f32.gmra.mrb[0].mxu0 %v6688
        %v9360 = vpop.f32.mrb[0].mxu0
        %v9361 = vadd.f32 %v8976, %v9360
        %v9362 = vpop.f32.mrb[0].mxu0
        %9363 = vmatprep.mubr.f32.mxu0 %v6706
        %9364 = vmatmul.mubr.f32.gmra.mrb[0].mxu0 %v6704
        %v9365 = vpop.f32.mrb[0].mxu0
        %v9366 = vadd.f32 %v8981, %v9365
        %v9367 = vpop.f32.mrb[0].mxu0
        %9368 = vmatprep.mubr.f32.mxu0 %v6722
        %9369 = vmatmul.mubr.f32.gmra.mrb[0].mxu0 %v6720
        %v9370 = vpop.f32.mrb[0].mxu0
        %v9371 = vadd.f32 %v8986, %v9370
        %v9372 = vpop.f32.mrb[0].mxu0
        %9373 = vmatprep.mubr.f32.mxu0 %v6738
        %9374 = vmatmul.mubr.f32.gmra.mrb[0].mxu0 %v6736
        %v9375 = vpop.f32.mrb[0].mxu0
        %v9376 = vadd.f32 %v8991, %v9375
        %v9377 = vpop.f32.mrb[0].mxu0
        %9378 = vmatprep.mubr.f32.mxu0 %v6754
        %9379 = vmatmul.mubr.f32.gmra.mrb[0].mxu0 %v6752
        %v9380 = vpop.f32.mrb[0].mxu0
        %v9381 = vadd.f32 %v8996, %v9380
        %v9382 = vpop.f32.mrb[0].mxu0
        %9383 = vmatprep.mubr.f32.mxu0 %v6770
        %9384 = vmatmul.mubr.f32.gmra.mrb[0].mxu0 %v6768
        %v9385 = vpop.f32.mrb[0].mxu0
        %v9386 = vadd.f32 %v9001, %v9385
        %v9387 = vpop.f32.mrb[0].mxu0
        %9388 = vmatprep.mubr.f32.mxu0 %v6786
        %9389 = vmatmul.mubr.f32.gmra.mrb[0].mxu0 %v6784
        %v9390 = vpop.f32.mrb[0].mxu0
        %v9391 = vadd.f32 %v9006, %v9390
        %v9392 = vpop.f32.mrb[0].mxu0
        %9393 = vmatprep.mubr.f32.mxu0 %v6802
        %9394 = vmatmul.mubr.f32.gmra.mrb[0].mxu0 %v6800
        %v9395 = vpop.f32.mrb[0].mxu0
        %v9396 = vadd.f32 %v9011, %v9395
        %v9397 = vpop.f32.mrb[0].mxu0
        %9398 = vmatprep.mubr.f32.mxu0 %v6818
        %9399 = vmatmul.mubr.f32.gmra.mrb[0].mxu0 %v6816
        %v9400 = vpop.f32.mrb[0].mxu0
        %v9401 = vadd.f32 %v9016, %v9400
        %v9402 = vpop.f32.mrb[0].mxu0
        %9403 = vmatprep.mubr.f32.mxu0 %v6834
        %9404 = vmatmul.mubr.f32.gmra.mrb[0].mxu0 %v6832
        %v9405 = vpop.f32.mrb[0].mxu0
        %v9406 = vadd.f32 %v9021, %v9405
        %v9407 = vpop.f32.mrb[0].mxu0
        %9408 = vmatprep.mubr.f32.mxu0 %v6850
        %9409 = vmatmul.mubr.f32.gmra.mrb[0].mxu0 %v6848
        %v9410 = vpop.f32.mrb[0].mxu0
        %v9411 = vadd.f32 %v9026, %v9410
        %v9412 = vpop.f32.mrb[0].mxu0
        %9413 = vmatprep.mubr.f32.mxu0 %v6866
        %9414 = vmatmul.mubr.f32.gmra.mrb[0].mxu0 %v6864
        %v9415 = vpop.f32.mrb[0].mxu0
        %v9416 = vadd.f32 %v9031, %v9415
        %v9417 = vpop.f32.mrb[0].mxu0
        %9418 = vmatprep.mubr.f32.mxu0 %v6882
        %9419 = vmatmul.mubr.f32.gmra.mrb[0].mxu0 %v6880
        %v9420 = vpop.f32.mrb[0].mxu0
        %v9421 = vadd.f32 %v9036, %v9420
        %v9422 = vpop.f32.mrb[0].mxu0
        %9423 = vmatprep.mubr.f32.mxu0 %v6898
        %9424 = vmatmul.mubr.f32.gmra.mrb[0].mxu0 %v6896
        %v9425 = vpop.f32.mrb[0].mxu0
        %v9426 = vadd.f32 %v9041, %v9425
        %v9427 = vpop.f32.mrb[0].mxu0
        %9428 = vmatprep.mubr.f32.mxu0 %v6914
        %9429 = vmatmul.mubr.f32.gmra.mrb[0].mxu0 %v6912
        %v9430 = vpop.f32.mrb[0].mxu0
        %v9431 = vadd.f32 %v9046, %v9430
        %v9432 = vpop.f32.mrb[0].mxu0
        %9433 = vmatprep.mubr.f32.mxu0 %v6930
        %9434 = vmatmul.mubr.f32.gmra.mrb[0].mxu0 %v6928
        %v9435 = vpop.f32.mrb[0].mxu0
        %v9436 = vadd.f32 %v9051, %v9435
        %v9437 = vpop.f32.mrb[0].mxu0
        %9438 = vmatprep.mubr.f32.mxu0 %v6946
        %9439 = vmatmul.mubr.f32.gmra.mrb[0].mxu0 %v6944
        %v9440 = vpop.f32.mrb[0].mxu0
        %v9441 = vadd.f32 %v9056, %v9440
        %v9442 = vpop.f32.mrb[0].mxu0
        %9443 = vmatprep.mubr.f32.mxu0 %v6962
        %9444 = vmatmul.mubr.f32.gmra.mrb[0].mxu0 %v6960
        %v9445 = vpop.f32.mrb[0].mxu0
        %v9446 = vadd.f32 %v9061, %v9445
        %v9447 = vpop.f32.mrb[0].mxu0
        %9448 = vmatprep.mubr.f32.mxu0 %v6978
        %9449 = vmatmul.mubr.f32.gmra.mrb[0].mxu0 %v6976
        %v9450 = vpop.f32.mrb[0].mxu0
        %v9451 = vadd.f32 %v9066, %v9450
        %v9452 = vpop.f32.mrb[0].mxu0
        %9453 = vmatprep.mubr.f32.mxu0 %v6994
        %9454 = vmatmul.mubr.f32.gmra.mrb[0].mxu0 %v6992
        %v9455 = vpop.f32.mrb[0].mxu0
        %v9456 = vadd.f32 %v9071, %v9455
        %v9457 = vpop.f32.mrb[0].mxu0
        %9458 = vmatprep.mubr.f32.mxu0 %v7010
        %9459 = vmatmul.mubr.f32.gmra.mrb[0].mxu0 %v7008
        %v9460 = vpop.f32.mrb[0].mxu0
        %v9461 = vadd.f32 %v9076, %v9460
        %v9462 = vpop.f32.mrb[0].mxu0
        %9463 = vmatprep.mubr.f32.mxu0 %v7026
        %9464 = vmatmul.mubr.f32.gmra.mrb[0].mxu0 %v7024
        %v9465 = vpop.f32.mrb[0].mxu0
        %v9466 = vadd.f32 %v9081, %v9465
        %v9467 = vpop.f32.mrb[0].mxu0
        %9468 = vmatprep.mubr.f32.mxu0 %v7042
        %9469 = vmatmul.mubr.f32.gmra.mrb[0].mxu0 %v7040
        %v9470 = vpop.f32.mrb[0].mxu0
        %v9471 = vadd.f32 %v9086, %v9470
        %v9472 = vpop.f32.mrb[0].mxu0
        %9473 = vmatprep.mubr.f32.mxu0 %v7058
        %9474 = vmatmul.mubr.f32.gmra.mrb[0].mxu0 %v7056
        %v9475 = vpop.f32.mrb[0].mxu0
        %v9476 = vadd.f32 %v9091, %v9475
        %v9477 = vpop.f32.mrb[0].mxu0
        %9478 = vmatprep.mubr.f32.mxu0 %v7074
        %9479 = vmatmul.mubr.f32.gmra.mrb[0].mxu0 %v7072
        %v9480 = vpop.f32.mrb[0].mxu0
        %v9481 = vadd.f32 %v9096, %v9480
        %v9482 = vpop.f32.mrb[0].mxu0
        %9483 = vmatprep.mubr.f32.mxu0 %v7090
        %9484 = vmatmul.mubr.f32.gmra.mrb[0].mxu0 %v7088
        %v9485 = vpop.f32.mrb[0].mxu0
        %v9486 = vadd.f32 %v9101, %v9485
        %v9487 = vpop.f32.mrb[0].mxu0
        %9488 = vmatprep.mubr.f32.mxu0 %v7106
        %9489 = vmatmul.mubr.f32.gmra.mrb[0].mxu0 %v7104
        %v9490 = vpop.f32.mrb[0].mxu0
        %v9491 = vadd.f32 %v9106, %v9490
        %v9492 = vpop.f32.mrb[0].mxu0
        %9493 = vmatprep.mubr.f32.mxu0 %v7122
        %9494 = vmatmul.mubr.f32.gmra.mrb[0].mxu0 %v7120
        %v9495 = vpop.f32.mrb[0].mxu0
        %v9496 = vadd.f32 %v9111, %v9495
        %v9497 = vpop.f32.mrb[0].mxu0
        %9498 = vmatprep.mubr.f32.mxu0 %v7138
        %9499 = vmatmul.mubr.f32.gmra.mrb[0].mxu0 %v7136
        %v9500 = vpop.f32.mrb[0].mxu0
        %v9501 = vadd.f32 %v9116, %v9500
        %v9502 = vpop.f32.mrb[0].mxu0
        %9503 = vmatprep.mubr.f32.mxu0 %v7154
        %9504 = vmatmul.mubr.f32.gmra.mrb[0].mxu0 %v7152
        %v9505 = vpop.f32.mrb[0].mxu0
        %v9506 = vadd.f32 %v9121, %v9505
        %v9507 = vpop.f32.mrb[0].mxu0
        %9508 = vmatprep.mubr.f32.mxu0 %v7170
        %9509 = vmatmul.mubr.f32.gmra.mrb[0].mxu0 %v7168
        %v9510 = vpop.f32.mrb[0].mxu0
        %v9511 = vadd.f32 %v9126, %v9510
        %v9512 = vpop.f32.mrb[0].mxu0
        %9513 = vmatprep.mubr.f32.mxu0 %v7186
        %9514 = vmatmul.mubr.f32.gmra.mrb[0].mxu0 %v7184
        %v9515 = vpop.f32.mrb[0].mxu0
        %v9516 = vadd.f32 %v9131, %v9515
        %v9517 = vpop.f32.mrb[0].mxu0
        %9518 = vmatprep.mubr.f32.mxu0 %v7202
        %9519 = vmatmul.mubr.f32.gmra.mrb[0].mxu0 %v7200
        %v9520 = vpop.f32.mrb[0].mxu0
        %v9521 = vadd.f32 %v9136, %v9520
        %v9522 = vpop.f32.mrb[0].mxu0
        %9523 = vmatprep.mubr.f32.mxu0 %v7218
        %9524 = vmatmul.mubr.f32.gmra.mrb[0].mxu0 %v7216
        %v9525 = vpop.f32.mrb[0].mxu0
        %v9526 = vadd.f32 %v9141, %v9525
        %v9527 = vpop.f32.mrb[0].mxu0
        %9528 = vmatprep.mubr.f32.mxu0 %v7234
        %9529 = vmatmul.mubr.f32.gmra.mrb[0].mxu0 %v7232
        %v9530 = vpop.f32.mrb[0].mxu0
        %v9531 = vadd.f32 %v9146, %v9530
        %v9532 = vpop.f32.mrb[0].mxu0
        %9533 = vmatprep.mubr.f32.mxu0 %v7250
        %9534 = vmatmul.mubr.f32.gmra.mrb[0].mxu0 %v7248
        %v9535 = vpop.f32.mrb[0].mxu0
        %v9536 = vadd.f32 %v9151, %v9535
        %v9537 = vpop.f32.mrb[0].mxu0
        %9538 = vmatprep.mubr.f32.mxu0 %v7266
        %9539 = vmatmul.mubr.f32.gmra.mrb[0].mxu0 %v7264
        %v9540 = vpop.f32.mrb[0].mxu0
        %v9541 = vadd.f32 %v9156, %v9540
        %v9542 = vpop.f32.mrb[0].mxu0
        %9543 = vmatprep.mubr.f32.mxu0 %v7282
        %9544 = vmatmul.mubr.f32.gmra.mrb[0].mxu0 %v7280
        %v9545 = vpop.f32.mrb[0].mxu0
        %v9546 = vadd.f32 %v9161, %v9545
        %v9547 = vpop.f32.mrb[0].mxu0
        %9548 = vmatprep.mubr.f32.mxu0 %v7298
        %9549 = vmatmul.mubr.f32.gmra.mrb[0].mxu0 %v7296
        %v9550 = vpop.f32.mrb[0].mxu0
        %v9551 = vadd.f32 %v9166, %v9550
        %v9552 = vpop.f32.mrb[0].mxu0
        %9553 = vmatprep.mubr.f32.mxu0 %v7314
        %9554 = vmatmul.mubr.f32.gmra.mrb[0].mxu0 %v7312
        %v9555 = vpop.f32.mrb[0].mxu0
        %v9556 = vadd.f32 %v9171, %v9555
        %v9557 = vpop.f32.mrb[0].mxu0
        %9558 = vdwg.mxu0
        %v9559 = vmax.f32 %v9241, 0.0
        %v9560 = vmax.f32 %v9246, 0.0
        %v9561 = vmax.f32 %v9251, 0.0
        %v9562 = vmax.f32 %v9256, 0.0
        %v9563 = vmax.f32 %v9261, 0.0
        %v9564 = vmax.f32 %v9266, 0.0
        %v9565 = vmax.f32 %v9271, 0.0
        %v9566 = vmax.f32 %v9276, 0.0
        %v9567 = vmax.f32 %v9281, 0.0
        %v9568 = vmax.f32 %v9286, 0.0
        %v9569 = vmax.f32 %v9291, 0.0
        %v9570 = vmax.f32 %v9296, 0.0
        %v9571 = vmax.f32 %v9301, 0.0
        %v9572 = vmax.f32 %v9306, 0.0
        %v9573 = vmax.f32 %v9311, 0.0
        %v9574 = vmax.f32 %v9316, 0.0
        %v9575 = vmax.f32 %v9321, 0.0
        %v9576 = vmax.f32 %v9326, 0.0
        %v9577 = vmax.f32 %v9331, 0.0
        %v9578 = vmax.f32 %v9336, 0.0
        %v9579 = vmax.f32 %v9341, 0.0
        %v9580 = vmax.f32 %v9346, 0.0
        %v9581 = vmax.f32 %v9351, 0.0
        %v9582 = vmax.f32 %v9356, 0.0
        %v9583 = vmax.f32 %v9361, 0.0
        %v9584 = vmax.f32 %v9366, 0.0
        %v9585 = vmax.f32 %v9371, 0.0
        %v9586 = vmax.f32 %v9376, 0.0
        %v9587 = vmax.f32 %v9381, 0.0
        %v9588 = vmax.f32 %v9386, 0.0
        %v9589 = vmax.f32 %v9391, 0.0
        %v9590 = vmax.f32 %v9396, 0.0
        %v9591 = vmax.f32 %v9401, 0.0
        %v9592 = vmax.f32 %v9406, 0.0
        %v9593 = vmax.f32 %v9411, 0.0
        %v9594 = vmax.f32 %v9416, 0.0
        %v9595 = vmax.f32 %v9421, 0.0
        %v9596 = vmax.f32 %v9426, 0.0
        %v9597 = vmax.f32 %v9431, 0.0
        %v9598 = vmax.f32 %v9436, 0.0
        %v9599 = vmax.f32 %v9441, 0.0
        %v9600 = vmax.f32 %v9446, 0.0
        %v9601 = vmax.f32 %v9451, 0.0
        %v9602 = vmax.f32 %v9456, 0.0
        %v9603 = vmax.f32 %v9461, 0.0
        %v9604 = vmax.f32 %v9466, 0.0
        %v9605 = vmax.f32 %v9471, 0.0
        %v9606 = vmax.f32 %v9476, 0.0
        %v9607 = vmax.f32 %v9481, 0.0
        %v9608 = vmax.f32 %v9486, 0.0
        %v9609 = vmax.f32 %v9491, 0.0
        %v9610 = vmax.f32 %v9496, 0.0
        %v9611 = vmax.f32 %v9501, 0.0
        %v9612 = vmax.f32 %v9506, 0.0
        %v9613 = vmax.f32 %v9511, 0.0
        %v9614 = vmax.f32 %v9516, 0.0
        %v9615 = vmax.f32 %v9521, 0.0
        %v9616 = vmax.f32 %v9526, 0.0
        %v9617 = vmax.f32 %v9531, 0.0
        %v9618 = vmax.f32 %v9536, 0.0
        %v9619 = vmax.f32 %v9541, 0.0
        %v9620 = vmax.f32 %v9546, 0.0
        %v9621 = vmax.f32 %v9551, 0.0
        %v9622 = vmax.f32 %v9556, 0.0
        %v9623 = vrcp.pop %v7323
        %v9624 = vrcp.pop %v7332
        %v9625 = vrcp.pop %v7341
        %v9626 = vrcp.pop %v7350
        %v9627 = vrcp.pop %v7359
        %v9628 = vrcp.pop %v7368
        %v9629 = vrcp.pop %v7377
        %v9630 = vrcp.pop %v7386
        %v9631 = vrcp.pop %v7395
        %v9632 = vrcp.pop %v7404
        %v9633 = vrcp.pop %v7413
        %v9634 = vrcp.pop %v7422
        %v9635 = vrcp.pop %v7431
        %v9636 = vrcp.pop %v7440
        %v9637 = vrcp.pop %v7449
        %v9638 = vrcp.pop %v7458
        %v9639 = vrcp.pop %v7467
        %v9640 = vrcp.pop %v7476
        %v9641 = vrcp.pop %v7485
        %v9642 = vrcp.pop %v7494
        %v9643 = vrcp.pop %v7503
        %v9644 = vrcp.pop %v7512
        %v9645 = vrcp.pop %v7521
        %v9646 = vrcp.pop %v7530
        %v9647 = vrcp.pop %v7539
        %v9648 = vrcp.pop %v7548
        %v9649 = vrcp.pop %v7557
        %v9650 = vrcp.pop %v7566
        %v9651 = vrcp.pop %v7575
        %v9652 = vrcp.pop %v7584
        %v9653 = vrcp.pop %v7593
        %v9654 = vrcp.pop %v7602
        %v9655 = vrcp.pop %v7611
        %v9656 = vrcp.pop %v7620
        %v9657 = vrcp.pop %v7629
        %v9658 = vrcp.pop %v7638
        %v9659 = vrcp.pop %v7647
        %v9660 = vrcp.pop %v7656
        %v9661 = vrcp.pop %v7665
        %v9662 = vrcp.pop %v7674
        %v9663 = vrcp.pop %v7683
        %v9664 = vrcp.pop %v7692
        %v9665 = vrcp.pop %v7701
        %v9666 = vrcp.pop %v7710
        %v9667 = vrcp.pop %v7719
        %v9668 = vrcp.pop %v7728
        %v9669 = vrcp.pop %v7737
        %v9670 = vrcp.pop %v7746
        %v9671 = vrcp.pop %v7755
        %v9672 = vrcp.pop %v7764
        %v9673 = vrcp.pop %v7773
        %v9674 = vrcp.pop %v7782
        %v9675 = vrcp.pop %v7791
        %v9676 = vrcp.pop %v7800
        %v9677 = vrcp.pop %v7809
        %v9678 = vrcp.pop %v7818
        %v9679 = vrcp.pop %v7827
        %v9680 = vrcp.pop %v7836
        %v9681 = vrcp.pop %v7845
        %v9682 = vrcp.pop %v7854
        %v9683 = vrcp.pop %v7863
        %v9684 = vrcp.pop %v7872
        %v9685 = vrcp.pop %v7881
        %v9686 = vrcp.pop %v7890
        %v9687 = vmul.f32 %v9559, %v9623
        %v9688 = vmul.f32 %v9560, %v9624
        %v9689 = vmul.f32 %v9561, %v9625
        %v9690 = vmul.f32 %v9562, %v9626
        %v9691 = vmul.f32 %v9563, %v9627
        %v9692 = vmul.f32 %v9564, %v9628
        %v9693 = vmul.f32 %v9565, %v9629
        %v9694 = vmul.f32 %v9566, %v9630
        %v9695 = vmul.f32 %v9567, %v9631
        %v9696 = vmul.f32 %v9568, %v9632
        %v9697 = vmul.f32 %v9569, %v9633
        %v9698 = vmul.f32 %v9570, %v9634
        %v9699 = vmul.f32 %v9571, %v9635
        %v9700 = vmul.f32 %v9572, %v9636
        %v9701 = vmul.f32 %v9573, %v9637
        %v9702 = vmul.f32 %v9574, %v9638
        %v9703 = vmul.f32 %v9575, %v9639
        %v9704 = vmul.f32 %v9576, %v9640
        %v9705 = vmul.f32 %v9577, %v9641
        %v9706 = vmul.f32 %v9578, %v9642
        %v9707 = vmul.f32 %v9579, %v9643
        %v9708 = vmul.f32 %v9580, %v9644
        %v9709 = vmul.f32 %v9581, %v9645
        %v9710 = vmul.f32 %v9582, %v9646
        %v9711 = vmul.f32 %v9583, %v9647
        %v9712 = vmul.f32 %v9584, %v9648
        %v9713 = vmul.f32 %v9585, %v9649
        %v9714 = vmul.f32 %v9586, %v9650
        %v9715 = vmul.f32 %v9587, %v9651
        %v9716 = vmul.f32 %v9588, %v9652
        %v9717 = vmul.f32 %v9589, %v9653
        %v9718 = vmul.f32 %v9590, %v9654
        %v9719 = vmul.f32 %v9591, %v9655
        %v9720 = vmul.f32 %v9592, %v9656
        %v9721 = vmul.f32 %v9593, %v9657
        %v9722 = vmul.f32 %v9594, %v9658
        %v9723 = vmul.f32 %v9595, %v9659
        %v9724 = vmul.f32 %v9596, %v9660
        %v9725 = vmul.f32 %v9597, %v9661
        %v9726 = vmul.f32 %v9598, %v9662
        %v9727 = vmul.f32 %v9599, %v9663
        %v9728 = vmul.f32 %v9600, %v9664
        %v9729 = vmul.f32 %v9601, %v9665
        %v9730 = vmul.f32 %v9602, %v9666
        %v9731 = vmul.f32 %v9603, %v9667
        %v9732 = vmul.f32 %v9604, %v9668
        %v9733 = vmul.f32 %v9605, %v9669
        %v9734 = vmul.f32 %v9606, %v9670
        %v9735 = vmul.f32 %v9607, %v9671
        %v9736 = vmul.f32 %v9608, %v9672
        %v9737 = vmul.f32 %v9609, %v9673
        %v9738 = vmul.f32 %v9610, %v9674
        %v9739 = vmul.f32 %v9611, %v9675
        %v9740 = vmul.f32 %v9612, %v9676
        %v9741 = vmul.f32 %v9613, %v9677
        %v9742 = vmul.f32 %v9614, %v9678
        %v9743 = vmul.f32 %v9615, %v9679
        %v9744 = vmul.f32 %v9616, %v9680
        %v9745 = vmul.f32 %v9617, %v9681
        %v9746 = vmul.f32 %v9618, %v9682
        %v9747 = vmul.f32 %v9619, %v9683
        %v9748 = vmul.f32 %v9620, %v9684
        %v9749 = vmul.f32 %v9621, %v9685
        %v9750 = vmul.f32 %v9622, %v9686
        %9751 = vst.msk [vmem:[%s219] sm:$0xff] %vm361, %v9687
        %9752 = vst.msk [vmem:[%s219 + $0x8] sm:$0xff] %vm361, %v9688
        %9753 = vst.msk [vmem:[%s219 + $0x10] sm:$0xff] %vm361, %v9689
        %9754 = vst.msk [vmem:[%s219 + $0x18] sm:$0xff] %vm361, %v9690
        %9755 = vst.msk [vmem:[%s219 + $0x20] sm:$0xff] %vm361, %v9691
        %9756 = vst.msk [vmem:[%s219 + $0x28] sm:$0xff] %vm361, %v9692
        %9757 = vst.msk [vmem:[%s219 + $0x30] sm:$0xff] %vm361, %v9693
        %9758 = vst.msk [vmem:[%s219 + $0x38] sm:$0xff] %vm361, %v9694
        %9759 = vst.msk [vmem:[%s219 + $0x40] sm:$0xff] %vm361, %v9695
        %9760 = vst.msk [vmem:[%s219 + $0x48] sm:$0xff] %vm361, %v9696
        %9761 = vst.msk [vmem:[%s219 + $0x50] sm:$0xff] %vm361, %v9697
        %9762 = vst.msk [vmem:[%s219 + $0x58] sm:$0xff] %vm361, %v9698
        %9763 = vst.msk [vmem:[%s219 + $0x60] sm:$0xff] %vm361, %v9699
        %9764 = vst.msk [vmem:[%s219 + $0x68] sm:$0xff] %vm361, %v9700
        %9765 = vst.msk [vmem:[%s219 + $0x70] sm:$0xff] %vm361, %v9701
        %9766 = vst.msk [vmem:[%s219 + $0x78] sm:$0xff] %vm361, %v9702
        %9767 = vst.msk [vmem:[%s219 + $0x80] sm:$0xff] %vm361, %v9703
        %9768 = vst.msk [vmem:[%s219 + $0x88] sm:$0xff] %vm361, %v9704
        %9769 = vst.msk [vmem:[%s219 + $0x90] sm:$0xff] %vm361, %v9705
        %9770 = vst.msk [vmem:[%s219 + $0x98] sm:$0xff] %vm361, %v9706
        %9771 = vst.msk [vmem:[%s219 + $0xa0] sm:$0xff] %vm361, %v9707
        %9772 = vst.msk [vmem:[%s219 + $0xa8] sm:$0xff] %vm361, %v9708
        %9773 = vst.msk [vmem:[%s219 + $0xb0] sm:$0xff] %vm361, %v9709
        %9774 = vst.msk [vmem:[%s219 + $0xb8] sm:$0xff] %vm361, %v9710
        %9775 = vst.msk [vmem:[%s219 + $0xc0] sm:$0xff] %vm361, %v9711
        %9776 = vst.msk [vmem:[%s219 + $0xc8] sm:$0xff] %vm361, %v9712
        %9777 = vst.msk [vmem:[%s219 + $0xd0] sm:$0xff] %vm361, %v9713
        %9778 = vst.msk [vmem:[%s219 + $0xd8] sm:$0xff] %vm361, %v9714
        %9779 = vst.msk [vmem:[%s219 + $0xe0] sm:$0xff] %vm361, %v9715
        %9780 = vst.msk [vmem:[%s219 + $0xe8] sm:$0xff] %vm361, %v9716
        %9781 = vst.msk [vmem:[%s219 + $0xf0] sm:$0xff] %vm361, %v9717
        %9782 = vst.msk [vmem:[%s219 + $0xf8] sm:$0xff] %vm361, %v9718
        %9783 = vst.msk [vmem:[%s219 + $0x100] sm:$0xff] %vm361, %v9719
        %9784 = vst.msk [vmem:[%s219 + $0x108] sm:$0xff] %vm361, %v9720
        %9785 = vst.msk [vmem:[%s219 + $0x110] sm:$0xff] %vm361, %v9721
        %9786 = vst.msk [vmem:[%s219 + $0x118] sm:$0xff] %vm361, %v9722
        %9787 = vst.msk [vmem:[%s219 + $0x120] sm:$0xff] %vm361, %v9723
        %9788 = vst.msk [vmem:[%s219 + $0x128] sm:$0xff] %vm361, %v9724
        %9789 = vst.msk [vmem:[%s219 + $0x130] sm:$0xff] %vm361, %v9725
        %9790 = vst.msk [vmem:[%s219 + $0x138] sm:$0xff] %vm361, %v9726
        %9791 = vst.msk [vmem:[%s219 + $0x140] sm:$0xff] %vm361, %v9727
        %9792 = vst.msk [vmem:[%s219 + $0x148] sm:$0xff] %vm361, %v9728
        %9793 = vst.msk [vmem:[%s219 + $0x150] sm:$0xff] %vm361, %v9729
        %9794 = vst.msk [vmem:[%s219 + $0x158] sm:$0xff] %vm361, %v9730
        %9795 = vst.msk [vmem:[%s219 + $0x160] sm:$0xff] %vm361, %v9731
        %9796 = vst.msk [vmem:[%s219 + $0x168] sm:$0xff] %vm361, %v9732
        %9797 = vst.msk [vmem:[%s219 + $0x170] sm:$0xff] %vm361, %v9733
        %9798 = vst.msk [vmem:[%s219 + $0x178] sm:$0xff] %vm361, %v9734
        %9799 = vst.msk [vmem:[%s219 + $0x180] sm:$0xff] %vm361, %v9735
        %9800 = vst.msk [vmem:[%s219 + $0x188] sm:$0xff] %vm361, %v9736
        %9801 = vst.msk [vmem:[%s219 + $0x190] sm:$0xff] %vm361, %v9737
        %9802 = vst.msk [vmem:[%s219 + $0x198] sm:$0xff] %vm361, %v9738
        %9803 = vst.msk [vmem:[%s219 + $0x1a0] sm:$0xff] %vm361, %v9739
        %9804 = vst.msk [vmem:[%s219 + $0x1a8] sm:$0xff] %vm361, %v9740
        %9805 = vst.msk [vmem:[%s219 + $0x1b0] sm:$0xff] %vm361, %v9741
        %9806 = vst.msk [vmem:[%s219 + $0x1b8] sm:$0xff] %vm361, %v9742
        %9807 = vst.msk [vmem:[%s219 + $0x1c0] sm:$0xff] %vm361, %v9743
        %9808 = vst.msk [vmem:[%s219 + $0x1c8] sm:$0xff] %vm361, %v9744
        %9809 = vst.msk [vmem:[%s219 + $0x1d0] sm:$0xff] %vm361, %v9745
        %9810 = vst.msk [vmem:[%s219 + $0x1d8] sm:$0xff] %vm361, %v9746
        %9811 = vst.msk [vmem:[%s219 + $0x1e0] sm:$0xff] %vm361, %v9747
        %9812 = vst.msk [vmem:[%s219 + $0x1e8] sm:$0xff] %vm361, %v9748
        %9813 = vst.msk [vmem:[%s219 + $0x1f0] sm:$0xff] %vm361, %v9749
        %9814 = vst.msk [vmem:[%s219 + $0x1f8] sm:$0xff] %vm361, %v9750
        %s9815 = smul.u32 64, %s18
        %p9816 = scmp.lt.s32.totalorder %s9815, 127
        %s9817 = scalar_select %p9816, %s9815, 127
        %s9818 = smul.addr %s9817, 8
        %s9819 = scalar_lea.vmem %s4, %s9818
        // Predicated region
        $region41: #{tpu_custom_call.1} parent=35 // pred_check
          %p9820 = pneg %p125
        $region42: #{tpu_custom_call.1} parent=35 // pred_check_branch
          %9822 = sbr.rel (%p9820) target = $region44
        $region43: #{tpu_custom_call.1} parent=35 // pred_region
          %s9823 = smul.u32 64, %s18
        $region44: #{tpu_custom_call.1} parent=35 // pred_fallthru
          _
      $region36: #{tpu_custom_call.1} parent=5 // pred_fallthru
        _
      %p9824 = scmp.le.s32.totalorder 2, %s13
      // Predicated region
      $region45: #{tpu_custom_call.1} parent=5 // pred_check
        %p9825 = pneg %p9824
      $region46: #{tpu_custom_call.1} parent=5 // pred_check_branch
        %9827 = sbr.rel (%p9825) target = $region48
      $region47: #{tpu_custom_call.1} parent=5 // pred_region
        %s9828 = ssub.s32 %s13, 2
        // Predicated region
        $region49: #{tpu_custom_call.1} parent=47 // pred_check
          %p9829 = pneg %p131
        $region50: #{tpu_custom_call.1} parent=47 // pred_check_branch
          %9831 = sbr.rel (%p9829) target = $region52
        $region51: #{tpu_custom_call.1} parent=47 // pred_region
          %s9832 = smul.u32 64, %s19
          %p9833 = scmp.lt.s32.totalorder %s9832, 127
          %s9834 = scalar_select %p9833, %s9832, 127
          %s9835 = smul.addr %s9834, 8
          %s9836 = scalar_lea.vmem %s4, %s9835
        $region52: #{tpu_custom_call.1} parent=47 // pred_fallthru
          _
      $region48: #{tpu_custom_call.1} parent=5 // pred_fallthru
        _
    $region6: #{tpu_custom_call.1} parent=1 // loop_footer
      %s17 = sadd.s32 1, %s13
    $region7: #{tpu_custom_call.1} parent=1 // loop_footer_branch
      %12 = sbr.rel target = $region3
    $region8: #{tpu_custom_call.1} parent=1 // loop_exit
      _
    %9837 = vsyncpa [#allocation3], 1
    %s9838 = scalar_lea.sflag [#allocation3], 1
    %9839 = vsyncpa %s9838, 1

</llo_original>
